<compile_context>
chip_gen: v7x
topology: tpu7x:2x2x1
jax: 0.10.0
libtpu: 0.0.40
codegen_flags: <defaults>
</compile_context>

<pallas_src>
import functools
import math

import jax
import jax.numpy as jnp
from jax import lax
from jax.experimental import pallas as pl
from jax.experimental.pallas import tpu as pltpu


# ---------------------------------------------------------------------------
# Per-generation tiling defaults (v5e: 128-row tiles; v6e/v7x: 256-row tiles;
# v7x gets a smaller hidden tile + tighter vmem cap for its 64 MiB VMEM).
# ---------------------------------------------------------------------------
def _tpu_tile_defaults():
    kind = ""
    try:
        kind = jax.devices()[0].device_kind.lower()
    except Exception:
        pass
    if "v5" in kind:
        return dict(tile_m=128, tile_h=512, vmem_limit=64 * 1024 * 1024)
    if "v7" in kind or "7x" in kind:
        return dict(tile_m=256, tile_h=512, vmem_limit=48 * 1024 * 1024)
    if "v6" in kind:
        return dict(tile_m=256, tile_h=1024, vmem_limit=96 * 1024 * 1024)
    return dict(tile_m=256, tile_h=512, vmem_limit=48 * 1024 * 1024)


def _round_up(x, m):
    return (x + m - 1) // m * m


# ---------------------------------------------------------------------------
# Kernel 1: (optionally RMS-normed) linear projection  y = norm?(x) @ W_t
# ---------------------------------------------------------------------------
def _linear_kernel(x_ref, w_ref, o_ref, *, do_norm, eps):
    x = x_ref[...]
    if do_norm:
        xf = x.astype(jnp.float32)
        ms = jnp.mean(xf * xf, axis=-1, keepdims=True)
        x = (xf * lax.rsqrt(ms + eps)).astype(x_ref.dtype)
    o_ref[...] = jnp.dot(
        x, w_ref[...], preferred_element_type=jnp.float32
    ).astype(o_ref.dtype)


def linear_pallas(x2d, w_t, *, do_norm=False, eps=1e-6, tile_m=None, tile_n=None):
    """x2d: (M, K); w_t: (K, N) pre-transposed & pre-cast weights."""
    M, K = x2d.shape
    K2, N = w_t.shape
    assert K == K2
    defaults = _tpu_tile_defaults()
    if tile_m is None:
        tile_m = defaults["tile_m"]
    tile_m = min(tile_m, _round_up(M, 8))
    if tile_n is None:
        tile_n = 512
    if N % tile_n != 0:
        tile_n = N  # small / irregular N: single (full, lane-dense) tile
    Mp = _round_up(M, tile_m)
    if Mp != M:
        x2d = jnp.pad(x2d, ((0, Mp - M), (0, 0)))
    grid = (Mp // tile_m, N // tile_n)

    out = pl.pallas_call(
        functools.partial(_linear_kernel, do_norm=do_norm, eps=eps),
        out_shape=jax.ShapeDtypeStruct((Mp, N), x2d.dtype),
        grid_spec=pltpu.PrefetchScalarGridSpec(
            num_scalar_prefetch=0,
            grid=grid,
            in_specs=[
                pl.BlockSpec((tile_m, K), lambda i, j: (i, 0)),
                pl.BlockSpec((K, tile_n), lambda i, j: (0, j)),
            ],
            out_specs=pl.BlockSpec((tile_m, tile_n), lambda i, j: (i, j)),
        ),
        compiler_params=pltpu.CompilerParams(
            dimension_semantics=("parallel", "parallel"),
            vmem_limit_bytes=defaults["vmem_limit"],
        ),
    )(x2d, w_t)
    return out[:M]


# ---------------------------------------------------------------------------
# Kernel 2: causal flash attention over (H, T, D), online softmax.
# ---------------------------------------------------------------------------
def _flash_attn_kernel(q_ref, k_ref, v_ref, o_ref, m_sc, l_sc, acc_sc, *, scale):
    qi = pl.program_id(0)
    ki = pl.program_id(1)
    tq = q_ref.shape[1]
    tkv = k_ref.shape[1]

    @pl.when(ki == 0)
    def _():
        m_sc[...] = jnp.full_like(m_sc, -jnp.inf)
        l_sc[...] = jnp.zeros_like(l_sc)
        acc_sc[...] = jnp.zeros_like(acc_sc)

    # Skip kv blocks entirely in the causal future of this q block.
    @pl.when(ki * tkv < (qi + 1) * tq)
    def _():
        s = jnp.einsum("hqd,hkd->hqk", q_ref[...], k_ref[...],
                       preferred_element_type=jnp.float32) * scale
        q_pos = qi * tq + lax.broadcasted_iota(jnp.int32, s.shape, 1)
        k_pos = ki * tkv + lax.broadcasted_iota(jnp.int32, s.shape, 2)
        s = jnp.where(k_pos <= q_pos, s, -1e30)
        m_prev = m_sc[...]
        m_new = jnp.maximum(m_prev, s.max(axis=-1, keepdims=True))
        alpha = jnp.exp(m_prev - m_new)
        p = jnp.exp(s - m_new)
        l_sc[...] = alpha * l_sc[...] + p.sum(axis=-1, keepdims=True)
        acc_sc[...] = alpha * acc_sc[...] + jnp.einsum(
            "hqk,hkd->hqd", p.astype(v_ref.dtype), v_ref[...],
            preferred_element_type=jnp.float32)
        m_sc[...] = m_new

    @pl.when(ki == pl.num_programs(1) - 1)
    def _():
        o_ref[...] = (acc_sc[...] / l_sc[...]).astype(o_ref.dtype)


def causal_flash_attention_pallas(q, k, v, *, scale, tile_q=128, tile_kv=128):
    """q, k, v: (H, T, D) -> (H, T, D) with causal masking.

    TODO(synk): only the causal case of FlexAttention's BlockMask is
    implemented; arbitrary block-sparse masks would need scalar-prefetched
    block indices.
    """
    H, T, D = q.shape
    tile_q = min(tile_q, T)
    tile_kv = min(tile_kv, T)
    if T % tile_q != 0:
        tile_q = T
    if T % tile_kv != 0:
        tile_kv = T
    grid = (T // tile_q, T // tile_kv)

    return pl.pallas_call(
        functools.partial(_flash_attn_kernel, scale=scale),
        out_shape=jax.ShapeDtypeStruct((H, T, D), q.dtype),
        grid_spec=pltpu.PrefetchScalarGridSpec(
            num_scalar_prefetch=0,
            grid=grid,
            in_specs=[
                pl.BlockSpec((H, tile_q, D), lambda qi, ki: (0, qi, 0)),
                pl.BlockSpec((H, tile_kv, D), lambda qi, ki: (0, ki, 0)),
                pl.BlockSpec((H, tile_kv, D), lambda qi, ki: (0, ki, 0)),
            ],
            out_specs=pl.BlockSpec((H, tile_q, D), lambda qi, ki: (0, qi, 0)),
            scratch_shapes=[
                pltpu.VMEM((H, tile_q, 1), jnp.float32),
                pltpu.VMEM((H, tile_q, 1), jnp.float32),
                pltpu.VMEM((H, tile_q, D), jnp.float32),
            ],
        ),
        compiler_params=pltpu.CompilerParams(
            dimension_semantics=("parallel", "arbitrary"),
        ),
    )(q, k, v)


# ---------------------------------------------------------------------------
# Kernel 3: fused residual MLP  out = x + relu(rms_norm(x) @ Wfc)^2 @ Wproj
# Grid = (M tiles [parallel], hidden tiles [arbitrary]); f32 accumulator.
# ---------------------------------------------------------------------------
def _mlp_resid_kernel(x_ref, wfc_ref, wproj_ref, o_ref, acc_ref, *, eps):
    k = pl.program_id(1)

    @pl.when(k == 0)
    def _():
        acc_ref[...] = jnp.zeros_like(acc_ref)

    xf = x_ref[...].astype(jnp.float32)
    # Fused RMSNorm: the x block spans the full feature dim, so stats are exact.
    ms = jnp.mean(xf * xf, axis=-1, keepdims=True)
    xn = (xf * lax.rsqrt(ms + eps)).astype(x_ref.dtype)
    h = jnp.dot(xn, wfc_ref[...], preferred_element_type=jnp.float32)
    h = jnp.maximum(h, 0.0)
    h = h * h
    acc_ref[...] += jnp.dot(
        h.astype(wproj_ref.dtype), wproj_ref[...],
        preferred_element_type=jnp.float32)

    @pl.when(k == pl.num_programs(1) - 1)
    def _():
        o_ref[...] = (xf + acc_ref[...]).astype(o_ref.dtype)  # residual add


def mlp_residual_pallas(x2d, wfc_t, wproj_t, *, eps, tile_m=None, tile_h=None):
    """x2d: (M, dim); wfc_t: (dim, hidden); wproj_t: (hidden, dim)."""
    M, dim = x2d.shape
    dim2, hidden = wfc_t.shape
    assert dim == dim2 and wproj_t.shape == (hidden, dim)
    defaults = _tpu_tile_defaults()
    if tile_m is None:
        tile_m = defaults["tile_m"]
    tile_m = min(tile_m, _round_up(M, 8))
    if tile_h is None:
        tile_h = defaults["tile_h"]
    tile_h = min(tile_h, hidden)
    if hidden % tile_h != 0:
        tile_h = hidden
    Mp = _round_up(M, tile_m)
    if Mp != M:
        x2d = jnp.pad(x2d, ((0, Mp - M), (0, 0)))
    grid = (Mp // tile_m, hidden // tile_h)

    out = pl.pallas_call(
        functools.partial(_mlp_resid_kernel, eps=eps),
        out_shape=jax.ShapeDtypeStruct((Mp, dim), x2d.dtype),
        grid_spec=pltpu.PrefetchScalarGridSpec(
            num_scalar_prefetch=0,
            grid=grid,
            in_specs=[
                pl.BlockSpec((tile_m, dim), lambda i, k: (i, 0)),
                pl.BlockSpec((dim, tile_h), lambda i, k: (0, k)),
                pl.BlockSpec((tile_h, dim), lambda i, k: (k, 0)),
            ],
            out_specs=pl.BlockSpec((tile_m, dim), lambda i, k: (i, 0)),
            scratch_shapes=[pltpu.VMEM((tile_m, dim), jnp.float32)],
        ),
        compiler_params=pltpu.CompilerParams(
            dimension_semantics=("parallel", "arbitrary"),
            vmem_limit_bytes=defaults["vmem_limit"],
        ),
    )(x2d, wfc_t, wproj_t)
    return out[:M]


# ---------------------------------------------------------------------------
# JAX glue: rotary tables / rotary / rms-norm / full Block forward
# ---------------------------------------------------------------------------
def rotary_tables(T, head_dim, base=10000.0, dtype=jnp.float32):
    inv_freq = (1.0 / base) ** (
        jnp.arange(0, head_dim, 2, dtype=jnp.float32) / head_dim)
    freqs = jnp.outer(jnp.arange(T, dtype=jnp.float32), inv_freq)
    return jnp.cos(freqs).astype(dtype), jnp.sin(freqs).astype(dtype)


def _apply_rotary(x, cos, sin):
    # x: (T, H, D); cos/sin: (T, D//2)
    D = x.shape[-1]
    x1, x2 = x[..., : D // 2], x[..., D // 2:]
    c, s = cos[:, None, :], sin[:, None, :]
    y1 = x1 * c + x2 * s
    y2 = -x1 * s + x2 * c
    return jnp.concatenate([y1, y2], axis=-1).astype(x.dtype)


def _rms_norm(x, eps):
    xf = x.astype(jnp.float32)
    ms = jnp.mean(xf * xf, axis=-1, keepdims=True)
    return (xf * lax.rsqrt(ms + eps)).astype(x.dtype)


def block_forward_pallas(params, x, vi, x0, *, n_head, tile_m=None, tile_h=None):
    """x, x0: (1, 1, T, dim); vi: (1, T, n_head, head_dim) or None."""
    eps = float(jnp.finfo(x.dtype).eps)  # F.rms_norm default eps
    _, _, T, dim = x.shape
    head_dim = dim // n_head
    lambdas = params["lambdas"]
    lamb = params["lamb"]

    # x = lambdas[0]*x + lambdas[1]*x0
    xm = (lambdas[0] * x + lambdas[1] * x0).reshape(T, dim)

    # ---- attention branch: x = attn(norm(x), vi) ----
    # RMSNorm fused into the (q|k|v) projection kernel.
    qkv = linear_pallas(xm, params["wqkv_t"], do_norm=True, eps=eps, tile_m=tile_m)
    q, k, v = jnp.split(qkv, 3, axis=-1)
    q = q.reshape(T, n_head, head_dim)
    k = k.reshape(T, n_head, head_dim)
    v = v.reshape(T, n_head, head_dim)
    vi_ = v if vi is None else vi.reshape(T, n_head, head_dim)
    v = (1.0 - lamb) * v + lamb * vi_
    q = _rms_norm(q, eps)
    k = _rms_norm(k, eps)
    q = _apply_rotary(q, params["rope_cos"], params["rope_sin"])
    k = _apply_rotary(k, params["rope_cos"], params["rope_sin"])

    qh = jnp.transpose(q, (1, 0, 2))
    kh = jnp.transpose(k, (1, 0, 2))
    vh = jnp.transpose(v, (1, 0, 2)).astype(x.dtype)
    y = causal_flash_attention_pallas(qh, kh, vh, scale=1.0 / math.sqrt(head_dim))
    y = jnp.transpose(y, (1, 0, 2)).reshape(T, dim)
    xattn = linear_pallas(y, params["wo_t"], do_norm=False, eps=eps, tile_m=tile_m)

    # ---- MLP branch (norm + MLP + residual fused in one kernel) ----
    out = mlp_residual_pallas(xattn, params["wfc_t"], params["wproj_t"],
                              eps=eps, tile_m=tile_m, tile_h=tile_h)
    return out.reshape(x.shape)


# ---------------------------------------------------------------------------
# Pure-JAX reference (mirrors the PyTorch forward exactly).
# ---------------------------------------------------------------------------
def block_forward_ref(weights, x, vi, x0, *, n_head):
    eps = float(jnp.finfo(x.dtype).eps)
    _, _, T, dim = x.shape
    head_dim = dim // n_head
    lambdas, lamb = weights["lambdas"], weights["lamb"]

    def rms(z):
        zf = z.astype(jnp.float32)
        return (zf / jnp.sqrt(jnp.mean(zf * zf, -1, keepdims=True) + eps)).astype(z.dtype)

    xm = lambdas[0] * x + lambdas[1] * x0
    xn = rms(xm).reshape(T, dim)
    q = (xn @ weights["wq"].T).reshape(T, n_head, head_dim)
    k = (xn @ weights["wk"].T).reshape(T, n_head, head_dim)
    v = (xn @ weights["wv"].T).reshape(T, n_head, head_dim)
    vi_ = v if vi is None else vi.reshape(T, n_head, head_dim)
    v = (1.0 - lamb) * v + lamb * vi_
    q, k = rms(q), rms(k)
    inv_freq = (1.0 / 10000.0) ** (
        jnp.arange(0, head_dim, 2, dtype=jnp.float32) / head_dim)
    freqs = jnp.outer(jnp.arange(T, dtype=jnp.float32), inv_freq)
    cos, sin = jnp.cos(freqs)[:, None, :], jnp.sin(freqs)[:, None, :]

    def rope(z):
        z1, z2 = z[..., : head_dim // 2], z[..., head_dim // 2:]
        return jnp.concatenate([z1 * cos + z2 * sin, -z1 * sin + z2 * cos],
                               axis=-1).astype(z.dtype)

    q, k = rope(q), rope(k)
    qh, kh, vh = (jnp.transpose(t, (1, 0, 2)) for t in (q, k, v))
    s = jnp.einsum("htd,hsd->hts", qh, kh).astype(jnp.float32) / math.sqrt(head_dim)
    mask = jnp.tril(jnp.ones((T, T), dtype=bool))
    s = jnp.where(mask[None], s, -jnp.inf)
    p = jax.nn.softmax(s, axis=-1)
    y = jnp.einsum("hts,hsd->htd", p, vh.astype(jnp.float32))
    y = jnp.transpose(y, (1, 0, 2)).reshape(T, dim).astype(x.dtype)
    xattn = (y @ weights["wo"].T).reshape(x.shape)
    hn = rms(xattn).reshape(T, dim)
    h = jnp.square(jnp.maximum(hn @ weights["wfc"].T, 0.0))
    return xattn + (h @ weights["wproj"].T).reshape(x.shape)


if __name__ == "__main__":
    # Small Block config: batch=1 (FlexAttention requirement), seq=256,
    # n_embd=128 (lane-dense), n_head=4 -> head_dim=32, hidden=512.
    B, T, dim, n_head = 1, 256, 128, 4
    head_dim = dim // n_head
    hidden = 4 * dim
    dtype = jnp.float32

    key = jax.random.PRNGKey(0)
    ks = jax.random.split(key, 9)

    def uniform(k, shape, bound):
        return jax.random.uniform(k, shape, dtype=dtype, minval=-bound, maxval=bound)

    lin_bound = 1.0 / math.sqrt(dim)
    xavier_bound = math.sqrt(6.0 / (dim + dim))
    weights = {
        "wq": uniform(ks[0], (dim, dim), lin_bound),
        "wk": uniform(ks[1], (dim, dim), lin_bound),
        "wv": uniform(ks[2], (dim, dim), lin_bound),
        "wo": uniform(ks[3], (dim, dim), xavier_bound),
        "wfc": uniform(ks[4], (hidden, dim), lin_bound),
        # NOTE: the module zero-inits mlp c_proj; nonzero here to exercise the
        # accumulation path (a zero-init variant is also checked below).
        "wproj": uniform(ks[5], (dim, hidden), 1.0 / math.sqrt(hidden)),
        "lamb": jnp.float32(0.5),
        "lambdas": jnp.array([1.0, 0.25], dtype=dtype),
    }

    x = jax.random.normal(ks[6], (B, 1, T, dim), dtype=dtype)
    x0 = jax.random.normal(ks[7], (B, 1, T, dim), dtype=dtype)
    vi = jax.random.normal(ks[8], (B, T, n_head, head_dim), dtype=dtype)

    # One-time parameter prep (outside the per-call hot path): transpose to
    # (in, out) layout, pre-cast to the activation dtype (CastedLinear; no-op
    # for f32), and precompute the rotary tables (= the PyTorch cached buffers).
    cos, sin = rotary_tables(T, head_dim, dtype=dtype)
    params = {
        "wqkv_t": jnp.concatenate(
            [weights["wq"].T, weights["wk"].T, weights["wv"].T], axis=1
        ).astype(dtype),
        "wo_t": weights["wo"].T.astype(dtype),
        "wfc_t": weights["wfc"].T.astype(dtype),
        "wproj_t": weights["wproj"].T.astype(dtype),
        "lamb": weights["lamb"],
        "lambdas": weights["lambdas"],
        "rope_cos": cos,
        "rope_sin": sin,
    }

    # Small explicit tiles at demo size so both grid axes (M tiles and hidden
    # tiles / kv tiles) take multiple steps; production defaults are the
    # per-generation sizes in _tpu_tile_defaults().
    fwd = jax.jit(functools.partial(block_forward_pallas, n_head=n_head,
                                    tile_m=128, tile_h=256))
    out = fwd(params, x, vi, x0)
    jax.block_until_ready(out)

    ref = block_forward_ref(weights, x, vi, x0, n_head=n_head)
    assert out.shape == x.shape
    err = float(jnp.max(jnp.abs(out - ref)))
    assert jnp.allclose(out, ref, atol=2e-3, rtol=2e-3), f"mismatch (max abs err {err})"

    # Also check the module's default zero-initialized MLP c_proj.
    params_zero = dict(params, wproj_t=jnp.zeros_like(params["wproj_t"]))
    weights_zero = dict(weights, wproj=jnp.zeros_like(weights["wproj"]))
    out_z = fwd(params_zero, x, vi, x0)
    jax.block_until_ready(out_z)
    ref_z = block_forward_ref(weights_zero, x, vi, x0, n_head=n_head)
    assert jnp.allclose(out_z, ref_z, atol=2e-3, rtol=2e-3), "mismatch (zero proj)"

    print("KERNEL_OK")
</pallas_src>

<mosaic_0001>
module attributes {stable_mosaic.version = 11 : i64} {
  func.func @_linear_kernel(%arg0: i32, %arg1: i32, %arg2: memref<128x128xf32, #tpu.memory_space<vmem>>, %arg3: memref<128x384xf32, #tpu.memory_space<vmem>>, %arg4: memref<128x384xf32, #tpu.memory_space<vmem>>) attributes {dimension_semantics = [#tpu.dimension_semantics<parallel>, #tpu.dimension_semantics<parallel>], iteration_bounds = array<i64: 2, 1>, scalar_prefetch = 0 : i64, scratch_operands = 0 : i64, tpu.core_type = #tpu.core_type<tc>, window_params = [{transform_indices = @transform_0, window_bounds = array<i64: 128, 128>}, {transform_indices = @transform_1, window_bounds = array<i64: 128, 384>}, {transform_indices = @transform_2, window_bounds = array<i64: 128, 384>}]} {
    %c0 = arith.constant 0 : index
    %c0_0 = arith.constant 0 : index
    %0 = vector.load %arg2[%c0, %c0_0] : memref<128x128xf32, #tpu.memory_space<vmem>>, vector<128x128xf32>
    %1 = arith.mulf %0, %0 : vector<128x128xf32>
    %cst = arith.constant dense<0.000000e+00> : vector<128xf32>
    %2 = vector.multi_reduction <add>, %1, %cst [1] : vector<128x128xf32> to vector<128xf32>
    %3 = vector.shape_cast %2 : vector<128xf32> to vector<128x1xf32>
    %cst_1 = arith.constant 1.280000e+02 : f32
    %4 = vector.broadcast %cst_1 : f32 to vector<128x1xf32>
    %5 = arith.divf %3, %4 : vector<128x1xf32>
    %cst_2 = arith.constant 1.1920929E-7 : f32
    %6 = vector.broadcast %cst_2 : f32 to vector<128x1xf32>
    %7 = arith.addf %5, %6 : vector<128x1xf32>
    %8 = math.rsqrt %7 : vector<128x1xf32>
    %9 = vector.broadcast %8 : vector<128x1xf32> to vector<128x128xf32>
    %10 = arith.mulf %0, %9 : vector<128x128xf32>
    %c0_3 = arith.constant 0 : index
    %c0_4 = arith.constant 0 : index
    %11 = vector.load %arg3[%c0_3, %c0_4] : memref<128x384xf32, #tpu.memory_space<vmem>>, vector<128x384xf32>
    %cst_5 = arith.constant dense<0.000000e+00> : vector<128x384xf32>
    %12 = tpu.matmul %10, %11, %cst_5 {dimension_numbers = #tpu.dot_dimension_numbers<[1], [0], [0], [1], [0, 0, 1, 1], [], []>} : vector<128x128xf32>, vector<128x384xf32>, vector<128x384xf32> -> vector<128x384xf32>
    %c0_6 = arith.constant 0 : index
    %c0_7 = arith.constant 0 : index
    %13 = vector.load %arg4[%c0_6, %c0_7] : memref<128x384xf32, #tpu.memory_space<vmem>>, vector<128x384xf32>
    tpu.vector_store %arg4[%c0_6, %c0_7], %12 {strides = array<i32>} : memref<128x384xf32, #tpu.memory_space<vmem>>, vector<128x384xf32>,
    return
  }
  func.func @transform_0(%arg0: i32, %arg1: i32) -> (i32, i32) {
    %c0_i32 = arith.constant 0 : i32
    %c0_i32_0 = arith.constant 0 : i32
    return %arg0, %c0_i32 : i32, i32
  }
  func.func @transform_1(%arg0: i32, %arg1: i32) -> (i32, i32) {
    %c0_i32 = arith.constant 0 : i32
    %c0_i32_0 = arith.constant 0 : i32
    return %c0_i32, %arg1 : i32, i32
  }
  func.func @transform_2(%arg0: i32, %arg1: i32) -> (i32, i32) {
    %c0_i32 = arith.constant 0 : i32
    return %arg0, %arg1 : i32, i32
  }
}

module attributes {stable_mosaic.version = 11 : i64} {
  func.func @_flash_attn_kernel(%arg0: i32, %arg1: i32, %arg2: memref<4x128x32xf32, #tpu.memory_space<vmem>>, %arg3: memref<4x128x32xf32, #tpu.memory_space<vmem>>, %arg4: memref<4x128x32xf32, #tpu.memory_space<vmem>>, %arg5: memref<4x128x32xf32, #tpu.memory_space<vmem>>, %arg6: memref<4x128x1xf32, #tpu.memory_space<vmem>>, %arg7: memref<4x128x1xf32, #tpu.memory_space<vmem>>, %arg8: memref<4x128x32xf32, #tpu.memory_space<vmem>>) attributes {dimension_semantics = [#tpu.dimension_semantics<parallel>, #tpu.dimension_semantics<arbitrary>], iteration_bounds = array<i64: 2, 2>, scalar_prefetch = 0 : i64, scratch_operands = 3 : i64, tpu.core_type = #tpu.core_type<tc>, window_params = [{transform_indices = @transform_0, window_bounds = array<i64: 4, 128, 32>}, {transform_indices = @transform_1, window_bounds = array<i64: 4, 128, 32>}, {transform_indices = @transform_2, window_bounds = array<i64: 4, 128, 32>}, {transform_indices = @transform_3, window_bounds = array<i64: 4, 128, 32>}]} {
    %c0_i32 = arith.constant 0 : i32
    %0 = arith.cmpi eq, %arg1, %c0_i32 : i32
    %1 = arith.extui %0 : i1 to i32
    %c0_i32_0 = arith.constant 0 : i32
    %2 = arith.cmpi ne, %1, %c0_i32_0 : i32
    scf.if %2 {
      %cst = arith.constant 0xFF800000 : f32
      %12 = vector.broadcast %cst : f32 to vector<4x128x1xf32>
      %c0 = arith.constant 0 : index
      %c0_5 = arith.constant 0 : index
      %c0_6 = arith.constant 0 : index
      %13 = vector.load %arg6[%c0, %c0_5, %c0_6] : memref<4x128x1xf32, #tpu.memory_space<vmem>>, vector<4x128x1xf32>
      tpu.vector_store %arg6[%c0, %c0_5, %c0_6], %12 {strides = array<i32>} : memref<4x128x1xf32, #tpu.memory_space<vmem>>, vector<4x128x1xf32>,
      %cst_7 = arith.constant 0.000000e+00 : f32
      %14 = vector.broadcast %cst_7 : f32 to vector<4x128x1xf32>
      %c0_8 = arith.constant 0 : index
      %c0_9 = arith.constant 0 : index
      %c0_10 = arith.constant 0 : index
      %15 = vector.load %arg7[%c0_8, %c0_9, %c0_10] : memref<4x128x1xf32, #tpu.memory_space<vmem>>, vector<4x128x1xf32>
      tpu.vector_store %arg7[%c0_8, %c0_9, %c0_10], %14 {strides = array<i32>} : memref<4x128x1xf32, #tpu.memory_space<vmem>>, vector<4x128x1xf32>,
      %cst_11 = arith.constant 0.000000e+00 : f32
      %16 = vector.broadcast %cst_11 : f32 to vector<4x128x32xf32>
      %c0_12 = arith.constant 0 : index
      %c0_13 = arith.constant 0 : index
      %c0_14 = arith.constant 0 : index
      %17 = vector.load %arg8[%c0_12, %c0_13, %c0_14] : memref<4x128x32xf32, #tpu.memory_space<vmem>>, vector<4x128x32xf32>
      tpu.vector_store %arg8[%c0_12, %c0_13, %c0_14], %16 {strides = array<i32>} : memref<4x128x32xf32, #tpu.memory_space<vmem>>, vector<4x128x32xf32>,
    } else {
    }
    %c128_i32 = arith.constant 128 : i32
    %3 = arith.muli %arg1, %c128_i32 : i32
    %c1_i32 = arith.constant 1 : i32
    %4 = arith.addi %arg0, %c1_i32 : i32
    %c128_i32_1 = arith.constant 128 : i32
    %5 = arith.muli %4, %c128_i32_1 : i32
    %6 = arith.cmpi slt, %3, %5 : i32
    %7 = arith.extui %6 : i1 to i32
    %c0_i32_2 = arith.constant 0 : i32
    %8 = arith.cmpi ne, %7, %c0_i32_2 : i32
    scf.if %8 {
      %c0 = arith.constant 0 : index
      %c0_5 = arith.constant 0 : index
      %c0_6 = arith.constant 0 : index
      %12 = vector.load %arg2[%c0, %c0_5, %c0_6] : memref<4x128x32xf32, #tpu.memory_space<vmem>>, vector<4x128x32xf32>
      %c0_7 = arith.constant 0 : index
      %c0_8 = arith.constant 0 : index
      %c0_9 = arith.constant 0 : index
      %13 = vector.load %arg3[%c0_7, %c0_8, %c0_9] : memref<4x128x32xf32, #tpu.memory_space<vmem>>, vector<4x128x32xf32>
      "tpu.trace_start"() <{level = 10 : i32, message = "hqd,hkd->hqk"}> : () -> ()
      %cst = arith.constant dense<0.000000e+00> : vector<4x128x128xf32>
      %14 = tpu.matmul %12, %13, %cst {dimension_numbers = #tpu.dot_dimension_numbers<[2], [2], [1], [1], [0, 0, 0, 1, 1, 1], [0], [0]>} : vector<4x128x32xf32>, vector<4x128x32xf32>, vector<4x128x128xf32> -> vector<4x128x128xf32>
      "tpu.trace_stop"() : () -> ()
      %cst_10 = arith.constant 0.176776692 : f32
      %15 = vector.broadcast %cst_10 : f32 to vector<4x128x128xf32>
      %16 = arith.mulf %14, %15 : vector<4x128x128xf32>
      %c128_i32_11 = arith.constant 128 : i32
      %17 = arith.muli %arg0, %c128_i32_11 : i32
      %18 = tpu.iota {dimensions = array<i32: 1>} : vector<4x128x128xi32>
      %19 = vector.broadcast %17 : i32 to vector<4x128x128xi32>
      %20 = arith.addi %19, %18 : vector<4x128x128xi32>
      %c128_i32_12 = arith.constant 128 : i32
      %21 = arith.muli %arg1, %c128_i32_12 : i32
      %22 = tpu.iota {dimensions = array<i32: 2>} : vector<4x128x128xi32>
      %23 = vector.broadcast %21 : i32 to vector<4x128x128xi32>
      %24 = arith.addi %23, %22 : vector<4x128x128xi32>
      %25 = arith.cmpi sle, %24, %20 : vector<4x128x128xi32>
      %cst_13 = arith.constant -1.000000e+30 : f32
      %26 = vector.broadcast %cst_13 : f32 to vector<4x128x128xf32>
      %27 = arith.select %25, %16, %26 : vector<4x128x128xi1>, vector<4x128x128xf32>
      %c0_14 = arith.constant 0 : index
      %c0_15 = arith.constant 0 : index
      %c0_16 = arith.constant 0 : index
      %28 = vector.load %arg6[%c0_14, %c0_15, %c0_16] : memref<4x128x1xf32, #tpu.memory_space<vmem>>, vector<4x128x1xf32>
      %cst_17 = arith.constant dense<0xFF800000> : vector<4x128xf32>
      %29 = vector.multi_reduction <maximumf>, %27, %cst_17 [2] : vector<4x128x128xf32> to vector<4x128xf32>
      %30 = vector.shape_cast %29 : vector<4x128xf32> to vector<4x128x1xf32>
      %31 = arith.maximumf %28, %30 : vector<4x128x1xf32>
      %32 = arith.subf %28, %31 : vector<4x128x1xf32>
      %33 = math.exp %32 : vector<4x128x1xf32>
      %34 = vector.broadcast %31 : vector<4x128x1xf32> to vector<4x128x128xf32>
      %35 = arith.subf %27, %34 : vector<4x128x128xf32>
      %36 = math.exp %35 : vector<4x128x128xf32>
      %c0_18 = arith.constant 0 : index
      %c0_19 = arith.constant 0 : index
      %c0_20 = arith.constant 0 : index
      %37 = vector.load %arg7[%c0_18, %c0_19, %c0_20] : memref<4x128x1xf32, #tpu.memory_space<vmem>>, vector<4x128x1xf32>
      %38 = arith.mulf %33, %37 : vector<4x128x1xf32>
      %cst_21 = arith.constant dense<0.000000e+00> : vector<4x128xf32>
      %39 = vector.multi_reduction <add>, %36, %cst_21 [2] : vector<4x128x128xf32> to vector<4x128xf32>
      %40 = vector.shape_cast %39 : vector<4x128xf32> to vector<4x128x1xf32>
      %41 = arith.addf %38, %40 : vector<4x128x1xf32>
      %c0_22 = arith.constant 0 : index
      %c0_23 = arith.constant 0 : index
      %c0_24 = arith.constant 0 : index
      %42 = vector.load %arg7[%c0_22, %c0_23, %c0_24] : memref<4x128x1xf32, #tpu.memory_space<vmem>>, vector<4x128x1xf32>
      tpu.vector_store %arg7[%c0_22, %c0_23, %c0_24], %41 {strides = array<i32>} : memref<4x128x1xf32, #tpu.memory_space<vmem>>, vector<4x128x1xf32>,
      %c0_25 = arith.constant 0 : index
      %c0_26 = arith.constant 0 : index
      %c0_27 = arith.constant 0 : index
      %43 = vector.load %arg8[%c0_25, %c0_26, %c0_27] : memref<4x128x32xf32, #tpu.memory_space<vmem>>, vector<4x128x32xf32>
      %44 = vector.broadcast %33 : vector<4x128x1xf32> to vector<4x128x32xf32>
      %45 = arith.mulf %44, %43 : vector<4x128x32xf32>
      %c0_28 = arith.constant 0 : index
      %c0_29 = arith.constant 0 : index
      %c0_30 = arith.constant 0 : index
      %46 = vector.load %arg4[%c0_28, %c0_29, %c0_30] : memref<4x128x32xf32, #tpu.memory_space<vmem>>, vector<4x128x32xf32>
      "tpu.trace_start"() <{level = 10 : i32, message = "hqk,hkd->hqd"}> : () -> ()
      %cst_31 = arith.constant dense<0.000000e+00> : vector<4x128x32xf32>
      %47 = tpu.matmul %36, %46, %cst_31 {dimension_numbers = #tpu.dot_dimension_numbers<[2], [1], [1], [2], [0, 0, 0, 1, 1, 2], [0], [0]>} : vector<4x128x128xf32>, vector<4x128x32xf32>, vector<4x128x32xf32> -> vector<4x128x32xf32>
      "tpu.trace_stop"() : () -> ()
      %48 = arith.addf %45, %47 : vector<4x128x32xf32>
      %c0_32 = arith.constant 0 : index
      %c0_33 = arith.constant 0 : index
      %c0_34 = arith.constant 0 : index
      %49 = vector.load %arg8[%c0_32, %c0_33, %c0_34] : memref<4x128x32xf32, #tpu.memory_space<vmem>>, vector<4x128x32xf32>
      tpu.vector_store %arg8[%c0_32, %c0_33, %c0_34], %48 {strides = array<i32>} : memref<4x128x32xf32, #tpu.memory_space<vmem>>, vector<4x128x32xf32>,
      %c0_35 = arith.constant 0 : index
      %c0_36 = arith.constant 0 : index
      %c0_37 = arith.constant 0 : index
      %50 = vector.load %arg6[%c0_35, %c0_36, %c0_37] : memref<4x128x1xf32, #tpu.memory_space<vmem>>, vector<4x128x1xf32>
      tpu.vector_store %arg6[%c0_35, %c0_36, %c0_37], %31 {strides = array<i32>} : memref<4x128x1xf32, #tpu.memory_space<vmem>>, vector<4x128x1xf32>,
    } else {
    }
    %c1_i32_3 = arith.constant 1 : i32
    %9 = arith.cmpi eq, %arg1, %c1_i32_3 : i32
    %10 = arith.extui %9 : i1 to i32
    %c0_i32_4 = arith.constant 0 : i32
    %11 = arith.cmpi ne, %10, %c0_i32_4 : i32
    scf.if %11 {
      %c0 = arith.constant 0 : index
      %c0_5 = arith.constant 0 : index
      %c0_6 = arith.constant 0 : index
      %12 = vector.load %arg8[%c0, %c0_5, %c0_6] : memref<4x128x32xf32, #tpu.memory_space<vmem>>, vector<4x128x32xf32>
      %c0_7 = arith.constant 0 : index
      %c0_8 = arith.constant 0 : index
      %c0_9 = arith.constant 0 : index
      %13 = vector.load %arg7[%c0_7, %c0_8, %c0_9] : memref<4x128x1xf32, #tpu.memory_space<vmem>>, vector<4x128x1xf32>
      %14 = vector.broadcast %13 : vector<4x128x1xf32> to vector<4x128x32xf32>
      %15 = arith.divf %12, %14 : vector<4x128x32xf32>
      %c0_10 = arith.constant 0 : index
      %c0_11 = arith.constant 0 : index
      %c0_12 = arith.constant 0 : index
      %16 = vector.load %arg5[%c0_10, %c0_11, %c0_12] : memref<4x128x32xf32, #tpu.memory_space<vmem>>, vector<4x128x32xf32>
      tpu.vector_store %arg5[%c0_10, %c0_11, %c0_12], %15 {strides = array<i32>} : memref<4x128x32xf32, #tpu.memory_space<vmem>>, vector<4x128x32xf32>,
    } else {
    }
    return
  }
  func.func @transform_0(%arg0: i32, %arg1: i32) -> (i32, i32, i32) {
    %c0_i32 = arith.constant 0 : i32
    %c0_i32_0 = arith.constant 0 : i32
    %c0_i32_1 = arith.constant 0 : i32
    return %c0_i32, %arg0, %c0_i32_0 : i32, i32, i32
  }
  func.func @transform_1(%arg0: i32, %arg1: i32) -> (i32, i32, i32) {
    %c0_i32 = arith.constant 0 : i32
    %c0_i32_0 = arith.constant 0 : i32
    %c0_i32_1 = arith.constant 0 : i32
    return %c0_i32, %arg1, %c0_i32_0 : i32, i32, i32
  }
  func.func @transform_2(%arg0: i32, %arg1: i32) -> (i32, i32, i32) {
    %c0_i32 = arith.constant 0 : i32
    %c0_i32_0 = arith.constant 0 : i32
    %c0_i32_1 = arith.constant 0 : i32
    return %c0_i32, %arg1, %c0_i32_0 : i32, i32, i32
  }
  func.func @transform_3(%arg0: i32, %arg1: i32) -> (i32, i32, i32) {
    %c0_i32 = arith.constant 0 : i32
    %c0_i32_0 = arith.constant 0 : i32
    %c0_i32_1 = arith.constant 0 : i32
    return %c0_i32, %arg0, %c0_i32_0 : i32, i32, i32
  }
}

module attributes {stable_mosaic.version = 11 : i64} {
  func.func @_linear_kernel(%arg0: i32, %arg1: i32, %arg2: memref<128x128xf32, #tpu.memory_space<vmem>>, %arg3: memref<128x128xf32, #tpu.memory_space<vmem>>, %arg4: memref<128x128xf32, #tpu.memory_space<vmem>>) attributes {dimension_semantics = [#tpu.dimension_semantics<parallel>, #tpu.dimension_semantics<parallel>], iteration_bounds = array<i64: 2, 1>, scalar_prefetch = 0 : i64, scratch_operands = 0 : i64, tpu.core_type = #tpu.core_type<tc>, window_params = [{transform_indices = @transform_0, window_bounds = array<i64: 128, 128>}, {transform_indices = @transform_1, window_bounds = array<i64: 128, 128>}, {transform_indices = @transform_2, window_bounds = array<i64: 128, 128>}]} {
    %c0 = arith.constant 0 : index
    %c0_0 = arith.constant 0 : index
    %0 = vector.load %arg2[%c0, %c0_0] : memref<128x128xf32, #tpu.memory_space<vmem>>, vector<128x128xf32>
    %c0_1 = arith.constant 0 : index
    %c0_2 = arith.constant 0 : index
    %1 = vector.load %arg3[%c0_1, %c0_2] : memref<128x128xf32, #tpu.memory_space<vmem>>, vector<128x128xf32>
    %cst = arith.constant dense<0.000000e+00> : vector<128x128xf32>
    %2 = tpu.matmul %0, %1, %cst {dimension_numbers = #tpu.dot_dimension_numbers<[1], [0], [0], [1], [0, 0, 1, 1], [], []>} : vector<128x128xf32>, vector<128x128xf32>, vector<128x128xf32> -> vector<128x128xf32>
    %c0_3 = arith.constant 0 : index
    %c0_4 = arith.constant 0 : index
    %3 = vector.load %arg4[%c0_3, %c0_4] : memref<128x128xf32, #tpu.memory_space<vmem>>, vector<128x128xf32>
    tpu.vector_store %arg4[%c0_3, %c0_4], %2 {strides = array<i32>} : memref<128x128xf32, #tpu.memory_space<vmem>>, vector<128x128xf32>,
    return
  }
  func.func @transform_0(%arg0: i32, %arg1: i32) -> (i32, i32) {
    %c0_i32 = arith.constant 0 : i32
    %c0_i32_0 = arith.constant 0 : i32
    return %arg0, %c0_i32 : i32, i32
  }
  func.func @transform_1(%arg0: i32, %arg1: i32) -> (i32, i32) {
    %c0_i32 = arith.constant 0 : i32
    %c0_i32_0 = arith.constant 0 : i32
    return %c0_i32, %arg1 : i32, i32
  }
  func.func @transform_2(%arg0: i32, %arg1: i32) -> (i32, i32) {
    %c0_i32 = arith.constant 0 : i32
    return %arg0, %arg1 : i32, i32
  }
}

module attributes {stable_mosaic.version = 11 : i64} {
  func.func @_mlp_resid_kernel(%arg0: i32, %arg1: i32, %arg2: memref<128x128xf32, #tpu.memory_space<vmem>>, %arg3: memref<128x256xf32, #tpu.memory_space<vmem>>, %arg4: memref<256x128xf32, #tpu.memory_space<vmem>>, %arg5: memref<128x128xf32, #tpu.memory_space<vmem>>, %arg6: memref<128x128xf32, #tpu.memory_space<vmem>>) attributes {dimension_semantics = [#tpu.dimension_semantics<parallel>, #tpu.dimension_semantics<arbitrary>], iteration_bounds = array<i64: 2, 2>, scalar_prefetch = 0 : i64, scratch_operands = 1 : i64, tpu.core_type = #tpu.core_type<tc>, window_params = [{transform_indices = @transform_0, window_bounds = array<i64: 128, 128>}, {transform_indices = @transform_1, window_bounds = array<i64: 128, 256>}, {transform_indices = @transform_2, window_bounds = array<i64: 256, 128>}, {transform_indices = @transform_3, window_bounds = array<i64: 128, 128>}]} {
    %c0_i32 = arith.constant 0 : i32
    %0 = arith.cmpi eq, %arg1, %c0_i32 : i32
    %1 = arith.extui %0 : i1 to i32
    %c0_i32_0 = arith.constant 0 : i32
    %2 = arith.cmpi ne, %1, %c0_i32_0 : i32
    scf.if %2 {
      %cst_16 = arith.constant 0.000000e+00 : f32
      %27 = vector.broadcast %cst_16 : f32 to vector<128x128xf32>
      %c0_17 = arith.constant 0 : index
      %c0_18 = arith.constant 0 : index
      %28 = vector.load %arg6[%c0_17, %c0_18] : memref<128x128xf32, #tpu.memory_space<vmem>>, vector<128x128xf32>
      tpu.vector_store %arg6[%c0_17, %c0_18], %27 {strides = array<i32>} : memref<128x128xf32, #tpu.memory_space<vmem>>, vector<128x128xf32>,
    } else {
    }
    %c0 = arith.constant 0 : index
    %c0_1 = arith.constant 0 : index
    %3 = vector.load %arg2[%c0, %c0_1] : memref<128x128xf32, #tpu.memory_space<vmem>>, vector<128x128xf32>
    %4 = arith.mulf %3, %3 : vector<128x128xf32>
    %cst = arith.constant dense<0.000000e+00> : vector<128xf32>
    %5 = vector.multi_reduction <add>, %4, %cst [1] : vector<128x128xf32> to vector<128xf32>
    %6 = vector.shape_cast %5 : vector<128xf32> to vector<128x1xf32>
    %cst_2 = arith.constant 1.280000e+02 : f32
    %7 = vector.broadcast %cst_2 : f32 to vector<128x1xf32>
    %8 = arith.divf %6, %7 : vector<128x1xf32>
    %cst_3 = arith.constant 1.1920929E-7 : f32
    %9 = vector.broadcast %cst_3 : f32 to vector<128x1xf32>
    %10 = arith.addf %8, %9 : vector<128x1xf32>
    %11 = math.rsqrt %10 : vector<128x1xf32>
    %12 = vector.broadcast %11 : vector<128x1xf32> to vector<128x128xf32>
    %13 = arith.mulf %3, %12 : vector<128x128xf32>
    %c0_4 = arith.constant 0 : index
    %c0_5 = arith.constant 0 : index
    %14 = vector.load %arg3[%c0_4, %c0_5] : memref<128x256xf32, #tpu.memory_space<vmem>>, vector<128x256xf32>
    %cst_6 = arith.constant dense<0.000000e+00> : vector<128x256xf32>
    %15 = tpu.matmul %13, %14, %cst_6 {dimension_numbers = #tpu.dot_dimension_numbers<[1], [0], [0], [1], [0, 0, 1, 1], [], []>} : vector<128x128xf32>, vector<128x256xf32>, vector<128x256xf32> -> vector<128x256xf32>
    %cst_7 = arith.constant 0.000000e+00 : f32
    %16 = vector.broadcast %cst_7 : f32 to vector<128x256xf32>
    %17 = arith.maximumf %15, %16 : vector<128x256xf32>
    %18 = arith.mulf %17, %17 : vector<128x256xf32>
    %c0_8 = arith.constant 0 : index
    %c0_9 = arith.constant 0 : index
    %19 = vector.load %arg6[%c0_8, %c0_9] : memref<128x128xf32, #tpu.memory_space<vmem>>, vector<128x128xf32>
    %c0_10 = arith.constant 0 : index
    %c0_11 = arith.constant 0 : index
    %20 = vector.load %arg4[%c0_10, %c0_11] : memref<256x128xf32, #tpu.memory_space<vmem>>, vector<256x128xf32>
    %cst_12 = arith.constant dense<0.000000e+00> : vector<128x128xf32>
    %21 = tpu.matmul %18, %20, %cst_12 {dimension_numbers = #tpu.dot_dimension_numbers<[1], [0], [0], [1], [0, 0, 1, 1], [], []>} : vector<128x256xf32>, vector<256x128xf32>, vector<128x128xf32> -> vector<128x128xf32>
    %22 = arith.addf %19, %21 : vector<128x128xf32>
    %c0_13 = arith.constant 0 : index
    %c0_14 = arith.constant 0 : index
    %23 = vector.load %arg6[%c0_13, %c0_14] : memref<128x128xf32, #tpu.memory_space<vmem>>, vector<128x128xf32>
    tpu.vector_store %arg6[%c0_13, %c0_14], %22 {strides = array<i32>} : memref<128x128xf32, #tpu.memory_space<vmem>>, vector<128x128xf32>,
    %c1_i32 = arith.constant 1 : i32
    %24 = arith.cmpi eq, %arg1, %c1_i32 : i32
    %25 = arith.extui %24 : i1 to i32
    %c0_i32_15 = arith.constant 0 : i32
    %26 = arith.cmpi ne, %25, %c0_i32_15 : i32
    scf.if %26 {
      %c0_16 = arith.constant 0 : index
      %c0_17 = arith.constant 0 : index
      %27 = vector.load %arg6[%c0_16, %c0_17] : memref<128x128xf32, #tpu.memory_space<vmem>>, vector<128x128xf32>
      %28 = arith.addf %3, %27 : vector<128x128xf32>
      %c0_18 = arith.constant 0 : index
      %c0_19 = arith.constant 0 : index
      %29 = vector.load %arg5[%c0_18, %c0_19] : memref<128x128xf32, #tpu.memory_space<vmem>>, vector<128x128xf32>
      tpu.vector_store %arg5[%c0_18, %c0_19], %28 {strides = array<i32>} : memref<128x128xf32, #tpu.memory_space<vmem>>, vector<128x128xf32>,
    } else {
    }
    return
  }
  func.func @transform_0(%arg0: i32, %arg1: i32) -> (i32, i32) {
    %c0_i32 = arith.constant 0 : i32
    %c0_i32_0 = arith.constant 0 : i32
    return %arg0, %c0_i32 : i32, i32
  }
  func.func @transform_1(%arg0: i32, %arg1: i32) -> (i32, i32) {
    %c0_i32 = arith.constant 0 : i32
    %c0_i32_0 = arith.constant 0 : i32
    return %c0_i32, %arg1 : i32, i32
  }
  func.func @transform_2(%arg0: i32, %arg1: i32) -> (i32, i32) {
    %c0_i32 = arith.constant 0 : i32
    %c0_i32_0 = arith.constant 0 : i32
    return %arg1, %c0_i32 : i32, i32
  }
  func.func @transform_3(%arg0: i32, %arg1: i32) -> (i32, i32) {
    %c0_i32 = arith.constant 0 : i32
    %c0_i32_0 = arith.constant 0 : i32
    return %arg0, %c0_i32 : i32, i32
  }
}

</mosaic_0001>

<llo_original>
// kernel: block_forward_pallas.4
$region0: #{block_forward_pallas.4}
  #allocation0 [shape = 'u32[]', space=smem, size = 0x4, offset = 0x4, fixed_abs, tag = 'smem constant byte address 0x4 - core index']
  #allocation1 [shape = 'u32[144,128]{1,0:T(1,128)}', space=vmem, size = 0x12000, scoped, tag = 'internal scratch']
  %s0 = inlined_call_operand.vmem [shape: f32[256,128], index: 0, kind: input, shape index: {}]
  %s1 = inlined_call_operand.vmem [shape: f32[128,384], index: 1, kind: input, shape index: {}]
  %s2 = inlined_call_operand.vmem [shape: f32[256,384], index: 2, kind: output, shape index: {}]
  %s3 = sld [smem:[#allocation0]]
  $region41: #{block_forward_pallas.4} parent=0
    _
  %s5 = ssub.s32 1, %s3
  %s6 = scalar_select 0, %s5, %s3
  loop: start=0, step=1, limit=4
  $region2: #{block_forward_pallas.4} parent=0 // loop_pre_header
    _
  $region3: #{block_forward_pallas.4} parent=0 // loop_header
    %s8 = sphi 0, %s12
    %p9 = scmp.ge.s32.totalorder %s8, 4
    %s15 = sphi 0, %s27
    %s16 = sphi 0, %s23
    %s17 = sphi 0, %s15
    %s18 = sphi 0, %s16
    %s19 = sphi 0, %s17
    %s20 = sphi 0, %s18
    %s30 = sphi 0, %s32
    %s33 = sphi 0, %s30
    %s34 = sphi 0, %s33
    %s50 = sphi 0, %s34
    %s56 = sphi 0, %s58
    %s59 = sphi 0, %s56
    %s60 = sphi 0, %s59
    %s76 = sphi 0, %s60
    %s84 = sphi 0, %s86
    %s87 = sphi 0, %s84
    %s88 = sphi 0, %s87
    %s104 = sphi 0, %s88
  $region4: #{block_forward_pallas.4} parent=0 // loop_header_branch
    %11 = sbr.rel (%p9) target = $region8
  $region5: #{block_forward_pallas.4} parent=0 // loop_body
    %s13 = ssub.s32 %s8, 1
    %s14 = ssub.s32 %s8, 2
    %s21 = sadd.s32 1, %s16
    %p22 = scmp.ge.s32.totalorder %s21, 1
    %s23 = scalar_select %p22, 0, %s21
    %s24 = sadd.s32 1, %s15
    %s25 = scalar_select %p22, %s24, %s15
    %p26 = scmp.ge.s32.totalorder %s25, 2
    %s27 = scalar_select %p26, 0, %s25
    %s28 = ssub.s32 %s15, %s27
    %p29 = scmp.eq.s32.totalorder %s28, 0
    %s31 = sadd.s32 %s30, 1
    %s32 = scalar_select %p29, %s30, %s31
    %p35 = pneg %p29
    %p36 = scmp.eq.s32.totalorder %s8, 1
    %p37 = por %p35, %p36
    %p38 = scmp.ne.s32.totalorder %s30, %s33
    %p39 = scmp.eq.s32.totalorder %s8, 0
    %p40 = por %p38, %p39
    %p41 = scmp.ne.s32.totalorder %s30, %s33
    %p42 = scmp.eq.s32.totalorder %s13, 1
    %p43 = por %p41, %p42
    %p44 = scmp.ne.s32.totalorder %s33, %s34
    %p45 = scmp.eq.s32.totalorder %s13, 0
    %p46 = por %p44, %p45
    %p47 = scmp.ne.s32.totalorder %s33, %s34
    %p48 = scmp.eq.s32.totalorder %s14, 1
    %p49 = por %p47, %p48
    %p51 = scmp.ne.s32.totalorder %s34, %s50
    %p52 = scmp.eq.s32.totalorder %s14, 0
    %p53 = por %p51, %p52
    %s54 = ssub.s32 %s16, %s23
    %p55 = scmp.eq.s32.totalorder %s54, 0
    %s57 = sadd.s32 %s56, 1
    %s58 = scalar_select %p55, %s56, %s57
    %p61 = pneg %p55
    %p62 = scmp.eq.s32.totalorder %s8, 1
    %p63 = por %p61, %p62
    %p64 = scmp.ne.s32.totalorder %s56, %s59
    %p65 = scmp.eq.s32.totalorder %s8, 0
    %p66 = por %p64, %p65
    %p67 = scmp.ne.s32.totalorder %s56, %s59
    %p68 = scmp.eq.s32.totalorder %s13, 1
    %p69 = por %p67, %p68
    %p70 = scmp.ne.s32.totalorder %s59, %s60
    %p71 = scmp.eq.s32.totalorder %s13, 0
    %p72 = por %p70, %p71
    %p73 = scmp.ne.s32.totalorder %s59, %s60
    %p74 = scmp.eq.s32.totalorder %s14, 1
    %p75 = por %p73, %p74
    %p77 = scmp.ne.s32.totalorder %s60, %s76
    %p78 = scmp.eq.s32.totalorder %s14, 0
    %p79 = por %p77, %p78
    %s80 = ssub.s32 %s15, %s27
    %s81 = ssub.s32 %s16, %s23
    %s82 = sor.u32 %s80, %s81
    %p83 = scmp.eq.s32.totalorder %s82, 0
    %s85 = sadd.s32 %s84, 1
    %s86 = scalar_select %p83, %s84, %s85
    %p89 = pneg %p83
    %p90 = scmp.eq.s32.totalorder %s8, 1
    %p91 = por %p89, %p90
    %p92 = scmp.ne.s32.totalorder %s84, %s87
    %p93 = scmp.eq.s32.totalorder %s8, 0
    %p94 = por %p92, %p93
    %p95 = scmp.ne.s32.totalorder %s84, %s87
    %p96 = scmp.eq.s32.totalorder %s13, 1
    %p97 = por %p95, %p96
    %p98 = scmp.ne.s32.totalorder %s87, %s88
    %p99 = scmp.eq.s32.totalorder %s13, 0
    %p100 = por %p98, %p99
    %p101 = scmp.ne.s32.totalorder %s87, %s88
    %p102 = scmp.eq.s32.totalorder %s14, 1
    %p103 = por %p101, %p102
    %p105 = scmp.ne.s32.totalorder %s88, %s104
    %p106 = scmp.eq.s32.totalorder %s14, 0
    %p107 = por %p105, %p106
    %p108 = scmp.le.s32.totalorder 1, %s8
    %p109 = scmp.lt.s32.totalorder %s8, 3
    %p110 = pnand %p108, %p109
    %p111 = pneg %p110
    // Predicated region
    $region9: #{block_forward_pallas.4} parent=5 // pred_check
      _
    $region10: #{block_forward_pallas.4} parent=5 // pred_check_branch
      %113 = sbr.rel (%p110) target = $region12
    $region11: #{block_forward_pallas.4} parent=5 // pred_region
      %s114 = ssub.s32 %s8, 1
      // Predicated region
      $region13: #{block_forward_pallas.4} parent=11 // pred_check
        %p115 = pneg %p72
      $region14: #{block_forward_pallas.4} parent=11 // pred_check_branch
        %117 = sbr.rel (%p115) target = $region16
      $region15: #{block_forward_pallas.4} parent=11 // pred_region
        %s118 = smul.u32 3, %s18
        %p119 = scmp.lt.s32.totalorder %s118, 2
        %s120 = scalar_select %p119, %s118, 2
        %s121 = smul.addr %s120, 8
        %s122 = scalar_lea.vmem %s1, %s121
        %s123 = smul.u32 3, %s18
      $region16: #{block_forward_pallas.4} parent=11 // pred_fallthru
        _
    $region12: #{block_forward_pallas.4} parent=5 // pred_fallthru
      _
    %p124 = scmp.lt.s32.totalorder %s8, 2
    // Predicated region
    $region17: #{block_forward_pallas.4} parent=5 // pred_check
      %p125 = pneg %p124
    $region18: #{block_forward_pallas.4} parent=5 // pred_check_branch
      %127 = sbr.rel (%p125) target = $region20
    $region19: #{block_forward_pallas.4} parent=5 // pred_region
      // Predicated region
      $region21: #{block_forward_pallas.4} parent=19 // pred_check
        %p128 = pneg %p40
      $region22: #{block_forward_pallas.4} parent=19 // pred_check_branch
        %130 = sbr.rel (%p128) target = $region24
      $region23: #{block_forward_pallas.4} parent=19 // pred_region
        %s131 = smul.u32 16, %s15
        %p132 = scmp.lt.s32.totalorder %s131, 31
        %s133 = scalar_select %p132, %s131, 31
        %s134 = smul.addr %s133, 8
        %s135 = scalar_lea.vmem %s0, %s134
        %s136 = smul.u32 16, %s15
      $region24: #{block_forward_pallas.4} parent=19 // pred_fallthru
        _
    $region20: #{block_forward_pallas.4} parent=5 // pred_fallthru
      _
    %p137 = scmp.le.s32.totalorder 1, %s8
    %p138 = scmp.lt.s32.totalorder %s8, 3
    %p139 = pnand %p137, %p138
    %p140 = pneg %p139
    // Predicated region
    $region25: #{block_forward_pallas.4} parent=5 // pred_check
      _
    $region26: #{block_forward_pallas.4} parent=5 // pred_check_branch
      %142 = sbr.rel (%p139) target = $region28
    $region27: #{block_forward_pallas.4} parent=5 // pred_region
      %s143 = ssub.s32 %s8, 1
      %s144 = smul.u32 16, %s17
      %p145 = scmp.lt.s32.totalorder %s144, 31
      %s146 = scalar_select %p145, %s144, 31
      %s147 = smul.addr %s146, 8
      %s148 = scalar_lea.vmem %s0, %s147
      %p149 = pneg %p46
      %p150 = pneg %p43
      %s151 = smul.u32 3, %s18
      %p152 = scmp.lt.s32.totalorder %s151, 2
      %s153 = scalar_select %p152, %s151, 2
      %s154 = smul.addr %s153, 8
      %s155 = scalar_lea.vmem %s1, %s154
      %p156 = pneg %p72
      %p157 = pneg %p69
      %p158 = pneg %p100
      %p159 = pneg %p97
      %s160 = smul.u32 16, %s17
      %s161 = smul.u32 3, %s18
      %p162 = scmp.lt.s32.totalorder %s160, 31
      %s163 = scalar_select %p162, %s160, 31
      %p164 = scmp.lt.s32.totalorder %s161, 2
      %s165 = scalar_select %p164, %s161, 2
      %s166 = smul.addr %s163, 3
      %s167 = sadd.s32 %s165, %s166
      %s168 = smul.addr %s167, 8
      %s169 = scalar_lea.vmem %s2, %s168
      %s170 = smul.u32 16, %s17
      %p171 = scmp.lt.s32.totalorder %s170, 31
      %s172 = scalar_select %p171, %s170, 31
      %s173 = smul.addr %s172, 8
      %s174 = scalar_lea.vmem %s0, %s173
      %s175 = smul.u32 16, %s17
      %s176 = smul.u32 3, %s18
      %p177 = scmp.lt.s32.totalorder %s176, 2
      %s178 = scalar_select %p177, %s176, 2
      %s179 = smul.addr %s178, 8
      %s180 = scalar_lea.vmem %s1, %s179
      %s181 = smul.u32 3, %s18
      %s182 = smul.u32 16, %s17
      %s183 = smul.u32 3, %s18
      %p184 = scmp.lt.s32.totalorder %s182, 31
      %s185 = scalar_select %p184, %s182, 31
      %p186 = scmp.lt.s32.totalorder %s183, 2
      %s187 = scalar_select %p186, %s183, 2
      %s188 = smul.addr %s185, 3
      %s189 = sadd.s32 %s187, %s188
      %s190 = smul.addr %s189, 8
      %s191 = scalar_lea.vmem %s2, %s190
      %s192 = smul.u32 16, %s17
      %s193 = smul.u32 3, %s18
      %v194 = vld [vmem:[%s174] sm:$0xff]
      %v195 = vld [vmem:[%s174 + $0x8] sm:$0xff]
      %v196 = vld [vmem:[%s174 + $0x10] sm:$0xff]
      %v197 = vld [vmem:[%s174 + $0x18] sm:$0xff]
      %v198 = vld [vmem:[%s174 + $0x20] sm:$0xff]
      %v199 = vld [vmem:[%s174 + $0x28] sm:$0xff]
      %v200 = vld [vmem:[%s174 + $0x30] sm:$0xff]
      %v201 = vld [vmem:[%s174 + $0x38] sm:$0xff]
      %v202 = vld [vmem:[%s174 + $0x40] sm:$0xff]
      %v203 = vld [vmem:[%s174 + $0x48] sm:$0xff]
      %v204 = vld [vmem:[%s174 + $0x50] sm:$0xff]
      %v205 = vld [vmem:[%s174 + $0x58] sm:$0xff]
      %v206 = vld [vmem:[%s174 + $0x60] sm:$0xff]
      %v207 = vld [vmem:[%s174 + $0x68] sm:$0xff]
      %v208 = vld [vmem:[%s174 + $0x70] sm:$0xff]
      %v209 = vld [vmem:[%s174 + $0x78] sm:$0xff]
      %v210 = vmul.f32 %v194, %v194
      %v211 = vmul.f32 %v195, %v195
      %v212 = vmul.f32 %v196, %v196
      %v213 = vmul.f32 %v197, %v197
      %v214 = vmul.f32 %v198, %v198
      %v215 = vmul.f32 %v199, %v199
      %v216 = vmul.f32 %v200, %v200
      %v217 = vmul.f32 %v201, %v201
      %v218 = vmul.f32 %v202, %v202
      %v219 = vmul.f32 %v203, %v203
      %v220 = vmul.f32 %v204, %v204
      %v221 = vmul.f32 %v205, %v205
      %v222 = vmul.f32 %v206, %v206
      %v223 = vmul.f32 %v207, %v207
      %v224 = vmul.f32 %v208, %v208
      %v225 = vmul.f32 %v209, %v209
      %226 = vadd.xlane.f32.xlu0 %v210
      %v227 = vpop.xlane.xlu0 %226
      %228 = vadd.xlane.f32.xlu0 %v211
      %v229 = vpop.xlane.xlu0 %228
      %230 = vadd.xlane.f32.xlu0 %v212
      %v231 = vpop.xlane.xlu0 %230
      %232 = vadd.xlane.f32.xlu0 %v213
      %v233 = vpop.xlane.xlu0 %232
      %234 = vadd.xlane.f32.xlu0 %v214
      %v235 = vpop.xlane.xlu0 %234
      %236 = vadd.xlane.f32.xlu0 %v215
      %v237 = vpop.xlane.xlu0 %236
      %238 = vadd.xlane.f32.xlu0 %v216
      %v239 = vpop.xlane.xlu0 %238
      %240 = vadd.xlane.f32.xlu0 %v217
      %v241 = vpop.xlane.xlu0 %240
      %242 = vadd.xlane.f32.xlu0 %v218
      %v243 = vpop.xlane.xlu0 %242
      %244 = vadd.xlane.f32.xlu0 %v219
      %v245 = vpop.xlane.xlu0 %244
      %246 = vadd.xlane.f32.xlu0 %v220
      %v247 = vpop.xlane.xlu0 %246
      %248 = vadd.xlane.f32.xlu0 %v221
      %v249 = vpop.xlane.xlu0 %248
      %250 = vadd.xlane.f32.xlu0 %v222
      %v251 = vpop.xlane.xlu0 %250
      %252 = vadd.xlane.f32.xlu0 %v223
      %v253 = vpop.xlane.xlu0 %252
      %254 = vadd.xlane.f32.xlu0 %v224
      %v255 = vpop.xlane.xlu0 %254
      %256 = vadd.xlane.f32.xlu0 %v225
      %v257 = vpop.xlane.xlu0 %256
      %v258 = vrcp.pop 128.0
      %v259 = vmul.f32 %v227, %v258
      %v260 = vmul.f32 %v229, %v258
      %v261 = vmul.f32 %v231, %v258
      %v262 = vmul.f32 %v233, %v258
      %v263 = vmul.f32 %v235, %v258
      %v264 = vmul.f32 %v237, %v258
      %v265 = vmul.f32 %v239, %v258
      %v266 = vmul.f32 %v241, %v258
      %v267 = vmul.f32 %v243, %v258
      %v268 = vmul.f32 %v245, %v258
      %v269 = vmul.f32 %v247, %v258
      %v270 = vmul.f32 %v249, %v258
      %v271 = vmul.f32 %v251, %v258
      %v272 = vmul.f32 %v253, %v258
      %v273 = vmul.f32 %v255, %v258
      %v274 = vmul.f32 %v257, %v258
      %v275 = vadd.f32 %v259, 1.1920929e-07
      %v276 = vadd.f32 %v260, 1.1920929e-07
      %v277 = vadd.f32 %v261, 1.1920929e-07
      %v278 = vadd.f32 %v262, 1.1920929e-07
      %v279 = vadd.f32 %v263, 1.1920929e-07
      %v280 = vadd.f32 %v264, 1.1920929e-07
      %v281 = vadd.f32 %v265, 1.1920929e-07
      %v282 = vadd.f32 %v266, 1.1920929e-07
      %v283 = vadd.f32 %v267, 1.1920929e-07
      %v284 = vadd.f32 %v268, 1.1920929e-07
      %v285 = vadd.f32 %v269, 1.1920929e-07
      %v286 = vadd.f32 %v270, 1.1920929e-07
      %v287 = vadd.f32 %v271, 1.1920929e-07
      %v288 = vadd.f32 %v272, 1.1920929e-07
      %v289 = vadd.f32 %v273, 1.1920929e-07
      %v290 = vadd.f32 %v274, 1.1920929e-07
      %v291 = vrsqrt.pop %v275
      %v292 = vrsqrt.pop %v276
      %v293 = vrsqrt.pop %v277
      %v294 = vrsqrt.pop %v278
      %v295 = vrsqrt.pop %v279
      %v296 = vrsqrt.pop %v280
      %v297 = vrsqrt.pop %v281
      %v298 = vrsqrt.pop %v282
      %v299 = vrsqrt.pop %v283
      %v300 = vrsqrt.pop %v284
      %v301 = vrsqrt.pop %v285
      %v302 = vrsqrt.pop %v286
      %v303 = vrsqrt.pop %v287
      %v304 = vrsqrt.pop %v288
      %v305 = vrsqrt.pop %v289
      %v306 = vrsqrt.pop %v290
      %v307 = vmul.f32 %v194, %v291
      %v308 = vmul.f32 %v195, %v292
      %v309 = vmul.f32 %v196, %v293
      %v310 = vmul.f32 %v197, %v294
      %v311 = vmul.f32 %v198, %v295
      %v312 = vmul.f32 %v199, %v296
      %v313 = vmul.f32 %v200, %v297
      %v314 = vmul.f32 %v201, %v298
      %v315 = vmul.f32 %v202, %v299
      %v316 = vmul.f32 %v203, %v300
      %v317 = vmul.f32 %v204, %v301
      %v318 = vmul.f32 %v205, %v302
      %v319 = vmul.f32 %v206, %v303
      %v320 = vmul.f32 %v207, %v304
      %v321 = vmul.f32 %v208, %v305
      %v322 = vmul.f32 %v209, %v306
      %v323 = vld [vmem:[%s180] sm:$0xff]
      %v324 = vld [vmem:[%s180 + $0x8] sm:$0xff]
      %v325 = vld [vmem:[%s180 + $0x10] sm:$0xff]
      %v326 = vld [vmem:[%s180 + $0x18] sm:$0xff]
      %v327 = vld [vmem:[%s180 + $0x20] sm:$0xff]
      %v328 = vld [vmem:[%s180 + $0x28] sm:$0xff]
      %v329 = vld [vmem:[%s180 + $0x30] sm:$0xff]
      %v330 = vld [vmem:[%s180 + $0x38] sm:$0xff]
      %v331 = vld [vmem:[%s180 + $0x40] sm:$0xff]
      %v332 = vld [vmem:[%s180 + $0x48] sm:$0xff]
      %v333 = vld [vmem:[%s180 + $0x50] sm:$0xff]
      %v334 = vld [vmem:[%s180 + $0x58] sm:$0xff]
      %v335 = vld [vmem:[%s180 + $0x60] sm:$0xff]
      %v336 = vld [vmem:[%s180 + $0x68] sm:$0xff]
      %v337 = vld [vmem:[%s180 + $0x70] sm:$0xff]
      %v338 = vld [vmem:[%s180 + $0x78] sm:$0xff]
      %v339 = vld [vmem:[%s180 + $0x80] sm:$0xff]
      %v340 = vld [vmem:[%s180 + $0x88] sm:$0xff]
      %v341 = vld [vmem:[%s180 + $0x90] sm:$0xff]
      %v342 = vld [vmem:[%s180 + $0x98] sm:$0xff]
      %v343 = vld [vmem:[%s180 + $0xa0] sm:$0xff]
      %v344 = vld [vmem:[%s180 + $0xa8] sm:$0xff]
      %v345 = vld [vmem:[%s180 + $0xb0] sm:$0xff]
      %v346 = vld [vmem:[%s180 + $0xb8] sm:$0xff]
      %v347 = vld [vmem:[%s180 + $0xc0] sm:$0xff]
      %v348 = vld [vmem:[%s180 + $0xc8] sm:$0xff]
      %v349 = vld [vmem:[%s180 + $0xd0] sm:$0xff]
      %v350 = vld [vmem:[%s180 + $0xd8] sm:$0xff]
      %v351 = vld [vmem:[%s180 + $0xe0] sm:$0xff]
      %v352 = vld [vmem:[%s180 + $0xe8] sm:$0xff]
      %v353 = vld [vmem:[%s180 + $0xf0] sm:$0xff]
      %v354 = vld [vmem:[%s180 + $0xf8] sm:$0xff]
      %v355 = vld [vmem:[%s180 + $0x100] sm:$0xff]
      %v356 = vld [vmem:[%s180 + $0x108] sm:$0xff]
      %v357 = vld [vmem:[%s180 + $0x110] sm:$0xff]
      %v358 = vld [vmem:[%s180 + $0x118] sm:$0xff]
      %v359 = vld [vmem:[%s180 + $0x120] sm:$0xff]
      %v360 = vld [vmem:[%s180 + $0x128] sm:$0xff]
      %v361 = vld [vmem:[%s180 + $0x130] sm:$0xff]
      %v362 = vld [vmem:[%s180 + $0x138] sm:$0xff]
      %v363 = vld [vmem:[%s180 + $0x140] sm:$0xff]
      %v364 = vld [vmem:[%s180 + $0x148] sm:$0xff]
      %v365 = vld [vmem:[%s180 + $0x150] sm:$0xff]
      %v366 = vld [vmem:[%s180 + $0x158] sm:$0xff]
      %v367 = vld [vmem:[%s180 + $0x160] sm:$0xff]
      %v368 = vld [vmem:[%s180 + $0x168] sm:$0xff]
      %v369 = vld [vmem:[%s180 + $0x170] sm:$0xff]
      %v370 = vld [vmem:[%s180 + $0x178] sm:$0xff]
      %371 = vmatprep.subr.mxu0 %v324
      %372 = vmatpush1.msra.mxu0 %v323
      %373 = vmatprep.subr.mxu0 %v327
      %374 = vmatpush1.msra.mxu0 %v326
      %375 = vmatprep.subr.mxu0 %v330
      %376 = vmatpush1.msra.mxu0 %v329
      %377 = vmatprep.subr.mxu0 %v333
      %378 = vmatpush1.msra.mxu0 %v332
      %379 = vmatprep.subr.mxu0 %v336
      %380 = vmatpush1.msra.mxu0 %v335
      %381 = vmatprep.subr.mxu0 %v339
      %382 = vmatpush1.msra.mxu0 %v338
      %383 = vmatprep.subr.mxu0 %v342
      %384 = vmatpush1.msra.mxu0 %v341
      %385 = vmatprep.subr.mxu0 %v345
      %386 = vmatpush1.msra.mxu0 %v344
      %387 = vmatprep.subr.mxu0 %v348
      %388 = vmatpush1.msra.mxu0 %v347
      %389 = vmatprep.subr.mxu0 %v351
      %390 = vmatpush1.msra.mxu0 %v350
      %391 = vmatprep.subr.mxu0 %v354
      %392 = vmatpush1.msra.mxu0 %v353
      %393 = vmatprep.subr.mxu0 %v357
      %394 = vmatpush1.msra.mxu0 %v356
      %395 = vmatprep.subr.mxu0 %v360
      %396 = vmatpush1.msra.mxu0 %v359
      %397 = vmatprep.subr.mxu0 %v363
      %398 = vmatpush1.msra.mxu0 %v362
      %399 = vmatprep.subr.mxu0 %v366
      %400 = vmatpush1.msra.mxu0 %v365
      %401 = vmatprep.subr.mxu0 %v369
      %402 = vmatpush1.msra.mxu0 %v368
      %403 = vmatprep.subr.mxu0 0.0
      %404 = vmatpush1.msra.mxu0 0.0
      %405 = vmatprep.subr.mxu0 0.0
      %406 = vmatpush1.msra.mxu0 0.0
      %407 = vmatprep.subr.mxu0 0.0
      %408 = vmatpush1.msra.mxu0 0.0
      %409 = vmatprep.subr.mxu0 0.0
      %410 = vmatpush1.msra.mxu0 0.0
      %411 = vmatprep.subr.mxu0 0.0
      %412 = vmatpush1.msra.mxu0 0.0
      %413 = vmatprep.subr.mxu0 0.0
      %414 = vmatpush1.msra.mxu0 0.0
      %415 = vmatprep.subr.mxu0 0.0
      %416 = vmatpush1.msra.mxu0 0.0
      %417 = vmatprep.subr.mxu0 0.0
      %418 = vmatpush1.msra.mxu0 0.0
      %419 = vmatprep.subr.mxu0 0.0
      %420 = vmatpush1.msra.mxu0 0.0
      %421 = vmatprep.subr.mxu0 0.0
      %422 = vmatpush1.msra.mxu0 0.0
      %423 = vmatprep.subr.mxu0 0.0
      %424 = vmatpush1.msra.mxu0 0.0
      %425 = vmatprep.subr.mxu0 0.0
      %426 = vmatpush1.msra.mxu0 0.0
      %427 = vmatprep.subr.mxu0 0.0
      %428 = vmatpush1.msra.mxu0 0.0
      %429 = vmatprep.subr.mxu0 0.0
      %430 = vmatpush1.msra.mxu0 0.0
      %431 = vmatprep.subr.mxu0 0.0
      %432 = vmatpush1.msra.mxu0 0.0
      %433 = vmatprep.subr.mxu0 0.0
      %434 = vmatpush1.msra.mxu0 0.0
      %435 = vmatprep.mubr.f32.mxu0 0.0
      %436 = vmatmul.mubr.f32.gmra.mrb[0].mxu0 %v307
      %v437 = vpop.f32.mrb[0].mxu0
      %v438 = vadd.f32 0.0, %v437
      %v439 = vpop.f32.mrb[0].mxu0
      %v440 = vadd.f32 0.0, %v439
      %441 = vmatprep.mubr.f32.mxu0 0.0
      %442 = vmatmul.mubr.f32.gmra.mrb[0].mxu0 %v308
      %v443 = vpop.f32.mrb[0].mxu0
      %v444 = vadd.f32 0.0, %v443
      %v445 = vpop.f32.mrb[0].mxu0
      %v446 = vadd.f32 0.0, %v445
      %447 = vmatprep.mubr.f32.mxu0 0.0
      %448 = vmatmul.mubr.f32.gmra.mrb[0].mxu0 %v309
      %v449 = vpop.f32.mrb[0].mxu0
      %v450 = vadd.f32 0.0, %v449
      %v451 = vpop.f32.mrb[0].mxu0
      %v452 = vadd.f32 0.0, %v451
      %453 = vmatprep.mubr.f32.mxu0 0.0
      %454 = vmatmul.mubr.f32.gmra.mrb[0].mxu0 %v310
      %v455 = vpop.f32.mrb[0].mxu0
      %v456 = vadd.f32 0.0, %v455
      %v457 = vpop.f32.mrb[0].mxu0
      %v458 = vadd.f32 0.0, %v457
      %459 = vmatprep.mubr.f32.mxu0 0.0
      %460 = vmatmul.mubr.f32.gmra.mrb[0].mxu0 %v311
      %v461 = vpop.f32.mrb[0].mxu0
      %v462 = vadd.f32 0.0, %v461
      %v463 = vpop.f32.mrb[0].mxu0
      %v464 = vadd.f32 0.0, %v463
      %465 = vmatprep.mubr.f32.mxu0 0.0
      %466 = vmatmul.mubr.f32.gmra.mrb[0].mxu0 %v312
      %v467 = vpop.f32.mrb[0].mxu0
      %v468 = vadd.f32 0.0, %v467
      %v469 = vpop.f32.mrb[0].mxu0
      %v470 = vadd.f32 0.0, %v469
      %471 = vmatprep.mubr.f32.mxu0 0.0
      %472 = vmatmul.mubr.f32.gmra.mrb[0].mxu0 %v313
      %v473 = vpop.f32.mrb[0].mxu0
      %v474 = vadd.f32 0.0, %v473
      %v475 = vpop.f32.mrb[0].mxu0
      %v476 = vadd.f32 0.0, %v475
      %477 = vmatprep.mubr.f32.mxu0 0.0
      %478 = vmatmul.mubr.f32.gmra.mrb[0].mxu0 %v314
      %v479 = vpop.f32.mrb[0].mxu0
      %v480 = vadd.f32 0.0, %v479
      %v481 = vpop.f32.mrb[0].mxu0
      %v482 = vadd.f32 0.0, %v481
      %483 = vmatprep.mubr.f32.mxu0 0.0
      %484 = vmatmul.mubr.f32.gmra.mrb[0].mxu0 %v315
      %v485 = vpop.f32.mrb[0].mxu0
      %v486 = vadd.f32 0.0, %v485
      %v487 = vpop.f32.mrb[0].mxu0
      %v488 = vadd.f32 0.0, %v487
      %489 = vmatprep.mubr.f32.mxu0 0.0
      %490 = vmatmul.mubr.f32.gmra.mrb[0].mxu0 %v316
      %v491 = vpop.f32.mrb[0].mxu0
      %v492 = vadd.f32 0.0, %v491
      %v493 = vpop.f32.mrb[0].mxu0
      %v494 = vadd.f32 0.0, %v493
      %495 = vmatprep.mubr.f32.mxu0 0.0
      %496 = vmatmul.mubr.f32.gmra.mrb[0].mxu0 %v317
      %v497 = vpop.f32.mrb[0].mxu0
      %v498 = vadd.f32 0.0, %v497
      %v499 = vpop.f32.mrb[0].mxu0
      %v500 = vadd.f32 0.0, %v499
      %501 = vmatprep.mubr.f32.mxu0 0.0
      %502 = vmatmul.mubr.f32.gmra.mrb[0].mxu0 %v318
      %v503 = vpop.f32.mrb[0].mxu0
      %v504 = vadd.f32 0.0, %v503
      %v505 = vpop.f32.mrb[0].mxu0
      %v506 = vadd.f32 0.0, %v505
      %507 = vmatprep.mubr.f32.mxu0 0.0
      %508 = vmatmul.mubr.f32.gmra.mrb[0].mxu0 %v319
      %v509 = vpop.f32.mrb[0].mxu0
      %v510 = vadd.f32 0.0, %v509
      %v511 = vpop.f32.mrb[0].mxu0
      %v512 = vadd.f32 0.0, %v511
      %513 = vmatprep.mubr.f32.mxu0 0.0
      %514 = vmatmul.mubr.f32.gmra.mrb[0].mxu0 %v320
      %v515 = vpop.f32.mrb[0].mxu0
      %v516 = vadd.f32 0.0, %v515
      %v517 = vpop.f32.mrb[0].mxu0
      %v518 = vadd.f32 0.0, %v517
      %519 = vmatprep.mubr.f32.mxu0 0.0
      %520 = vmatmul.mubr.f32.gmra.mrb[0].mxu0 %v321
      %v521 = vpop.f32.mrb[0].mxu0
      %v522 = vadd.f32 0.0, %v521
      %v523 = vpop.f32.mrb[0].mxu0
      %v524 = vadd.f32 0.0, %v523
      %525 = vmatprep.mubr.f32.mxu0 0.0
      %526 = vmatmul.mubr.f32.gmra.mrb[0].mxu0 %v322
      %v527 = vpop.f32.mrb[0].mxu0
      %v528 = vadd.f32 0.0, %v527
      %v529 = vpop.f32.mrb[0].mxu0
      %v530 = vadd.f32 0.0, %v529
      %531 = vdwg.mxu0
      %532 = vmatprep.subr.mxu0 0.0
      %533 = vmatpush1.msra.mxu0 %v325
      %534 = vmatprep.subr.mxu0 0.0
      %535 = vmatpush1.msra.mxu0 %v328
      %536 = vmatprep.subr.mxu0 0.0
      %537 = vmatpush1.msra.mxu0 %v331
      %538 = vmatprep.subr.mxu0 0.0
      %539 = vmatpush1.msra.mxu0 %v334
      %540 = vmatprep.subr.mxu0 0.0
      %541 = vmatpush1.msra.mxu0 %v337
      %542 = vmatprep.subr.mxu0 0.0
      %543 = vmatpush1.msra.mxu0 %v340
      %544 = vmatprep.subr.mxu0 0.0
      %545 = vmatpush1.msra.mxu0 %v343
      %546 = vmatprep.subr.mxu0 0.0
      %547 = vmatpush1.msra.mxu0 %v346
      %548 = vmatprep.subr.mxu0 0.0
      %549 = vmatpush1.msra.mxu0 %v349
      %550 = vmatprep.subr.mxu0 0.0
      %551 = vmatpush1.msra.mxu0 %v352
      %552 = vmatprep.subr.mxu0 0.0
      %553 = vmatpush1.msra.mxu0 %v355
      %554 = vmatprep.subr.mxu0 0.0
      %555 = vmatpush1.msra.mxu0 %v358
      %556 = vmatprep.subr.mxu0 0.0
      %557 = vmatpush1.msra.mxu0 %v361
      %558 = vmatprep.subr.mxu0 0.0
      %559 = vmatpush1.msra.mxu0 %v364
      %560 = vmatprep.subr.mxu0 0.0
      %561 = vmatpush1.msra.mxu0 %v367
      %562 = vmatprep.subr.mxu0 0.0
      %563 = vmatpush1.msra.mxu0 %v370
      %564 = vmatprep.subr.mxu0 0.0
      %565 = vmatpush1.msra.mxu0 0.0
      %566 = vmatprep.subr.mxu0 0.0
      %567 = vmatpush1.msra.mxu0 0.0
      %568 = vmatprep.subr.mxu0 0.0
      %569 = vmatpush1.msra.mxu0 0.0
      %570 = vmatprep.subr.mxu0 0.0
      %571 = vmatpush1.msra.mxu0 0.0
      %572 = vmatprep.subr.mxu0 0.0
      %573 = vmatpush1.msra.mxu0 0.0
      %574 = vmatprep.subr.mxu0 0.0
      %575 = vmatpush1.msra.mxu0 0.0
      %576 = vmatprep.subr.mxu0 0.0
      %577 = vmatpush1.msra.mxu0 0.0
      %578 = vmatprep.subr.mxu0 0.0
      %579 = vmatpush1.msra.mxu0 0.0
      %580 = vmatprep.subr.mxu0 0.0
      %581 = vmatpush1.msra.mxu0 0.0
      %582 = vmatprep.subr.mxu0 0.0
      %583 = vmatpush1.msra.mxu0 0.0
      %584 = vmatprep.subr.mxu0 0.0
      %585 = vmatpush1.msra.mxu0 0.0
      %586 = vmatprep.subr.mxu0 0.0
      %587 = vmatpush1.msra.mxu0 0.0
      %588 = vmatprep.subr.mxu0 0.0
      %589 = vmatpush1.msra.mxu0 0.0
      %590 = vmatprep.subr.mxu0 0.0
      %591 = vmatpush1.msra.mxu0 0.0
      %592 = vmatprep.subr.mxu0 0.0
      %593 = vmatpush1.msra.mxu0 0.0
      %594 = vmatprep.subr.mxu0 0.0
      %595 = vmatpush1.msra.mxu0 0.0
      %596 = vmatprep.mubr.f32.mxu0 0.0
      %597 = vmatmul.mubr.f32.gmra.mrb[0].mxu0 %v307
      %v598 = vpop.f32.mrb[0].mxu0
      %v599 = vadd.f32 0.0, %v598
      %v600 = vpop.f32.mrb[0].mxu0
      %601 = vmatprep.mubr.f32.mxu0 0.0
      %602 = vmatmul.mubr.f32.gmra.mrb[0].mxu0 %v308
      %v603 = vpop.f32.mrb[0].mxu0
      %v604 = vadd.f32 0.0, %v603
      %v605 = vpop.f32.mrb[0].mxu0
      %606 = vmatprep.mubr.f32.mxu0 0.0
      %607 = vmatmul.mubr.f32.gmra.mrb[0].mxu0 %v309
      %v608 = vpop.f32.mrb[0].mxu0
      %v609 = vadd.f32 0.0, %v608
      %v610 = vpop.f32.mrb[0].mxu0
      %611 = vmatprep.mubr.f32.mxu0 0.0
      %612 = vmatmul.mubr.f32.gmra.mrb[0].mxu0 %v310
      %v613 = vpop.f32.mrb[0].mxu0
      %v614 = vadd.f32 0.0, %v613
      %v615 = vpop.f32.mrb[0].mxu0
      %616 = vmatprep.mubr.f32.mxu0 0.0
      %617 = vmatmul.mubr.f32.gmra.mrb[0].mxu0 %v311
      %v618 = vpop.f32.mrb[0].mxu0
      %v619 = vadd.f32 0.0, %v618
      %v620 = vpop.f32.mrb[0].mxu0
      %621 = vmatprep.mubr.f32.mxu0 0.0
      %622 = vmatmul.mubr.f32.gmra.mrb[0].mxu0 %v312
      %v623 = vpop.f32.mrb[0].mxu0
      %v624 = vadd.f32 0.0, %v623
      %v625 = vpop.f32.mrb[0].mxu0
      %626 = vmatprep.mubr.f32.mxu0 0.0
      %627 = vmatmul.mubr.f32.gmra.mrb[0].mxu0 %v313
      %v628 = vpop.f32.mrb[0].mxu0
      %v629 = vadd.f32 0.0, %v628
      %v630 = vpop.f32.mrb[0].mxu0
      %631 = vmatprep.mubr.f32.mxu0 0.0
      %632 = vmatmul.mubr.f32.gmra.mrb[0].mxu0 %v314
      %v633 = vpop.f32.mrb[0].mxu0
      %v634 = vadd.f32 0.0, %v633
      %v635 = vpop.f32.mrb[0].mxu0
      %636 = vmatprep.mubr.f32.mxu0 0.0
      %637 = vmatmul.mubr.f32.gmra.mrb[0].mxu0 %v315
      %v638 = vpop.f32.mrb[0].mxu0
      %v639 = vadd.f32 0.0, %v638
      %v640 = vpop.f32.mrb[0].mxu0
      %641 = vmatprep.mubr.f32.mxu0 0.0
      %642 = vmatmul.mubr.f32.gmra.mrb[0].mxu0 %v316
      %v643 = vpop.f32.mrb[0].mxu0
      %v644 = vadd.f32 0.0, %v643
      %v645 = vpop.f32.mrb[0].mxu0
      %646 = vmatprep.mubr.f32.mxu0 0.0
      %647 = vmatmul.mubr.f32.gmra.mrb[0].mxu0 %v317
      %v648 = vpop.f32.mrb[0].mxu0
      %v649 = vadd.f32 0.0, %v648
      %v650 = vpop.f32.mrb[0].mxu0
      %651 = vmatprep.mubr.f32.mxu0 0.0
      %652 = vmatmul.mubr.f32.gmra.mrb[0].mxu0 %v318
      %v653 = vpop.f32.mrb[0].mxu0
      %v654 = vadd.f32 0.0, %v653
      %v655 = vpop.f32.mrb[0].mxu0
      %656 = vmatprep.mubr.f32.mxu0 0.0
      %657 = vmatmul.mubr.f32.gmra.mrb[0].mxu0 %v319
      %v658 = vpop.f32.mrb[0].mxu0
      %v659 = vadd.f32 0.0, %v658
      %v660 = vpop.f32.mrb[0].mxu0
      %661 = vmatprep.mubr.f32.mxu0 0.0
      %662 = vmatmul.mubr.f32.gmra.mrb[0].mxu0 %v320
      %v663 = vpop.f32.mrb[0].mxu0
      %v664 = vadd.f32 0.0, %v663
      %v665 = vpop.f32.mrb[0].mxu0
      %666 = vmatprep.mubr.f32.mxu0 0.0
      %667 = vmatmul.mubr.f32.gmra.mrb[0].mxu0 %v321
      %v668 = vpop.f32.mrb[0].mxu0
      %v669 = vadd.f32 0.0, %v668
      %v670 = vpop.f32.mrb[0].mxu0
      %671 = vmatprep.mubr.f32.mxu0 0.0
      %672 = vmatmul.mubr.f32.gmra.mrb[0].mxu0 %v322
      %v673 = vpop.f32.mrb[0].mxu0
      %v674 = vadd.f32 0.0, %v673
      %v675 = vpop.f32.mrb[0].mxu0
      %676 = vdwg.mxu0
      %677 = vst [vmem:[%s191] sm:$0xff] %v438
      %678 = vst [vmem:[%s191 + $0x8] sm:$0xff] %v440
      %679 = vst [vmem:[%s191 + $0x10] sm:$0xff] %v599
      %680 = vst [vmem:[%s191 + $0x18] sm:$0xff] %v444
      %681 = vst [vmem:[%s191 + $0x20] sm:$0xff] %v446
      %682 = vst [vmem:[%s191 + $0x28] sm:$0xff] %v604
      %683 = vst [vmem:[%s191 + $0x30] sm:$0xff] %v450
      %684 = vst [vmem:[%s191 + $0x38] sm:$0xff] %v452
      %685 = vst [vmem:[%s191 + $0x40] sm:$0xff] %v609
      %686 = vst [vmem:[%s191 + $0x48] sm:$0xff] %v456
      %687 = vst [vmem:[%s191 + $0x50] sm:$0xff] %v458
      %688 = vst [vmem:[%s191 + $0x58] sm:$0xff] %v614
      %689 = vst [vmem:[%s191 + $0x60] sm:$0xff] %v462
      %690 = vst [vmem:[%s191 + $0x68] sm:$0xff] %v464
      %691 = vst [vmem:[%s191 + $0x70] sm:$0xff] %v619
      %692 = vst [vmem:[%s191 + $0x78] sm:$0xff] %v468
      %693 = vst [vmem:[%s191 + $0x80] sm:$0xff] %v470
      %694 = vst [vmem:[%s191 + $0x88] sm:$0xff] %v624
      %695 = vst [vmem:[%s191 + $0x90] sm:$0xff] %v474
      %696 = vst [vmem:[%s191 + $0x98] sm:$0xff] %v476
      %697 = vst [vmem:[%s191 + $0xa0] sm:$0xff] %v629
      %698 = vst [vmem:[%s191 + $0xa8] sm:$0xff] %v480
      %699 = vst [vmem:[%s191 + $0xb0] sm:$0xff] %v482
      %700 = vst [vmem:[%s191 + $0xb8] sm:$0xff] %v634
      %701 = vst [vmem:[%s191 + $0xc0] sm:$0xff] %v486
      %702 = vst [vmem:[%s191 + $0xc8] sm:$0xff] %v488
      %703 = vst [vmem:[%s191 + $0xd0] sm:$0xff] %v639
      %704 = vst [vmem:[%s191 + $0xd8] sm:$0xff] %v492
      %705 = vst [vmem:[%s191 + $0xe0] sm:$0xff] %v494
      %706 = vst [vmem:[%s191 + $0xe8] sm:$0xff] %v644
      %707 = vst [vmem:[%s191 + $0xf0] sm:$0xff] %v498
      %708 = vst [vmem:[%s191 + $0xf8] sm:$0xff] %v500
      %709 = vst [vmem:[%s191 + $0x100] sm:$0xff] %v649
      %710 = vst [vmem:[%s191 + $0x108] sm:$0xff] %v504
      %711 = vst [vmem:[%s191 + $0x110] sm:$0xff] %v506
      %712 = vst [vmem:[%s191 + $0x118] sm:$0xff] %v654
      %713 = vst [vmem:[%s191 + $0x120] sm:$0xff] %v510
      %714 = vst [vmem:[%s191 + $0x128] sm:$0xff] %v512
      %715 = vst [vmem:[%s191 + $0x130] sm:$0xff] %v659
      %716 = vst [vmem:[%s191 + $0x138] sm:$0xff] %v516
      %717 = vst [vmem:[%s191 + $0x140] sm:$0xff] %v518
      %718 = vst [vmem:[%s191 + $0x148] sm:$0xff] %v664
      %719 = vst [vmem:[%s191 + $0x150] sm:$0xff] %v522
      %720 = vst [vmem:[%s191 + $0x158] sm:$0xff] %v524
      %721 = vst [vmem:[%s191 + $0x160] sm:$0xff] %v669
      %722 = vst [vmem:[%s191 + $0x168] sm:$0xff] %v528
      %723 = vst [vmem:[%s191 + $0x170] sm:$0xff] %v530
      %724 = vst [vmem:[%s191 + $0x178] sm:$0xff] %v674
      %s725 = smul.u32 16, %s17
      %s726 = smul.u32 3, %s18
      %p727 = scmp.lt.s32.totalorder %s725, 31
      %s728 = scalar_select %p727, %s725, 31
      %p729 = scmp.lt.s32.totalorder %s726, 2
      %s730 = scalar_select %p729, %s726, 2
      %s731 = smul.addr %s728, 3
      %s732 = sadd.s32 %s730, %s731
      %s733 = smul.addr %s732, 8
      %s734 = scalar_lea.vmem %s2, %s733
      // Predicated region
      $region29: #{block_forward_pallas.4} parent=27 // pred_check
        %p735 = pneg %p97
      $region30: #{block_forward_pallas.4} parent=27 // pred_check_branch
        %737 = sbr.rel (%p735) target = $region32
      $region31: #{block_forward_pallas.4} parent=27 // pred_region
        %s738 = smul.u32 16, %s17
        %s739 = smul.u32 3, %s18
      $region32: #{block_forward_pallas.4} parent=27 // pred_fallthru
        _
    $region28: #{block_forward_pallas.4} parent=5 // pred_fallthru
      _
    %p740 = scmp.le.s32.totalorder 2, %s8
    // Predicated region
    $region33: #{block_forward_pallas.4} parent=5 // pred_check
      %p741 = pneg %p740
    $region34: #{block_forward_pallas.4} parent=5 // pred_check_branch
      %743 = sbr.rel (%p741) target = $region36
    $region35: #{block_forward_pallas.4} parent=5 // pred_region
      %s744 = ssub.s32 %s8, 2
      // Predicated region
      $region37: #{block_forward_pallas.4} parent=35 // pred_check
        %p745 = pneg %p103
      $region38: #{block_forward_pallas.4} parent=35 // pred_check_branch
        %747 = sbr.rel (%p745) target = $region40
      $region39: #{block_forward_pallas.4} parent=35 // pred_region
        %s748 = smul.u32 16, %s19
        %s749 = smul.u32 3, %s20
        %p750 = scmp.lt.s32.totalorder %s748, 31
        %s751 = scalar_select %p750, %s748, 31
        %p752 = scmp.lt.s32.totalorder %s749, 2
        %s753 = scalar_select %p752, %s749, 2
        %s754 = smul.addr %s751, 3
        %s755 = sadd.s32 %s753, %s754
        %s756 = smul.addr %s755, 8
        %s757 = scalar_lea.vmem %s2, %s756
      $region40: #{block_forward_pallas.4} parent=35 // pred_fallthru
        _
    $region36: #{block_forward_pallas.4} parent=5 // pred_fallthru
      _
  $region6: #{block_forward_pallas.4} parent=0 // loop_footer
    %s12 = sadd.s32 1, %s8
  $region7: #{block_forward_pallas.4} parent=0 // loop_footer_branch
    %7 = sbr.rel target = $region3
  $region8: #{block_forward_pallas.4} parent=0 // loop_exit
    _

// kernel: block_forward_pallas.6
$region0: #{block_forward_pallas.6}
  #allocation0 [shape = 'u32[]', space=smem, size = 0x4, offset = 0x4, fixed_abs, tag = 'smem constant byte address 0x4 - core index']
  #allocation1 [shape = 'u32[144,128]{1,0:T(1,128)}', space=vmem, size = 0x12000, scoped, tag = 'internal scratch']
  %s0 = inlined_call_operand.vmem [shape: f32[256,128], index: 0, kind: input, shape index: {}]
  %s1 = inlined_call_operand.vmem [shape: f32[128,128], index: 1, kind: input, shape index: {}]
  %s2 = inlined_call_operand.vmem [shape: f32[256,128], index: 2, kind: output, shape index: {}]
  %s3 = sld [smem:[#allocation0]]
  $region41: #{block_forward_pallas.6} parent=0
    _
  %s5 = ssub.s32 1, %s3
  %s6 = scalar_select 0, %s5, %s3
  loop: start=0, step=1, limit=4
  $region2: #{block_forward_pallas.6} parent=0 // loop_pre_header
    _
  $region3: #{block_forward_pallas.6} parent=0 // loop_header
    %s8 = sphi 0, %s12
    %p9 = scmp.ge.s32.totalorder %s8, 4
    %s15 = sphi 0, %s27
    %s16 = sphi 0, %s23
    %s17 = sphi 0, %s15
    %s18 = sphi 0, %s16
    %s19 = sphi 0, %s17
    %s20 = sphi 0, %s18
    %s30 = sphi 0, %s32
    %s33 = sphi 0, %s30
    %s34 = sphi 0, %s33
    %s50 = sphi 0, %s34
    %s56 = sphi 0, %s58
    %s59 = sphi 0, %s56
    %s60 = sphi 0, %s59
    %s76 = sphi 0, %s60
    %s84 = sphi 0, %s86
    %s87 = sphi 0, %s84
    %s88 = sphi 0, %s87
    %s104 = sphi 0, %s88
  $region4: #{block_forward_pallas.6} parent=0 // loop_header_branch
    %11 = sbr.rel (%p9) target = $region8
  $region5: #{block_forward_pallas.6} parent=0 // loop_body
    %s13 = ssub.s32 %s8, 1
    %s14 = ssub.s32 %s8, 2
    %s21 = sadd.s32 1, %s16
    %p22 = scmp.ge.s32.totalorder %s21, 1
    %s23 = scalar_select %p22, 0, %s21
    %s24 = sadd.s32 1, %s15
    %s25 = scalar_select %p22, %s24, %s15
    %p26 = scmp.ge.s32.totalorder %s25, 2
    %s27 = scalar_select %p26, 0, %s25
    %s28 = ssub.s32 %s15, %s27
    %p29 = scmp.eq.s32.totalorder %s28, 0
    %s31 = sadd.s32 %s30, 1
    %s32 = scalar_select %p29, %s30, %s31
    %p35 = pneg %p29
    %p36 = scmp.eq.s32.totalorder %s8, 1
    %p37 = por %p35, %p36
    %p38 = scmp.ne.s32.totalorder %s30, %s33
    %p39 = scmp.eq.s32.totalorder %s8, 0
    %p40 = por %p38, %p39
    %p41 = scmp.ne.s32.totalorder %s30, %s33
    %p42 = scmp.eq.s32.totalorder %s13, 1
    %p43 = por %p41, %p42
    %p44 = scmp.ne.s32.totalorder %s33, %s34
    %p45 = scmp.eq.s32.totalorder %s13, 0
    %p46 = por %p44, %p45
    %p47 = scmp.ne.s32.totalorder %s33, %s34
    %p48 = scmp.eq.s32.totalorder %s14, 1
    %p49 = por %p47, %p48
    %p51 = scmp.ne.s32.totalorder %s34, %s50
    %p52 = scmp.eq.s32.totalorder %s14, 0
    %p53 = por %p51, %p52
    %s54 = ssub.s32 %s16, %s23
    %p55 = scmp.eq.s32.totalorder %s54, 0
    %s57 = sadd.s32 %s56, 1
    %s58 = scalar_select %p55, %s56, %s57
    %p61 = pneg %p55
    %p62 = scmp.eq.s32.totalorder %s8, 1
    %p63 = por %p61, %p62
    %p64 = scmp.ne.s32.totalorder %s56, %s59
    %p65 = scmp.eq.s32.totalorder %s8, 0
    %p66 = por %p64, %p65
    %p67 = scmp.ne.s32.totalorder %s56, %s59
    %p68 = scmp.eq.s32.totalorder %s13, 1
    %p69 = por %p67, %p68
    %p70 = scmp.ne.s32.totalorder %s59, %s60
    %p71 = scmp.eq.s32.totalorder %s13, 0
    %p72 = por %p70, %p71
    %p73 = scmp.ne.s32.totalorder %s59, %s60
    %p74 = scmp.eq.s32.totalorder %s14, 1
    %p75 = por %p73, %p74
    %p77 = scmp.ne.s32.totalorder %s60, %s76
    %p78 = scmp.eq.s32.totalorder %s14, 0
    %p79 = por %p77, %p78
    %s80 = ssub.s32 %s15, %s27
    %s81 = ssub.s32 %s16, %s23
    %s82 = sor.u32 %s80, %s81
    %p83 = scmp.eq.s32.totalorder %s82, 0
    %s85 = sadd.s32 %s84, 1
    %s86 = scalar_select %p83, %s84, %s85
    %p89 = pneg %p83
    %p90 = scmp.eq.s32.totalorder %s8, 1
    %p91 = por %p89, %p90
    %p92 = scmp.ne.s32.totalorder %s84, %s87
    %p93 = scmp.eq.s32.totalorder %s8, 0
    %p94 = por %p92, %p93
    %p95 = scmp.ne.s32.totalorder %s84, %s87
    %p96 = scmp.eq.s32.totalorder %s13, 1
    %p97 = por %p95, %p96
    %p98 = scmp.ne.s32.totalorder %s87, %s88
    %p99 = scmp.eq.s32.totalorder %s13, 0
    %p100 = por %p98, %p99
    %p101 = scmp.ne.s32.totalorder %s87, %s88
    %p102 = scmp.eq.s32.totalorder %s14, 1
    %p103 = por %p101, %p102
    %p105 = scmp.ne.s32.totalorder %s88, %s104
    %p106 = scmp.eq.s32.totalorder %s14, 0
    %p107 = por %p105, %p106
    %p108 = scmp.le.s32.totalorder 1, %s8
    %p109 = scmp.lt.s32.totalorder %s8, 3
    %p110 = pnand %p108, %p109
    %p111 = pneg %p110
    // Predicated region
    $region9: #{block_forward_pallas.6} parent=5 // pred_check
      _
    $region10: #{block_forward_pallas.6} parent=5 // pred_check_branch
      %113 = sbr.rel (%p110) target = $region12
    $region11: #{block_forward_pallas.6} parent=5 // pred_region
      %s114 = ssub.s32 %s8, 1
      // Predicated region
      $region13: #{block_forward_pallas.6} parent=11 // pred_check
        %p115 = pneg %p72
      $region14: #{block_forward_pallas.6} parent=11 // pred_check_branch
        %117 = sbr.rel (%p115) target = $region16
      $region15: #{block_forward_pallas.6} parent=11 // pred_region
        %p118 = scmp.lt.s32.totalorder %s18, 0
        %s119 = scalar_select %p118, %s18, 0
        %s120 = smul.addr %s119, 8
        %s121 = scalar_lea.vmem %s1, %s120
      $region16: #{block_forward_pallas.6} parent=11 // pred_fallthru
        _
    $region12: #{block_forward_pallas.6} parent=5 // pred_fallthru
      _
    %p122 = scmp.lt.s32.totalorder %s8, 2
    // Predicated region
    $region17: #{block_forward_pallas.6} parent=5 // pred_check
      %p123 = pneg %p122
    $region18: #{block_forward_pallas.6} parent=5 // pred_check_branch
      %125 = sbr.rel (%p123) target = $region20
    $region19: #{block_forward_pallas.6} parent=5 // pred_region
      // Predicated region
      $region21: #{block_forward_pallas.6} parent=19 // pred_check
        %p126 = pneg %p40
      $region22: #{block_forward_pallas.6} parent=19 // pred_check_branch
        %128 = sbr.rel (%p126) target = $region24
      $region23: #{block_forward_pallas.6} parent=19 // pred_region
        %s129 = smul.u32 16, %s15
        %p130 = scmp.lt.s32.totalorder %s129, 31
        %s131 = scalar_select %p130, %s129, 31
        %s132 = smul.addr %s131, 8
        %s133 = scalar_lea.vmem %s0, %s132
        %s134 = smul.u32 16, %s15
      $region24: #{block_forward_pallas.6} parent=19 // pred_fallthru
        _
    $region20: #{block_forward_pallas.6} parent=5 // pred_fallthru
      _
    %p135 = scmp.le.s32.totalorder 1, %s8
    %p136 = scmp.lt.s32.totalorder %s8, 3
    %p137 = pnand %p135, %p136
    %p138 = pneg %p137
    // Predicated region
    $region25: #{block_forward_pallas.6} parent=5 // pred_check
      _
    $region26: #{block_forward_pallas.6} parent=5 // pred_check_branch
      %140 = sbr.rel (%p137) target = $region28
    $region27: #{block_forward_pallas.6} parent=5 // pred_region
      %s141 = ssub.s32 %s8, 1
      %s142 = smul.u32 16, %s17
      %p143 = scmp.lt.s32.totalorder %s142, 31
      %s144 = scalar_select %p143, %s142, 31
      %s145 = smul.addr %s144, 8
      %s146 = scalar_lea.vmem %s0, %s145
      %p147 = pneg %p46
      %p148 = pneg %p43
      %p149 = scmp.lt.s32.totalorder %s18, 0
      %s150 = scalar_select %p149, %s18, 0
      %s151 = smul.addr %s150, 8
      %s152 = scalar_lea.vmem %s1, %s151
      %p153 = pneg %p72
      %p154 = pneg %p69
      %p155 = pneg %p100
      %p156 = pneg %p97
      %s157 = smul.u32 16, %s17
      %p158 = scmp.lt.s32.totalorder %s157, 31
      %s159 = scalar_select %p158, %s157, 31
      %p160 = scmp.lt.s32.totalorder %s18, 0
      %s161 = scalar_select %p160, %s18, 0
      %s162 = sadd.s32 %s161, %s159
      %s163 = smul.addr %s162, 8
      %s164 = scalar_lea.vmem %s2, %s163
      %s165 = smul.u32 16, %s17
      %p166 = scmp.lt.s32.totalorder %s165, 31
      %s167 = scalar_select %p166, %s165, 31
      %s168 = smul.addr %s167, 8
      %s169 = scalar_lea.vmem %s0, %s168
      %s170 = smul.u32 16, %s17
      %p171 = scmp.lt.s32.totalorder %s18, 0
      %s172 = scalar_select %p171, %s18, 0
      %s173 = smul.addr %s172, 8
      %s174 = scalar_lea.vmem %s1, %s173
      %s175 = smul.u32 16, %s17
      %p176 = scmp.lt.s32.totalorder %s175, 31
      %s177 = scalar_select %p176, %s175, 31
      %p178 = scmp.lt.s32.totalorder %s18, 0
      %s179 = scalar_select %p178, %s18, 0
      %s180 = sadd.s32 %s179, %s177
      %s181 = smul.addr %s180, 8
      %s182 = scalar_lea.vmem %s2, %s181
      %s183 = smul.u32 16, %s17
      %v184 = vld [vmem:[%s169] sm:$0xff]
      %v185 = vld [vmem:[%s169 + $0x8] sm:$0xff]
      %v186 = vld [vmem:[%s169 + $0x10] sm:$0xff]
      %v187 = vld [vmem:[%s169 + $0x18] sm:$0xff]
      %v188 = vld [vmem:[%s169 + $0x20] sm:$0xff]
      %v189 = vld [vmem:[%s169 + $0x28] sm:$0xff]
      %v190 = vld [vmem:[%s169 + $0x30] sm:$0xff]
      %v191 = vld [vmem:[%s169 + $0x38] sm:$0xff]
      %v192 = vld [vmem:[%s169 + $0x40] sm:$0xff]
      %v193 = vld [vmem:[%s169 + $0x48] sm:$0xff]
      %v194 = vld [vmem:[%s169 + $0x50] sm:$0xff]
      %v195 = vld [vmem:[%s169 + $0x58] sm:$0xff]
      %v196 = vld [vmem:[%s169 + $0x60] sm:$0xff]
      %v197 = vld [vmem:[%s169 + $0x68] sm:$0xff]
      %v198 = vld [vmem:[%s169 + $0x70] sm:$0xff]
      %v199 = vld [vmem:[%s169 + $0x78] sm:$0xff]
      %v200 = vld [vmem:[%s174] sm:$0xff]
      %v201 = vld [vmem:[%s174 + $0x8] sm:$0xff]
      %v202 = vld [vmem:[%s174 + $0x10] sm:$0xff]
      %v203 = vld [vmem:[%s174 + $0x18] sm:$0xff]
      %v204 = vld [vmem:[%s174 + $0x20] sm:$0xff]
      %v205 = vld [vmem:[%s174 + $0x28] sm:$0xff]
      %v206 = vld [vmem:[%s174 + $0x30] sm:$0xff]
      %v207 = vld [vmem:[%s174 + $0x38] sm:$0xff]
      %v208 = vld [vmem:[%s174 + $0x40] sm:$0xff]
      %v209 = vld [vmem:[%s174 + $0x48] sm:$0xff]
      %v210 = vld [vmem:[%s174 + $0x50] sm:$0xff]
      %v211 = vld [vmem:[%s174 + $0x58] sm:$0xff]
      %v212 = vld [vmem:[%s174 + $0x60] sm:$0xff]
      %v213 = vld [vmem:[%s174 + $0x68] sm:$0xff]
      %v214 = vld [vmem:[%s174 + $0x70] sm:$0xff]
      %v215 = vld [vmem:[%s174 + $0x78] sm:$0xff]
      %216 = vmatprep.subr.mxu0 0.0
      %217 = vmatpush1.msra.mxu0 %v200
      %218 = vmatprep.subr.mxu0 0.0
      %219 = vmatpush1.msra.mxu0 %v201
      %220 = vmatprep.subr.mxu0 0.0
      %221 = vmatpush1.msra.mxu0 %v202
      %222 = vmatprep.subr.mxu0 0.0
      %223 = vmatpush1.msra.mxu0 %v203
      %224 = vmatprep.subr.mxu0 0.0
      %225 = vmatpush1.msra.mxu0 %v204
      %226 = vmatprep.subr.mxu0 0.0
      %227 = vmatpush1.msra.mxu0 %v205
      %228 = vmatprep.subr.mxu0 0.0
      %229 = vmatpush1.msra.mxu0 %v206
      %230 = vmatprep.subr.mxu0 0.0
      %231 = vmatpush1.msra.mxu0 %v207
      %232 = vmatprep.subr.mxu0 0.0
      %233 = vmatpush1.msra.mxu0 %v208
      %234 = vmatprep.subr.mxu0 0.0
      %235 = vmatpush1.msra.mxu0 %v209
      %236 = vmatprep.subr.mxu0 0.0
      %237 = vmatpush1.msra.mxu0 %v210
      %238 = vmatprep.subr.mxu0 0.0
      %239 = vmatpush1.msra.mxu0 %v211
      %240 = vmatprep.subr.mxu0 0.0
      %241 = vmatpush1.msra.mxu0 %v212
      %242 = vmatprep.subr.mxu0 0.0
      %243 = vmatpush1.msra.mxu0 %v213
      %244 = vmatprep.subr.mxu0 0.0
      %245 = vmatpush1.msra.mxu0 %v214
      %246 = vmatprep.subr.mxu0 0.0
      %247 = vmatpush1.msra.mxu0 %v215
      %248 = vmatprep.subr.mxu0 0.0
      %249 = vmatpush1.msra.mxu0 0.0
      %250 = vmatprep.subr.mxu0 0.0
      %251 = vmatpush1.msra.mxu0 0.0
      %252 = vmatprep.subr.mxu0 0.0
      %253 = vmatpush1.msra.mxu0 0.0
      %254 = vmatprep.subr.mxu0 0.0
      %255 = vmatpush1.msra.mxu0 0.0
      %256 = vmatprep.subr.mxu0 0.0
      %257 = vmatpush1.msra.mxu0 0.0
      %258 = vmatprep.subr.mxu0 0.0
      %259 = vmatpush1.msra.mxu0 0.0
      %260 = vmatprep.subr.mxu0 0.0
      %261 = vmatpush1.msra.mxu0 0.0
      %262 = vmatprep.subr.mxu0 0.0
      %263 = vmatpush1.msra.mxu0 0.0
      %264 = vmatprep.subr.mxu0 0.0
      %265 = vmatpush1.msra.mxu0 0.0
      %266 = vmatprep.subr.mxu0 0.0
      %267 = vmatpush1.msra.mxu0 0.0
      %268 = vmatprep.subr.mxu0 0.0
      %269 = vmatpush1.msra.mxu0 0.0
      %270 = vmatprep.subr.mxu0 0.0
      %271 = vmatpush1.msra.mxu0 0.0
      %272 = vmatprep.subr.mxu0 0.0
      %273 = vmatpush1.msra.mxu0 0.0
      %274 = vmatprep.subr.mxu0 0.0
      %275 = vmatpush1.msra.mxu0 0.0
      %276 = vmatprep.subr.mxu0 0.0
      %277 = vmatpush1.msra.mxu0 0.0
      %278 = vmatprep.subr.mxu0 0.0
      %279 = vmatpush1.msra.mxu0 0.0
      %280 = vmatprep.mubr.f32.mxu0 0.0
      %281 = vmatmul.mubr.f32.gmra.mrb[0].mxu0 %v184
      %v282 = vpop.f32.mrb[0].mxu0
      %v283 = vadd.f32 0.0, %v282
      %v284 = vpop.f32.mrb[0].mxu0
      %285 = vmatprep.mubr.f32.mxu0 0.0
      %286 = vmatmul.mubr.f32.gmra.mrb[0].mxu0 %v185
      %v287 = vpop.f32.mrb[0].mxu0
      %v288 = vadd.f32 0.0, %v287
      %v289 = vpop.f32.mrb[0].mxu0
      %290 = vmatprep.mubr.f32.mxu0 0.0
      %291 = vmatmul.mubr.f32.gmra.mrb[0].mxu0 %v186
      %v292 = vpop.f32.mrb[0].mxu0
      %v293 = vadd.f32 0.0, %v292
      %v294 = vpop.f32.mrb[0].mxu0
      %295 = vmatprep.mubr.f32.mxu0 0.0
      %296 = vmatmul.mubr.f32.gmra.mrb[0].mxu0 %v187
      %v297 = vpop.f32.mrb[0].mxu0
      %v298 = vadd.f32 0.0, %v297
      %v299 = vpop.f32.mrb[0].mxu0
      %300 = vmatprep.mubr.f32.mxu0 0.0
      %301 = vmatmul.mubr.f32.gmra.mrb[0].mxu0 %v188
      %v302 = vpop.f32.mrb[0].mxu0
      %v303 = vadd.f32 0.0, %v302
      %v304 = vpop.f32.mrb[0].mxu0
      %305 = vmatprep.mubr.f32.mxu0 0.0
      %306 = vmatmul.mubr.f32.gmra.mrb[0].mxu0 %v189
      %v307 = vpop.f32.mrb[0].mxu0
      %v308 = vadd.f32 0.0, %v307
      %v309 = vpop.f32.mrb[0].mxu0
      %310 = vmatprep.mubr.f32.mxu0 0.0
      %311 = vmatmul.mubr.f32.gmra.mrb[0].mxu0 %v190
      %v312 = vpop.f32.mrb[0].mxu0
      %v313 = vadd.f32 0.0, %v312
      %v314 = vpop.f32.mrb[0].mxu0
      %315 = vmatprep.mubr.f32.mxu0 0.0
      %316 = vmatmul.mubr.f32.gmra.mrb[0].mxu0 %v191
      %v317 = vpop.f32.mrb[0].mxu0
      %v318 = vadd.f32 0.0, %v317
      %v319 = vpop.f32.mrb[0].mxu0
      %320 = vmatprep.mubr.f32.mxu0 0.0
      %321 = vmatmul.mubr.f32.gmra.mrb[0].mxu0 %v192
      %v322 = vpop.f32.mrb[0].mxu0
      %v323 = vadd.f32 0.0, %v322
      %v324 = vpop.f32.mrb[0].mxu0
      %325 = vmatprep.mubr.f32.mxu0 0.0
      %326 = vmatmul.mubr.f32.gmra.mrb[0].mxu0 %v193
      %v327 = vpop.f32.mrb[0].mxu0
      %v328 = vadd.f32 0.0, %v327
      %v329 = vpop.f32.mrb[0].mxu0
      %330 = vmatprep.mubr.f32.mxu0 0.0
      %331 = vmatmul.mubr.f32.gmra.mrb[0].mxu0 %v194
      %v332 = vpop.f32.mrb[0].mxu0
      %v333 = vadd.f32 0.0, %v332
      %v334 = vpop.f32.mrb[0].mxu0
      %335 = vmatprep.mubr.f32.mxu0 0.0
      %336 = vmatmul.mubr.f32.gmra.mrb[0].mxu0 %v195
      %v337 = vpop.f32.mrb[0].mxu0
      %v338 = vadd.f32 0.0, %v337
      %v339 = vpop.f32.mrb[0].mxu0
      %340 = vmatprep.mubr.f32.mxu0 0.0
      %341 = vmatmul.mubr.f32.gmra.mrb[0].mxu0 %v196
      %v342 = vpop.f32.mrb[0].mxu0
      %v343 = vadd.f32 0.0, %v342
      %v344 = vpop.f32.mrb[0].mxu0
      %345 = vmatprep.mubr.f32.mxu0 0.0
      %346 = vmatmul.mubr.f32.gmra.mrb[0].mxu0 %v197
      %v347 = vpop.f32.mrb[0].mxu0
      %v348 = vadd.f32 0.0, %v347
      %v349 = vpop.f32.mrb[0].mxu0
      %350 = vmatprep.mubr.f32.mxu0 0.0
      %351 = vmatmul.mubr.f32.gmra.mrb[0].mxu0 %v198
      %v352 = vpop.f32.mrb[0].mxu0
      %v353 = vadd.f32 0.0, %v352
      %v354 = vpop.f32.mrb[0].mxu0
      %355 = vmatprep.mubr.f32.mxu0 0.0
      %356 = vmatmul.mubr.f32.gmra.mrb[0].mxu0 %v199
      %v357 = vpop.f32.mrb[0].mxu0
      %v358 = vadd.f32 0.0, %v357
      %v359 = vpop.f32.mrb[0].mxu0
      %360 = vdwg.mxu0
      %361 = vst [vmem:[%s182] sm:$0xff] %v283
      %362 = vst [vmem:[%s182 + $0x8] sm:$0xff] %v288
      %363 = vst [vmem:[%s182 + $0x10] sm:$0xff] %v293
      %364 = vst [vmem:[%s182 + $0x18] sm:$0xff] %v298
      %365 = vst [vmem:[%s182 + $0x20] sm:$0xff] %v303
      %366 = vst [vmem:[%s182 + $0x28] sm:$0xff] %v308
      %367 = vst [vmem:[%s182 + $0x30] sm:$0xff] %v313
      %368 = vst [vmem:[%s182 + $0x38] sm:$0xff] %v318
      %369 = vst [vmem:[%s182 + $0x40] sm:$0xff] %v323
      %370 = vst [vmem:[%s182 + $0x48] sm:$0xff] %v328
      %371 = vst [vmem:[%s182 + $0x50] sm:$0xff] %v333
      %372 = vst [vmem:[%s182 + $0x58] sm:$0xff] %v338
      %373 = vst [vmem:[%s182 + $0x60] sm:$0xff] %v343
      %374 = vst [vmem:[%s182 + $0x68] sm:$0xff] %v348
      %375 = vst [vmem:[%s182 + $0x70] sm:$0xff] %v353
      %376 = vst [vmem:[%s182 + $0x78] sm:$0xff] %v358
      %s377 = smul.u32 16, %s17
      %p378 = scmp.lt.s32.totalorder %s377, 31
      %s379 = scalar_select %p378, %s377, 31
      %p380 = scmp.lt.s32.totalorder %s18, 0
      %s381 = scalar_select %p380, %s18, 0
      %s382 = sadd.s32 %s381, %s379
      %s383 = smul.addr %s382, 8
      %s384 = scalar_lea.vmem %s2, %s383
      // Predicated region
      $region29: #{block_forward_pallas.6} parent=27 // pred_check
        %p385 = pneg %p97
      $region30: #{block_forward_pallas.6} parent=27 // pred_check_branch
        %387 = sbr.rel (%p385) target = $region32
      $region31: #{block_forward_pallas.6} parent=27 // pred_region
        %s388 = smul.u32 16, %s17
      $region32: #{block_forward_pallas.6} parent=27 // pred_fallthru
        _
    $region28: #{block_forward_pallas.6} parent=5 // pred_fallthru
      _
    %p389 = scmp.le.s32.totalorder 2, %s8
    // Predicated region
    $region33: #{block_forward_pallas.6} parent=5 // pred_check
      %p390 = pneg %p389
    $region34: #{block_forward_pallas.6} parent=5 // pred_check_branch
      %392 = sbr.rel (%p390) target = $region36
    $region35: #{block_forward_pallas.6} parent=5 // pred_region
      %s393 = ssub.s32 %s8, 2
      // Predicated region
      $region37: #{block_forward_pallas.6} parent=35 // pred_check
        %p394 = pneg %p103
      $region38: #{block_forward_pallas.6} parent=35 // pred_check_branch
        %396 = sbr.rel (%p394) target = $region40
      $region39: #{block_forward_pallas.6} parent=35 // pred_region
        %s397 = smul.u32 16, %s19
        %p398 = scmp.lt.s32.totalorder %s397, 31
        %s399 = scalar_select %p398, %s397, 31
        %p400 = scmp.lt.s32.totalorder %s20, 0
        %s401 = scalar_select %p400, %s20, 0
        %s402 = sadd.s32 %s401, %s399
        %s403 = smul.addr %s402, 8
        %s404 = scalar_lea.vmem %s2, %s403
      $region40: #{block_forward_pallas.6} parent=35 // pred_fallthru
        _
    $region36: #{block_forward_pallas.6} parent=5 // pred_fallthru
      _
  $region6: #{block_forward_pallas.6} parent=0 // loop_footer
    %s12 = sadd.s32 1, %s8
  $region7: #{block_forward_pallas.6} parent=0 // loop_footer_branch
    %7 = sbr.rel target = $region3
  $region8: #{block_forward_pallas.6} parent=0 // loop_exit
    _

// kernel: block_forward_pallas.7
$region0: #{block_forward_pallas.7}
  #allocation0 [shape = 'u32[]', space=smem, size = 0x4, offset = 0x4, fixed_abs, tag = 'smem constant byte address 0x4 - core index']
  #allocation1 [shape = 'u32[144,128]{1,0:T(1,128)}', space=vmem, size = 0x12000, scoped, tag = 'internal scratch']
  #allocation2 [shape = 'f32[128,128]{1,0:T(8,128)}', space=vmem, size = 0x10000, scoped, tag = 'scratch operand']
  %s0 = inlined_call_operand.vmem [shape: f32[256,128], index: 0, kind: input, shape index: {}]
  %s1 = inlined_call_operand.vmem [shape: f32[128,512], index: 1, kind: input, shape index: {}]
  %s2 = inlined_call_operand.vmem [shape: f32[512,128], index: 2, kind: input, shape index: {}]
  %s3 = inlined_call_operand.hbm [shape: f32[256,128], index: 3, kind: output, shape index: {}]
  %s4 = sld [smem:[#allocation0]]
  $region76: #{block_forward_pallas.7} parent=0
    _
  %s6 = ssub.s32 1, %s4
  %s7 = scalar_select 0, %s6, %s4
  $region1: #{block_forward_pallas.7} parent=0
    #allocation3 [shape = 'u8[262144]{0}', space=vmem, size = 0x40000, scoped, tag = 'input window, operand 1']
    #allocation4 [shape = 'u8[131072]{0}', space=vmem, size = 0x20000, scoped, tag = 'output window, operand 0']
    #allocation5 [shape = 's32[2]{0}', space=sflag, size = 0x8, scoped, tag = 'scoped memory for block_forward_pallas.7']
    %8 = vsyncpa [#allocation5], 0
    %s9 = scalar_lea.sflag [#allocation5], 1
    %10 = vsyncpa %s9, 0
    loop: start=0, step=1, limit=6
    $region2: #{block_forward_pallas.7} parent=1 // loop_pre_header
      _
    $region3: #{block_forward_pallas.7} parent=1 // loop_header
      %s12 = sphi 0, %s16
      %p13 = scmp.ge.s32.totalorder %s12, 6
      %s19 = sphi 0, %s31
      %s20 = sphi 0, %s27
      %s21 = sphi 0, %s19
      %s22 = sphi 0, %s20
      %s23 = sphi 0, %s21
      %s24 = sphi 0, %s22
      %s34 = sphi 0, %s36
      %s37 = sphi 0, %s34
      %s38 = sphi 0, %s37
      %s54 = sphi 0, %s38
      %s60 = sphi 0, %s62
      %s63 = sphi 0, %s60
      %s64 = sphi 0, %s63
      %s80 = sphi 0, %s64
      %s86 = sphi 0, %s88
      %s89 = sphi 0, %s86
      %s90 = sphi 0, %s89
      %s106 = sphi 0, %s90
      %s112 = sphi 0, %s114
      %s115 = sphi 0, %s112
      %s116 = sphi 0, %s115
      %s132 = sphi 0, %s116
    $region4: #{block_forward_pallas.7} parent=1 // loop_header_branch
      %15 = sbr.rel (%p13) target = $region8
    $region5: #{block_forward_pallas.7} parent=1 // loop_body
      %s17 = ssub.s32 %s12, 1
      %s18 = ssub.s32 %s12, 2
      %s25 = sadd.s32 1, %s20
      %p26 = scmp.ge.s32.totalorder %s25, 2
      %s27 = scalar_select %p26, 0, %s25
      %s28 = sadd.s32 1, %s19
      %s29 = scalar_select %p26, %s28, %s19
      %p30 = scmp.ge.s32.totalorder %s29, 2
      %s31 = scalar_select %p30, 0, %s29
      %s32 = ssub.s32 %s19, %s31
      %p33 = scmp.eq.s32.totalorder %s32, 0
      %s35 = sadd.s32 %s34, 1
      %s36 = scalar_select %p33, %s34, %s35
      %p39 = pneg %p33
      %p40 = scmp.eq.s32.totalorder %s12, 3
      %p41 = por %p39, %p40
      %p42 = scmp.ne.s32.totalorder %s34, %s37
      %p43 = scmp.eq.s32.totalorder %s12, 0
      %p44 = por %p42, %p43
      %p45 = scmp.ne.s32.totalorder %s34, %s37
      %p46 = scmp.eq.s32.totalorder %s17, 3
      %p47 = por %p45, %p46
      %p48 = scmp.ne.s32.totalorder %s37, %s38
      %p49 = scmp.eq.s32.totalorder %s17, 0
      %p50 = por %p48, %p49
      %p51 = scmp.ne.s32.totalorder %s37, %s38
      %p52 = scmp.eq.s32.totalorder %s18, 3
      %p53 = por %p51, %p52
      %p55 = scmp.ne.s32.totalorder %s38, %s54
      %p56 = scmp.eq.s32.totalorder %s18, 0
      %p57 = por %p55, %p56
      %s58 = ssub.s32 %s20, %s27
      %p59 = scmp.eq.s32.totalorder %s58, 0
      %s61 = sadd.s32 %s60, 1
      %s62 = scalar_select %p59, %s60, %s61
      %p65 = pneg %p59
      %p66 = scmp.eq.s32.totalorder %s12, 3
      %p67 = por %p65, %p66
      %p68 = scmp.ne.s32.totalorder %s60, %s63
      %p69 = scmp.eq.s32.totalorder %s12, 0
      %p70 = por %p68, %p69
      %p71 = scmp.ne.s32.totalorder %s60, %s63
      %p72 = scmp.eq.s32.totalorder %s17, 3
      %p73 = por %p71, %p72
      %p74 = scmp.ne.s32.totalorder %s63, %s64
      %p75 = scmp.eq.s32.totalorder %s17, 0
      %p76 = por %p74, %p75
      %p77 = scmp.ne.s32.totalorder %s63, %s64
      %p78 = scmp.eq.s32.totalorder %s18, 3
      %p79 = por %p77, %p78
      %p81 = scmp.ne.s32.totalorder %s64, %s80
      %p82 = scmp.eq.s32.totalorder %s18, 0
      %p83 = por %p81, %p82
      %s84 = ssub.s32 %s20, %s27
      %p85 = scmp.eq.s32.totalorder %s84, 0
      %s87 = sadd.s32 %s86, 1
      %s88 = scalar_select %p85, %s86, %s87
      %p91 = pneg %p85
      %p92 = scmp.eq.s32.totalorder %s12, 3
      %p93 = por %p91, %p92
      %p94 = scmp.ne.s32.totalorder %s86, %s89
      %p95 = scmp.eq.s32.totalorder %s12, 0
      %p96 = por %p94, %p95
      %p97 = scmp.ne.s32.totalorder %s86, %s89
      %p98 = scmp.eq.s32.totalorder %s17, 3
      %p99 = por %p97, %p98
      %p100 = scmp.ne.s32.totalorder %s89, %s90
      %p101 = scmp.eq.s32.totalorder %s17, 0
      %p102 = por %p100, %p101
      %p103 = scmp.ne.s32.totalorder %s89, %s90
      %p104 = scmp.eq.s32.totalorder %s18, 3
      %p105 = por %p103, %p104
      %p107 = scmp.ne.s32.totalorder %s90, %s106
      %p108 = scmp.eq.s32.totalorder %s18, 0
      %p109 = por %p107, %p108
      %s110 = ssub.s32 %s19, %s31
      %p111 = scmp.eq.s32.totalorder %s110, 0
      %s113 = sadd.s32 %s112, 1
      %s114 = scalar_select %p111, %s112, %s113
      %p117 = pneg %p111
      %p118 = scmp.eq.s32.totalorder %s12, 3
      %p119 = por %p117, %p118
      %p120 = scmp.ne.s32.totalorder %s112, %s115
      %p121 = scmp.eq.s32.totalorder %s12, 0
      %p122 = por %p120, %p121
      %p123 = scmp.ne.s32.totalorder %s112, %s115
      %p124 = scmp.eq.s32.totalorder %s17, 3
      %p125 = por %p123, %p124
      %p126 = scmp.ne.s32.totalorder %s115, %s116
      %p127 = scmp.eq.s32.totalorder %s17, 0
      %p128 = por %p126, %p127
      %p129 = scmp.ne.s32.totalorder %s115, %s116
      %p130 = scmp.eq.s32.totalorder %s18, 3
      %p131 = por %p129, %p130
      %p133 = scmp.ne.s32.totalorder %s116, %s132
      %p134 = scmp.eq.s32.totalorder %s18, 0
      %p135 = por %p133, %p134
      %p136 = scmp.le.s32.totalorder 1, %s12
      %p137 = scmp.lt.s32.totalorder %s12, 5
      %p138 = pnand %p136, %p137
      %p139 = pneg %p138
      // Predicated region
      $region9: #{block_forward_pallas.7} parent=5 // pred_check
        _
      $region10: #{block_forward_pallas.7} parent=5 // pred_check_branch
        %141 = sbr.rel (%p138) target = $region12
      $region11: #{block_forward_pallas.7} parent=5 // pred_region
        %s142 = ssub.s32 %s12, 1
      $region12: #{block_forward_pallas.7} parent=5 // pred_fallthru
        _
      %p143 = scmp.lt.s32.totalorder %s12, 4
      // Predicated region
      $region13: #{block_forward_pallas.7} parent=5 // pred_check
        %p144 = pneg %p143
      $region14: #{block_forward_pallas.7} parent=5 // pred_check_branch
        %146 = sbr.rel (%p144) target = $region16
      $region15: #{block_forward_pallas.7} parent=5 // pred_region
        // Predicated region
        $region17: #{block_forward_pallas.7} parent=15 // pred_check
          %p147 = pneg %p44
        $region18: #{block_forward_pallas.7} parent=15 // pred_check_branch
          %149 = sbr.rel (%p147) target = $region20
        $region19: #{block_forward_pallas.7} parent=15 // pred_region
          %s150 = smul.u32 16, %s19
          %p151 = scmp.lt.s32.totalorder %s150, 31
          %s152 = scalar_select %p151, %s150, 31
          %s153 = smul.addr %s152, 8
          %s154 = scalar_lea.vmem %s0, %s153
          %s155 = smul.u32 16, %s19
        $region20: #{block_forward_pallas.7} parent=15 // pred_fallthru
          _
        // Predicated region
        $region21: #{block_forward_pallas.7} parent=15 // pred_check
          %p156 = pneg %p70
        $region22: #{block_forward_pallas.7} parent=15 // pred_check_branch
          %158 = sbr.rel (%p156) target = $region24
        $region23: #{block_forward_pallas.7} parent=15 // pred_region
          %s159 = sand.u32 %s60, 1
          %s160 = sand.u32 %s60, 1
          %s161 = smul.addr %s160, 256
          %s162 = scalar_lea.vmem [#allocation3], %s161
          %s163 = smul.u32 2, %s20
          %s164 = smul.addr %s163, 8
          %s165 = scalar_lea.vmem %s1, %s164
          // Predicated region
          $region25: #{block_forward_pallas.7} parent=23 // pred_check
            _
          $region26: #{block_forward_pallas.7} parent=23 // pred_check_branch
            %167 = sbr.rel (0) target = $region28
          $region27: #{block_forward_pallas.7} parent=23 // pred_region
            // Predicated region
            $region29: #{block_forward_pallas.7} parent=27 // pred_check
              _
            $region30: #{block_forward_pallas.7} parent=27 // pred_check_branch
              %169 = sbr.rel (0) target = $region32
            $region31: #{block_forward_pallas.7} parent=27 // pred_region
              loop: start=0, step=1, limit=1
              $region33: #{block_forward_pallas.7} parent=31 // loop_pre_header
                _
              $region34: #{block_forward_pallas.7} parent=31 // loop_header
                %s171 = sphi 0, %s175
                %p172 = scmp.ge.s32.totalorder %s171, 1
                %s176 = sphi %s165, %s165
                %s177 = sphi %s162, %s162
              $region35: #{block_forward_pallas.7} parent=31 // loop_header_branch
                %174 = sbr.rel (%p172) target = $region39
              $region36: #{block_forward_pallas.7} parent=31 // loop_body
                %v178 = vld [vmem:[%s176] sm:$0xff]
                %179 = vst [vmem:[%s177] sm:$0xff] %v178
                %v180 = vld [vmem:[%s176 + $0x8] sm:$0xff]
                %181 = vst [vmem:[%s177 + $0x8] sm:$0xff] %v180
                %v182 = vld [vmem:[%s176 + $0x20] sm:$0xff]
                %183 = vst [vmem:[%s177 + $0x10] sm:$0xff] %v182
                %v184 = vld [vmem:[%s176 + $0x28] sm:$0xff]
                %185 = vst [vmem:[%s177 + $0x18] sm:$0xff] %v184
                %v186 = vld [vmem:[%s176 + $0x40] sm:$0xff]
                %187 = vst [vmem:[%s177 + $0x20] sm:$0xff] %v186
                %v188 = vld [vmem:[%s176 + $0x48] sm:$0xff]
                %189 = vst [vmem:[%s177 + $0x28] sm:$0xff] %v188
                %v190 = vld [vmem:[%s176 + $0x60] sm:$0xff]
                %191 = vst [vmem:[%s177 + $0x30] sm:$0xff] %v190
                %v192 = vld [vmem:[%s176 + $0x68] sm:$0xff]
                %193 = vst [vmem:[%s177 + $0x38] sm:$0xff] %v192
                %v194 = vld [vmem:[%s176 + $0x80] sm:$0xff]
                %195 = vst [vmem:[%s177 + $0x40] sm:$0xff] %v194
                %v196 = vld [vmem:[%s176 + $0x88] sm:$0xff]
                %197 = vst [vmem:[%s177 + $0x48] sm:$0xff] %v196
                %v198 = vld [vmem:[%s176 + $0xa0] sm:$0xff]
                %199 = vst [vmem:[%s177 + $0x50] sm:$0xff] %v198
                %v200 = vld [vmem:[%s176 + $0xa8] sm:$0xff]
                %201 = vst [vmem:[%s177 + $0x58] sm:$0xff] %v200
                %v202 = vld [vmem:[%s176 + $0xc0] sm:$0xff]
                %203 = vst [vmem:[%s177 + $0x60] sm:$0xff] %v202
                %v204 = vld [vmem:[%s176 + $0xc8] sm:$0xff]
                %205 = vst [vmem:[%s177 + $0x68] sm:$0xff] %v204
                %v206 = vld [vmem:[%s176 + $0xe0] sm:$0xff]
                %207 = vst [vmem:[%s177 + $0x70] sm:$0xff] %v206
                %v208 = vld [vmem:[%s176 + $0xe8] sm:$0xff]
                %209 = vst [vmem:[%s177 + $0x78] sm:$0xff] %v208
                %v210 = vld [vmem:[%s176 + $0x100] sm:$0xff]
                %211 = vst [vmem:[%s177 + $0x80] sm:$0xff] %v210
                %v212 = vld [vmem:[%s176 + $0x108] sm:$0xff]
                %213 = vst [vmem:[%s177 + $0x88] sm:$0xff] %v212
                %v214 = vld [vmem:[%s176 + $0x120] sm:$0xff]
                %215 = vst [vmem:[%s177 + $0x90] sm:$0xff] %v214
                %v216 = vld [vmem:[%s176 + $0x128] sm:$0xff]
                %217 = vst [vmem:[%s177 + $0x98] sm:$0xff] %v216
                %v218 = vld [vmem:[%s176 + $0x140] sm:$0xff]
                %219 = vst [vmem:[%s177 + $0xa0] sm:$0xff] %v218
                %v220 = vld [vmem:[%s176 + $0x148] sm:$0xff]
                %221 = vst [vmem:[%s177 + $0xa8] sm:$0xff] %v220
                %v222 = vld [vmem:[%s176 + $0x160] sm:$0xff]
                %223 = vst [vmem:[%s177 + $0xb0] sm:$0xff] %v222
                %v224 = vld [vmem:[%s176 + $0x168] sm:$0xff]
                %225 = vst [vmem:[%s177 + $0xb8] sm:$0xff] %v224
                %v226 = vld [vmem:[%s176 + $0x180] sm:$0xff]
                %227 = vst [vmem:[%s177 + $0xc0] sm:$0xff] %v226
                %v228 = vld [vmem:[%s176 + $0x188] sm:$0xff]
                %229 = vst [vmem:[%s177 + $0xc8] sm:$0xff] %v228
                %v230 = vld [vmem:[%s176 + $0x1a0] sm:$0xff]
                %231 = vst [vmem:[%s177 + $0xd0] sm:$0xff] %v230
                %v232 = vld [vmem:[%s176 + $0x1a8] sm:$0xff]
                %233 = vst [vmem:[%s177 + $0xd8] sm:$0xff] %v232
                %v234 = vld [vmem:[%s176 + $0x1c0] sm:$0xff]
                %235 = vst [vmem:[%s177 + $0xe0] sm:$0xff] %v234
                %v236 = vld [vmem:[%s176 + $0x1c8] sm:$0xff]
                %237 = vst [vmem:[%s177 + $0xe8] sm:$0xff] %v236
                %v238 = vld [vmem:[%s176 + $0x1e0] sm:$0xff]
                %239 = vst [vmem:[%s177 + $0xf0] sm:$0xff] %v238
                %v240 = vld [vmem:[%s176 + $0x1e8] sm:$0xff]
                %241 = vst [vmem:[%s177 + $0xf8] sm:$0xff] %v240
              $region37: #{block_forward_pallas.7} parent=31 // loop_footer
                %s175 = sadd.s32 1, %s171
              $region38: #{block_forward_pallas.7} parent=31 // loop_footer_branch
                %170 = sbr.rel target = $region34
              $region39: #{block_forward_pallas.7} parent=31 // loop_exit
                _
            $region32: #{block_forward_pallas.7} parent=27 // pred_fallthru
              _
            // Predicated region
            $region40: #{block_forward_pallas.7} parent=27 // pred_check
              _
            $region41: #{block_forward_pallas.7} parent=27 // pred_check_branch
              %243 = sbr.rel target = $region43
            $region42: #{block_forward_pallas.7} parent=27 // pred_region
              _
            $region43: #{block_forward_pallas.7} parent=27 // pred_fallthru
              _
          $region28: #{block_forward_pallas.7} parent=23 // pred_fallthru
            _
          %244 = vnop
        $region24: #{block_forward_pallas.7} parent=15 // pred_fallthru
          _
        // Predicated region
        $region44: #{block_forward_pallas.7} parent=15 // pred_check
          %p245 = pneg %p96
        $region45: #{block_forward_pallas.7} parent=15 // pred_check_branch
          %247 = sbr.rel (%p245) target = $region47
        $region46: #{block_forward_pallas.7} parent=15 // pred_region
          %s248 = smul.u32 32, %s20
          %p249 = scmp.lt.s32.totalorder %s248, 63
          %s250 = scalar_select %p249, %s248, 63
          %s251 = smul.addr %s250, 8
          %s252 = scalar_lea.vmem %s2, %s251
          %s253 = smul.u32 32, %s20
        $region47: #{block_forward_pallas.7} parent=15 // pred_fallthru
          _
      $region16: #{block_forward_pallas.7} parent=5 // pred_fallthru
        _
      %p254 = scmp.le.s32.totalorder 1, %s12
      %p255 = scmp.lt.s32.totalorder %s12, 5
      %p256 = pnand %p254, %p255
      %p257 = pneg %p256
      // Predicated region
      $region48: #{block_forward_pallas.7} parent=5 // pred_check
        _
      $region49: #{block_forward_pallas.7} parent=5 // pred_check_branch
        %259 = sbr.rel (%p256) target = $region51
      $region50: #{block_forward_pallas.7} parent=5 // pred_region
        %s260 = ssub.s32 %s12, 1
        %s261 = sand.u32 %s63, 1
        %s262 = sand.u32 %s63, 1
        %s263 = smul.addr %s262, 256
        %s264 = scalar_lea.vmem [#allocation3], %s263
        // Predicated region
        $region52: #{block_forward_pallas.7} parent=50 // pred_check
          %p265 = pneg %p76
        $region53: #{block_forward_pallas.7} parent=50 // pred_check_branch
          %267 = sbr.rel (%p265) target = $region55
        $region54: #{block_forward_pallas.7} parent=50 // pred_region
          _
        $region55: #{block_forward_pallas.7} parent=50 // pred_fallthru
          _
        %s268 = smul.u32 16, %s21
        %p269 = scmp.lt.s32.totalorder %s268, 31
        %s270 = scalar_select %p269, %s268, 31
        %s271 = smul.addr %s270, 8
        %s272 = scalar_lea.vmem %s0, %s271
        %p273 = pneg %p50
        %p274 = pneg %p47
        %s275 = sand.u32 %s63, 1
        %s276 = sand.u32 %s63, 1
        %s277 = smul.addr %s276, 256
        %s278 = scalar_lea.vmem [#allocation3], %s277
        %p279 = pneg %p76
        %p280 = pneg %p73
        %s281 = smul.u32 32, %s22
        %p282 = scmp.lt.s32.totalorder %s281, 63
        %s283 = scalar_select %p282, %s281, 63
        %s284 = smul.addr %s283, 8
        %s285 = scalar_lea.vmem %s2, %s284
        %p286 = pneg %p102
        %p287 = pneg %p99
        %p288 = pneg %p128
        %p289 = pneg %p125
        %s290 = sand.u32 %s115, 1
        %s291 = scalar_lea.sflag [#allocation5], %s290
        %s292 = sand.u32 %s115, 1
        %s293 = smul.addr %s292, 128
        %s294 = scalar_lea.vmem [#allocation4], %s293
        %s295 = smul.u32 16, %s21
        %p296 = scmp.lt.s32.totalorder %s295, 31
        %s297 = scalar_select %p296, %s295, 31
        %s298 = smul.addr %s297, 8
        %s299 = scalar_lea.vmem %s0, %s298
        %s300 = smul.u32 16, %s21
        %s301 = smul.u32 2, %s22
        %s302 = smul.u32 32, %s22
        %p303 = scmp.lt.s32.totalorder %s302, 63
        %s304 = scalar_select %p303, %s302, 63
        %s305 = smul.addr %s304, 8
        %s306 = scalar_lea.vmem %s2, %s305
        %s307 = smul.u32 32, %s22
        %s308 = smul.u32 16, %s21
        %p309 = scmp.eq.s32.totalorder %s22, 0
        // Predicated region
        $region56: #{block_forward_pallas.7} parent=50 // pred_check
          %p310 = pneg %p309
        $region57: #{block_forward_pallas.7} parent=50 // pred_check_branch
          %312 = sbr.rel (%p310) target = $region59
        $region58: #{block_forward_pallas.7} parent=50 // pred_region
          %313 = vst [vmem:[#allocation2] sm:$0xff] 0.0
          %314 = vst [vmem:[#allocation2 + $0x8] sm:$0xff] 0.0
          %315 = vst [vmem:[#allocation2 + $0x10] sm:$0xff] 0.0
          %316 = vst [vmem:[#allocation2 + $0x18] sm:$0xff] 0.0
          %317 = vst [vmem:[#allocation2 + $0x20] sm:$0xff] 0.0
          %318 = vst [vmem:[#allocation2 + $0x28] sm:$0xff] 0.0
          %319 = vst [vmem:[#allocation2 + $0x30] sm:$0xff] 0.0
          %320 = vst [vmem:[#allocation2 + $0x38] sm:$0xff] 0.0
          %321 = vst [vmem:[#allocation2 + $0x40] sm:$0xff] 0.0
          %322 = vst [vmem:[#allocation2 + $0x48] sm:$0xff] 0.0
          %323 = vst [vmem:[#allocation2 + $0x50] sm:$0xff] 0.0
          %324 = vst [vmem:[#allocation2 + $0x58] sm:$0xff] 0.0
          %325 = vst [vmem:[#allocation2 + $0x60] sm:$0xff] 0.0
          %326 = vst [vmem:[#allocation2 + $0x68] sm:$0xff] 0.0
          %327 = vst [vmem:[#allocation2 + $0x70] sm:$0xff] 0.0
          %328 = vst [vmem:[#allocation2 + $0x78] sm:$0xff] 0.0
        $region59: #{block_forward_pallas.7} parent=50 // pred_fallthru
          _
        %v329 = vld [vmem:[%s299] sm:$0xff]
        %v330 = vld [vmem:[%s299 + $0x8] sm:$0xff]
        %v331 = vld [vmem:[%s299 + $0x10] sm:$0xff]
        %v332 = vld [vmem:[%s299 + $0x18] sm:$0xff]
        %v333 = vld [vmem:[%s299 + $0x20] sm:$0xff]
        %v334 = vld [vmem:[%s299 + $0x28] sm:$0xff]
        %v335 = vld [vmem:[%s299 + $0x30] sm:$0xff]
        %v336 = vld [vmem:[%s299 + $0x38] sm:$0xff]
        %v337 = vld [vmem:[%s299 + $0x40] sm:$0xff]
        %v338 = vld [vmem:[%s299 + $0x48] sm:$0xff]
        %v339 = vld [vmem:[%s299 + $0x50] sm:$0xff]
        %v340 = vld [vmem:[%s299 + $0x58] sm:$0xff]
        %v341 = vld [vmem:[%s299 + $0x60] sm:$0xff]
        %v342 = vld [vmem:[%s299 + $0x68] sm:$0xff]
        %v343 = vld [vmem:[%s299 + $0x70] sm:$0xff]
        %v344 = vld [vmem:[%s299 + $0x78] sm:$0xff]
        %v345 = vmul.f32 %v329, %v329
        %v346 = vmul.f32 %v330, %v330
        %v347 = vmul.f32 %v331, %v331
        %v348 = vmul.f32 %v332, %v332
        %v349 = vmul.f32 %v333, %v333
        %v350 = vmul.f32 %v334, %v334
        %v351 = vmul.f32 %v335, %v335
        %v352 = vmul.f32 %v336, %v336
        %v353 = vmul.f32 %v337, %v337
        %v354 = vmul.f32 %v338, %v338
        %v355 = vmul.f32 %v339, %v339
        %v356 = vmul.f32 %v340, %v340
        %v357 = vmul.f32 %v341, %v341
        %v358 = vmul.f32 %v342, %v342
        %v359 = vmul.f32 %v343, %v343
        %v360 = vmul.f32 %v344, %v344
        %361 = vadd.xlane.f32.xlu0 %v345
        %v362 = vpop.xlane.xlu0 %361
        %363 = vadd.xlane.f32.xlu0 %v346
        %v364 = vpop.xlane.xlu0 %363
        %365 = vadd.xlane.f32.xlu0 %v347
        %v366 = vpop.xlane.xlu0 %365
        %367 = vadd.xlane.f32.xlu0 %v348
        %v368 = vpop.xlane.xlu0 %367
        %369 = vadd.xlane.f32.xlu0 %v349
        %v370 = vpop.xlane.xlu0 %369
        %371 = vadd.xlane.f32.xlu0 %v350
        %v372 = vpop.xlane.xlu0 %371
        %373 = vadd.xlane.f32.xlu0 %v351
        %v374 = vpop.xlane.xlu0 %373
        %375 = vadd.xlane.f32.xlu0 %v352
        %v376 = vpop.xlane.xlu0 %375
        %377 = vadd.xlane.f32.xlu0 %v353
        %v378 = vpop.xlane.xlu0 %377
        %379 = vadd.xlane.f32.xlu0 %v354
        %v380 = vpop.xlane.xlu0 %379
        %381 = vadd.xlane.f32.xlu0 %v355
        %v382 = vpop.xlane.xlu0 %381
        %383 = vadd.xlane.f32.xlu0 %v356
        %v384 = vpop.xlane.xlu0 %383
        %385 = vadd.xlane.f32.xlu0 %v357
        %v386 = vpop.xlane.xlu0 %385
        %387 = vadd.xlane.f32.xlu0 %v358
        %v388 = vpop.xlane.xlu0 %387
        %389 = vadd.xlane.f32.xlu0 %v359
        %v390 = vpop.xlane.xlu0 %389
        %391 = vadd.xlane.f32.xlu0 %v360
        %v392 = vpop.xlane.xlu0 %391
        %v393 = vrcp.pop 128.0
        %v394 = vmul.f32 %v362, %v393
        %v395 = vmul.f32 %v364, %v393
        %v396 = vmul.f32 %v366, %v393
        %v397 = vmul.f32 %v368, %v393
        %v398 = vmul.f32 %v370, %v393
        %v399 = vmul.f32 %v372, %v393
        %v400 = vmul.f32 %v374, %v393
        %v401 = vmul.f32 %v376, %v393
        %v402 = vmul.f32 %v378, %v393
        %v403 = vmul.f32 %v380, %v393
        %v404 = vmul.f32 %v382, %v393
        %v405 = vmul.f32 %v384, %v393
        %v406 = vmul.f32 %v386, %v393
        %v407 = vmul.f32 %v388, %v393
        %v408 = vmul.f32 %v390, %v393
        %v409 = vmul.f32 %v392, %v393
        %v410 = vadd.f32 %v394, 1.1920929e-07
        %v411 = vadd.f32 %v395, 1.1920929e-07
        %v412 = vadd.f32 %v396, 1.1920929e-07
        %v413 = vadd.f32 %v397, 1.1920929e-07
        %v414 = vadd.f32 %v398, 1.1920929e-07
        %v415 = vadd.f32 %v399, 1.1920929e-07
        %v416 = vadd.f32 %v400, 1.1920929e-07
        %v417 = vadd.f32 %v401, 1.1920929e-07
        %v418 = vadd.f32 %v402, 1.1920929e-07
        %v419 = vadd.f32 %v403, 1.1920929e-07
        %v420 = vadd.f32 %v404, 1.1920929e-07
        %v421 = vadd.f32 %v405, 1.1920929e-07
        %v422 = vadd.f32 %v406, 1.1920929e-07
        %v423 = vadd.f32 %v407, 1.1920929e-07
        %v424 = vadd.f32 %v408, 1.1920929e-07
        %v425 = vadd.f32 %v409, 1.1920929e-07
        %v426 = vrsqrt.pop %v410
        %v427 = vrsqrt.pop %v411
        %v428 = vrsqrt.pop %v412
        %v429 = vrsqrt.pop %v413
        %v430 = vrsqrt.pop %v414
        %v431 = vrsqrt.pop %v415
        %v432 = vrsqrt.pop %v416
        %v433 = vrsqrt.pop %v417
        %v434 = vrsqrt.pop %v418
        %v435 = vrsqrt.pop %v419
        %v436 = vrsqrt.pop %v420
        %v437 = vrsqrt.pop %v421
        %v438 = vrsqrt.pop %v422
        %v439 = vrsqrt.pop %v423
        %v440 = vrsqrt.pop %v424
        %v441 = vrsqrt.pop %v425
        %v442 = vmul.f32 %v329, %v426
        %v443 = vmul.f32 %v330, %v427
        %v444 = vmul.f32 %v331, %v428
        %v445 = vmul.f32 %v332, %v429
        %v446 = vmul.f32 %v333, %v430
        %v447 = vmul.f32 %v334, %v431
        %v448 = vmul.f32 %v335, %v432
        %v449 = vmul.f32 %v336, %v433
        %v450 = vmul.f32 %v337, %v434
        %v451 = vmul.f32 %v338, %v435
        %v452 = vmul.f32 %v339, %v436
        %v453 = vmul.f32 %v340, %v437
        %v454 = vmul.f32 %v341, %v438
        %v455 = vmul.f32 %v342, %v439
        %v456 = vmul.f32 %v343, %v440
        %v457 = vmul.f32 %v344, %v441
        %v458 = vld [vmem:[%s264] sm:$0xff]
        %v459 = vld [vmem:[%s264 + $0x8] sm:$0xff]
        %v460 = vld [vmem:[%s264 + $0x10] sm:$0xff]
        %v461 = vld [vmem:[%s264 + $0x18] sm:$0xff]
        %v462 = vld [vmem:[%s264 + $0x20] sm:$0xff]
        %v463 = vld [vmem:[%s264 + $0x28] sm:$0xff]
        %v464 = vld [vmem:[%s264 + $0x30] sm:$0xff]
        %v465 = vld [vmem:[%s264 + $0x38] sm:$0xff]
        %v466 = vld [vmem:[%s264 + $0x40] sm:$0xff]
        %v467 = vld [vmem:[%s264 + $0x48] sm:$0xff]
        %v468 = vld [vmem:[%s264 + $0x50] sm:$0xff]
        %v469 = vld [vmem:[%s264 + $0x58] sm:$0xff]
        %v470 = vld [vmem:[%s264 + $0x60] sm:$0xff]
        %v471 = vld [vmem:[%s264 + $0x68] sm:$0xff]
        %v472 = vld [vmem:[%s264 + $0x70] sm:$0xff]
        %v473 = vld [vmem:[%s264 + $0x78] sm:$0xff]
        %v474 = vld [vmem:[%s264 + $0x80] sm:$0xff]
        %v475 = vld [vmem:[%s264 + $0x88] sm:$0xff]
        %v476 = vld [vmem:[%s264 + $0x90] sm:$0xff]
        %v477 = vld [vmem:[%s264 + $0x98] sm:$0xff]
        %v478 = vld [vmem:[%s264 + $0xa0] sm:$0xff]
        %v479 = vld [vmem:[%s264 + $0xa8] sm:$0xff]
        %v480 = vld [vmem:[%s264 + $0xb0] sm:$0xff]
        %v481 = vld [vmem:[%s264 + $0xb8] sm:$0xff]
        %v482 = vld [vmem:[%s264 + $0xc0] sm:$0xff]
        %v483 = vld [vmem:[%s264 + $0xc8] sm:$0xff]
        %v484 = vld [vmem:[%s264 + $0xd0] sm:$0xff]
        %v485 = vld [vmem:[%s264 + $0xd8] sm:$0xff]
        %v486 = vld [vmem:[%s264 + $0xe0] sm:$0xff]
        %v487 = vld [vmem:[%s264 + $0xe8] sm:$0xff]
        %v488 = vld [vmem:[%s264 + $0xf0] sm:$0xff]
        %v489 = vld [vmem:[%s264 + $0xf8] sm:$0xff]
        %490 = vmatprep.subr.mxu0 %v459
        %491 = vmatpush1.msra.mxu0 %v458
        %492 = vmatprep.subr.mxu0 %v461
        %493 = vmatpush1.msra.mxu0 %v460
        %494 = vmatprep.subr.mxu0 %v463
        %495 = vmatpush1.msra.mxu0 %v462
        %496 = vmatprep.subr.mxu0 %v465
        %497 = vmatpush1.msra.mxu0 %v464
        %498 = vmatprep.subr.mxu0 %v467
        %499 = vmatpush1.msra.mxu0 %v466
        %500 = vmatprep.subr.mxu0 %v469
        %501 = vmatpush1.msra.mxu0 %v468
        %502 = vmatprep.subr.mxu0 %v471
        %503 = vmatpush1.msra.mxu0 %v470
        %504 = vmatprep.subr.mxu0 %v473
        %505 = vmatpush1.msra.mxu0 %v472
        %506 = vmatprep.subr.mxu0 %v475
        %507 = vmatpush1.msra.mxu0 %v474
        %508 = vmatprep.subr.mxu0 %v477
        %509 = vmatpush1.msra.mxu0 %v476
        %510 = vmatprep.subr.mxu0 %v479
        %511 = vmatpush1.msra.mxu0 %v478
        %512 = vmatprep.subr.mxu0 %v481
        %513 = vmatpush1.msra.mxu0 %v480
        %514 = vmatprep.subr.mxu0 %v483
        %515 = vmatpush1.msra.mxu0 %v482
        %516 = vmatprep.subr.mxu0 %v485
        %517 = vmatpush1.msra.mxu0 %v484
        %518 = vmatprep.subr.mxu0 %v487
        %519 = vmatpush1.msra.mxu0 %v486
        %520 = vmatprep.subr.mxu0 %v489
        %521 = vmatpush1.msra.mxu0 %v488
        %522 = vmatprep.subr.mxu0 0.0
        %523 = vmatpush1.msra.mxu0 0.0
        %524 = vmatprep.subr.mxu0 0.0
        %525 = vmatpush1.msra.mxu0 0.0
        %526 = vmatprep.subr.mxu0 0.0
        %527 = vmatpush1.msra.mxu0 0.0
        %528 = vmatprep.subr.mxu0 0.0
        %529 = vmatpush1.msra.mxu0 0.0
        %530 = vmatprep.subr.mxu0 0.0
        %531 = vmatpush1.msra.mxu0 0.0
        %532 = vmatprep.subr.mxu0 0.0
        %533 = vmatpush1.msra.mxu0 0.0
        %534 = vmatprep.subr.mxu0 0.0
        %535 = vmatpush1.msra.mxu0 0.0
        %536 = vmatprep.subr.mxu0 0.0
        %537 = vmatpush1.msra.mxu0 0.0
        %538 = vmatprep.subr.mxu0 0.0
        %539 = vmatpush1.msra.mxu0 0.0
        %540 = vmatprep.subr.mxu0 0.0
        %541 = vmatpush1.msra.mxu0 0.0
        %542 = vmatprep.subr.mxu0 0.0
        %543 = vmatpush1.msra.mxu0 0.0
        %544 = vmatprep.subr.mxu0 0.0
        %545 = vmatpush1.msra.mxu0 0.0
        %546 = vmatprep.subr.mxu0 0.0
        %547 = vmatpush1.msra.mxu0 0.0
        %548 = vmatprep.subr.mxu0 0.0
        %549 = vmatpush1.msra.mxu0 0.0
        %550 = vmatprep.subr.mxu0 0.0
        %551 = vmatpush1.msra.mxu0 0.0
        %552 = vmatprep.subr.mxu0 0.0
        %553 = vmatpush1.msra.mxu0 0.0
        %554 = vmatprep.mubr.f32.mxu0 0.0
        %555 = vmatmul.mubr.f32.gmra.mrb[0].mxu0 %v442
        %v556 = vpop.f32.mrb[0].mxu0
        %v557 = vadd.f32 0.0, %v556
        %v558 = vpop.f32.mrb[0].mxu0
        %v559 = vadd.f32 0.0, %v558
        %560 = vmatprep.mubr.f32.mxu0 0.0
        %561 = vmatmul.mubr.f32.gmra.mrb[0].mxu0 %v443
        %v562 = vpop.f32.mrb[0].mxu0
        %v563 = vadd.f32 0.0, %v562
        %v564 = vpop.f32.mrb[0].mxu0
        %v565 = vadd.f32 0.0, %v564
        %566 = vmatprep.mubr.f32.mxu0 0.0
        %567 = vmatmul.mubr.f32.gmra.mrb[0].mxu0 %v444
        %v568 = vpop.f32.mrb[0].mxu0
        %v569 = vadd.f32 0.0, %v568
        %v570 = vpop.f32.mrb[0].mxu0
        %v571 = vadd.f32 0.0, %v570
        %572 = vmatprep.mubr.f32.mxu0 0.0
        %573 = vmatmul.mubr.f32.gmra.mrb[0].mxu0 %v445
        %v574 = vpop.f32.mrb[0].mxu0
        %v575 = vadd.f32 0.0, %v574
        %v576 = vpop.f32.mrb[0].mxu0
        %v577 = vadd.f32 0.0, %v576
        %578 = vmatprep.mubr.f32.mxu0 0.0
        %579 = vmatmul.mubr.f32.gmra.mrb[0].mxu0 %v446
        %v580 = vpop.f32.mrb[0].mxu0
        %v581 = vadd.f32 0.0, %v580
        %v582 = vpop.f32.mrb[0].mxu0
        %v583 = vadd.f32 0.0, %v582
        %584 = vmatprep.mubr.f32.mxu0 0.0
        %585 = vmatmul.mubr.f32.gmra.mrb[0].mxu0 %v447
        %v586 = vpop.f32.mrb[0].mxu0
        %v587 = vadd.f32 0.0, %v586
        %v588 = vpop.f32.mrb[0].mxu0
        %v589 = vadd.f32 0.0, %v588
        %590 = vmatprep.mubr.f32.mxu0 0.0
        %591 = vmatmul.mubr.f32.gmra.mrb[0].mxu0 %v448
        %v592 = vpop.f32.mrb[0].mxu0
        %v593 = vadd.f32 0.0, %v592
        %v594 = vpop.f32.mrb[0].mxu0
        %v595 = vadd.f32 0.0, %v594
        %596 = vmatprep.mubr.f32.mxu0 0.0
        %597 = vmatmul.mubr.f32.gmra.mrb[0].mxu0 %v449
        %v598 = vpop.f32.mrb[0].mxu0
        %v599 = vadd.f32 0.0, %v598
        %v600 = vpop.f32.mrb[0].mxu0
        %v601 = vadd.f32 0.0, %v600
        %602 = vmatprep.mubr.f32.mxu0 0.0
        %603 = vmatmul.mubr.f32.gmra.mrb[0].mxu0 %v450
        %v604 = vpop.f32.mrb[0].mxu0
        %v605 = vadd.f32 0.0, %v604
        %v606 = vpop.f32.mrb[0].mxu0
        %v607 = vadd.f32 0.0, %v606
        %608 = vmatprep.mubr.f32.mxu0 0.0
        %609 = vmatmul.mubr.f32.gmra.mrb[0].mxu0 %v451
        %v610 = vpop.f32.mrb[0].mxu0
        %v611 = vadd.f32 0.0, %v610
        %v612 = vpop.f32.mrb[0].mxu0
        %v613 = vadd.f32 0.0, %v612
        %614 = vmatprep.mubr.f32.mxu0 0.0
        %615 = vmatmul.mubr.f32.gmra.mrb[0].mxu0 %v452
        %v616 = vpop.f32.mrb[0].mxu0
        %v617 = vadd.f32 0.0, %v616
        %v618 = vpop.f32.mrb[0].mxu0
        %v619 = vadd.f32 0.0, %v618
        %620 = vmatprep.mubr.f32.mxu0 0.0
        %621 = vmatmul.mubr.f32.gmra.mrb[0].mxu0 %v453
        %v622 = vpop.f32.mrb[0].mxu0
        %v623 = vadd.f32 0.0, %v622
        %v624 = vpop.f32.mrb[0].mxu0
        %v625 = vadd.f32 0.0, %v624
        %626 = vmatprep.mubr.f32.mxu0 0.0
        %627 = vmatmul.mubr.f32.gmra.mrb[0].mxu0 %v454
        %v628 = vpop.f32.mrb[0].mxu0
        %v629 = vadd.f32 0.0, %v628
        %v630 = vpop.f32.mrb[0].mxu0
        %v631 = vadd.f32 0.0, %v630
        %632 = vmatprep.mubr.f32.mxu0 0.0
        %633 = vmatmul.mubr.f32.gmra.mrb[0].mxu0 %v455
        %v634 = vpop.f32.mrb[0].mxu0
        %v635 = vadd.f32 0.0, %v634
        %v636 = vpop.f32.mrb[0].mxu0
        %v637 = vadd.f32 0.0, %v636
        %638 = vmatprep.mubr.f32.mxu0 0.0
        %639 = vmatmul.mubr.f32.gmra.mrb[0].mxu0 %v456
        %v640 = vpop.f32.mrb[0].mxu0
        %v641 = vadd.f32 0.0, %v640
        %v642 = vpop.f32.mrb[0].mxu0
        %v643 = vadd.f32 0.0, %v642
        %644 = vmatprep.mubr.f32.mxu0 0.0
        %645 = vmatmul.mubr.f32.gmra.mrb[0].mxu0 %v457
        %v646 = vpop.f32.mrb[0].mxu0
        %v647 = vadd.f32 0.0, %v646
        %v648 = vpop.f32.mrb[0].mxu0
        %v649 = vadd.f32 0.0, %v648
        %650 = vdwg.mxu0
        %v651 = vmax.f32 %v557, 0.0
        %v652 = vmax.f32 %v559, 0.0
        %v653 = vmax.f32 %v563, 0.0
        %v654 = vmax.f32 %v565, 0.0
        %v655 = vmax.f32 %v569, 0.0
        %v656 = vmax.f32 %v571, 0.0
        %v657 = vmax.f32 %v575, 0.0
        %v658 = vmax.f32 %v577, 0.0
        %v659 = vmax.f32 %v581, 0.0
        %v660 = vmax.f32 %v583, 0.0
        %v661 = vmax.f32 %v587, 0.0
        %v662 = vmax.f32 %v589, 0.0
        %v663 = vmax.f32 %v593, 0.0
        %v664 = vmax.f32 %v595, 0.0
        %v665 = vmax.f32 %v599, 0.0
        %v666 = vmax.f32 %v601, 0.0
        %v667 = vmax.f32 %v605, 0.0
        %v668 = vmax.f32 %v607, 0.0
        %v669 = vmax.f32 %v611, 0.0
        %v670 = vmax.f32 %v613, 0.0
        %v671 = vmax.f32 %v617, 0.0
        %v672 = vmax.f32 %v619, 0.0
        %v673 = vmax.f32 %v623, 0.0
        %v674 = vmax.f32 %v625, 0.0
        %v675 = vmax.f32 %v629, 0.0
        %v676 = vmax.f32 %v631, 0.0
        %v677 = vmax.f32 %v635, 0.0
        %v678 = vmax.f32 %v637, 0.0
        %v679 = vmax.f32 %v641, 0.0
        %v680 = vmax.f32 %v643, 0.0
        %v681 = vmax.f32 %v647, 0.0
        %v682 = vmax.f32 %v649, 0.0
        %v683 = vmul.f32 %v651, %v651
        %v684 = vmul.f32 %v652, %v652
        %v685 = vmul.f32 %v653, %v653
        %v686 = vmul.f32 %v654, %v654
        %v687 = vmul.f32 %v655, %v655
        %v688 = vmul.f32 %v656, %v656
        %v689 = vmul.f32 %v657, %v657
        %v690 = vmul.f32 %v658, %v658
        %v691 = vmul.f32 %v659, %v659
        %v692 = vmul.f32 %v660, %v660
        %v693 = vmul.f32 %v661, %v661
        %v694 = vmul.f32 %v662, %v662
        %v695 = vmul.f32 %v663, %v663
        %v696 = vmul.f32 %v664, %v664
        %v697 = vmul.f32 %v665, %v665
        %v698 = vmul.f32 %v666, %v666
        %v699 = vmul.f32 %v667, %v667
        %v700 = vmul.f32 %v668, %v668
        %v701 = vmul.f32 %v669, %v669
        %v702 = vmul.f32 %v670, %v670
        %v703 = vmul.f32 %v671, %v671
        %v704 = vmul.f32 %v672, %v672
        %v705 = vmul.f32 %v673, %v673
        %v706 = vmul.f32 %v674, %v674
        %v707 = vmul.f32 %v675, %v675
        %v708 = vmul.f32 %v676, %v676
        %v709 = vmul.f32 %v677, %v677
        %v710 = vmul.f32 %v678, %v678
        %v711 = vmul.f32 %v679, %v679
        %v712 = vmul.f32 %v680, %v680
        %v713 = vmul.f32 %v681, %v681
        %v714 = vmul.f32 %v682, %v682
        %v715 = vld [vmem:[#allocation2] sm:$0xff]
        %v716 = vld [vmem:[#allocation2 + $0x8] sm:$0xff]
        %v717 = vld [vmem:[#allocation2 + $0x10] sm:$0xff]
        %v718 = vld [vmem:[#allocation2 + $0x18] sm:$0xff]
        %v719 = vld [vmem:[#allocation2 + $0x20] sm:$0xff]
        %v720 = vld [vmem:[#allocation2 + $0x28] sm:$0xff]
        %v721 = vld [vmem:[#allocation2 + $0x30] sm:$0xff]
        %v722 = vld [vmem:[#allocation2 + $0x38] sm:$0xff]
        %v723 = vld [vmem:[#allocation2 + $0x40] sm:$0xff]
        %v724 = vld [vmem:[#allocation2 + $0x48] sm:$0xff]
        %v725 = vld [vmem:[#allocation2 + $0x50] sm:$0xff]
        %v726 = vld [vmem:[#allocation2 + $0x58] sm:$0xff]
        %v727 = vld [vmem:[#allocation2 + $0x60] sm:$0xff]
        %v728 = vld [vmem:[#allocation2 + $0x68] sm:$0xff]
        %v729 = vld [vmem:[#allocation2 + $0x70] sm:$0xff]
        %v730 = vld [vmem:[#allocation2 + $0x78] sm:$0xff]
        %v731 = vld [vmem:[%s306] sm:$0xff]
        %v732 = vld [vmem:[%s306 + $0x8] sm:$0xff]
        %v733 = vld [vmem:[%s306 + $0x10] sm:$0xff]
        %v734 = vld [vmem:[%s306 + $0x18] sm:$0xff]
        %v735 = vld [vmem:[%s306 + $0x20] sm:$0xff]
        %v736 = vld [vmem:[%s306 + $0x28] sm:$0xff]
        %v737 = vld [vmem:[%s306 + $0x30] sm:$0xff]
        %v738 = vld [vmem:[%s306 + $0x38] sm:$0xff]
        %v739 = vld [vmem:[%s306 + $0x40] sm:$0xff]
        %v740 = vld [vmem:[%s306 + $0x48] sm:$0xff]
        %v741 = vld [vmem:[%s306 + $0x50] sm:$0xff]
        %v742 = vld [vmem:[%s306 + $0x58] sm:$0xff]
        %v743 = vld [vmem:[%s306 + $0x60] sm:$0xff]
        %v744 = vld [vmem:[%s306 + $0x68] sm:$0xff]
        %v745 = vld [vmem:[%s306 + $0x70] sm:$0xff]
        %v746 = vld [vmem:[%s306 + $0x78] sm:$0xff]
        %v747 = vld [vmem:[%s306 + $0x80] sm:$0xff]
        %v748 = vld [vmem:[%s306 + $0x88] sm:$0xff]
        %v749 = vld [vmem:[%s306 + $0x90] sm:$0xff]
        %v750 = vld [vmem:[%s306 + $0x98] sm:$0xff]
        %v751 = vld [vmem:[%s306 + $0xa0] sm:$0xff]
        %v752 = vld [vmem:[%s306 + $0xa8] sm:$0xff]
        %v753 = vld [vmem:[%s306 + $0xb0] sm:$0xff]
        %v754 = vld [vmem:[%s306 + $0xb8] sm:$0xff]
        %v755 = vld [vmem:[%s306 + $0xc0] sm:$0xff]
        %v756 = vld [vmem:[%s306 + $0xc8] sm:$0xff]
        %v757 = vld [vmem:[%s306 + $0xd0] sm:$0xff]
        %v758 = vld [vmem:[%s306 + $0xd8] sm:$0xff]
        %v759 = vld [vmem:[%s306 + $0xe0] sm:$0xff]
        %v760 = vld [vmem:[%s306 + $0xe8] sm:$0xff]
        %v761 = vld [vmem:[%s306 + $0xf0] sm:$0xff]
        %v762 = vld [vmem:[%s306 + $0xf8] sm:$0xff]
        %763 = vmatprep.subr.mxu0 0.0
        %764 = vmatpush1.msra.mxu0 %v731
        %765 = vmatprep.subr.mxu0 0.0
        %766 = vmatpush1.msra.mxu0 %v732
        %767 = vmatprep.subr.mxu0 0.0
        %768 = vmatpush1.msra.mxu0 %v733
        %769 = vmatprep.subr.mxu0 0.0
        %770 = vmatpush1.msra.mxu0 %v734
        %771 = vmatprep.subr.mxu0 0.0
        %772 = vmatpush1.msra.mxu0 %v735
        %773 = vmatprep.subr.mxu0 0.0
        %774 = vmatpush1.msra.mxu0 %v736
        %775 = vmatprep.subr.mxu0 0.0
        %776 = vmatpush1.msra.mxu0 %v737
        %777 = vmatprep.subr.mxu0 0.0
        %778 = vmatpush1.msra.mxu0 %v738
        %779 = vmatprep.subr.mxu0 0.0
        %780 = vmatpush1.msra.mxu0 %v739
        %781 = vmatprep.subr.mxu0 0.0
        %782 = vmatpush1.msra.mxu0 %v740
        %783 = vmatprep.subr.mxu0 0.0
        %784 = vmatpush1.msra.mxu0 %v741
        %785 = vmatprep.subr.mxu0 0.0
        %786 = vmatpush1.msra.mxu0 %v742
        %787 = vmatprep.subr.mxu0 0.0
        %788 = vmatpush1.msra.mxu0 %v743
        %789 = vmatprep.subr.mxu0 0.0
        %790 = vmatpush1.msra.mxu0 %v744
        %791 = vmatprep.subr.mxu0 0.0
        %792 = vmatpush1.msra.mxu0 %v745
        %793 = vmatprep.subr.mxu0 0.0
        %794 = vmatpush1.msra.mxu0 %v746
        %795 = vmatprep.subr.mxu0 0.0
        %796 = vmatpush1.msra.mxu0 %v747
        %797 = vmatprep.subr.mxu0 0.0
        %798 = vmatpush1.msra.mxu0 %v748
        %799 = vmatprep.subr.mxu0 0.0
        %800 = vmatpush1.msra.mxu0 %v749
        %801 = vmatprep.subr.mxu0 0.0
        %802 = vmatpush1.msra.mxu0 %v750
        %803 = vmatprep.subr.mxu0 0.0
        %804 = vmatpush1.msra.mxu0 %v751
        %805 = vmatprep.subr.mxu0 0.0
        %806 = vmatpush1.msra.mxu0 %v752
        %807 = vmatprep.subr.mxu0 0.0
        %808 = vmatpush1.msra.mxu0 %v753
        %809 = vmatprep.subr.mxu0 0.0
        %810 = vmatpush1.msra.mxu0 %v754
        %811 = vmatprep.subr.mxu0 0.0
        %812 = vmatpush1.msra.mxu0 %v755
        %813 = vmatprep.subr.mxu0 0.0
        %814 = vmatpush1.msra.mxu0 %v756
        %815 = vmatprep.subr.mxu0 0.0
        %816 = vmatpush1.msra.mxu0 %v757
        %817 = vmatprep.subr.mxu0 0.0
        %818 = vmatpush1.msra.mxu0 %v758
        %819 = vmatprep.subr.mxu0 0.0
        %820 = vmatpush1.msra.mxu0 %v759
        %821 = vmatprep.subr.mxu0 0.0
        %822 = vmatpush1.msra.mxu0 %v760
        %823 = vmatprep.subr.mxu0 0.0
        %824 = vmatpush1.msra.mxu0 %v761
        %825 = vmatprep.subr.mxu0 0.0
        %826 = vmatpush1.msra.mxu0 %v762
        %827 = vmatprep.mubr.f32.mxu0 %v684
        %828 = vmatmul.mubr.f32.gmra.mrb[0].mxu0 %v683
        %v829 = vpop.f32.mrb[0].mxu0
        %v830 = vadd.f32 0.0, %v829
        %v831 = vpop.f32.mrb[0].mxu0
        %832 = vmatprep.mubr.f32.mxu0 %v686
        %833 = vmatmul.mubr.f32.gmra.mrb[0].mxu0 %v685
        %v834 = vpop.f32.mrb[0].mxu0
        %v835 = vadd.f32 0.0, %v834
        %v836 = vpop.f32.mrb[0].mxu0
        %837 = vmatprep.mubr.f32.mxu0 %v688
        %838 = vmatmul.mubr.f32.gmra.mrb[0].mxu0 %v687
        %v839 = vpop.f32.mrb[0].mxu0
        %v840 = vadd.f32 0.0, %v839
        %v841 = vpop.f32.mrb[0].mxu0
        %842 = vmatprep.mubr.f32.mxu0 %v690
        %843 = vmatmul.mubr.f32.gmra.mrb[0].mxu0 %v689
        %v844 = vpop.f32.mrb[0].mxu0
        %v845 = vadd.f32 0.0, %v844
        %v846 = vpop.f32.mrb[0].mxu0
        %847 = vmatprep.mubr.f32.mxu0 %v692
        %848 = vmatmul.mubr.f32.gmra.mrb[0].mxu0 %v691
        %v849 = vpop.f32.mrb[0].mxu0
        %v850 = vadd.f32 0.0, %v849
        %v851 = vpop.f32.mrb[0].mxu0
        %852 = vmatprep.mubr.f32.mxu0 %v694
        %853 = vmatmul.mubr.f32.gmra.mrb[0].mxu0 %v693
        %v854 = vpop.f32.mrb[0].mxu0
        %v855 = vadd.f32 0.0, %v854
        %v856 = vpop.f32.mrb[0].mxu0
        %857 = vmatprep.mubr.f32.mxu0 %v696
        %858 = vmatmul.mubr.f32.gmra.mrb[0].mxu0 %v695
        %v859 = vpop.f32.mrb[0].mxu0
        %v860 = vadd.f32 0.0, %v859
        %v861 = vpop.f32.mrb[0].mxu0
        %862 = vmatprep.mubr.f32.mxu0 %v698
        %863 = vmatmul.mubr.f32.gmra.mrb[0].mxu0 %v697
        %v864 = vpop.f32.mrb[0].mxu0
        %v865 = vadd.f32 0.0, %v864
        %v866 = vpop.f32.mrb[0].mxu0
        %867 = vmatprep.mubr.f32.mxu0 %v700
        %868 = vmatmul.mubr.f32.gmra.mrb[0].mxu0 %v699
        %v869 = vpop.f32.mrb[0].mxu0
        %v870 = vadd.f32 0.0, %v869
        %v871 = vpop.f32.mrb[0].mxu0
        %872 = vmatprep.mubr.f32.mxu0 %v702
        %873 = vmatmul.mubr.f32.gmra.mrb[0].mxu0 %v701
        %v874 = vpop.f32.mrb[0].mxu0
        %v875 = vadd.f32 0.0, %v874
        %v876 = vpop.f32.mrb[0].mxu0
        %877 = vmatprep.mubr.f32.mxu0 %v704
        %878 = vmatmul.mubr.f32.gmra.mrb[0].mxu0 %v703
        %v879 = vpop.f32.mrb[0].mxu0
        %v880 = vadd.f32 0.0, %v879
        %v881 = vpop.f32.mrb[0].mxu0
        %882 = vmatprep.mubr.f32.mxu0 %v706
        %883 = vmatmul.mubr.f32.gmra.mrb[0].mxu0 %v705
        %v884 = vpop.f32.mrb[0].mxu0
        %v885 = vadd.f32 0.0, %v884
        %v886 = vpop.f32.mrb[0].mxu0
        %887 = vmatprep.mubr.f32.mxu0 %v708
        %888 = vmatmul.mubr.f32.gmra.mrb[0].mxu0 %v707
        %v889 = vpop.f32.mrb[0].mxu0
        %v890 = vadd.f32 0.0, %v889
        %v891 = vpop.f32.mrb[0].mxu0
        %892 = vmatprep.mubr.f32.mxu0 %v710
        %893 = vmatmul.mubr.f32.gmra.mrb[0].mxu0 %v709
        %v894 = vpop.f32.mrb[0].mxu0
        %v895 = vadd.f32 0.0, %v894
        %v896 = vpop.f32.mrb[0].mxu0
        %897 = vmatprep.mubr.f32.mxu0 %v712
        %898 = vmatmul.mubr.f32.gmra.mrb[0].mxu0 %v711
        %v899 = vpop.f32.mrb[0].mxu0
        %v900 = vadd.f32 0.0, %v899
        %v901 = vpop.f32.mrb[0].mxu0
        %902 = vmatprep.mubr.f32.mxu0 %v714
        %903 = vmatmul.mubr.f32.gmra.mrb[0].mxu0 %v713
        %v904 = vpop.f32.mrb[0].mxu0
        %v905 = vadd.f32 0.0, %v904
        %v906 = vpop.f32.mrb[0].mxu0
        %907 = vdwg.mxu0
        %v908 = vadd.f32 %v715, %v830
        %v909 = vadd.f32 %v716, %v835
        %v910 = vadd.f32 %v717, %v840
        %v911 = vadd.f32 %v718, %v845
        %v912 = vadd.f32 %v719, %v850
        %v913 = vadd.f32 %v720, %v855
        %v914 = vadd.f32 %v721, %v860
        %v915 = vadd.f32 %v722, %v865
        %v916 = vadd.f32 %v723, %v870
        %v917 = vadd.f32 %v724, %v875
        %v918 = vadd.f32 %v725, %v880
        %v919 = vadd.f32 %v726, %v885
        %v920 = vadd.f32 %v727, %v890
        %v921 = vadd.f32 %v728, %v895
        %v922 = vadd.f32 %v729, %v900
        %v923 = vadd.f32 %v730, %v905
        %924 = vst [vmem:[#allocation2] sm:$0xff] %v908
        %925 = vst [vmem:[#allocation2 + $0x8] sm:$0xff] %v909
        %926 = vst [vmem:[#allocation2 + $0x10] sm:$0xff] %v910
        %927 = vst [vmem:[#allocation2 + $0x18] sm:$0xff] %v911
        %928 = vst [vmem:[#allocation2 + $0x20] sm:$0xff] %v912
        %929 = vst [vmem:[#allocation2 + $0x28] sm:$0xff] %v913
        %930 = vst [vmem:[#allocation2 + $0x30] sm:$0xff] %v914
        %931 = vst [vmem:[#allocation2 + $0x38] sm:$0xff] %v915
        %932 = vst [vmem:[#allocation2 + $0x40] sm:$0xff] %v916
        %933 = vst [vmem:[#allocation2 + $0x48] sm:$0xff] %v917
        %934 = vst [vmem:[#allocation2 + $0x50] sm:$0xff] %v918
        %935 = vst [vmem:[#allocation2 + $0x58] sm:$0xff] %v919
        %936 = vst [vmem:[#allocation2 + $0x60] sm:$0xff] %v920
        %937 = vst [vmem:[#allocation2 + $0x68] sm:$0xff] %v921
        %938 = vst [vmem:[#allocation2 + $0x70] sm:$0xff] %v922
        %939 = vst [vmem:[#allocation2 + $0x78] sm:$0xff] %v923
        %p940 = scmp.eq.s32.totalorder %s22, 1
        // Predicated region
        $region60: #{block_forward_pallas.7} parent=50 // pred_check
          %p941 = pneg %p940
        $region61: #{block_forward_pallas.7} parent=50 // pred_check_branch
          %943 = sbr.rel (%p941) target = $region63
        $region62: #{block_forward_pallas.7} parent=50 // pred_region
          %v944 = vld [vmem:[#allocation2] sm:$0xff]
          %v945 = vld [vmem:[#allocation2 + $0x8] sm:$0xff]
          %v946 = vld [vmem:[#allocation2 + $0x10] sm:$0xff]
          %v947 = vld [vmem:[#allocation2 + $0x18] sm:$0xff]
          %v948 = vld [vmem:[#allocation2 + $0x20] sm:$0xff]
          %v949 = vld [vmem:[#allocation2 + $0x28] sm:$0xff]
          %v950 = vld [vmem:[#allocation2 + $0x30] sm:$0xff]
          %v951 = vld [vmem:[#allocation2 + $0x38] sm:$0xff]
          %v952 = vld [vmem:[#allocation2 + $0x40] sm:$0xff]
          %v953 = vld [vmem:[#allocation2 + $0x48] sm:$0xff]
          %v954 = vld [vmem:[#allocation2 + $0x50] sm:$0xff]
          %v955 = vld [vmem:[#allocation2 + $0x58] sm:$0xff]
          %v956 = vld [vmem:[#allocation2 + $0x60] sm:$0xff]
          %v957 = vld [vmem:[#allocation2 + $0x68] sm:$0xff]
          %v958 = vld [vmem:[#allocation2 + $0x70] sm:$0xff]
          %v959 = vld [vmem:[#allocation2 + $0x78] sm:$0xff]
          %v960 = vadd.f32 %v329, %v944
          %v961 = vadd.f32 %v330, %v945
          %v962 = vadd.f32 %v331, %v946
          %v963 = vadd.f32 %v332, %v947
          %v964 = vadd.f32 %v333, %v948
          %v965 = vadd.f32 %v334, %v949
          %v966 = vadd.f32 %v335, %v950
          %v967 = vadd.f32 %v336, %v951
          %v968 = vadd.f32 %v337, %v952
          %v969 = vadd.f32 %v338, %v953
          %v970 = vadd.f32 %v339, %v954
          %v971 = vadd.f32 %v340, %v955
          %v972 = vadd.f32 %v341, %v956
          %v973 = vadd.f32 %v342, %v957
          %v974 = vadd.f32 %v343, %v958
          %v975 = vadd.f32 %v344, %v959
          %976 = vst [vmem:[%s294] sm:$0xff] %v960
          %977 = vst [vmem:[%s294 + $0x8] sm:$0xff] %v961
          %978 = vst [vmem:[%s294 + $0x10] sm:$0xff] %v962
          %979 = vst [vmem:[%s294 + $0x18] sm:$0xff] %v963
          %980 = vst [vmem:[%s294 + $0x20] sm:$0xff] %v964
          %981 = vst [vmem:[%s294 + $0x28] sm:$0xff] %v965
          %982 = vst [vmem:[%s294 + $0x30] sm:$0xff] %v966
          %983 = vst [vmem:[%s294 + $0x38] sm:$0xff] %v967
          %984 = vst [vmem:[%s294 + $0x40] sm:$0xff] %v968
          %985 = vst [vmem:[%s294 + $0x48] sm:$0xff] %v969
          %986 = vst [vmem:[%s294 + $0x50] sm:$0xff] %v970
          %987 = vst [vmem:[%s294 + $0x58] sm:$0xff] %v971
          %988 = vst [vmem:[%s294 + $0x60] sm:$0xff] %v972
          %989 = vst [vmem:[%s294 + $0x68] sm:$0xff] %v973
          %990 = vst [vmem:[%s294 + $0x70] sm:$0xff] %v974
          %991 = vst [vmem:[%s294 + $0x78] sm:$0xff] %v975
        $region63: #{block_forward_pallas.7} parent=50 // pred_fallthru
          _
        %s992 = sand.u32 %s115, 1
        %s993 = scalar_lea.sflag [#allocation5], %s992
        %s994 = sand.u32 %s115, 1
        %s995 = smul.addr %s994, 128
        %s996 = scalar_lea.vmem [#allocation4], %s995
        // Predicated region
        $region64: #{block_forward_pallas.7} parent=50 // pred_check
          %p997 = pneg %p125
        $region65: #{block_forward_pallas.7} parent=50 // pred_check_branch
          %999 = sbr.rel (%p997) target = $region67
        $region66: #{block_forward_pallas.7} parent=50 // pred_region
          %s1000 = smul.u32 16, %s21
          %s1002 = ssub.s32 2048, 2048
          %1003 = vsyncadd %s993, %s1002
          %s1004 = smul.addr %s1000, 128
          %s1005 = scalar_lea.hbm %s3, %s1004
          %s1006 = sshll.u32 %s996, 4
          %s1007 = int_to_ptr.vmem [resolvable:$true] %s1006
          %1012 = dma.vmem_to_hbm [thread:$0]  %s1007, 2048, %s1005, %s993, 128, 128, 8
        $region67: #{block_forward_pallas.7} parent=50 // pred_fallthru
          _
      $region51: #{block_forward_pallas.7} parent=5 // pred_fallthru
        _
      %p1013 = scmp.le.s32.totalorder 2, %s12
      // Predicated region
      $region68: #{block_forward_pallas.7} parent=5 // pred_check
        %p1014 = pneg %p1013
      $region69: #{block_forward_pallas.7} parent=5 // pred_check_branch
        %1016 = sbr.rel (%p1014) target = $region71
      $region70: #{block_forward_pallas.7} parent=5 // pred_region
        %s1017 = ssub.s32 %s12, 2
        // Predicated region
        $region72: #{block_forward_pallas.7} parent=70 // pred_check
          %p1018 = pneg %p131
        $region73: #{block_forward_pallas.7} parent=70 // pred_check_branch
          %1020 = sbr.rel (%p1018) target = $region75
        $region74: #{block_forward_pallas.7} parent=70 // pred_region
          %s1021 = sand.u32 %s116, 1
          %s1022 = scalar_lea.sflag [#allocation5], %s1021
          %s1023 = sand.u32 %s116, 1
          %s1024 = smul.addr %s1023, 128
          %s1025 = scalar_lea.vmem [#allocation4], %s1024
          %1026 = dma.done %s1022, 2048
        $region75: #{block_forward_pallas.7} parent=70 // pred_fallthru
          _
      $region71: #{block_forward_pallas.7} parent=5 // pred_fallthru
        _
    $region6: #{block_forward_pallas.7} parent=1 // loop_footer
      %s16 = sadd.s32 1, %s12
    $region7: #{block_forward_pallas.7} parent=1 // loop_footer_branch
      %11 = sbr.rel target = $region3
    $region8: #{block_forward_pallas.7} parent=1 // loop_exit
      _
    %1027 = vsyncpa [#allocation5], 1
    %s1028 = scalar_lea.sflag [#allocation5], 1
    %1029 = vsyncpa %s1028, 1

// kernel: block_forward_pallas.5
$region0: #{block_forward_pallas.5}
  #allocation0 [shape = 'u32[]', space=smem, size = 0x4, offset = 0x4, fixed_abs, tag = 'smem constant byte address 0x4 - core index']
  #allocation1 [shape = 'u32[144,128]{1,0:T(1,128)}', space=vmem, size = 0x12000, scoped, tag = 'internal scratch']
  #allocation2 [shape = 'f32[4,128,1]{2,1,0:T(8,128)}', space=vmem, size = 0x40000, scoped, tag = 'scratch operand']
  #allocation3 [shape = 'f32[4,128,1]{2,1,0:T(8,128)}', space=vmem, size = 0x40000, scoped, tag = 'scratch operand']
  #allocation4 [shape = 'f32[4,128,32]{2,1,0:T(8,128)}', space=vmem, size = 0x40000, scoped, tag = 'scratch operand']
  %s0 = inlined_call_operand.vmem [shape: f32[4,256,32], index: 0, kind: input, shape index: {}]
  %s1 = inlined_call_operand.vmem [shape: f32[4,256,32], index: 1, kind: input, shape index: {}]
  %s2 = inlined_call_operand.vmem [shape: f32[4,256,32], index: 2, kind: input, shape index: {}]
  %s3 = inlined_call_operand.vmem [shape: f32[4,256,32], index: 3, kind: output, shape index: {}]
  %s4 = sld [smem:[#allocation0]]
  $region205: #{block_forward_pallas.5} parent=0
    _
  %s6 = ssub.s32 1, %s4
  %s7 = scalar_select 0, %s6, %s4
  $region1: #{block_forward_pallas.5} parent=0
    #allocation5 [shape = 'u8[524288]{0}', space=vmem, size = 0x80000, scoped, tag = 'input window, operand 0']
    #allocation6 [shape = 'u8[524288]{0}', space=vmem, size = 0x80000, scoped, tag = 'input window, operand 1']
    #allocation7 [shape = 'u8[524288]{0}', space=vmem, size = 0x80000, scoped, tag = 'input window, operand 2']
    #allocation8 [shape = 'u8[524288]{0}', space=vmem, size = 0x80000, scoped, tag = 'output window, operand 0']
    loop: start=0, step=1, limit=6
    $region2: #{block_forward_pallas.5} parent=1 // loop_pre_header
      _
    $region3: #{block_forward_pallas.5} parent=1 // loop_header
      %s9 = sphi 0, %s13
      %p10 = scmp.ge.s32.totalorder %s9, 6
      %s16 = sphi 0, %s28
      %s17 = sphi 0, %s24
      %s18 = sphi 0, %s16
      %s19 = sphi 0, %s17
      %s20 = sphi 0, %s18
      %s21 = sphi 0, %s19
      %s31 = sphi 0, %s33
      %s34 = sphi 0, %s31
      %s35 = sphi 0, %s34
      %s51 = sphi 0, %s35
      %s57 = sphi 0, %s59
      %s60 = sphi 0, %s57
      %s61 = sphi 0, %s60
      %s77 = sphi 0, %s61
      %s83 = sphi 0, %s85
      %s86 = sphi 0, %s83
      %s87 = sphi 0, %s86
      %s103 = sphi 0, %s87
      %s109 = sphi 0, %s111
      %s112 = sphi 0, %s109
      %s113 = sphi 0, %s112
      %s129 = sphi 0, %s113
    $region4: #{block_forward_pallas.5} parent=1 // loop_header_branch
      %12 = sbr.rel (%p10) target = $region8
    $region5: #{block_forward_pallas.5} parent=1 // loop_body
      %s14 = ssub.s32 %s9, 1
      %s15 = ssub.s32 %s9, 2
      %s22 = sadd.s32 1, %s17
      %p23 = scmp.ge.s32.totalorder %s22, 2
      %s24 = scalar_select %p23, 0, %s22
      %s25 = sadd.s32 1, %s16
      %s26 = scalar_select %p23, %s25, %s16
      %p27 = scmp.ge.s32.totalorder %s26, 2
      %s28 = scalar_select %p27, 0, %s26
      %s29 = ssub.s32 %s16, %s28
      %p30 = scmp.eq.s32.totalorder %s29, 0
      %s32 = sadd.s32 %s31, 1
      %s33 = scalar_select %p30, %s31, %s32
      %p36 = pneg %p30
      %p37 = scmp.eq.s32.totalorder %s9, 3
      %p38 = por %p36, %p37
      %p39 = scmp.ne.s32.totalorder %s31, %s34
      %p40 = scmp.eq.s32.totalorder %s9, 0
      %p41 = por %p39, %p40
      %p42 = scmp.ne.s32.totalorder %s31, %s34
      %p43 = scmp.eq.s32.totalorder %s14, 3
      %p44 = por %p42, %p43
      %p45 = scmp.ne.s32.totalorder %s34, %s35
      %p46 = scmp.eq.s32.totalorder %s14, 0
      %p47 = por %p45, %p46
      %p48 = scmp.ne.s32.totalorder %s34, %s35
      %p49 = scmp.eq.s32.totalorder %s15, 3
      %p50 = por %p48, %p49
      %p52 = scmp.ne.s32.totalorder %s35, %s51
      %p53 = scmp.eq.s32.totalorder %s15, 0
      %p54 = por %p52, %p53
      %s55 = ssub.s32 %s17, %s24
      %p56 = scmp.eq.s32.totalorder %s55, 0
      %s58 = sadd.s32 %s57, 1
      %s59 = scalar_select %p56, %s57, %s58
      %p62 = pneg %p56
      %p63 = scmp.eq.s32.totalorder %s9, 3
      %p64 = por %p62, %p63
      %p65 = scmp.ne.s32.totalorder %s57, %s60
      %p66 = scmp.eq.s32.totalorder %s9, 0
      %p67 = por %p65, %p66
      %p68 = scmp.ne.s32.totalorder %s57, %s60
      %p69 = scmp.eq.s32.totalorder %s14, 3
      %p70 = por %p68, %p69
      %p71 = scmp.ne.s32.totalorder %s60, %s61
      %p72 = scmp.eq.s32.totalorder %s14, 0
      %p73 = por %p71, %p72
      %p74 = scmp.ne.s32.totalorder %s60, %s61
      %p75 = scmp.eq.s32.totalorder %s15, 3
      %p76 = por %p74, %p75
      %p78 = scmp.ne.s32.totalorder %s61, %s77
      %p79 = scmp.eq.s32.totalorder %s15, 0
      %p80 = por %p78, %p79
      %s81 = ssub.s32 %s17, %s24
      %p82 = scmp.eq.s32.totalorder %s81, 0
      %s84 = sadd.s32 %s83, 1
      %s85 = scalar_select %p82, %s83, %s84
      %p88 = pneg %p82
      %p89 = scmp.eq.s32.totalorder %s9, 3
      %p90 = por %p88, %p89
      %p91 = scmp.ne.s32.totalorder %s83, %s86
      %p92 = scmp.eq.s32.totalorder %s9, 0
      %p93 = por %p91, %p92
      %p94 = scmp.ne.s32.totalorder %s83, %s86
      %p95 = scmp.eq.s32.totalorder %s14, 3
      %p96 = por %p94, %p95
      %p97 = scmp.ne.s32.totalorder %s86, %s87
      %p98 = scmp.eq.s32.totalorder %s14, 0
      %p99 = por %p97, %p98
      %p100 = scmp.ne.s32.totalorder %s86, %s87
      %p101 = scmp.eq.s32.totalorder %s15, 3
      %p102 = por %p100, %p101
      %p104 = scmp.ne.s32.totalorder %s87, %s103
      %p105 = scmp.eq.s32.totalorder %s15, 0
      %p106 = por %p104, %p105
      %s107 = ssub.s32 %s16, %s28
      %p108 = scmp.eq.s32.totalorder %s107, 0
      %s110 = sadd.s32 %s109, 1
      %s111 = scalar_select %p108, %s109, %s110
      %p114 = pneg %p108
      %p115 = scmp.eq.s32.totalorder %s9, 3
      %p116 = por %p114, %p115
      %p117 = scmp.ne.s32.totalorder %s109, %s112
      %p118 = scmp.eq.s32.totalorder %s9, 0
      %p119 = por %p117, %p118
      %p120 = scmp.ne.s32.totalorder %s109, %s112
      %p121 = scmp.eq.s32.totalorder %s14, 3
      %p122 = por %p120, %p121
      %p123 = scmp.ne.s32.totalorder %s112, %s113
      %p124 = scmp.eq.s32.totalorder %s14, 0
      %p125 = por %p123, %p124
      %p126 = scmp.ne.s32.totalorder %s112, %s113
      %p127 = scmp.eq.s32.totalorder %s15, 3
      %p128 = por %p126, %p127
      %p130 = scmp.ne.s32.totalorder %s113, %s129
      %p131 = scmp.eq.s32.totalorder %s15, 0
      %p132 = por %p130, %p131
      %p133 = scmp.le.s32.totalorder 1, %s9
      %p134 = scmp.lt.s32.totalorder %s9, 5
      %p135 = pnand %p133, %p134
      %p136 = pneg %p135
      // Predicated region
      $region9: #{block_forward_pallas.5} parent=5 // pred_check
        _
      $region10: #{block_forward_pallas.5} parent=5 // pred_check_branch
        %138 = sbr.rel (%p135) target = $region12
      $region11: #{block_forward_pallas.5} parent=5 // pred_region
        %s139 = ssub.s32 %s9, 1
      $region12: #{block_forward_pallas.5} parent=5 // pred_fallthru
        _
      %p140 = scmp.lt.s32.totalorder %s9, 4
      // Predicated region
      $region13: #{block_forward_pallas.5} parent=5 // pred_check
        %p141 = pneg %p140
      $region14: #{block_forward_pallas.5} parent=5 // pred_check_branch
        %143 = sbr.rel (%p141) target = $region16
      $region15: #{block_forward_pallas.5} parent=5 // pred_region
        // Predicated region
        $region17: #{block_forward_pallas.5} parent=15 // pred_check
          %p144 = pneg %p41
        $region18: #{block_forward_pallas.5} parent=15 // pred_check_branch
          %146 = sbr.rel (%p144) target = $region20
        $region19: #{block_forward_pallas.5} parent=15 // pred_region
          %s147 = sand.u32 %s31, 1
          %s148 = sand.u32 %s31, 1
          %s149 = smul.addr %s148, 512
          %s150 = scalar_lea.vmem [#allocation5], %s149
          %s151 = smul.u32 16, %s16
          %s152 = smul.addr %s151, 8
          %s153 = scalar_lea.vmem %s0, %s152
          // Predicated region
          $region21: #{block_forward_pallas.5} parent=19 // pred_check
            _
          $region22: #{block_forward_pallas.5} parent=19 // pred_check_branch
            %155 = sbr.rel (0) target = $region24
          $region23: #{block_forward_pallas.5} parent=19 // pred_region
            // Predicated region
            $region25: #{block_forward_pallas.5} parent=23 // pred_check
              _
            $region26: #{block_forward_pallas.5} parent=23 // pred_check_branch
              %157 = sbr.rel (0) target = $region28
            $region27: #{block_forward_pallas.5} parent=23 // pred_region
              // Predicated region
              $region40: #{block_forward_pallas.5} parent=27 // pred_check
                _
              $region41: #{block_forward_pallas.5} parent=27 // pred_check_branch
                %298 = sbr.rel (0) target = $region43
              $region42: #{block_forward_pallas.5} parent=27 // pred_region
                loop: start=0, step=1, limit=1
                $region44: #{block_forward_pallas.5} parent=42 // loop_pre_header
                  _
                $region45: #{block_forward_pallas.5} parent=42 // loop_header
                  %s300 = sphi 0, %s304
                  %p301 = scmp.ge.s32.totalorder %s300, 1
                  %s305 = sphi %s153, %s153
                  %s306 = sphi %s150, %s150
                $region46: #{block_forward_pallas.5} parent=42 // loop_header_branch
                  %303 = sbr.rel (%p301) target = $region50
                $region47: #{block_forward_pallas.5} parent=42 // loop_body
                  %v307 = vld [vmem:[%s305] sm:$0xff]
                  %308 = vst [vmem:[%s306] sm:$0xff] %v307
                  %v309 = vld [vmem:[%s305 + $0x8] sm:$0xff]
                  %310 = vst [vmem:[%s306 + $0x8] sm:$0xff] %v309
                  %v311 = vld [vmem:[%s305 + $0x10] sm:$0xff]
                  %312 = vst [vmem:[%s306 + $0x10] sm:$0xff] %v311
                  %v313 = vld [vmem:[%s305 + $0x18] sm:$0xff]
                  %314 = vst [vmem:[%s306 + $0x18] sm:$0xff] %v313
                  %v315 = vld [vmem:[%s305 + $0x20] sm:$0xff]
                  %316 = vst [vmem:[%s306 + $0x20] sm:$0xff] %v315
                  %v317 = vld [vmem:[%s305 + $0x28] sm:$0xff]
                  %318 = vst [vmem:[%s306 + $0x28] sm:$0xff] %v317
                  %v319 = vld [vmem:[%s305 + $0x30] sm:$0xff]
                  %320 = vst [vmem:[%s306 + $0x30] sm:$0xff] %v319
                  %v321 = vld [vmem:[%s305 + $0x38] sm:$0xff]
                  %322 = vst [vmem:[%s306 + $0x38] sm:$0xff] %v321
                  %v323 = vld [vmem:[%s305 + $0x40] sm:$0xff]
                  %324 = vst [vmem:[%s306 + $0x40] sm:$0xff] %v323
                  %v325 = vld [vmem:[%s305 + $0x48] sm:$0xff]
                  %326 = vst [vmem:[%s306 + $0x48] sm:$0xff] %v325
                  %v327 = vld [vmem:[%s305 + $0x50] sm:$0xff]
                  %328 = vst [vmem:[%s306 + $0x50] sm:$0xff] %v327
                  %v329 = vld [vmem:[%s305 + $0x58] sm:$0xff]
                  %330 = vst [vmem:[%s306 + $0x58] sm:$0xff] %v329
                  %v331 = vld [vmem:[%s305 + $0x60] sm:$0xff]
                  %332 = vst [vmem:[%s306 + $0x60] sm:$0xff] %v331
                  %v333 = vld [vmem:[%s305 + $0x68] sm:$0xff]
                  %334 = vst [vmem:[%s306 + $0x68] sm:$0xff] %v333
                  %v335 = vld [vmem:[%s305 + $0x70] sm:$0xff]
                  %336 = vst [vmem:[%s306 + $0x70] sm:$0xff] %v335
                  %v337 = vld [vmem:[%s305 + $0x78] sm:$0xff]
                  %338 = vst [vmem:[%s306 + $0x78] sm:$0xff] %v337
                  %v339 = vld [vmem:[%s305 + $0x100] sm:$0xff]
                  %340 = vst [vmem:[%s306 + $0x80] sm:$0xff] %v339
                  %v341 = vld [vmem:[%s305 + $0x108] sm:$0xff]
                  %342 = vst [vmem:[%s306 + $0x88] sm:$0xff] %v341
                  %v343 = vld [vmem:[%s305 + $0x110] sm:$0xff]
                  %344 = vst [vmem:[%s306 + $0x90] sm:$0xff] %v343
                  %v345 = vld [vmem:[%s305 + $0x118] sm:$0xff]
                  %346 = vst [vmem:[%s306 + $0x98] sm:$0xff] %v345
                  %v347 = vld [vmem:[%s305 + $0x120] sm:$0xff]
                  %348 = vst [vmem:[%s306 + $0xa0] sm:$0xff] %v347
                  %v349 = vld [vmem:[%s305 + $0x128] sm:$0xff]
                  %350 = vst [vmem:[%s306 + $0xa8] sm:$0xff] %v349
                  %v351 = vld [vmem:[%s305 + $0x130] sm:$0xff]
                  %352 = vst [vmem:[%s306 + $0xb0] sm:$0xff] %v351
                  %v353 = vld [vmem:[%s305 + $0x138] sm:$0xff]
                  %354 = vst [vmem:[%s306 + $0xb8] sm:$0xff] %v353
                  %v355 = vld [vmem:[%s305 + $0x140] sm:$0xff]
                  %356 = vst [vmem:[%s306 + $0xc0] sm:$0xff] %v355
                  %v357 = vld [vmem:[%s305 + $0x148] sm:$0xff]
                  %358 = vst [vmem:[%s306 + $0xc8] sm:$0xff] %v357
                  %v359 = vld [vmem:[%s305 + $0x150] sm:$0xff]
                  %360 = vst [vmem:[%s306 + $0xd0] sm:$0xff] %v359
                  %v361 = vld [vmem:[%s305 + $0x158] sm:$0xff]
                  %362 = vst [vmem:[%s306 + $0xd8] sm:$0xff] %v361
                  %v363 = vld [vmem:[%s305 + $0x160] sm:$0xff]
                  %364 = vst [vmem:[%s306 + $0xe0] sm:$0xff] %v363
                  %v365 = vld [vmem:[%s305 + $0x168] sm:$0xff]
                  %366 = vst [vmem:[%s306 + $0xe8] sm:$0xff] %v365
                  %v367 = vld [vmem:[%s305 + $0x170] sm:$0xff]
                  %368 = vst [vmem:[%s306 + $0xf0] sm:$0xff] %v367
                  %v369 = vld [vmem:[%s305 + $0x178] sm:$0xff]
                  %370 = vst [vmem:[%s306 + $0xf8] sm:$0xff] %v369
                  %v371 = vld [vmem:[%s305 + $0x200] sm:$0xff]
                  %372 = vst [vmem:[%s306 + $0x100] sm:$0xff] %v371
                  %v373 = vld [vmem:[%s305 + $0x208] sm:$0xff]
                  %374 = vst [vmem:[%s306 + $0x108] sm:$0xff] %v373
                  %v375 = vld [vmem:[%s305 + $0x210] sm:$0xff]
                  %376 = vst [vmem:[%s306 + $0x110] sm:$0xff] %v375
                  %v377 = vld [vmem:[%s305 + $0x218] sm:$0xff]
                  %378 = vst [vmem:[%s306 + $0x118] sm:$0xff] %v377
                  %v379 = vld [vmem:[%s305 + $0x220] sm:$0xff]
                  %380 = vst [vmem:[%s306 + $0x120] sm:$0xff] %v379
                  %v381 = vld [vmem:[%s305 + $0x228] sm:$0xff]
                  %382 = vst [vmem:[%s306 + $0x128] sm:$0xff] %v381
                  %v383 = vld [vmem:[%s305 + $0x230] sm:$0xff]
                  %384 = vst [vmem:[%s306 + $0x130] sm:$0xff] %v383
                  %v385 = vld [vmem:[%s305 + $0x238] sm:$0xff]
                  %386 = vst [vmem:[%s306 + $0x138] sm:$0xff] %v385
                  %v387 = vld [vmem:[%s305 + $0x240] sm:$0xff]
                  %388 = vst [vmem:[%s306 + $0x140] sm:$0xff] %v387
                  %v389 = vld [vmem:[%s305 + $0x248] sm:$0xff]
                  %390 = vst [vmem:[%s306 + $0x148] sm:$0xff] %v389
                  %v391 = vld [vmem:[%s305 + $0x250] sm:$0xff]
                  %392 = vst [vmem:[%s306 + $0x150] sm:$0xff] %v391
                  %v393 = vld [vmem:[%s305 + $0x258] sm:$0xff]
                  %394 = vst [vmem:[%s306 + $0x158] sm:$0xff] %v393
                  %v395 = vld [vmem:[%s305 + $0x260] sm:$0xff]
                  %396 = vst [vmem:[%s306 + $0x160] sm:$0xff] %v395
                  %v397 = vld [vmem:[%s305 + $0x268] sm:$0xff]
                  %398 = vst [vmem:[%s306 + $0x168] sm:$0xff] %v397
                  %v399 = vld [vmem:[%s305 + $0x270] sm:$0xff]
                  %400 = vst [vmem:[%s306 + $0x170] sm:$0xff] %v399
                  %v401 = vld [vmem:[%s305 + $0x278] sm:$0xff]
                  %402 = vst [vmem:[%s306 + $0x178] sm:$0xff] %v401
                  %v403 = vld [vmem:[%s305 + $0x300] sm:$0xff]
                  %404 = vst [vmem:[%s306 + $0x180] sm:$0xff] %v403
                  %v405 = vld [vmem:[%s305 + $0x308] sm:$0xff]
                  %406 = vst [vmem:[%s306 + $0x188] sm:$0xff] %v405
                  %v407 = vld [vmem:[%s305 + $0x310] sm:$0xff]
                  %408 = vst [vmem:[%s306 + $0x190] sm:$0xff] %v407
                  %v409 = vld [vmem:[%s305 + $0x318] sm:$0xff]
                  %410 = vst [vmem:[%s306 + $0x198] sm:$0xff] %v409
                  %v411 = vld [vmem:[%s305 + $0x320] sm:$0xff]
                  %412 = vst [vmem:[%s306 + $0x1a0] sm:$0xff] %v411
                  %v413 = vld [vmem:[%s305 + $0x328] sm:$0xff]
                  %414 = vst [vmem:[%s306 + $0x1a8] sm:$0xff] %v413
                  %v415 = vld [vmem:[%s305 + $0x330] sm:$0xff]
                  %416 = vst [vmem:[%s306 + $0x1b0] sm:$0xff] %v415
                  %v417 = vld [vmem:[%s305 + $0x338] sm:$0xff]
                  %418 = vst [vmem:[%s306 + $0x1b8] sm:$0xff] %v417
                  %v419 = vld [vmem:[%s305 + $0x340] sm:$0xff]
                  %420 = vst [vmem:[%s306 + $0x1c0] sm:$0xff] %v419
                  %v421 = vld [vmem:[%s305 + $0x348] sm:$0xff]
                  %422 = vst [vmem:[%s306 + $0x1c8] sm:$0xff] %v421
                  %v423 = vld [vmem:[%s305 + $0x350] sm:$0xff]
                  %424 = vst [vmem:[%s306 + $0x1d0] sm:$0xff] %v423
                  %v425 = vld [vmem:[%s305 + $0x358] sm:$0xff]
                  %426 = vst [vmem:[%s306 + $0x1d8] sm:$0xff] %v425
                  %v427 = vld [vmem:[%s305 + $0x360] sm:$0xff]
                  %428 = vst [vmem:[%s306 + $0x1e0] sm:$0xff] %v427
                  %v429 = vld [vmem:[%s305 + $0x368] sm:$0xff]
                  %430 = vst [vmem:[%s306 + $0x1e8] sm:$0xff] %v429
                  %v431 = vld [vmem:[%s305 + $0x370] sm:$0xff]
                  %432 = vst [vmem:[%s306 + $0x1f0] sm:$0xff] %v431
                  %v433 = vld [vmem:[%s305 + $0x378] sm:$0xff]
                  %434 = vst [vmem:[%s306 + $0x1f8] sm:$0xff] %v433
                $region48: #{block_forward_pallas.5} parent=42 // loop_footer
                  %s304 = sadd.s32 1, %s300
                $region49: #{block_forward_pallas.5} parent=42 // loop_footer_branch
                  %299 = sbr.rel target = $region45
                $region50: #{block_forward_pallas.5} parent=42 // loop_exit
                  _
              $region43: #{block_forward_pallas.5} parent=27 // pred_fallthru
                _
              // Predicated region
              $region51: #{block_forward_pallas.5} parent=27 // pred_check
                _
              $region52: #{block_forward_pallas.5} parent=27 // pred_check_branch
                %436 = sbr.rel target = $region54
              $region53: #{block_forward_pallas.5} parent=27 // pred_region
                _
              $region54: #{block_forward_pallas.5} parent=27 // pred_fallthru
                _
            $region28: #{block_forward_pallas.5} parent=23 // pred_fallthru
              _
            // Predicated region
            $region29: #{block_forward_pallas.5} parent=23 // pred_check
              _
            $region30: #{block_forward_pallas.5} parent=23 // pred_check_branch
              %159 = sbr.rel target = $region32
            $region31: #{block_forward_pallas.5} parent=23 // pred_region
              loop: start=0, step=1, limit=1
              $region33: #{block_forward_pallas.5} parent=31 // loop_pre_header
                _
              $region34: #{block_forward_pallas.5} parent=31 // loop_header
                %s162 = sphi 0, %s166
                %p163 = scmp.ge.s32.totalorder %s162, 1
                %s167 = sphi %s153, %s153
                %s168 = sphi %s150, %s150
              $region35: #{block_forward_pallas.5} parent=31 // loop_header_branch
                %165 = sbr.rel (%p163) target = $region39
              $region36: #{block_forward_pallas.5} parent=31 // loop_body
                %v169 = vld [vmem:[%s167] sm:$0xff]
                %170 = vst [vmem:[%s168] sm:$0xff] %v169
                %v171 = vld [vmem:[%s167 + $0x8] sm:$0xff]
                %172 = vst [vmem:[%s168 + $0x8] sm:$0xff] %v171
                %v173 = vld [vmem:[%s167 + $0x10] sm:$0xff]
                %174 = vst [vmem:[%s168 + $0x10] sm:$0xff] %v173
                %v175 = vld [vmem:[%s167 + $0x18] sm:$0xff]
                %176 = vst [vmem:[%s168 + $0x18] sm:$0xff] %v175
                %v177 = vld [vmem:[%s167 + $0x20] sm:$0xff]
                %178 = vst [vmem:[%s168 + $0x20] sm:$0xff] %v177
                %v179 = vld [vmem:[%s167 + $0x28] sm:$0xff]
                %180 = vst [vmem:[%s168 + $0x28] sm:$0xff] %v179
                %v181 = vld [vmem:[%s167 + $0x30] sm:$0xff]
                %182 = vst [vmem:[%s168 + $0x30] sm:$0xff] %v181
                %v183 = vld [vmem:[%s167 + $0x38] sm:$0xff]
                %184 = vst [vmem:[%s168 + $0x38] sm:$0xff] %v183
                %v185 = vld [vmem:[%s167 + $0x40] sm:$0xff]
                %186 = vst [vmem:[%s168 + $0x40] sm:$0xff] %v185
                %v187 = vld [vmem:[%s167 + $0x48] sm:$0xff]
                %188 = vst [vmem:[%s168 + $0x48] sm:$0xff] %v187
                %v189 = vld [vmem:[%s167 + $0x50] sm:$0xff]
                %190 = vst [vmem:[%s168 + $0x50] sm:$0xff] %v189
                %v191 = vld [vmem:[%s167 + $0x58] sm:$0xff]
                %192 = vst [vmem:[%s168 + $0x58] sm:$0xff] %v191
                %v193 = vld [vmem:[%s167 + $0x60] sm:$0xff]
                %194 = vst [vmem:[%s168 + $0x60] sm:$0xff] %v193
                %v195 = vld [vmem:[%s167 + $0x68] sm:$0xff]
                %196 = vst [vmem:[%s168 + $0x68] sm:$0xff] %v195
                %v197 = vld [vmem:[%s167 + $0x70] sm:$0xff]
                %198 = vst [vmem:[%s168 + $0x70] sm:$0xff] %v197
                %v199 = vld [vmem:[%s167 + $0x78] sm:$0xff]
                %200 = vst [vmem:[%s168 + $0x78] sm:$0xff] %v199
                %v201 = vld [vmem:[%s167 + $0x100] sm:$0xff]
                %202 = vst [vmem:[%s168 + $0x80] sm:$0xff] %v201
                %v203 = vld [vmem:[%s167 + $0x108] sm:$0xff]
                %204 = vst [vmem:[%s168 + $0x88] sm:$0xff] %v203
                %v205 = vld [vmem:[%s167 + $0x110] sm:$0xff]
                %206 = vst [vmem:[%s168 + $0x90] sm:$0xff] %v205
                %v207 = vld [vmem:[%s167 + $0x118] sm:$0xff]
                %208 = vst [vmem:[%s168 + $0x98] sm:$0xff] %v207
                %v209 = vld [vmem:[%s167 + $0x120] sm:$0xff]
                %210 = vst [vmem:[%s168 + $0xa0] sm:$0xff] %v209
                %v211 = vld [vmem:[%s167 + $0x128] sm:$0xff]
                %212 = vst [vmem:[%s168 + $0xa8] sm:$0xff] %v211
                %v213 = vld [vmem:[%s167 + $0x130] sm:$0xff]
                %214 = vst [vmem:[%s168 + $0xb0] sm:$0xff] %v213
                %v215 = vld [vmem:[%s167 + $0x138] sm:$0xff]
                %216 = vst [vmem:[%s168 + $0xb8] sm:$0xff] %v215
                %v217 = vld [vmem:[%s167 + $0x140] sm:$0xff]
                %218 = vst [vmem:[%s168 + $0xc0] sm:$0xff] %v217
                %v219 = vld [vmem:[%s167 + $0x148] sm:$0xff]
                %220 = vst [vmem:[%s168 + $0xc8] sm:$0xff] %v219
                %v221 = vld [vmem:[%s167 + $0x150] sm:$0xff]
                %222 = vst [vmem:[%s168 + $0xd0] sm:$0xff] %v221
                %v223 = vld [vmem:[%s167 + $0x158] sm:$0xff]
                %224 = vst [vmem:[%s168 + $0xd8] sm:$0xff] %v223
                %v225 = vld [vmem:[%s167 + $0x160] sm:$0xff]
                %226 = vst [vmem:[%s168 + $0xe0] sm:$0xff] %v225
                %v227 = vld [vmem:[%s167 + $0x168] sm:$0xff]
                %228 = vst [vmem:[%s168 + $0xe8] sm:$0xff] %v227
                %v229 = vld [vmem:[%s167 + $0x170] sm:$0xff]
                %230 = vst [vmem:[%s168 + $0xf0] sm:$0xff] %v229
                %v231 = vld [vmem:[%s167 + $0x178] sm:$0xff]
                %232 = vst [vmem:[%s168 + $0xf8] sm:$0xff] %v231
                %v233 = vld [vmem:[%s167 + $0x200] sm:$0xff]
                %234 = vst [vmem:[%s168 + $0x100] sm:$0xff] %v233
                %v235 = vld [vmem:[%s167 + $0x208] sm:$0xff]
                %236 = vst [vmem:[%s168 + $0x108] sm:$0xff] %v235
                %v237 = vld [vmem:[%s167 + $0x210] sm:$0xff]
                %238 = vst [vmem:[%s168 + $0x110] sm:$0xff] %v237
                %v239 = vld [vmem:[%s167 + $0x218] sm:$0xff]
                %240 = vst [vmem:[%s168 + $0x118] sm:$0xff] %v239
                %v241 = vld [vmem:[%s167 + $0x220] sm:$0xff]
                %242 = vst [vmem:[%s168 + $0x120] sm:$0xff] %v241
                %v243 = vld [vmem:[%s167 + $0x228] sm:$0xff]
                %244 = vst [vmem:[%s168 + $0x128] sm:$0xff] %v243
                %v245 = vld [vmem:[%s167 + $0x230] sm:$0xff]
                %246 = vst [vmem:[%s168 + $0x130] sm:$0xff] %v245
                %v247 = vld [vmem:[%s167 + $0x238] sm:$0xff]
                %248 = vst [vmem:[%s168 + $0x138] sm:$0xff] %v247
                %v249 = vld [vmem:[%s167 + $0x240] sm:$0xff]
                %250 = vst [vmem:[%s168 + $0x140] sm:$0xff] %v249
                %v251 = vld [vmem:[%s167 + $0x248] sm:$0xff]
                %252 = vst [vmem:[%s168 + $0x148] sm:$0xff] %v251
                %v253 = vld [vmem:[%s167 + $0x250] sm:$0xff]
                %254 = vst [vmem:[%s168 + $0x150] sm:$0xff] %v253
                %v255 = vld [vmem:[%s167 + $0x258] sm:$0xff]
                %256 = vst [vmem:[%s168 + $0x158] sm:$0xff] %v255
                %v257 = vld [vmem:[%s167 + $0x260] sm:$0xff]
                %258 = vst [vmem:[%s168 + $0x160] sm:$0xff] %v257
                %v259 = vld [vmem:[%s167 + $0x268] sm:$0xff]
                %260 = vst [vmem:[%s168 + $0x168] sm:$0xff] %v259
                %v261 = vld [vmem:[%s167 + $0x270] sm:$0xff]
                %262 = vst [vmem:[%s168 + $0x170] sm:$0xff] %v261
                %v263 = vld [vmem:[%s167 + $0x278] sm:$0xff]
                %264 = vst [vmem:[%s168 + $0x178] sm:$0xff] %v263
                %v265 = vld [vmem:[%s167 + $0x300] sm:$0xff]
                %266 = vst [vmem:[%s168 + $0x180] sm:$0xff] %v265
                %v267 = vld [vmem:[%s167 + $0x308] sm:$0xff]
                %268 = vst [vmem:[%s168 + $0x188] sm:$0xff] %v267
                %v269 = vld [vmem:[%s167 + $0x310] sm:$0xff]
                %270 = vst [vmem:[%s168 + $0x190] sm:$0xff] %v269
                %v271 = vld [vmem:[%s167 + $0x318] sm:$0xff]
                %272 = vst [vmem:[%s168 + $0x198] sm:$0xff] %v271
                %v273 = vld [vmem:[%s167 + $0x320] sm:$0xff]
                %274 = vst [vmem:[%s168 + $0x1a0] sm:$0xff] %v273
                %v275 = vld [vmem:[%s167 + $0x328] sm:$0xff]
                %276 = vst [vmem:[%s168 + $0x1a8] sm:$0xff] %v275
                %v277 = vld [vmem:[%s167 + $0x330] sm:$0xff]
                %278 = vst [vmem:[%s168 + $0x1b0] sm:$0xff] %v277
                %v279 = vld [vmem:[%s167 + $0x338] sm:$0xff]
                %280 = vst [vmem:[%s168 + $0x1b8] sm:$0xff] %v279
                %v281 = vld [vmem:[%s167 + $0x340] sm:$0xff]
                %282 = vst [vmem:[%s168 + $0x1c0] sm:$0xff] %v281
                %v283 = vld [vmem:[%s167 + $0x348] sm:$0xff]
                %284 = vst [vmem:[%s168 + $0x1c8] sm:$0xff] %v283
                %v285 = vld [vmem:[%s167 + $0x350] sm:$0xff]
                %286 = vst [vmem:[%s168 + $0x1d0] sm:$0xff] %v285
                %v287 = vld [vmem:[%s167 + $0x358] sm:$0xff]
                %288 = vst [vmem:[%s168 + $0x1d8] sm:$0xff] %v287
                %v289 = vld [vmem:[%s167 + $0x360] sm:$0xff]
                %290 = vst [vmem:[%s168 + $0x1e0] sm:$0xff] %v289
                %v291 = vld [vmem:[%s167 + $0x368] sm:$0xff]
                %292 = vst [vmem:[%s168 + $0x1e8] sm:$0xff] %v291
                %v293 = vld [vmem:[%s167 + $0x370] sm:$0xff]
                %294 = vst [vmem:[%s168 + $0x1f0] sm:$0xff] %v293
                %v295 = vld [vmem:[%s167 + $0x378] sm:$0xff]
                %296 = vst [vmem:[%s168 + $0x1f8] sm:$0xff] %v295
              $region37: #{block_forward_pallas.5} parent=31 // loop_footer
                %s166 = sadd.s32 1, %s162
              $region38: #{block_forward_pallas.5} parent=31 // loop_footer_branch
                %161 = sbr.rel target = $region34
              $region39: #{block_forward_pallas.5} parent=31 // loop_exit
                _
            $region32: #{block_forward_pallas.5} parent=23 // pred_fallthru
              _
          $region24: #{block_forward_pallas.5} parent=19 // pred_fallthru
            _
          %437 = vnop
        $region20: #{block_forward_pallas.5} parent=15 // pred_fallthru
          _
        // Predicated region
        $region55: #{block_forward_pallas.5} parent=15 // pred_check
          %p438 = pneg %p67
        $region56: #{block_forward_pallas.5} parent=15 // pred_check_branch
          %440 = sbr.rel (%p438) target = $region58
        $region57: #{block_forward_pallas.5} parent=15 // pred_region
          %s441 = sand.u32 %s57, 1
          %s442 = sand.u32 %s57, 1
          %s443 = smul.addr %s442, 512
          %s444 = scalar_lea.vmem [#allocation6], %s443
          %s445 = smul.u32 16, %s17
          %s446 = smul.addr %s445, 8
          %s447 = scalar_lea.vmem %s1, %s446
          // Predicated region
          $region59: #{block_forward_pallas.5} parent=57 // pred_check
            _
          $region60: #{block_forward_pallas.5} parent=57 // pred_check_branch
            %449 = sbr.rel (0) target = $region62
          $region61: #{block_forward_pallas.5} parent=57 // pred_region
            // Predicated region
            $region63: #{block_forward_pallas.5} parent=61 // pred_check
              _
            $region64: #{block_forward_pallas.5} parent=61 // pred_check_branch
              %451 = sbr.rel (0) target = $region66
            $region65: #{block_forward_pallas.5} parent=61 // pred_region
              // Predicated region
              $region78: #{block_forward_pallas.5} parent=65 // pred_check
                _
              $region79: #{block_forward_pallas.5} parent=65 // pred_check_branch
                %592 = sbr.rel (0) target = $region81
              $region80: #{block_forward_pallas.5} parent=65 // pred_region
                loop: start=0, step=1, limit=1
                $region82: #{block_forward_pallas.5} parent=80 // loop_pre_header
                  _
                $region83: #{block_forward_pallas.5} parent=80 // loop_header
                  %s594 = sphi 0, %s598
                  %p595 = scmp.ge.s32.totalorder %s594, 1
                  %s599 = sphi %s447, %s447
                  %s600 = sphi %s444, %s444
                $region84: #{block_forward_pallas.5} parent=80 // loop_header_branch
                  %597 = sbr.rel (%p595) target = $region88
                $region85: #{block_forward_pallas.5} parent=80 // loop_body
                  %v601 = vld [vmem:[%s599] sm:$0xff]
                  %602 = vst [vmem:[%s600] sm:$0xff] %v601
                  %v603 = vld [vmem:[%s599 + $0x8] sm:$0xff]
                  %604 = vst [vmem:[%s600 + $0x8] sm:$0xff] %v603
                  %v605 = vld [vmem:[%s599 + $0x10] sm:$0xff]
                  %606 = vst [vmem:[%s600 + $0x10] sm:$0xff] %v605
                  %v607 = vld [vmem:[%s599 + $0x18] sm:$0xff]
                  %608 = vst [vmem:[%s600 + $0x18] sm:$0xff] %v607
                  %v609 = vld [vmem:[%s599 + $0x20] sm:$0xff]
                  %610 = vst [vmem:[%s600 + $0x20] sm:$0xff] %v609
                  %v611 = vld [vmem:[%s599 + $0x28] sm:$0xff]
                  %612 = vst [vmem:[%s600 + $0x28] sm:$0xff] %v611
                  %v613 = vld [vmem:[%s599 + $0x30] sm:$0xff]
                  %614 = vst [vmem:[%s600 + $0x30] sm:$0xff] %v613
                  %v615 = vld [vmem:[%s599 + $0x38] sm:$0xff]
                  %616 = vst [vmem:[%s600 + $0x38] sm:$0xff] %v615
                  %v617 = vld [vmem:[%s599 + $0x40] sm:$0xff]
                  %618 = vst [vmem:[%s600 + $0x40] sm:$0xff] %v617
                  %v619 = vld [vmem:[%s599 + $0x48] sm:$0xff]
                  %620 = vst [vmem:[%s600 + $0x48] sm:$0xff] %v619
                  %v621 = vld [vmem:[%s599 + $0x50] sm:$0xff]
                  %622 = vst [vmem:[%s600 + $0x50] sm:$0xff] %v621
                  %v623 = vld [vmem:[%s599 + $0x58] sm:$0xff]
                  %624 = vst [vmem:[%s600 + $0x58] sm:$0xff] %v623
                  %v625 = vld [vmem:[%s599 + $0x60] sm:$0xff]
                  %626 = vst [vmem:[%s600 + $0x60] sm:$0xff] %v625
                  %v627 = vld [vmem:[%s599 + $0x68] sm:$0xff]
                  %628 = vst [vmem:[%s600 + $0x68] sm:$0xff] %v627
                  %v629 = vld [vmem:[%s599 + $0x70] sm:$0xff]
                  %630 = vst [vmem:[%s600 + $0x70] sm:$0xff] %v629
                  %v631 = vld [vmem:[%s599 + $0x78] sm:$0xff]
                  %632 = vst [vmem:[%s600 + $0x78] sm:$0xff] %v631
                  %v633 = vld [vmem:[%s599 + $0x100] sm:$0xff]
                  %634 = vst [vmem:[%s600 + $0x80] sm:$0xff] %v633
                  %v635 = vld [vmem:[%s599 + $0x108] sm:$0xff]
                  %636 = vst [vmem:[%s600 + $0x88] sm:$0xff] %v635
                  %v637 = vld [vmem:[%s599 + $0x110] sm:$0xff]
                  %638 = vst [vmem:[%s600 + $0x90] sm:$0xff] %v637
                  %v639 = vld [vmem:[%s599 + $0x118] sm:$0xff]
                  %640 = vst [vmem:[%s600 + $0x98] sm:$0xff] %v639
                  %v641 = vld [vmem:[%s599 + $0x120] sm:$0xff]
                  %642 = vst [vmem:[%s600 + $0xa0] sm:$0xff] %v641
                  %v643 = vld [vmem:[%s599 + $0x128] sm:$0xff]
                  %644 = vst [vmem:[%s600 + $0xa8] sm:$0xff] %v643
                  %v645 = vld [vmem:[%s599 + $0x130] sm:$0xff]
                  %646 = vst [vmem:[%s600 + $0xb0] sm:$0xff] %v645
                  %v647 = vld [vmem:[%s599 + $0x138] sm:$0xff]
                  %648 = vst [vmem:[%s600 + $0xb8] sm:$0xff] %v647
                  %v649 = vld [vmem:[%s599 + $0x140] sm:$0xff]
                  %650 = vst [vmem:[%s600 + $0xc0] sm:$0xff] %v649
                  %v651 = vld [vmem:[%s599 + $0x148] sm:$0xff]
                  %652 = vst [vmem:[%s600 + $0xc8] sm:$0xff] %v651
                  %v653 = vld [vmem:[%s599 + $0x150] sm:$0xff]
                  %654 = vst [vmem:[%s600 + $0xd0] sm:$0xff] %v653
                  %v655 = vld [vmem:[%s599 + $0x158] sm:$0xff]
                  %656 = vst [vmem:[%s600 + $0xd8] sm:$0xff] %v655
                  %v657 = vld [vmem:[%s599 + $0x160] sm:$0xff]
                  %658 = vst [vmem:[%s600 + $0xe0] sm:$0xff] %v657
                  %v659 = vld [vmem:[%s599 + $0x168] sm:$0xff]
                  %660 = vst [vmem:[%s600 + $0xe8] sm:$0xff] %v659
                  %v661 = vld [vmem:[%s599 + $0x170] sm:$0xff]
                  %662 = vst [vmem:[%s600 + $0xf0] sm:$0xff] %v661
                  %v663 = vld [vmem:[%s599 + $0x178] sm:$0xff]
                  %664 = vst [vmem:[%s600 + $0xf8] sm:$0xff] %v663
                  %v665 = vld [vmem:[%s599 + $0x200] sm:$0xff]
                  %666 = vst [vmem:[%s600 + $0x100] sm:$0xff] %v665
                  %v667 = vld [vmem:[%s599 + $0x208] sm:$0xff]
                  %668 = vst [vmem:[%s600 + $0x108] sm:$0xff] %v667
                  %v669 = vld [vmem:[%s599 + $0x210] sm:$0xff]
                  %670 = vst [vmem:[%s600 + $0x110] sm:$0xff] %v669
                  %v671 = vld [vmem:[%s599 + $0x218] sm:$0xff]
                  %672 = vst [vmem:[%s600 + $0x118] sm:$0xff] %v671
                  %v673 = vld [vmem:[%s599 + $0x220] sm:$0xff]
                  %674 = vst [vmem:[%s600 + $0x120] sm:$0xff] %v673
                  %v675 = vld [vmem:[%s599 + $0x228] sm:$0xff]
                  %676 = vst [vmem:[%s600 + $0x128] sm:$0xff] %v675
                  %v677 = vld [vmem:[%s599 + $0x230] sm:$0xff]
                  %678 = vst [vmem:[%s600 + $0x130] sm:$0xff] %v677
                  %v679 = vld [vmem:[%s599 + $0x238] sm:$0xff]
                  %680 = vst [vmem:[%s600 + $0x138] sm:$0xff] %v679
                  %v681 = vld [vmem:[%s599 + $0x240] sm:$0xff]
                  %682 = vst [vmem:[%s600 + $0x140] sm:$0xff] %v681
                  %v683 = vld [vmem:[%s599 + $0x248] sm:$0xff]
                  %684 = vst [vmem:[%s600 + $0x148] sm:$0xff] %v683
                  %v685 = vld [vmem:[%s599 + $0x250] sm:$0xff]
                  %686 = vst [vmem:[%s600 + $0x150] sm:$0xff] %v685
                  %v687 = vld [vmem:[%s599 + $0x258] sm:$0xff]
                  %688 = vst [vmem:[%s600 + $0x158] sm:$0xff] %v687
                  %v689 = vld [vmem:[%s599 + $0x260] sm:$0xff]
                  %690 = vst [vmem:[%s600 + $0x160] sm:$0xff] %v689
                  %v691 = vld [vmem:[%s599 + $0x268] sm:$0xff]
                  %692 = vst [vmem:[%s600 + $0x168] sm:$0xff] %v691
                  %v693 = vld [vmem:[%s599 + $0x270] sm:$0xff]
                  %694 = vst [vmem:[%s600 + $0x170] sm:$0xff] %v693
                  %v695 = vld [vmem:[%s599 + $0x278] sm:$0xff]
                  %696 = vst [vmem:[%s600 + $0x178] sm:$0xff] %v695
                  %v697 = vld [vmem:[%s599 + $0x300] sm:$0xff]
                  %698 = vst [vmem:[%s600 + $0x180] sm:$0xff] %v697
                  %v699 = vld [vmem:[%s599 + $0x308] sm:$0xff]
                  %700 = vst [vmem:[%s600 + $0x188] sm:$0xff] %v699
                  %v701 = vld [vmem:[%s599 + $0x310] sm:$0xff]
                  %702 = vst [vmem:[%s600 + $0x190] sm:$0xff] %v701
                  %v703 = vld [vmem:[%s599 + $0x318] sm:$0xff]
                  %704 = vst [vmem:[%s600 + $0x198] sm:$0xff] %v703
                  %v705 = vld [vmem:[%s599 + $0x320] sm:$0xff]
                  %706 = vst [vmem:[%s600 + $0x1a0] sm:$0xff] %v705
                  %v707 = vld [vmem:[%s599 + $0x328] sm:$0xff]
                  %708 = vst [vmem:[%s600 + $0x1a8] sm:$0xff] %v707
                  %v709 = vld [vmem:[%s599 + $0x330] sm:$0xff]
                  %710 = vst [vmem:[%s600 + $0x1b0] sm:$0xff] %v709
                  %v711 = vld [vmem:[%s599 + $0x338] sm:$0xff]
                  %712 = vst [vmem:[%s600 + $0x1b8] sm:$0xff] %v711
                  %v713 = vld [vmem:[%s599 + $0x340] sm:$0xff]
                  %714 = vst [vmem:[%s600 + $0x1c0] sm:$0xff] %v713
                  %v715 = vld [vmem:[%s599 + $0x348] sm:$0xff]
                  %716 = vst [vmem:[%s600 + $0x1c8] sm:$0xff] %v715
                  %v717 = vld [vmem:[%s599 + $0x350] sm:$0xff]
                  %718 = vst [vmem:[%s600 + $0x1d0] sm:$0xff] %v717
                  %v719 = vld [vmem:[%s599 + $0x358] sm:$0xff]
                  %720 = vst [vmem:[%s600 + $0x1d8] sm:$0xff] %v719
                  %v721 = vld [vmem:[%s599 + $0x360] sm:$0xff]
                  %722 = vst [vmem:[%s600 + $0x1e0] sm:$0xff] %v721
                  %v723 = vld [vmem:[%s599 + $0x368] sm:$0xff]
                  %724 = vst [vmem:[%s600 + $0x1e8] sm:$0xff] %v723
                  %v725 = vld [vmem:[%s599 + $0x370] sm:$0xff]
                  %726 = vst [vmem:[%s600 + $0x1f0] sm:$0xff] %v725
                  %v727 = vld [vmem:[%s599 + $0x378] sm:$0xff]
                  %728 = vst [vmem:[%s600 + $0x1f8] sm:$0xff] %v727
                $region86: #{block_forward_pallas.5} parent=80 // loop_footer
                  %s598 = sadd.s32 1, %s594
                $region87: #{block_forward_pallas.5} parent=80 // loop_footer_branch
                  %593 = sbr.rel target = $region83
                $region88: #{block_forward_pallas.5} parent=80 // loop_exit
                  _
              $region81: #{block_forward_pallas.5} parent=65 // pred_fallthru
                _
              // Predicated region
              $region89: #{block_forward_pallas.5} parent=65 // pred_check
                _
              $region90: #{block_forward_pallas.5} parent=65 // pred_check_branch
                %730 = sbr.rel target = $region92
              $region91: #{block_forward_pallas.5} parent=65 // pred_region
                _
              $region92: #{block_forward_pallas.5} parent=65 // pred_fallthru
                _
            $region66: #{block_forward_pallas.5} parent=61 // pred_fallthru
              _
            // Predicated region
            $region67: #{block_forward_pallas.5} parent=61 // pred_check
              _
            $region68: #{block_forward_pallas.5} parent=61 // pred_check_branch
              %453 = sbr.rel target = $region70
            $region69: #{block_forward_pallas.5} parent=61 // pred_region
              loop: start=0, step=1, limit=1
              $region71: #{block_forward_pallas.5} parent=69 // loop_pre_header
                _
              $region72: #{block_forward_pallas.5} parent=69 // loop_header
                %s456 = sphi 0, %s460
                %p457 = scmp.ge.s32.totalorder %s456, 1
                %s461 = sphi %s447, %s447
                %s462 = sphi %s444, %s444
              $region73: #{block_forward_pallas.5} parent=69 // loop_header_branch
                %459 = sbr.rel (%p457) target = $region77
              $region74: #{block_forward_pallas.5} parent=69 // loop_body
                %v463 = vld [vmem:[%s461] sm:$0xff]
                %464 = vst [vmem:[%s462] sm:$0xff] %v463
                %v465 = vld [vmem:[%s461 + $0x8] sm:$0xff]
                %466 = vst [vmem:[%s462 + $0x8] sm:$0xff] %v465
                %v467 = vld [vmem:[%s461 + $0x10] sm:$0xff]
                %468 = vst [vmem:[%s462 + $0x10] sm:$0xff] %v467
                %v469 = vld [vmem:[%s461 + $0x18] sm:$0xff]
                %470 = vst [vmem:[%s462 + $0x18] sm:$0xff] %v469
                %v471 = vld [vmem:[%s461 + $0x20] sm:$0xff]
                %472 = vst [vmem:[%s462 + $0x20] sm:$0xff] %v471
                %v473 = vld [vmem:[%s461 + $0x28] sm:$0xff]
                %474 = vst [vmem:[%s462 + $0x28] sm:$0xff] %v473
                %v475 = vld [vmem:[%s461 + $0x30] sm:$0xff]
                %476 = vst [vmem:[%s462 + $0x30] sm:$0xff] %v475
                %v477 = vld [vmem:[%s461 + $0x38] sm:$0xff]
                %478 = vst [vmem:[%s462 + $0x38] sm:$0xff] %v477
                %v479 = vld [vmem:[%s461 + $0x40] sm:$0xff]
                %480 = vst [vmem:[%s462 + $0x40] sm:$0xff] %v479
                %v481 = vld [vmem:[%s461 + $0x48] sm:$0xff]
                %482 = vst [vmem:[%s462 + $0x48] sm:$0xff] %v481
                %v483 = vld [vmem:[%s461 + $0x50] sm:$0xff]
                %484 = vst [vmem:[%s462 + $0x50] sm:$0xff] %v483
                %v485 = vld [vmem:[%s461 + $0x58] sm:$0xff]
                %486 = vst [vmem:[%s462 + $0x58] sm:$0xff] %v485
                %v487 = vld [vmem:[%s461 + $0x60] sm:$0xff]
                %488 = vst [vmem:[%s462 + $0x60] sm:$0xff] %v487
                %v489 = vld [vmem:[%s461 + $0x68] sm:$0xff]
                %490 = vst [vmem:[%s462 + $0x68] sm:$0xff] %v489
                %v491 = vld [vmem:[%s461 + $0x70] sm:$0xff]
                %492 = vst [vmem:[%s462 + $0x70] sm:$0xff] %v491
                %v493 = vld [vmem:[%s461 + $0x78] sm:$0xff]
                %494 = vst [vmem:[%s462 + $0x78] sm:$0xff] %v493
                %v495 = vld [vmem:[%s461 + $0x100] sm:$0xff]
                %496 = vst [vmem:[%s462 + $0x80] sm:$0xff] %v495
                %v497 = vld [vmem:[%s461 + $0x108] sm:$0xff]
                %498 = vst [vmem:[%s462 + $0x88] sm:$0xff] %v497
                %v499 = vld [vmem:[%s461 + $0x110] sm:$0xff]
                %500 = vst [vmem:[%s462 + $0x90] sm:$0xff] %v499
                %v501 = vld [vmem:[%s461 + $0x118] sm:$0xff]
                %502 = vst [vmem:[%s462 + $0x98] sm:$0xff] %v501
                %v503 = vld [vmem:[%s461 + $0x120] sm:$0xff]
                %504 = vst [vmem:[%s462 + $0xa0] sm:$0xff] %v503
                %v505 = vld [vmem:[%s461 + $0x128] sm:$0xff]
                %506 = vst [vmem:[%s462 + $0xa8] sm:$0xff] %v505
                %v507 = vld [vmem:[%s461 + $0x130] sm:$0xff]
                %508 = vst [vmem:[%s462 + $0xb0] sm:$0xff] %v507
                %v509 = vld [vmem:[%s461 + $0x138] sm:$0xff]
                %510 = vst [vmem:[%s462 + $0xb8] sm:$0xff] %v509
                %v511 = vld [vmem:[%s461 + $0x140] sm:$0xff]
                %512 = vst [vmem:[%s462 + $0xc0] sm:$0xff] %v511
                %v513 = vld [vmem:[%s461 + $0x148] sm:$0xff]
                %514 = vst [vmem:[%s462 + $0xc8] sm:$0xff] %v513
                %v515 = vld [vmem:[%s461 + $0x150] sm:$0xff]
                %516 = vst [vmem:[%s462 + $0xd0] sm:$0xff] %v515
                %v517 = vld [vmem:[%s461 + $0x158] sm:$0xff]
                %518 = vst [vmem:[%s462 + $0xd8] sm:$0xff] %v517
                %v519 = vld [vmem:[%s461 + $0x160] sm:$0xff]
                %520 = vst [vmem:[%s462 + $0xe0] sm:$0xff] %v519
                %v521 = vld [vmem:[%s461 + $0x168] sm:$0xff]
                %522 = vst [vmem:[%s462 + $0xe8] sm:$0xff] %v521
                %v523 = vld [vmem:[%s461 + $0x170] sm:$0xff]
                %524 = vst [vmem:[%s462 + $0xf0] sm:$0xff] %v523
                %v525 = vld [vmem:[%s461 + $0x178] sm:$0xff]
                %526 = vst [vmem:[%s462 + $0xf8] sm:$0xff] %v525
                %v527 = vld [vmem:[%s461 + $0x200] sm:$0xff]
                %528 = vst [vmem:[%s462 + $0x100] sm:$0xff] %v527
                %v529 = vld [vmem:[%s461 + $0x208] sm:$0xff]
                %530 = vst [vmem:[%s462 + $0x108] sm:$0xff] %v529
                %v531 = vld [vmem:[%s461 + $0x210] sm:$0xff]
                %532 = vst [vmem:[%s462 + $0x110] sm:$0xff] %v531
                %v533 = vld [vmem:[%s461 + $0x218] sm:$0xff]
                %534 = vst [vmem:[%s462 + $0x118] sm:$0xff] %v533
                %v535 = vld [vmem:[%s461 + $0x220] sm:$0xff]
                %536 = vst [vmem:[%s462 + $0x120] sm:$0xff] %v535
                %v537 = vld [vmem:[%s461 + $0x228] sm:$0xff]
                %538 = vst [vmem:[%s462 + $0x128] sm:$0xff] %v537
                %v539 = vld [vmem:[%s461 + $0x230] sm:$0xff]
                %540 = vst [vmem:[%s462 + $0x130] sm:$0xff] %v539
                %v541 = vld [vmem:[%s461 + $0x238] sm:$0xff]
                %542 = vst [vmem:[%s462 + $0x138] sm:$0xff] %v541
                %v543 = vld [vmem:[%s461 + $0x240] sm:$0xff]
                %544 = vst [vmem:[%s462 + $0x140] sm:$0xff] %v543
                %v545 = vld [vmem:[%s461 + $0x248] sm:$0xff]
                %546 = vst [vmem:[%s462 + $0x148] sm:$0xff] %v545
                %v547 = vld [vmem:[%s461 + $0x250] sm:$0xff]
                %548 = vst [vmem:[%s462 + $0x150] sm:$0xff] %v547
                %v549 = vld [vmem:[%s461 + $0x258] sm:$0xff]
                %550 = vst [vmem:[%s462 + $0x158] sm:$0xff] %v549
                %v551 = vld [vmem:[%s461 + $0x260] sm:$0xff]
                %552 = vst [vmem:[%s462 + $0x160] sm:$0xff] %v551
                %v553 = vld [vmem:[%s461 + $0x268] sm:$0xff]
                %554 = vst [vmem:[%s462 + $0x168] sm:$0xff] %v553
                %v555 = vld [vmem:[%s461 + $0x270] sm:$0xff]
                %556 = vst [vmem:[%s462 + $0x170] sm:$0xff] %v555
                %v557 = vld [vmem:[%s461 + $0x278] sm:$0xff]
                %558 = vst [vmem:[%s462 + $0x178] sm:$0xff] %v557
                %v559 = vld [vmem:[%s461 + $0x300] sm:$0xff]
                %560 = vst [vmem:[%s462 + $0x180] sm:$0xff] %v559
                %v561 = vld [vmem:[%s461 + $0x308] sm:$0xff]
                %562 = vst [vmem:[%s462 + $0x188] sm:$0xff] %v561
                %v563 = vld [vmem:[%s461 + $0x310] sm:$0xff]
                %564 = vst [vmem:[%s462 + $0x190] sm:$0xff] %v563
                %v565 = vld [vmem:[%s461 + $0x318] sm:$0xff]
                %566 = vst [vmem:[%s462 + $0x198] sm:$0xff] %v565
                %v567 = vld [vmem:[%s461 + $0x320] sm:$0xff]
                %568 = vst [vmem:[%s462 + $0x1a0] sm:$0xff] %v567
                %v569 = vld [vmem:[%s461 + $0x328] sm:$0xff]
                %570 = vst [vmem:[%s462 + $0x1a8] sm:$0xff] %v569
                %v571 = vld [vmem:[%s461 + $0x330] sm:$0xff]
                %572 = vst [vmem:[%s462 + $0x1b0] sm:$0xff] %v571
                %v573 = vld [vmem:[%s461 + $0x338] sm:$0xff]
                %574 = vst [vmem:[%s462 + $0x1b8] sm:$0xff] %v573
                %v575 = vld [vmem:[%s461 + $0x340] sm:$0xff]
                %576 = vst [vmem:[%s462 + $0x1c0] sm:$0xff] %v575
                %v577 = vld [vmem:[%s461 + $0x348] sm:$0xff]
                %578 = vst [vmem:[%s462 + $0x1c8] sm:$0xff] %v577
                %v579 = vld [vmem:[%s461 + $0x350] sm:$0xff]
                %580 = vst [vmem:[%s462 + $0x1d0] sm:$0xff] %v579
                %v581 = vld [vmem:[%s461 + $0x358] sm:$0xff]
                %582 = vst [vmem:[%s462 + $0x1d8] sm:$0xff] %v581
                %v583 = vld [vmem:[%s461 + $0x360] sm:$0xff]
                %584 = vst [vmem:[%s462 + $0x1e0] sm:$0xff] %v583
                %v585 = vld [vmem:[%s461 + $0x368] sm:$0xff]
                %586 = vst [vmem:[%s462 + $0x1e8] sm:$0xff] %v585
                %v587 = vld [vmem:[%s461 + $0x370] sm:$0xff]
                %588 = vst [vmem:[%s462 + $0x1f0] sm:$0xff] %v587
                %v589 = vld [vmem:[%s461 + $0x378] sm:$0xff]
                %590 = vst [vmem:[%s462 + $0x1f8] sm:$0xff] %v589
              $region75: #{block_forward_pallas.5} parent=69 // loop_footer
                %s460 = sadd.s32 1, %s456
              $region76: #{block_forward_pallas.5} parent=69 // loop_footer_branch
                %455 = sbr.rel target = $region72
              $region77: #{block_forward_pallas.5} parent=69 // loop_exit
                _
            $region70: #{block_forward_pallas.5} parent=61 // pred_fallthru
              _
          $region62: #{block_forward_pallas.5} parent=57 // pred_fallthru
            _
          %731 = vnop
        $region58: #{block_forward_pallas.5} parent=15 // pred_fallthru
          _
        // Predicated region
        $region93: #{block_forward_pallas.5} parent=15 // pred_check
          %p732 = pneg %p93
        $region94: #{block_forward_pallas.5} parent=15 // pred_check_branch
          %734 = sbr.rel (%p732) target = $region96
        $region95: #{block_forward_pallas.5} parent=15 // pred_region
          %s735 = sand.u32 %s83, 1
          %s736 = sand.u32 %s83, 1
          %s737 = smul.addr %s736, 512
          %s738 = scalar_lea.vmem [#allocation7], %s737
          %s739 = smul.u32 16, %s17
          %s740 = smul.addr %s739, 8
          %s741 = scalar_lea.vmem %s2, %s740
          // Predicated region
          $region97: #{block_forward_pallas.5} parent=95 // pred_check
            _
          $region98: #{block_forward_pallas.5} parent=95 // pred_check_branch
            %743 = sbr.rel (0) target = $region100
          $region99: #{block_forward_pallas.5} parent=95 // pred_region
            // Predicated region
            $region101: #{block_forward_pallas.5} parent=99 // pred_check
              _
            $region102: #{block_forward_pallas.5} parent=99 // pred_check_branch
              %745 = sbr.rel (0) target = $region104
            $region103: #{block_forward_pallas.5} parent=99 // pred_region
              // Predicated region
              $region116: #{block_forward_pallas.5} parent=103 // pred_check
                _
              $region117: #{block_forward_pallas.5} parent=103 // pred_check_branch
                %886 = sbr.rel (0) target = $region119
              $region118: #{block_forward_pallas.5} parent=103 // pred_region
                loop: start=0, step=1, limit=1
                $region120: #{block_forward_pallas.5} parent=118 // loop_pre_header
                  _
                $region121: #{block_forward_pallas.5} parent=118 // loop_header
                  %s888 = sphi 0, %s892
                  %p889 = scmp.ge.s32.totalorder %s888, 1
                  %s893 = sphi %s741, %s741
                  %s894 = sphi %s738, %s738
                $region122: #{block_forward_pallas.5} parent=118 // loop_header_branch
                  %891 = sbr.rel (%p889) target = $region126
                $region123: #{block_forward_pallas.5} parent=118 // loop_body
                  %v895 = vld [vmem:[%s893] sm:$0xff]
                  %896 = vst [vmem:[%s894] sm:$0xff] %v895
                  %v897 = vld [vmem:[%s893 + $0x8] sm:$0xff]
                  %898 = vst [vmem:[%s894 + $0x8] sm:$0xff] %v897
                  %v899 = vld [vmem:[%s893 + $0x10] sm:$0xff]
                  %900 = vst [vmem:[%s894 + $0x10] sm:$0xff] %v899
                  %v901 = vld [vmem:[%s893 + $0x18] sm:$0xff]
                  %902 = vst [vmem:[%s894 + $0x18] sm:$0xff] %v901
                  %v903 = vld [vmem:[%s893 + $0x20] sm:$0xff]
                  %904 = vst [vmem:[%s894 + $0x20] sm:$0xff] %v903
                  %v905 = vld [vmem:[%s893 + $0x28] sm:$0xff]
                  %906 = vst [vmem:[%s894 + $0x28] sm:$0xff] %v905
                  %v907 = vld [vmem:[%s893 + $0x30] sm:$0xff]
                  %908 = vst [vmem:[%s894 + $0x30] sm:$0xff] %v907
                  %v909 = vld [vmem:[%s893 + $0x38] sm:$0xff]
                  %910 = vst [vmem:[%s894 + $0x38] sm:$0xff] %v909
                  %v911 = vld [vmem:[%s893 + $0x40] sm:$0xff]
                  %912 = vst [vmem:[%s894 + $0x40] sm:$0xff] %v911
                  %v913 = vld [vmem:[%s893 + $0x48] sm:$0xff]
                  %914 = vst [vmem:[%s894 + $0x48] sm:$0xff] %v913
                  %v915 = vld [vmem:[%s893 + $0x50] sm:$0xff]
                  %916 = vst [vmem:[%s894 + $0x50] sm:$0xff] %v915
                  %v917 = vld [vmem:[%s893 + $0x58] sm:$0xff]
                  %918 = vst [vmem:[%s894 + $0x58] sm:$0xff] %v917
                  %v919 = vld [vmem:[%s893 + $0x60] sm:$0xff]
                  %920 = vst [vmem:[%s894 + $0x60] sm:$0xff] %v919
                  %v921 = vld [vmem:[%s893 + $0x68] sm:$0xff]
                  %922 = vst [vmem:[%s894 + $0x68] sm:$0xff] %v921
                  %v923 = vld [vmem:[%s893 + $0x70] sm:$0xff]
                  %924 = vst [vmem:[%s894 + $0x70] sm:$0xff] %v923
                  %v925 = vld [vmem:[%s893 + $0x78] sm:$0xff]
                  %926 = vst [vmem:[%s894 + $0x78] sm:$0xff] %v925
                  %v927 = vld [vmem:[%s893 + $0x100] sm:$0xff]
                  %928 = vst [vmem:[%s894 + $0x80] sm:$0xff] %v927
                  %v929 = vld [vmem:[%s893 + $0x108] sm:$0xff]
                  %930 = vst [vmem:[%s894 + $0x88] sm:$0xff] %v929
                  %v931 = vld [vmem:[%s893 + $0x110] sm:$0xff]
                  %932 = vst [vmem:[%s894 + $0x90] sm:$0xff] %v931
                  %v933 = vld [vmem:[%s893 + $0x118] sm:$0xff]
                  %934 = vst [vmem:[%s894 + $0x98] sm:$0xff] %v933
                  %v935 = vld [vmem:[%s893 + $0x120] sm:$0xff]
                  %936 = vst [vmem:[%s894 + $0xa0] sm:$0xff] %v935
                  %v937 = vld [vmem:[%s893 + $0x128] sm:$0xff]
                  %938 = vst [vmem:[%s894 + $0xa8] sm:$0xff] %v937
                  %v939 = vld [vmem:[%s893 + $0x130] sm:$0xff]
                  %940 = vst [vmem:[%s894 + $0xb0] sm:$0xff] %v939
                  %v941 = vld [vmem:[%s893 + $0x138] sm:$0xff]
                  %942 = vst [vmem:[%s894 + $0xb8] sm:$0xff] %v941
                  %v943 = vld [vmem:[%s893 + $0x140] sm:$0xff]
                  %944 = vst [vmem:[%s894 + $0xc0] sm:$0xff] %v943
                  %v945 = vld [vmem:[%s893 + $0x148] sm:$0xff]
                  %946 = vst [vmem:[%s894 + $0xc8] sm:$0xff] %v945
                  %v947 = vld [vmem:[%s893 + $0x150] sm:$0xff]
                  %948 = vst [vmem:[%s894 + $0xd0] sm:$0xff] %v947
                  %v949 = vld [vmem:[%s893 + $0x158] sm:$0xff]
                  %950 = vst [vmem:[%s894 + $0xd8] sm:$0xff] %v949
                  %v951 = vld [vmem:[%s893 + $0x160] sm:$0xff]
                  %952 = vst [vmem:[%s894 + $0xe0] sm:$0xff] %v951
                  %v953 = vld [vmem:[%s893 + $0x168] sm:$0xff]
                  %954 = vst [vmem:[%s894 + $0xe8] sm:$0xff] %v953
                  %v955 = vld [vmem:[%s893 + $0x170] sm:$0xff]
                  %956 = vst [vmem:[%s894 + $0xf0] sm:$0xff] %v955
                  %v957 = vld [vmem:[%s893 + $0x178] sm:$0xff]
                  %958 = vst [vmem:[%s894 + $0xf8] sm:$0xff] %v957
                  %v959 = vld [vmem:[%s893 + $0x200] sm:$0xff]
                  %960 = vst [vmem:[%s894 + $0x100] sm:$0xff] %v959
                  %v961 = vld [vmem:[%s893 + $0x208] sm:$0xff]
                  %962 = vst [vmem:[%s894 + $0x108] sm:$0xff] %v961
                  %v963 = vld [vmem:[%s893 + $0x210] sm:$0xff]
                  %964 = vst [vmem:[%s894 + $0x110] sm:$0xff] %v963
                  %v965 = vld [vmem:[%s893 + $0x218] sm:$0xff]
                  %966 = vst [vmem:[%s894 + $0x118] sm:$0xff] %v965
                  %v967 = vld [vmem:[%s893 + $0x220] sm:$0xff]
                  %968 = vst [vmem:[%s894 + $0x120] sm:$0xff] %v967
                  %v969 = vld [vmem:[%s893 + $0x228] sm:$0xff]
                  %970 = vst [vmem:[%s894 + $0x128] sm:$0xff] %v969
                  %v971 = vld [vmem:[%s893 + $0x230] sm:$0xff]
                  %972 = vst [vmem:[%s894 + $0x130] sm:$0xff] %v971
                  %v973 = vld [vmem:[%s893 + $0x238] sm:$0xff]
                  %974 = vst [vmem:[%s894 + $0x138] sm:$0xff] %v973
                  %v975 = vld [vmem:[%s893 + $0x240] sm:$0xff]
                  %976 = vst [vmem:[%s894 + $0x140] sm:$0xff] %v975
                  %v977 = vld [vmem:[%s893 + $0x248] sm:$0xff]
                  %978 = vst [vmem:[%s894 + $0x148] sm:$0xff] %v977
                  %v979 = vld [vmem:[%s893 + $0x250] sm:$0xff]
                  %980 = vst [vmem:[%s894 + $0x150] sm:$0xff] %v979
                  %v981 = vld [vmem:[%s893 + $0x258] sm:$0xff]
                  %982 = vst [vmem:[%s894 + $0x158] sm:$0xff] %v981
                  %v983 = vld [vmem:[%s893 + $0x260] sm:$0xff]
                  %984 = vst [vmem:[%s894 + $0x160] sm:$0xff] %v983
                  %v985 = vld [vmem:[%s893 + $0x268] sm:$0xff]
                  %986 = vst [vmem:[%s894 + $0x168] sm:$0xff] %v985
                  %v987 = vld [vmem:[%s893 + $0x270] sm:$0xff]
                  %988 = vst [vmem:[%s894 + $0x170] sm:$0xff] %v987
                  %v989 = vld [vmem:[%s893 + $0x278] sm:$0xff]
                  %990 = vst [vmem:[%s894 + $0x178] sm:$0xff] %v989
                  %v991 = vld [vmem:[%s893 + $0x300] sm:$0xff]
                  %992 = vst [vmem:[%s894 + $0x180] sm:$0xff] %v991
                  %v993 = vld [vmem:[%s893 + $0x308] sm:$0xff]
                  %994 = vst [vmem:[%s894 + $0x188] sm:$0xff] %v993
                  %v995 = vld [vmem:[%s893 + $0x310] sm:$0xff]
                  %996 = vst [vmem:[%s894 + $0x190] sm:$0xff] %v995
                  %v997 = vld [vmem:[%s893 + $0x318] sm:$0xff]
                  %998 = vst [vmem:[%s894 + $0x198] sm:$0xff] %v997
                  %v999 = vld [vmem:[%s893 + $0x320] sm:$0xff]
                  %1000 = vst [vmem:[%s894 + $0x1a0] sm:$0xff] %v999
                  %v1001 = vld [vmem:[%s893 + $0x328] sm:$0xff]
                  %1002 = vst [vmem:[%s894 + $0x1a8] sm:$0xff] %v1001
                  %v1003 = vld [vmem:[%s893 + $0x330] sm:$0xff]
                  %1004 = vst [vmem:[%s894 + $0x1b0] sm:$0xff] %v1003
                  %v1005 = vld [vmem:[%s893 + $0x338] sm:$0xff]
                  %1006 = vst [vmem:[%s894 + $0x1b8] sm:$0xff] %v1005
                  %v1007 = vld [vmem:[%s893 + $0x340] sm:$0xff]
                  %1008 = vst [vmem:[%s894 + $0x1c0] sm:$0xff] %v1007
                  %v1009 = vld [vmem:[%s893 + $0x348] sm:$0xff]
                  %1010 = vst [vmem:[%s894 + $0x1c8] sm:$0xff] %v1009
                  %v1011 = vld [vmem:[%s893 + $0x350] sm:$0xff]
                  %1012 = vst [vmem:[%s894 + $0x1d0] sm:$0xff] %v1011
                  %v1013 = vld [vmem:[%s893 + $0x358] sm:$0xff]
                  %1014 = vst [vmem:[%s894 + $0x1d8] sm:$0xff] %v1013
                  %v1015 = vld [vmem:[%s893 + $0x360] sm:$0xff]
                  %1016 = vst [vmem:[%s894 + $0x1e0] sm:$0xff] %v1015
                  %v1017 = vld [vmem:[%s893 + $0x368] sm:$0xff]
                  %1018 = vst [vmem:[%s894 + $0x1e8] sm:$0xff] %v1017
                  %v1019 = vld [vmem:[%s893 + $0x370] sm:$0xff]
                  %1020 = vst [vmem:[%s894 + $0x1f0] sm:$0xff] %v1019
                  %v1021 = vld [vmem:[%s893 + $0x378] sm:$0xff]
                  %1022 = vst [vmem:[%s894 + $0x1f8] sm:$0xff] %v1021
                $region124: #{block_forward_pallas.5} parent=118 // loop_footer
                  %s892 = sadd.s32 1, %s888
                $region125: #{block_forward_pallas.5} parent=118 // loop_footer_branch
                  %887 = sbr.rel target = $region121
                $region126: #{block_forward_pallas.5} parent=118 // loop_exit
                  _
              $region119: #{block_forward_pallas.5} parent=103 // pred_fallthru
                _
              // Predicated region
              $region127: #{block_forward_pallas.5} parent=103 // pred_check
                _
              $region128: #{block_forward_pallas.5} parent=103 // pred_check_branch
                %1024 = sbr.rel target = $region130
              $region129: #{block_forward_pallas.5} parent=103 // pred_region
                _
              $region130: #{block_forward_pallas.5} parent=103 // pred_fallthru
                _
            $region104: #{block_forward_pallas.5} parent=99 // pred_fallthru
              _
            // Predicated region
            $region105: #{block_forward_pallas.5} parent=99 // pred_check
              _
            $region106: #{block_forward_pallas.5} parent=99 // pred_check_branch
              %747 = sbr.rel target = $region108
            $region107: #{block_forward_pallas.5} parent=99 // pred_region
              loop: start=0, step=1, limit=1
              $region109: #{block_forward_pallas.5} parent=107 // loop_pre_header
                _
              $region110: #{block_forward_pallas.5} parent=107 // loop_header
                %s750 = sphi 0, %s754
                %p751 = scmp.ge.s32.totalorder %s750, 1
                %s755 = sphi %s741, %s741
                %s756 = sphi %s738, %s738
              $region111: #{block_forward_pallas.5} parent=107 // loop_header_branch
                %753 = sbr.rel (%p751) target = $region115
              $region112: #{block_forward_pallas.5} parent=107 // loop_body
                %v757 = vld [vmem:[%s755] sm:$0xff]
                %758 = vst [vmem:[%s756] sm:$0xff] %v757
                %v759 = vld [vmem:[%s755 + $0x8] sm:$0xff]
                %760 = vst [vmem:[%s756 + $0x8] sm:$0xff] %v759
                %v761 = vld [vmem:[%s755 + $0x10] sm:$0xff]
                %762 = vst [vmem:[%s756 + $0x10] sm:$0xff] %v761
                %v763 = vld [vmem:[%s755 + $0x18] sm:$0xff]
                %764 = vst [vmem:[%s756 + $0x18] sm:$0xff] %v763
                %v765 = vld [vmem:[%s755 + $0x20] sm:$0xff]
                %766 = vst [vmem:[%s756 + $0x20] sm:$0xff] %v765
                %v767 = vld [vmem:[%s755 + $0x28] sm:$0xff]
                %768 = vst [vmem:[%s756 + $0x28] sm:$0xff] %v767
                %v769 = vld [vmem:[%s755 + $0x30] sm:$0xff]
                %770 = vst [vmem:[%s756 + $0x30] sm:$0xff] %v769
                %v771 = vld [vmem:[%s755 + $0x38] sm:$0xff]
                %772 = vst [vmem:[%s756 + $0x38] sm:$0xff] %v771
                %v773 = vld [vmem:[%s755 + $0x40] sm:$0xff]
                %774 = vst [vmem:[%s756 + $0x40] sm:$0xff] %v773
                %v775 = vld [vmem:[%s755 + $0x48] sm:$0xff]
                %776 = vst [vmem:[%s756 + $0x48] sm:$0xff] %v775
                %v777 = vld [vmem:[%s755 + $0x50] sm:$0xff]
                %778 = vst [vmem:[%s756 + $0x50] sm:$0xff] %v777
                %v779 = vld [vmem:[%s755 + $0x58] sm:$0xff]
                %780 = vst [vmem:[%s756 + $0x58] sm:$0xff] %v779
                %v781 = vld [vmem:[%s755 + $0x60] sm:$0xff]
                %782 = vst [vmem:[%s756 + $0x60] sm:$0xff] %v781
                %v783 = vld [vmem:[%s755 + $0x68] sm:$0xff]
                %784 = vst [vmem:[%s756 + $0x68] sm:$0xff] %v783
                %v785 = vld [vmem:[%s755 + $0x70] sm:$0xff]
                %786 = vst [vmem:[%s756 + $0x70] sm:$0xff] %v785
                %v787 = vld [vmem:[%s755 + $0x78] sm:$0xff]
                %788 = vst [vmem:[%s756 + $0x78] sm:$0xff] %v787
                %v789 = vld [vmem:[%s755 + $0x100] sm:$0xff]
                %790 = vst [vmem:[%s756 + $0x80] sm:$0xff] %v789
                %v791 = vld [vmem:[%s755 + $0x108] sm:$0xff]
                %792 = vst [vmem:[%s756 + $0x88] sm:$0xff] %v791
                %v793 = vld [vmem:[%s755 + $0x110] sm:$0xff]
                %794 = vst [vmem:[%s756 + $0x90] sm:$0xff] %v793
                %v795 = vld [vmem:[%s755 + $0x118] sm:$0xff]
                %796 = vst [vmem:[%s756 + $0x98] sm:$0xff] %v795
                %v797 = vld [vmem:[%s755 + $0x120] sm:$0xff]
                %798 = vst [vmem:[%s756 + $0xa0] sm:$0xff] %v797
                %v799 = vld [vmem:[%s755 + $0x128] sm:$0xff]
                %800 = vst [vmem:[%s756 + $0xa8] sm:$0xff] %v799
                %v801 = vld [vmem:[%s755 + $0x130] sm:$0xff]
                %802 = vst [vmem:[%s756 + $0xb0] sm:$0xff] %v801
                %v803 = vld [vmem:[%s755 + $0x138] sm:$0xff]
                %804 = vst [vmem:[%s756 + $0xb8] sm:$0xff] %v803
                %v805 = vld [vmem:[%s755 + $0x140] sm:$0xff]
                %806 = vst [vmem:[%s756 + $0xc0] sm:$0xff] %v805
                %v807 = vld [vmem:[%s755 + $0x148] sm:$0xff]
                %808 = vst [vmem:[%s756 + $0xc8] sm:$0xff] %v807
                %v809 = vld [vmem:[%s755 + $0x150] sm:$0xff]
                %810 = vst [vmem:[%s756 + $0xd0] sm:$0xff] %v809
                %v811 = vld [vmem:[%s755 + $0x158] sm:$0xff]
                %812 = vst [vmem:[%s756 + $0xd8] sm:$0xff] %v811
                %v813 = vld [vmem:[%s755 + $0x160] sm:$0xff]
                %814 = vst [vmem:[%s756 + $0xe0] sm:$0xff] %v813
                %v815 = vld [vmem:[%s755 + $0x168] sm:$0xff]
                %816 = vst [vmem:[%s756 + $0xe8] sm:$0xff] %v815
                %v817 = vld [vmem:[%s755 + $0x170] sm:$0xff]
                %818 = vst [vmem:[%s756 + $0xf0] sm:$0xff] %v817
                %v819 = vld [vmem:[%s755 + $0x178] sm:$0xff]
                %820 = vst [vmem:[%s756 + $0xf8] sm:$0xff] %v819
                %v821 = vld [vmem:[%s755 + $0x200] sm:$0xff]
                %822 = vst [vmem:[%s756 + $0x100] sm:$0xff] %v821
                %v823 = vld [vmem:[%s755 + $0x208] sm:$0xff]
                %824 = vst [vmem:[%s756 + $0x108] sm:$0xff] %v823
                %v825 = vld [vmem:[%s755 + $0x210] sm:$0xff]
                %826 = vst [vmem:[%s756 + $0x110] sm:$0xff] %v825
                %v827 = vld [vmem:[%s755 + $0x218] sm:$0xff]
                %828 = vst [vmem:[%s756 + $0x118] sm:$0xff] %v827
                %v829 = vld [vmem:[%s755 + $0x220] sm:$0xff]
                %830 = vst [vmem:[%s756 + $0x120] sm:$0xff] %v829
                %v831 = vld [vmem:[%s755 + $0x228] sm:$0xff]
                %832 = vst [vmem:[%s756 + $0x128] sm:$0xff] %v831
                %v833 = vld [vmem:[%s755 + $0x230] sm:$0xff]
                %834 = vst [vmem:[%s756 + $0x130] sm:$0xff] %v833
                %v835 = vld [vmem:[%s755 + $0x238] sm:$0xff]
                %836 = vst [vmem:[%s756 + $0x138] sm:$0xff] %v835
                %v837 = vld [vmem:[%s755 + $0x240] sm:$0xff]
                %838 = vst [vmem:[%s756 + $0x140] sm:$0xff] %v837
                %v839 = vld [vmem:[%s755 + $0x248] sm:$0xff]
                %840 = vst [vmem:[%s756 + $0x148] sm:$0xff] %v839
                %v841 = vld [vmem:[%s755 + $0x250] sm:$0xff]
                %842 = vst [vmem:[%s756 + $0x150] sm:$0xff] %v841
                %v843 = vld [vmem:[%s755 + $0x258] sm:$0xff]
                %844 = vst [vmem:[%s756 + $0x158] sm:$0xff] %v843
                %v845 = vld [vmem:[%s755 + $0x260] sm:$0xff]
                %846 = vst [vmem:[%s756 + $0x160] sm:$0xff] %v845
                %v847 = vld [vmem:[%s755 + $0x268] sm:$0xff]
                %848 = vst [vmem:[%s756 + $0x168] sm:$0xff] %v847
                %v849 = vld [vmem:[%s755 + $0x270] sm:$0xff]
                %850 = vst [vmem:[%s756 + $0x170] sm:$0xff] %v849
                %v851 = vld [vmem:[%s755 + $0x278] sm:$0xff]
                %852 = vst [vmem:[%s756 + $0x178] sm:$0xff] %v851
                %v853 = vld [vmem:[%s755 + $0x300] sm:$0xff]
                %854 = vst [vmem:[%s756 + $0x180] sm:$0xff] %v853
                %v855 = vld [vmem:[%s755 + $0x308] sm:$0xff]
                %856 = vst [vmem:[%s756 + $0x188] sm:$0xff] %v855
                %v857 = vld [vmem:[%s755 + $0x310] sm:$0xff]
                %858 = vst [vmem:[%s756 + $0x190] sm:$0xff] %v857
                %v859 = vld [vmem:[%s755 + $0x318] sm:$0xff]
                %860 = vst [vmem:[%s756 + $0x198] sm:$0xff] %v859
                %v861 = vld [vmem:[%s755 + $0x320] sm:$0xff]
                %862 = vst [vmem:[%s756 + $0x1a0] sm:$0xff] %v861
                %v863 = vld [vmem:[%s755 + $0x328] sm:$0xff]
                %864 = vst [vmem:[%s756 + $0x1a8] sm:$0xff] %v863
                %v865 = vld [vmem:[%s755 + $0x330] sm:$0xff]
                %866 = vst [vmem:[%s756 + $0x1b0] sm:$0xff] %v865
                %v867 = vld [vmem:[%s755 + $0x338] sm:$0xff]
                %868 = vst [vmem:[%s756 + $0x1b8] sm:$0xff] %v867
                %v869 = vld [vmem:[%s755 + $0x340] sm:$0xff]
                %870 = vst [vmem:[%s756 + $0x1c0] sm:$0xff] %v869
                %v871 = vld [vmem:[%s755 + $0x348] sm:$0xff]
                %872 = vst [vmem:[%s756 + $0x1c8] sm:$0xff] %v871
                %v873 = vld [vmem:[%s755 + $0x350] sm:$0xff]
                %874 = vst [vmem:[%s756 + $0x1d0] sm:$0xff] %v873
                %v875 = vld [vmem:[%s755 + $0x358] sm:$0xff]
                %876 = vst [vmem:[%s756 + $0x1d8] sm:$0xff] %v875
                %v877 = vld [vmem:[%s755 + $0x360] sm:$0xff]
                %878 = vst [vmem:[%s756 + $0x1e0] sm:$0xff] %v877
                %v879 = vld [vmem:[%s755 + $0x368] sm:$0xff]
                %880 = vst [vmem:[%s756 + $0x1e8] sm:$0xff] %v879
                %v881 = vld [vmem:[%s755 + $0x370] sm:$0xff]
                %882 = vst [vmem:[%s756 + $0x1f0] sm:$0xff] %v881
                %v883 = vld [vmem:[%s755 + $0x378] sm:$0xff]
                %884 = vst [vmem:[%s756 + $0x1f8] sm:$0xff] %v883
              $region113: #{block_forward_pallas.5} parent=107 // loop_footer
                %s754 = sadd.s32 1, %s750
              $region114: #{block_forward_pallas.5} parent=107 // loop_footer_branch
                %749 = sbr.rel target = $region110
              $region115: #{block_forward_pallas.5} parent=107 // loop_exit
                _
            $region108: #{block_forward_pallas.5} parent=99 // pred_fallthru
              _
          $region100: #{block_forward_pallas.5} parent=95 // pred_fallthru
            _
          %1025 = vnop
        $region96: #{block_forward_pallas.5} parent=15 // pred_fallthru
          _
      $region16: #{block_forward_pallas.5} parent=5 // pred_fallthru
        _
      %p1026 = scmp.le.s32.totalorder 1, %s9
      %p1027 = scmp.lt.s32.totalorder %s9, 5
      %p1028 = pnand %p1026, %p1027
      %p1029 = pneg %p1028
      // Predicated region
      $region131: #{block_forward_pallas.5} parent=5 // pred_check
        _
      $region132: #{block_forward_pallas.5} parent=5 // pred_check_branch
        %1031 = sbr.rel (%p1028) target = $region134
      $region133: #{block_forward_pallas.5} parent=5 // pred_region
        %s1032 = ssub.s32 %s9, 1
        %s1033 = sand.u32 %s34, 1
        %s1034 = sand.u32 %s34, 1
        %s1035 = smul.addr %s1034, 512
        %s1036 = scalar_lea.vmem [#allocation5], %s1035
        // Predicated region
        $region135: #{block_forward_pallas.5} parent=133 // pred_check
          %p1037 = pneg %p47
        $region136: #{block_forward_pallas.5} parent=133 // pred_check_branch
          %1039 = sbr.rel (%p1037) target = $region138
        $region137: #{block_forward_pallas.5} parent=133 // pred_region
          _
        $region138: #{block_forward_pallas.5} parent=133 // pred_fallthru
          _
        %s1040 = sand.u32 %s60, 1
        %s1041 = sand.u32 %s60, 1
        %s1042 = smul.addr %s1041, 512
        %s1043 = scalar_lea.vmem [#allocation6], %s1042
        // Predicated region
        $region139: #{block_forward_pallas.5} parent=133 // pred_check
          %p1044 = pneg %p73
        $region140: #{block_forward_pallas.5} parent=133 // pred_check_branch
          %1046 = sbr.rel (%p1044) target = $region142
        $region141: #{block_forward_pallas.5} parent=133 // pred_region
          _
        $region142: #{block_forward_pallas.5} parent=133 // pred_fallthru
          _
        %s1047 = sand.u32 %s86, 1
        %s1048 = sand.u32 %s86, 1
        %s1049 = smul.addr %s1048, 512
        %s1050 = scalar_lea.vmem [#allocation7], %s1049
        // Predicated region
        $region143: #{block_forward_pallas.5} parent=133 // pred_check
          %p1051 = pneg %p99
        $region144: #{block_forward_pallas.5} parent=133 // pred_check_branch
          %1053 = sbr.rel (%p1051) target = $region146
        $region145: #{block_forward_pallas.5} parent=133 // pred_region
          _
        $region146: #{block_forward_pallas.5} parent=133 // pred_fallthru
          _
        %s1054 = sand.u32 %s34, 1
        %s1055 = sand.u32 %s34, 1
        %s1056 = smul.addr %s1055, 512
        %s1057 = scalar_lea.vmem [#allocation5], %s1056
        %p1058 = pneg %p47
        %p1059 = pneg %p44
        %s1060 = sand.u32 %s60, 1
        %s1061 = sand.u32 %s60, 1
        %s1062 = smul.addr %s1061, 512
        %s1063 = scalar_lea.vmem [#allocation6], %s1062
        %p1064 = pneg %p73
        %p1065 = pneg %p70
        %s1066 = sand.u32 %s86, 1
        %s1067 = sand.u32 %s86, 1
        %s1068 = smul.addr %s1067, 512
        %s1069 = scalar_lea.vmem [#allocation7], %s1068
        %p1070 = pneg %p99
        %p1071 = pneg %p96
        %p1072 = pneg %p125
        %p1073 = pneg %p122
        %s1074 = sand.u32 %s112, 1
        %s1075 = sand.u32 %s112, 1
        %s1076 = smul.addr %s1075, 512
        %s1077 = scalar_lea.vmem [#allocation8], %s1076
        %s1078 = smul.u32 16, %s18
        %s1079 = smul.u32 16, %s19
        %s1080 = smul.u32 16, %s19
        %s1081 = smul.u32 16, %s18
        %p1082 = scmp.eq.s32.totalorder %s19, 0
        // Predicated region
        $region147: #{block_forward_pallas.5} parent=133 // pred_check
          %p1083 = pneg %p1082
        $region148: #{block_forward_pallas.5} parent=133 // pred_check_branch
          %1085 = sbr.rel (%p1083) target = $region150
        $region149: #{block_forward_pallas.5} parent=133 // pred_region
          %vm1086 = vcmask 7168
          %1087 = vst.msk [vmem:[#allocation2] sm:$0xff] %vm1086, -inf
          %1088 = vst.msk [vmem:[#allocation2 + $0x8] sm:$0xff] %vm1086, -inf
          %1089 = vst.msk [vmem:[#allocation2 + $0x10] sm:$0xff] %vm1086, -inf
          %1090 = vst.msk [vmem:[#allocation2 + $0x18] sm:$0xff] %vm1086, -inf
          %1091 = vst.msk [vmem:[#allocation2 + $0x20] sm:$0xff] %vm1086, -inf
          %1092 = vst.msk [vmem:[#allocation2 + $0x28] sm:$0xff] %vm1086, -inf
          %1093 = vst.msk [vmem:[#allocation2 + $0x30] sm:$0xff] %vm1086, -inf
          %1094 = vst.msk [vmem:[#allocation2 + $0x38] sm:$0xff] %vm1086, -inf
          %1095 = vst.msk [vmem:[#allocation2 + $0x40] sm:$0xff] %vm1086, -inf
          %1096 = vst.msk [vmem:[#allocation2 + $0x48] sm:$0xff] %vm1086, -inf
          %1097 = vst.msk [vmem:[#allocation2 + $0x50] sm:$0xff] %vm1086, -inf
          %1098 = vst.msk [vmem:[#allocation2 + $0x58] sm:$0xff] %vm1086, -inf
          %1099 = vst.msk [vmem:[#allocation2 + $0x60] sm:$0xff] %vm1086, -inf
          %1100 = vst.msk [vmem:[#allocation2 + $0x68] sm:$0xff] %vm1086, -inf
          %1101 = vst.msk [vmem:[#allocation2 + $0x70] sm:$0xff] %vm1086, -inf
          %1102 = vst.msk [vmem:[#allocation2 + $0x78] sm:$0xff] %vm1086, -inf
          %1103 = vst.msk [vmem:[#allocation2 + $0x80] sm:$0xff] %vm1086, -inf
          %1104 = vst.msk [vmem:[#allocation2 + $0x88] sm:$0xff] %vm1086, -inf
          %1105 = vst.msk [vmem:[#allocation2 + $0x90] sm:$0xff] %vm1086, -inf
          %1106 = vst.msk [vmem:[#allocation2 + $0x98] sm:$0xff] %vm1086, -inf
          %1107 = vst.msk [vmem:[#allocation2 + $0xa0] sm:$0xff] %vm1086, -inf
          %1108 = vst.msk [vmem:[#allocation2 + $0xa8] sm:$0xff] %vm1086, -inf
          %1109 = vst.msk [vmem:[#allocation2 + $0xb0] sm:$0xff] %vm1086, -inf
          %1110 = vst.msk [vmem:[#allocation2 + $0xb8] sm:$0xff] %vm1086, -inf
          %1111 = vst.msk [vmem:[#allocation2 + $0xc0] sm:$0xff] %vm1086, -inf
          %1112 = vst.msk [vmem:[#allocation2 + $0xc8] sm:$0xff] %vm1086, -inf
          %1113 = vst.msk [vmem:[#allocation2 + $0xd0] sm:$0xff] %vm1086, -inf
          %1114 = vst.msk [vmem:[#allocation2 + $0xd8] sm:$0xff] %vm1086, -inf
          %1115 = vst.msk [vmem:[#allocation2 + $0xe0] sm:$0xff] %vm1086, -inf
          %1116 = vst.msk [vmem:[#allocation2 + $0xe8] sm:$0xff] %vm1086, -inf
          %1117 = vst.msk [vmem:[#allocation2 + $0xf0] sm:$0xff] %vm1086, -inf
          %1118 = vst.msk [vmem:[#allocation2 + $0xf8] sm:$0xff] %vm1086, -inf
          %1119 = vst.msk [vmem:[#allocation2 + $0x100] sm:$0xff] %vm1086, -inf
          %1120 = vst.msk [vmem:[#allocation2 + $0x108] sm:$0xff] %vm1086, -inf
          %1121 = vst.msk [vmem:[#allocation2 + $0x110] sm:$0xff] %vm1086, -inf
          %1122 = vst.msk [vmem:[#allocation2 + $0x118] sm:$0xff] %vm1086, -inf
          %1123 = vst.msk [vmem:[#allocation2 + $0x120] sm:$0xff] %vm1086, -inf
          %1124 = vst.msk [vmem:[#allocation2 + $0x128] sm:$0xff] %vm1086, -inf
          %1125 = vst.msk [vmem:[#allocation2 + $0x130] sm:$0xff] %vm1086, -inf
          %1126 = vst.msk [vmem:[#allocation2 + $0x138] sm:$0xff] %vm1086, -inf
          %1127 = vst.msk [vmem:[#allocation2 + $0x140] sm:$0xff] %vm1086, -inf
          %1128 = vst.msk [vmem:[#allocation2 + $0x148] sm:$0xff] %vm1086, -inf
          %1129 = vst.msk [vmem:[#allocation2 + $0x150] sm:$0xff] %vm1086, -inf
          %1130 = vst.msk [vmem:[#allocation2 + $0x158] sm:$0xff] %vm1086, -inf
          %1131 = vst.msk [vmem:[#allocation2 + $0x160] sm:$0xff] %vm1086, -inf
          %1132 = vst.msk [vmem:[#allocation2 + $0x168] sm:$0xff] %vm1086, -inf
          %1133 = vst.msk [vmem:[#allocation2 + $0x170] sm:$0xff] %vm1086, -inf
          %1134 = vst.msk [vmem:[#allocation2 + $0x178] sm:$0xff] %vm1086, -inf
          %1135 = vst.msk [vmem:[#allocation2 + $0x180] sm:$0xff] %vm1086, -inf
          %1136 = vst.msk [vmem:[#allocation2 + $0x188] sm:$0xff] %vm1086, -inf
          %1137 = vst.msk [vmem:[#allocation2 + $0x190] sm:$0xff] %vm1086, -inf
          %1138 = vst.msk [vmem:[#allocation2 + $0x198] sm:$0xff] %vm1086, -inf
          %1139 = vst.msk [vmem:[#allocation2 + $0x1a0] sm:$0xff] %vm1086, -inf
          %1140 = vst.msk [vmem:[#allocation2 + $0x1a8] sm:$0xff] %vm1086, -inf
          %1141 = vst.msk [vmem:[#allocation2 + $0x1b0] sm:$0xff] %vm1086, -inf
          %1142 = vst.msk [vmem:[#allocation2 + $0x1b8] sm:$0xff] %vm1086, -inf
          %1143 = vst.msk [vmem:[#allocation2 + $0x1c0] sm:$0xff] %vm1086, -inf
          %1144 = vst.msk [vmem:[#allocation2 + $0x1c8] sm:$0xff] %vm1086, -inf
          %1145 = vst.msk [vmem:[#allocation2 + $0x1d0] sm:$0xff] %vm1086, -inf
          %1146 = vst.msk [vmem:[#allocation2 + $0x1d8] sm:$0xff] %vm1086, -inf
          %1147 = vst.msk [vmem:[#allocation2 + $0x1e0] sm:$0xff] %vm1086, -inf
          %1148 = vst.msk [vmem:[#allocation2 + $0x1e8] sm:$0xff] %vm1086, -inf
          %1149 = vst.msk [vmem:[#allocation2 + $0x1f0] sm:$0xff] %vm1086, -inf
          %1150 = vst.msk [vmem:[#allocation2 + $0x1f8] sm:$0xff] %vm1086, -inf
          %1151 = vst.msk [vmem:[#allocation3] sm:$0xff] %vm1086, 0.0
          %1152 = vst.msk [vmem:[#allocation3 + $0x8] sm:$0xff] %vm1086, 0.0
          %1153 = vst.msk [vmem:[#allocation3 + $0x10] sm:$0xff] %vm1086, 0.0
          %1154 = vst.msk [vmem:[#allocation3 + $0x18] sm:$0xff] %vm1086, 0.0
          %1155 = vst.msk [vmem:[#allocation3 + $0x20] sm:$0xff] %vm1086, 0.0
          %1156 = vst.msk [vmem:[#allocation3 + $0x28] sm:$0xff] %vm1086, 0.0
          %1157 = vst.msk [vmem:[#allocation3 + $0x30] sm:$0xff] %vm1086, 0.0
          %1158 = vst.msk [vmem:[#allocation3 + $0x38] sm:$0xff] %vm1086, 0.0
          %1159 = vst.msk [vmem:[#allocation3 + $0x40] sm:$0xff] %vm1086, 0.0
          %1160 = vst.msk [vmem:[#allocation3 + $0x48] sm:$0xff] %vm1086, 0.0
          %1161 = vst.msk [vmem:[#allocation3 + $0x50] sm:$0xff] %vm1086, 0.0
          %1162 = vst.msk [vmem:[#allocation3 + $0x58] sm:$0xff] %vm1086, 0.0
          %1163 = vst.msk [vmem:[#allocation3 + $0x60] sm:$0xff] %vm1086, 0.0
          %1164 = vst.msk [vmem:[#allocation3 + $0x68] sm:$0xff] %vm1086, 0.0
          %1165 = vst.msk [vmem:[#allocation3 + $0x70] sm:$0xff] %vm1086, 0.0
          %1166 = vst.msk [vmem:[#allocation3 + $0x78] sm:$0xff] %vm1086, 0.0
          %1167 = vst.msk [vmem:[#allocation3 + $0x80] sm:$0xff] %vm1086, 0.0
          %1168 = vst.msk [vmem:[#allocation3 + $0x88] sm:$0xff] %vm1086, 0.0
          %1169 = vst.msk [vmem:[#allocation3 + $0x90] sm:$0xff] %vm1086, 0.0
          %1170 = vst.msk [vmem:[#allocation3 + $0x98] sm:$0xff] %vm1086, 0.0
          %1171 = vst.msk [vmem:[#allocation3 + $0xa0] sm:$0xff] %vm1086, 0.0
          %1172 = vst.msk [vmem:[#allocation3 + $0xa8] sm:$0xff] %vm1086, 0.0
          %1173 = vst.msk [vmem:[#allocation3 + $0xb0] sm:$0xff] %vm1086, 0.0
          %1174 = vst.msk [vmem:[#allocation3 + $0xb8] sm:$0xff] %vm1086, 0.0
          %1175 = vst.msk [vmem:[#allocation3 + $0xc0] sm:$0xff] %vm1086, 0.0
          %1176 = vst.msk [vmem:[#allocation3 + $0xc8] sm:$0xff] %vm1086, 0.0
          %1177 = vst.msk [vmem:[#allocation3 + $0xd0] sm:$0xff] %vm1086, 0.0
          %1178 = vst.msk [vmem:[#allocation3 + $0xd8] sm:$0xff] %vm1086, 0.0
          %1179 = vst.msk [vmem:[#allocation3 + $0xe0] sm:$0xff] %vm1086, 0.0
          %1180 = vst.msk [vmem:[#allocation3 + $0xe8] sm:$0xff] %vm1086, 0.0
          %1181 = vst.msk [vmem:[#allocation3 + $0xf0] sm:$0xff] %vm1086, 0.0
          %1182 = vst.msk [vmem:[#allocation3 + $0xf8] sm:$0xff] %vm1086, 0.0
          %1183 = vst.msk [vmem:[#allocation3 + $0x100] sm:$0xff] %vm1086, 0.0
          %1184 = vst.msk [vmem:[#allocation3 + $0x108] sm:$0xff] %vm1086, 0.0
          %1185 = vst.msk [vmem:[#allocation3 + $0x110] sm:$0xff] %vm1086, 0.0
          %1186 = vst.msk [vmem:[#allocation3 + $0x118] sm:$0xff] %vm1086, 0.0
          %1187 = vst.msk [vmem:[#allocation3 + $0x120] sm:$0xff] %vm1086, 0.0
          %1188 = vst.msk [vmem:[#allocation3 + $0x128] sm:$0xff] %vm1086, 0.0
          %1189 = vst.msk [vmem:[#allocation3 + $0x130] sm:$0xff] %vm1086, 0.0
          %1190 = vst.msk [vmem:[#allocation3 + $0x138] sm:$0xff] %vm1086, 0.0
          %1191 = vst.msk [vmem:[#allocation3 + $0x140] sm:$0xff] %vm1086, 0.0
          %1192 = vst.msk [vmem:[#allocation3 + $0x148] sm:$0xff] %vm1086, 0.0
          %1193 = vst.msk [vmem:[#allocation3 + $0x150] sm:$0xff] %vm1086, 0.0
          %1194 = vst.msk [vmem:[#allocation3 + $0x158] sm:$0xff] %vm1086, 0.0
          %1195 = vst.msk [vmem:[#allocation3 + $0x160] sm:$0xff] %vm1086, 0.0
          %1196 = vst.msk [vmem:[#allocation3 + $0x168] sm:$0xff] %vm1086, 0.0
          %1197 = vst.msk [vmem:[#allocation3 + $0x170] sm:$0xff] %vm1086, 0.0
          %1198 = vst.msk [vmem:[#allocation3 + $0x178] sm:$0xff] %vm1086, 0.0
          %1199 = vst.msk [vmem:[#allocation3 + $0x180] sm:$0xff] %vm1086, 0.0
          %1200 = vst.msk [vmem:[#allocation3 + $0x188] sm:$0xff] %vm1086, 0.0
          %1201 = vst.msk [vmem:[#allocation3 + $0x190] sm:$0xff] %vm1086, 0.0
          %1202 = vst.msk [vmem:[#allocation3 + $0x198] sm:$0xff] %vm1086, 0.0
          %1203 = vst.msk [vmem:[#allocation3 + $0x1a0] sm:$0xff] %vm1086, 0.0
          %1204 = vst.msk [vmem:[#allocation3 + $0x1a8] sm:$0xff] %vm1086, 0.0
          %1205 = vst.msk [vmem:[#allocation3 + $0x1b0] sm:$0xff] %vm1086, 0.0
          %1206 = vst.msk [vmem:[#allocation3 + $0x1b8] sm:$0xff] %vm1086, 0.0
          %1207 = vst.msk [vmem:[#allocation3 + $0x1c0] sm:$0xff] %vm1086, 0.0
          %1208 = vst.msk [vmem:[#allocation3 + $0x1c8] sm:$0xff] %vm1086, 0.0
          %1209 = vst.msk [vmem:[#allocation3 + $0x1d0] sm:$0xff] %vm1086, 0.0
          %1210 = vst.msk [vmem:[#allocation3 + $0x1d8] sm:$0xff] %vm1086, 0.0
          %1211 = vst.msk [vmem:[#allocation3 + $0x1e0] sm:$0xff] %vm1086, 0.0
          %1212 = vst.msk [vmem:[#allocation3 + $0x1e8] sm:$0xff] %vm1086, 0.0
          %1213 = vst.msk [vmem:[#allocation3 + $0x1f0] sm:$0xff] %vm1086, 0.0
          %1214 = vst.msk [vmem:[#allocation3 + $0x1f8] sm:$0xff] %vm1086, 0.0
          %vm1215 = vcmask 261120
          %1216 = vst.msk [vmem:[#allocation4] sm:$0xff] %vm1215, 0.0
          %1217 = vst.msk [vmem:[#allocation4 + $0x8] sm:$0xff] %vm1215, 0.0
          %1218 = vst.msk [vmem:[#allocation4 + $0x10] sm:$0xff] %vm1215, 0.0
          %1219 = vst.msk [vmem:[#allocation4 + $0x18] sm:$0xff] %vm1215, 0.0
          %1220 = vst.msk [vmem:[#allocation4 + $0x20] sm:$0xff] %vm1215, 0.0
          %1221 = vst.msk [vmem:[#allocation4 + $0x28] sm:$0xff] %vm1215, 0.0
          %1222 = vst.msk [vmem:[#allocation4 + $0x30] sm:$0xff] %vm1215, 0.0
          %1223 = vst.msk [vmem:[#allocation4 + $0x38] sm:$0xff] %vm1215, 0.0
          %1224 = vst.msk [vmem:[#allocation4 + $0x40] sm:$0xff] %vm1215, 0.0
          %1225 = vst.msk [vmem:[#allocation4 + $0x48] sm:$0xff] %vm1215, 0.0
          %1226 = vst.msk [vmem:[#allocation4 + $0x50] sm:$0xff] %vm1215, 0.0
          %1227 = vst.msk [vmem:[#allocation4 + $0x58] sm:$0xff] %vm1215, 0.0
          %1228 = vst.msk [vmem:[#allocation4 + $0x60] sm:$0xff] %vm1215, 0.0
          %1229 = vst.msk [vmem:[#allocation4 + $0x68] sm:$0xff] %vm1215, 0.0
          %1230 = vst.msk [vmem:[#allocation4 + $0x70] sm:$0xff] %vm1215, 0.0
          %1231 = vst.msk [vmem:[#allocation4 + $0x78] sm:$0xff] %vm1215, 0.0
          %1232 = vst.msk [vmem:[#allocation4 + $0x80] sm:$0xff] %vm1215, 0.0
          %1233 = vst.msk [vmem:[#allocation4 + $0x88] sm:$0xff] %vm1215, 0.0
          %1234 = vst.msk [vmem:[#allocation4 + $0x90] sm:$0xff] %vm1215, 0.0
          %1235 = vst.msk [vmem:[#allocation4 + $0x98] sm:$0xff] %vm1215, 0.0
          %1236 = vst.msk [vmem:[#allocation4 + $0xa0] sm:$0xff] %vm1215, 0.0
          %1237 = vst.msk [vmem:[#allocation4 + $0xa8] sm:$0xff] %vm1215, 0.0
          %1238 = vst.msk [vmem:[#allocation4 + $0xb0] sm:$0xff] %vm1215, 0.0
          %1239 = vst.msk [vmem:[#allocation4 + $0xb8] sm:$0xff] %vm1215, 0.0
          %1240 = vst.msk [vmem:[#allocation4 + $0xc0] sm:$0xff] %vm1215, 0.0
          %1241 = vst.msk [vmem:[#allocation4 + $0xc8] sm:$0xff] %vm1215, 0.0
          %1242 = vst.msk [vmem:[#allocation4 + $0xd0] sm:$0xff] %vm1215, 0.0
          %1243 = vst.msk [vmem:[#allocation4 + $0xd8] sm:$0xff] %vm1215, 0.0
          %1244 = vst.msk [vmem:[#allocation4 + $0xe0] sm:$0xff] %vm1215, 0.0
          %1245 = vst.msk [vmem:[#allocation4 + $0xe8] sm:$0xff] %vm1215, 0.0
          %1246 = vst.msk [vmem:[#allocation4 + $0xf0] sm:$0xff] %vm1215, 0.0
          %1247 = vst.msk [vmem:[#allocation4 + $0xf8] sm:$0xff] %vm1215, 0.0
          %1248 = vst.msk [vmem:[#allocation4 + $0x100] sm:$0xff] %vm1215, 0.0
          %1249 = vst.msk [vmem:[#allocation4 + $0x108] sm:$0xff] %vm1215, 0.0
          %1250 = vst.msk [vmem:[#allocation4 + $0x110] sm:$0xff] %vm1215, 0.0
          %1251 = vst.msk [vmem:[#allocation4 + $0x118] sm:$0xff] %vm1215, 0.0
          %1252 = vst.msk [vmem:[#allocation4 + $0x120] sm:$0xff] %vm1215, 0.0
          %1253 = vst.msk [vmem:[#allocation4 + $0x128] sm:$0xff] %vm1215, 0.0
          %1254 = vst.msk [vmem:[#allocation4 + $0x130] sm:$0xff] %vm1215, 0.0
          %1255 = vst.msk [vmem:[#allocation4 + $0x138] sm:$0xff] %vm1215, 0.0
          %1256 = vst.msk [vmem:[#allocation4 + $0x140] sm:$0xff] %vm1215, 0.0
          %1257 = vst.msk [vmem:[#allocation4 + $0x148] sm:$0xff] %vm1215, 0.0
          %1258 = vst.msk [vmem:[#allocation4 + $0x150] sm:$0xff] %vm1215, 0.0
          %1259 = vst.msk [vmem:[#allocation4 + $0x158] sm:$0xff] %vm1215, 0.0
          %1260 = vst.msk [vmem:[#allocation4 + $0x160] sm:$0xff] %vm1215, 0.0
          %1261 = vst.msk [vmem:[#allocation4 + $0x168] sm:$0xff] %vm1215, 0.0
          %1262 = vst.msk [vmem:[#allocation4 + $0x170] sm:$0xff] %vm1215, 0.0
          %1263 = vst.msk [vmem:[#allocation4 + $0x178] sm:$0xff] %vm1215, 0.0
          %1264 = vst.msk [vmem:[#allocation4 + $0x180] sm:$0xff] %vm1215, 0.0
          %1265 = vst.msk [vmem:[#allocation4 + $0x188] sm:$0xff] %vm1215, 0.0
          %1266 = vst.msk [vmem:[#allocation4 + $0x190] sm:$0xff] %vm1215, 0.0
          %1267 = vst.msk [vmem:[#allocation4 + $0x198] sm:$0xff] %vm1215, 0.0
          %1268 = vst.msk [vmem:[#allocation4 + $0x1a0] sm:$0xff] %vm1215, 0.0
          %1269 = vst.msk [vmem:[#allocation4 + $0x1a8] sm:$0xff] %vm1215, 0.0
          %1270 = vst.msk [vmem:[#allocation4 + $0x1b0] sm:$0xff] %vm1215, 0.0
          %1271 = vst.msk [vmem:[#allocation4 + $0x1b8] sm:$0xff] %vm1215, 0.0
          %1272 = vst.msk [vmem:[#allocation4 + $0x1c0] sm:$0xff] %vm1215, 0.0
          %1273 = vst.msk [vmem:[#allocation4 + $0x1c8] sm:$0xff] %vm1215, 0.0
          %1274 = vst.msk [vmem:[#allocation4 + $0x1d0] sm:$0xff] %vm1215, 0.0
          %1275 = vst.msk [vmem:[#allocation4 + $0x1d8] sm:$0xff] %vm1215, 0.0
          %1276 = vst.msk [vmem:[#allocation4 + $0x1e0] sm:$0xff] %vm1215, 0.0
          %1277 = vst.msk [vmem:[#allocation4 + $0x1e8] sm:$0xff] %vm1215, 0.0
          %1278 = vst.msk [vmem:[#allocation4 + $0x1f0] sm:$0xff] %vm1215, 0.0
          %1279 = vst.msk [vmem:[#allocation4 + $0x1f8] sm:$0xff] %vm1215, 0.0
        $region150: #{block_forward_pallas.5} parent=133 // pred_fallthru
          _
        %s1280 = smul.u32 %s19, 128
        %s1281 = sadd.s32 %s18, 1
        %s1282 = smul.u32 %s1281, 128
        %p1283 = scmp.lt.s32.totalorder %s1280, %s1282
        // Predicated region
        $region151: #{block_forward_pallas.5} parent=133 // pred_check
          %p1284 = pneg %p1283
        $region152: #{block_forward_pallas.5} parent=133 // pred_check_branch
          %1286 = sbr.rel (%p1284) target = $region154
        $region153: #{block_forward_pallas.5} parent=133 // pred_region
          %v1287 = vld [vmem:[%s1036] sm:$0xff]
          %v1288 = vld [vmem:[%s1036 + $0x8] sm:$0xff]
          %v1289 = vld [vmem:[%s1036 + $0x10] sm:$0xff]
          %v1290 = vld [vmem:[%s1036 + $0x18] sm:$0xff]
          %v1291 = vld [vmem:[%s1036 + $0x20] sm:$0xff]
          %v1292 = vld [vmem:[%s1036 + $0x28] sm:$0xff]
          %v1293 = vld [vmem:[%s1036 + $0x30] sm:$0xff]
          %v1294 = vld [vmem:[%s1036 + $0x38] sm:$0xff]
          %v1295 = vld [vmem:[%s1036 + $0x40] sm:$0xff]
          %v1296 = vld [vmem:[%s1036 + $0x48] sm:$0xff]
          %v1297 = vld [vmem:[%s1036 + $0x50] sm:$0xff]
          %v1298 = vld [vmem:[%s1036 + $0x58] sm:$0xff]
          %v1299 = vld [vmem:[%s1036 + $0x60] sm:$0xff]
          %v1300 = vld [vmem:[%s1036 + $0x68] sm:$0xff]
          %v1301 = vld [vmem:[%s1036 + $0x70] sm:$0xff]
          %v1302 = vld [vmem:[%s1036 + $0x78] sm:$0xff]
          %v1303 = vld [vmem:[%s1036 + $0x80] sm:$0xff]
          %v1304 = vld [vmem:[%s1036 + $0x88] sm:$0xff]
          %v1305 = vld [vmem:[%s1036 + $0x90] sm:$0xff]
          %v1306 = vld [vmem:[%s1036 + $0x98] sm:$0xff]
          %v1307 = vld [vmem:[%s1036 + $0xa0] sm:$0xff]
          %v1308 = vld [vmem:[%s1036 + $0xa8] sm:$0xff]
          %v1309 = vld [vmem:[%s1036 + $0xb0] sm:$0xff]
          %v1310 = vld [vmem:[%s1036 + $0xb8] sm:$0xff]
          %v1311 = vld [vmem:[%s1036 + $0xc0] sm:$0xff]
          %v1312 = vld [vmem:[%s1036 + $0xc8] sm:$0xff]
          %v1313 = vld [vmem:[%s1036 + $0xd0] sm:$0xff]
          %v1314 = vld [vmem:[%s1036 + $0xd8] sm:$0xff]
          %v1315 = vld [vmem:[%s1036 + $0xe0] sm:$0xff]
          %v1316 = vld [vmem:[%s1036 + $0xe8] sm:$0xff]
          %v1317 = vld [vmem:[%s1036 + $0xf0] sm:$0xff]
          %v1318 = vld [vmem:[%s1036 + $0xf8] sm:$0xff]
          %v1319 = vld [vmem:[%s1036 + $0x100] sm:$0xff]
          %v1320 = vld [vmem:[%s1036 + $0x108] sm:$0xff]
          %v1321 = vld [vmem:[%s1036 + $0x110] sm:$0xff]
          %v1322 = vld [vmem:[%s1036 + $0x118] sm:$0xff]
          %v1323 = vld [vmem:[%s1036 + $0x120] sm:$0xff]
          %v1324 = vld [vmem:[%s1036 + $0x128] sm:$0xff]
          %v1325 = vld [vmem:[%s1036 + $0x130] sm:$0xff]
          %v1326 = vld [vmem:[%s1036 + $0x138] sm:$0xff]
          %v1327 = vld [vmem:[%s1036 + $0x140] sm:$0xff]
          %v1328 = vld [vmem:[%s1036 + $0x148] sm:$0xff]
          %v1329 = vld [vmem:[%s1036 + $0x150] sm:$0xff]
          %v1330 = vld [vmem:[%s1036 + $0x158] sm:$0xff]
          %v1331 = vld [vmem:[%s1036 + $0x160] sm:$0xff]
          %v1332 = vld [vmem:[%s1036 + $0x168] sm:$0xff]
          %v1333 = vld [vmem:[%s1036 + $0x170] sm:$0xff]
          %v1334 = vld [vmem:[%s1036 + $0x178] sm:$0xff]
          %v1335 = vld [vmem:[%s1036 + $0x180] sm:$0xff]
          %v1336 = vld [vmem:[%s1036 + $0x188] sm:$0xff]
          %v1337 = vld [vmem:[%s1036 + $0x190] sm:$0xff]
          %v1338 = vld [vmem:[%s1036 + $0x198] sm:$0xff]
          %v1339 = vld [vmem:[%s1036 + $0x1a0] sm:$0xff]
          %v1340 = vld [vmem:[%s1036 + $0x1a8] sm:$0xff]
          %v1341 = vld [vmem:[%s1036 + $0x1b0] sm:$0xff]
          %v1342 = vld [vmem:[%s1036 + $0x1b8] sm:$0xff]
          %v1343 = vld [vmem:[%s1036 + $0x1c0] sm:$0xff]
          %v1344 = vld [vmem:[%s1036 + $0x1c8] sm:$0xff]
          %v1345 = vld [vmem:[%s1036 + $0x1d0] sm:$0xff]
          %v1346 = vld [vmem:[%s1036 + $0x1d8] sm:$0xff]
          %v1347 = vld [vmem:[%s1036 + $0x1e0] sm:$0xff]
          %v1348 = vld [vmem:[%s1036 + $0x1e8] sm:$0xff]
          %v1349 = vld [vmem:[%s1036 + $0x1f0] sm:$0xff]
          %v1350 = vld [vmem:[%s1036 + $0x1f8] sm:$0xff]
          %v1351 = vld [vmem:[%s1043] sm:$0xff]
          %v1352 = vld [vmem:[%s1043 + $0x8] sm:$0xff]
          %v1353 = vld [vmem:[%s1043 + $0x10] sm:$0xff]
          %v1354 = vld [vmem:[%s1043 + $0x18] sm:$0xff]
          %v1355 = vld [vmem:[%s1043 + $0x20] sm:$0xff]
          %v1356 = vld [vmem:[%s1043 + $0x28] sm:$0xff]
          %v1357 = vld [vmem:[%s1043 + $0x30] sm:$0xff]
          %v1358 = vld [vmem:[%s1043 + $0x38] sm:$0xff]
          %v1359 = vld [vmem:[%s1043 + $0x40] sm:$0xff]
          %v1360 = vld [vmem:[%s1043 + $0x48] sm:$0xff]
          %v1361 = vld [vmem:[%s1043 + $0x50] sm:$0xff]
          %v1362 = vld [vmem:[%s1043 + $0x58] sm:$0xff]
          %v1363 = vld [vmem:[%s1043 + $0x60] sm:$0xff]
          %v1364 = vld [vmem:[%s1043 + $0x68] sm:$0xff]
          %v1365 = vld [vmem:[%s1043 + $0x70] sm:$0xff]
          %v1366 = vld [vmem:[%s1043 + $0x78] sm:$0xff]
          %v1367 = vld [vmem:[%s1043 + $0x80] sm:$0xff]
          %v1368 = vld [vmem:[%s1043 + $0x88] sm:$0xff]
          %v1369 = vld [vmem:[%s1043 + $0x90] sm:$0xff]
          %v1370 = vld [vmem:[%s1043 + $0x98] sm:$0xff]
          %v1371 = vld [vmem:[%s1043 + $0xa0] sm:$0xff]
          %v1372 = vld [vmem:[%s1043 + $0xa8] sm:$0xff]
          %v1373 = vld [vmem:[%s1043 + $0xb0] sm:$0xff]
          %v1374 = vld [vmem:[%s1043 + $0xb8] sm:$0xff]
          %v1375 = vld [vmem:[%s1043 + $0xc0] sm:$0xff]
          %v1376 = vld [vmem:[%s1043 + $0xc8] sm:$0xff]
          %v1377 = vld [vmem:[%s1043 + $0xd0] sm:$0xff]
          %v1378 = vld [vmem:[%s1043 + $0xd8] sm:$0xff]
          %v1379 = vld [vmem:[%s1043 + $0xe0] sm:$0xff]
          %v1380 = vld [vmem:[%s1043 + $0xe8] sm:$0xff]
          %v1381 = vld [vmem:[%s1043 + $0xf0] sm:$0xff]
          %v1382 = vld [vmem:[%s1043 + $0xf8] sm:$0xff]
          %v1383 = vld [vmem:[%s1043 + $0x100] sm:$0xff]
          %v1384 = vld [vmem:[%s1043 + $0x108] sm:$0xff]
          %v1385 = vld [vmem:[%s1043 + $0x110] sm:$0xff]
          %v1386 = vld [vmem:[%s1043 + $0x118] sm:$0xff]
          %v1387 = vld [vmem:[%s1043 + $0x120] sm:$0xff]
          %v1388 = vld [vmem:[%s1043 + $0x128] sm:$0xff]
          %v1389 = vld [vmem:[%s1043 + $0x130] sm:$0xff]
          %v1390 = vld [vmem:[%s1043 + $0x138] sm:$0xff]
          %v1391 = vld [vmem:[%s1043 + $0x140] sm:$0xff]
          %v1392 = vld [vmem:[%s1043 + $0x148] sm:$0xff]
          %v1393 = vld [vmem:[%s1043 + $0x150] sm:$0xff]
          %v1394 = vld [vmem:[%s1043 + $0x158] sm:$0xff]
          %v1395 = vld [vmem:[%s1043 + $0x160] sm:$0xff]
          %v1396 = vld [vmem:[%s1043 + $0x168] sm:$0xff]
          %v1397 = vld [vmem:[%s1043 + $0x170] sm:$0xff]
          %v1398 = vld [vmem:[%s1043 + $0x178] sm:$0xff]
          %v1399 = vld [vmem:[%s1043 + $0x180] sm:$0xff]
          %v1400 = vld [vmem:[%s1043 + $0x188] sm:$0xff]
          %v1401 = vld [vmem:[%s1043 + $0x190] sm:$0xff]
          %v1402 = vld [vmem:[%s1043 + $0x198] sm:$0xff]
          %v1403 = vld [vmem:[%s1043 + $0x1a0] sm:$0xff]
          %v1404 = vld [vmem:[%s1043 + $0x1a8] sm:$0xff]
          %v1405 = vld [vmem:[%s1043 + $0x1b0] sm:$0xff]
          %v1406 = vld [vmem:[%s1043 + $0x1b8] sm:$0xff]
          %v1407 = vld [vmem:[%s1043 + $0x1c0] sm:$0xff]
          %v1408 = vld [vmem:[%s1043 + $0x1c8] sm:$0xff]
          %v1409 = vld [vmem:[%s1043 + $0x1d0] sm:$0xff]
          %v1410 = vld [vmem:[%s1043 + $0x1d8] sm:$0xff]
          %v1411 = vld [vmem:[%s1043 + $0x1e0] sm:$0xff]
          %v1412 = vld [vmem:[%s1043 + $0x1e8] sm:$0xff]
          %v1413 = vld [vmem:[%s1043 + $0x1f0] sm:$0xff]
          %v1414 = vld [vmem:[%s1043 + $0x1f8] sm:$0xff]
          %vm1415 = vcmask 261120
          %v1417 = vsel %vm1415, %v1287, 0
          %v1420 = vsel %vm1415, %v1288, 0
          %v1423 = vsel %vm1415, %v1289, 0
          %v1426 = vsel %vm1415, %v1290, 0
          %v1429 = vsel %vm1415, %v1291, 0
          %v1432 = vsel %vm1415, %v1292, 0
          %v1435 = vsel %vm1415, %v1293, 0
          %v1438 = vsel %vm1415, %v1294, 0
          %v1441 = vsel %vm1415, %v1295, 0
          %v1444 = vsel %vm1415, %v1296, 0
          %v1447 = vsel %vm1415, %v1297, 0
          %v1450 = vsel %vm1415, %v1298, 0
          %v1453 = vsel %vm1415, %v1299, 0
          %v1456 = vsel %vm1415, %v1300, 0
          %v1459 = vsel %vm1415, %v1301, 0
          %v1462 = vsel %vm1415, %v1302, 0
          %v1465 = vsel %vm1415, %v1351, 0
          %v1468 = vsel %vm1415, %v1352, 0
          %v1471 = vsel %vm1415, %v1353, 0
          %v1474 = vsel %vm1415, %v1354, 0
          %v1477 = vsel %vm1415, %v1355, 0
          %v1480 = vsel %vm1415, %v1356, 0
          %v1483 = vsel %vm1415, %v1357, 0
          %v1486 = vsel %vm1415, %v1358, 0
          %v1489 = vsel %vm1415, %v1359, 0
          %v1492 = vsel %vm1415, %v1360, 0
          %v1495 = vsel %vm1415, %v1361, 0
          %v1498 = vsel %vm1415, %v1362, 0
          %v1501 = vsel %vm1415, %v1363, 0
          %v1504 = vsel %vm1415, %v1364, 0
          %v1507 = vsel %vm1415, %v1365, 0
          %v1510 = vsel %vm1415, %v1366, 0
          %1512 = vmatprep.subr.mxu0 0.0
          %1513 = vmatpush1.xpose.msra.mxu0 %v1465
          %1514 = vmatprep.subr.mxu0 0.0
          %1515 = vmatpush1.xpose.msra.mxu0 %v1468
          %1516 = vmatprep.subr.mxu0 0.0
          %1517 = vmatpush1.xpose.msra.mxu0 %v1471
          %1518 = vmatprep.subr.mxu0 0.0
          %1519 = vmatpush1.xpose.msra.mxu0 %v1474
          %1520 = vmatprep.subr.mxu0 0.0
          %1521 = vmatpush1.xpose.msra.mxu0 %v1477
          %1522 = vmatprep.subr.mxu0 0.0
          %1523 = vmatpush1.xpose.msra.mxu0 %v1480
          %1524 = vmatprep.subr.mxu0 0.0
          %1525 = vmatpush1.xpose.msra.mxu0 %v1483
          %1526 = vmatprep.subr.mxu0 0.0
          %1527 = vmatpush1.xpose.msra.mxu0 %v1486
          %1528 = vmatprep.subr.mxu0 0.0
          %1529 = vmatpush1.xpose.msra.mxu0 %v1489
          %1530 = vmatprep.subr.mxu0 0.0
          %1531 = vmatpush1.xpose.msra.mxu0 %v1492
          %1532 = vmatprep.subr.mxu0 0.0
          %1533 = vmatpush1.xpose.msra.mxu0 %v1495
          %1534 = vmatprep.subr.mxu0 0.0
          %1535 = vmatpush1.xpose.msra.mxu0 %v1498
          %1536 = vmatprep.subr.mxu0 0.0
          %1537 = vmatpush1.xpose.msra.mxu0 %v1501
          %1538 = vmatprep.subr.mxu0 0.0
          %1539 = vmatpush1.xpose.msra.mxu0 %v1504
          %1540 = vmatprep.subr.mxu0 0.0
          %1541 = vmatpush1.xpose.msra.mxu0 %v1507
          %1542 = vmatprep.subr.mxu0 0.0
          %1543 = vmatpush1.xpose.msra.mxu0 %v1510
          %1544 = vmatprep.subr.mxu0 0.0
          %1545 = vmatpush1.xpose.msra.mxu0 0.0
          %1546 = vmatprep.subr.mxu0 0.0
          %1547 = vmatpush1.xpose.msra.mxu0 0.0
          %1548 = vmatprep.subr.mxu0 0.0
          %1549 = vmatpush1.xpose.msra.mxu0 0.0
          %1550 = vmatprep.subr.mxu0 0.0
          %1551 = vmatpush1.xpose.msra.mxu0 0.0
          %1552 = vmatprep.subr.mxu0 0.0
          %1553 = vmatpush1.xpose.msra.mxu0 0.0
          %1554 = vmatprep.subr.mxu0 0.0
          %1555 = vmatpush1.xpose.msra.mxu0 0.0
          %1556 = vmatprep.subr.mxu0 0.0
          %1557 = vmatpush1.xpose.msra.mxu0 0.0
          %1558 = vmatprep.subr.mxu0 0.0
          %1559 = vmatpush1.xpose.msra.mxu0 0.0
          %1560 = vmatprep.subr.mxu0 0.0
          %1561 = vmatpush1.xpose.msra.mxu0 0.0
          %1562 = vmatprep.subr.mxu0 0.0
          %1563 = vmatpush1.xpose.msra.mxu0 0.0
          %1564 = vmatprep.subr.mxu0 0.0
          %1565 = vmatpush1.xpose.msra.mxu0 0.0
          %1566 = vmatprep.subr.mxu0 0.0
          %1567 = vmatpush1.xpose.msra.mxu0 0.0
          %1568 = vmatprep.subr.mxu0 0.0
          %1569 = vmatpush1.xpose.msra.mxu0 0.0
          %1570 = vmatprep.subr.mxu0 0.0
          %1571 = vmatpush1.xpose.msra.mxu0 0.0
          %1572 = vmatprep.subr.mxu0 0.0
          %1573 = vmatpush1.xpose.msra.mxu0 0.0
          %1574 = vmatprep.subr.mxu0 0.0
          %1575 = vmatpush1.xpose.msra.mxu0 0.0
          %1576 = vmatprep.mubr.f32.mxu0 0.0
          %1577 = vmatmul.mubr.f32.gmra.mrb[0].mxu0 %v1417
          %v1578 = vpop.f32.mrb[0].mxu0
          %v1579 = vadd.f32 0.0, %v1578
          %v1580 = vpop.f32.mrb[0].mxu0
          %1581 = vmatprep.mubr.f32.mxu0 0.0
          %1582 = vmatmul.mubr.f32.gmra.mrb[0].mxu0 %v1420
          %v1583 = vpop.f32.mrb[0].mxu0
          %v1584 = vadd.f32 0.0, %v1583
          %v1585 = vpop.f32.mrb[0].mxu0
          %1586 = vmatprep.mubr.f32.mxu0 0.0
          %1587 = vmatmul.mubr.f32.gmra.mrb[0].mxu0 %v1423
          %v1588 = vpop.f32.mrb[0].mxu0
          %v1589 = vadd.f32 0.0, %v1588
          %v1590 = vpop.f32.mrb[0].mxu0
          %1591 = vmatprep.mubr.f32.mxu0 0.0
          %1592 = vmatmul.mubr.f32.gmra.mrb[0].mxu0 %v1426
          %v1593 = vpop.f32.mrb[0].mxu0
          %v1594 = vadd.f32 0.0, %v1593
          %v1595 = vpop.f32.mrb[0].mxu0
          %1596 = vmatprep.mubr.f32.mxu0 0.0
          %1597 = vmatmul.mubr.f32.gmra.mrb[0].mxu0 %v1429
          %v1598 = vpop.f32.mrb[0].mxu0
          %v1599 = vadd.f32 0.0, %v1598
          %v1600 = vpop.f32.mrb[0].mxu0
          %1601 = vmatprep.mubr.f32.mxu0 0.0
          %1602 = vmatmul.mubr.f32.gmra.mrb[0].mxu0 %v1432
          %v1603 = vpop.f32.mrb[0].mxu0
          %v1604 = vadd.f32 0.0, %v1603
          %v1605 = vpop.f32.mrb[0].mxu0
          %1606 = vmatprep.mubr.f32.mxu0 0.0
          %1607 = vmatmul.mubr.f32.gmra.mrb[0].mxu0 %v1435
          %v1608 = vpop.f32.mrb[0].mxu0
          %v1609 = vadd.f32 0.0, %v1608
          %v1610 = vpop.f32.mrb[0].mxu0
          %1611 = vmatprep.mubr.f32.mxu0 0.0
          %1612 = vmatmul.mubr.f32.gmra.mrb[0].mxu0 %v1438
          %v1613 = vpop.f32.mrb[0].mxu0
          %v1614 = vadd.f32 0.0, %v1613
          %v1615 = vpop.f32.mrb[0].mxu0
          %1616 = vmatprep.mubr.f32.mxu0 0.0
          %1617 = vmatmul.mubr.f32.gmra.mrb[0].mxu0 %v1441
          %v1618 = vpop.f32.mrb[0].mxu0
          %v1619 = vadd.f32 0.0, %v1618
          %v1620 = vpop.f32.mrb[0].mxu0
          %1621 = vmatprep.mubr.f32.mxu0 0.0
          %1622 = vmatmul.mubr.f32.gmra.mrb[0].mxu0 %v1444
          %v1623 = vpop.f32.mrb[0].mxu0
          %v1624 = vadd.f32 0.0, %v1623
          %v1625 = vpop.f32.mrb[0].mxu0
          %1626 = vmatprep.mubr.f32.mxu0 0.0
          %1627 = vmatmul.mubr.f32.gmra.mrb[0].mxu0 %v1447
          %v1628 = vpop.f32.mrb[0].mxu0
          %v1629 = vadd.f32 0.0, %v1628
          %v1630 = vpop.f32.mrb[0].mxu0
          %1631 = vmatprep.mubr.f32.mxu0 0.0
          %1632 = vmatmul.mubr.f32.gmra.mrb[0].mxu0 %v1450
          %v1633 = vpop.f32.mrb[0].mxu0
          %v1634 = vadd.f32 0.0, %v1633
          %v1635 = vpop.f32.mrb[0].mxu0
          %1636 = vmatprep.mubr.f32.mxu0 0.0
          %1637 = vmatmul.mubr.f32.gmra.mrb[0].mxu0 %v1453
          %v1638 = vpop.f32.mrb[0].mxu0
          %v1639 = vadd.f32 0.0, %v1638
          %v1640 = vpop.f32.mrb[0].mxu0
          %1641 = vmatprep.mubr.f32.mxu0 0.0
          %1642 = vmatmul.mubr.f32.gmra.mrb[0].mxu0 %v1456
          %v1643 = vpop.f32.mrb[0].mxu0
          %v1644 = vadd.f32 0.0, %v1643
          %v1645 = vpop.f32.mrb[0].mxu0
          %1646 = vmatprep.mubr.f32.mxu0 0.0
          %1647 = vmatmul.mubr.f32.gmra.mrb[0].mxu0 %v1459
          %v1648 = vpop.f32.mrb[0].mxu0
          %v1649 = vadd.f32 0.0, %v1648
          %v1650 = vpop.f32.mrb[0].mxu0
          %1651 = vmatprep.mubr.f32.mxu0 0.0
          %1652 = vmatmul.mubr.f32.gmra.mrb[0].mxu0 %v1462
          %v1653 = vpop.f32.mrb[0].mxu0
          %v1654 = vadd.f32 0.0, %v1653
          %v1655 = vpop.f32.mrb[0].mxu0
          %1656 = vdwg.mxu0
          %v1658 = vsel %vm1415, %v1303, 0
          %v1661 = vsel %vm1415, %v1304, 0
          %v1664 = vsel %vm1415, %v1305, 0
          %v1667 = vsel %vm1415, %v1306, 0
          %v1670 = vsel %vm1415, %v1307, 0
          %v1673 = vsel %vm1415, %v1308, 0
          %v1676 = vsel %vm1415, %v1309, 0
          %v1679 = vsel %vm1415, %v1310, 0
          %v1682 = vsel %vm1415, %v1311, 0
          %v1685 = vsel %vm1415, %v1312, 0
          %v1688 = vsel %vm1415, %v1313, 0
          %v1691 = vsel %vm1415, %v1314, 0
          %v1694 = vsel %vm1415, %v1315, 0
          %v1697 = vsel %vm1415, %v1316, 0
          %v1700 = vsel %vm1415, %v1317, 0
          %v1703 = vsel %vm1415, %v1318, 0
          %v1706 = vsel %vm1415, %v1367, 0
          %v1709 = vsel %vm1415, %v1368, 0
          %v1712 = vsel %vm1415, %v1369, 0
          %v1715 = vsel %vm1415, %v1370, 0
          %v1718 = vsel %vm1415, %v1371, 0
          %v1721 = vsel %vm1415, %v1372, 0
          %v1724 = vsel %vm1415, %v1373, 0
          %v1727 = vsel %vm1415, %v1374, 0
          %v1730 = vsel %vm1415, %v1375, 0
          %v1733 = vsel %vm1415, %v1376, 0
          %v1736 = vsel %vm1415, %v1377, 0
          %v1739 = vsel %vm1415, %v1378, 0
          %v1742 = vsel %vm1415, %v1379, 0
          %v1745 = vsel %vm1415, %v1380, 0
          %v1748 = vsel %vm1415, %v1381, 0
          %v1751 = vsel %vm1415, %v1382, 0
          %1753 = vmatprep.subr.mxu0 0.0
          %1754 = vmatpush1.xpose.msra.mxu0 %v1706
          %1755 = vmatprep.subr.mxu0 0.0
          %1756 = vmatpush1.xpose.msra.mxu0 %v1709
          %1757 = vmatprep.subr.mxu0 0.0
          %1758 = vmatpush1.xpose.msra.mxu0 %v1712
          %1759 = vmatprep.subr.mxu0 0.0
          %1760 = vmatpush1.xpose.msra.mxu0 %v1715
          %1761 = vmatprep.subr.mxu0 0.0
          %1762 = vmatpush1.xpose.msra.mxu0 %v1718
          %1763 = vmatprep.subr.mxu0 0.0
          %1764 = vmatpush1.xpose.msra.mxu0 %v1721
          %1765 = vmatprep.subr.mxu0 0.0
          %1766 = vmatpush1.xpose.msra.mxu0 %v1724
          %1767 = vmatprep.subr.mxu0 0.0
          %1768 = vmatpush1.xpose.msra.mxu0 %v1727
          %1769 = vmatprep.subr.mxu0 0.0
          %1770 = vmatpush1.xpose.msra.mxu0 %v1730
          %1771 = vmatprep.subr.mxu0 0.0
          %1772 = vmatpush1.xpose.msra.mxu0 %v1733
          %1773 = vmatprep.subr.mxu0 0.0
          %1774 = vmatpush1.xpose.msra.mxu0 %v1736
          %1775 = vmatprep.subr.mxu0 0.0
          %1776 = vmatpush1.xpose.msra.mxu0 %v1739
          %1777 = vmatprep.subr.mxu0 0.0
          %1778 = vmatpush1.xpose.msra.mxu0 %v1742
          %1779 = vmatprep.subr.mxu0 0.0
          %1780 = vmatpush1.xpose.msra.mxu0 %v1745
          %1781 = vmatprep.subr.mxu0 0.0
          %1782 = vmatpush1.xpose.msra.mxu0 %v1748
          %1783 = vmatprep.subr.mxu0 0.0
          %1784 = vmatpush1.xpose.msra.mxu0 %v1751
          %1785 = vmatprep.subr.mxu0 0.0
          %1786 = vmatpush1.xpose.msra.mxu0 0.0
          %1787 = vmatprep.subr.mxu0 0.0
          %1788 = vmatpush1.xpose.msra.mxu0 0.0
          %1789 = vmatprep.subr.mxu0 0.0
          %1790 = vmatpush1.xpose.msra.mxu0 0.0
          %1791 = vmatprep.subr.mxu0 0.0
          %1792 = vmatpush1.xpose.msra.mxu0 0.0
          %1793 = vmatprep.subr.mxu0 0.0
          %1794 = vmatpush1.xpose.msra.mxu0 0.0
          %1795 = vmatprep.subr.mxu0 0.0
          %1796 = vmatpush1.xpose.msra.mxu0 0.0
          %1797 = vmatprep.subr.mxu0 0.0
          %1798 = vmatpush1.xpose.msra.mxu0 0.0
          %1799 = vmatprep.subr.mxu0 0.0
          %1800 = vmatpush1.xpose.msra.mxu0 0.0
          %1801 = vmatprep.subr.mxu0 0.0
          %1802 = vmatpush1.xpose.msra.mxu0 0.0
          %1803 = vmatprep.subr.mxu0 0.0
          %1804 = vmatpush1.xpose.msra.mxu0 0.0
          %1805 = vmatprep.subr.mxu0 0.0
          %1806 = vmatpush1.xpose.msra.mxu0 0.0
          %1807 = vmatprep.subr.mxu0 0.0
          %1808 = vmatpush1.xpose.msra.mxu0 0.0
          %1809 = vmatprep.subr.mxu0 0.0
          %1810 = vmatpush1.xpose.msra.mxu0 0.0
          %1811 = vmatprep.subr.mxu0 0.0
          %1812 = vmatpush1.xpose.msra.mxu0 0.0
          %1813 = vmatprep.subr.mxu0 0.0
          %1814 = vmatpush1.xpose.msra.mxu0 0.0
          %1815 = vmatprep.subr.mxu0 0.0
          %1816 = vmatpush1.xpose.msra.mxu0 0.0
          %1817 = vmatprep.mubr.f32.mxu0 0.0
          %1818 = vmatmul.mubr.f32.gmra.mrb[0].mxu0 %v1658
          %v1819 = vpop.f32.mrb[0].mxu0
          %v1820 = vadd.f32 0.0, %v1819
          %v1821 = vpop.f32.mrb[0].mxu0
          %1822 = vmatprep.mubr.f32.mxu0 0.0
          %1823 = vmatmul.mubr.f32.gmra.mrb[0].mxu0 %v1661
          %v1824 = vpop.f32.mrb[0].mxu0
          %v1825 = vadd.f32 0.0, %v1824
          %v1826 = vpop.f32.mrb[0].mxu0
          %1827 = vmatprep.mubr.f32.mxu0 0.0
          %1828 = vmatmul.mubr.f32.gmra.mrb[0].mxu0 %v1664
          %v1829 = vpop.f32.mrb[0].mxu0
          %v1830 = vadd.f32 0.0, %v1829
          %v1831 = vpop.f32.mrb[0].mxu0
          %1832 = vmatprep.mubr.f32.mxu0 0.0
          %1833 = vmatmul.mubr.f32.gmra.mrb[0].mxu0 %v1667
          %v1834 = vpop.f32.mrb[0].mxu0
          %v1835 = vadd.f32 0.0, %v1834
          %v1836 = vpop.f32.mrb[0].mxu0
          %1837 = vmatprep.mubr.f32.mxu0 0.0
          %1838 = vmatmul.mubr.f32.gmra.mrb[0].mxu0 %v1670
          %v1839 = vpop.f32.mrb[0].mxu0
          %v1840 = vadd.f32 0.0, %v1839
          %v1841 = vpop.f32.mrb[0].mxu0
          %1842 = vmatprep.mubr.f32.mxu0 0.0
          %1843 = vmatmul.mubr.f32.gmra.mrb[0].mxu0 %v1673
          %v1844 = vpop.f32.mrb[0].mxu0
          %v1845 = vadd.f32 0.0, %v1844
          %v1846 = vpop.f32.mrb[0].mxu0
          %1847 = vmatprep.mubr.f32.mxu0 0.0
          %1848 = vmatmul.mubr.f32.gmra.mrb[0].mxu0 %v1676
          %v1849 = vpop.f32.mrb[0].mxu0
          %v1850 = vadd.f32 0.0, %v1849
          %v1851 = vpop.f32.mrb[0].mxu0
          %1852 = vmatprep.mubr.f32.mxu0 0.0
          %1853 = vmatmul.mubr.f32.gmra.mrb[0].mxu0 %v1679
          %v1854 = vpop.f32.mrb[0].mxu0
          %v1855 = vadd.f32 0.0, %v1854
          %v1856 = vpop.f32.mrb[0].mxu0
          %1857 = vmatprep.mubr.f32.mxu0 0.0
          %1858 = vmatmul.mubr.f32.gmra.mrb[0].mxu0 %v1682
          %v1859 = vpop.f32.mrb[0].mxu0
          %v1860 = vadd.f32 0.0, %v1859
          %v1861 = vpop.f32.mrb[0].mxu0
          %1862 = vmatprep.mubr.f32.mxu0 0.0
          %1863 = vmatmul.mubr.f32.gmra.mrb[0].mxu0 %v1685
          %v1864 = vpop.f32.mrb[0].mxu0
          %v1865 = vadd.f32 0.0, %v1864
          %v1866 = vpop.f32.mrb[0].mxu0
          %1867 = vmatprep.mubr.f32.mxu0 0.0
          %1868 = vmatmul.mubr.f32.gmra.mrb[0].mxu0 %v1688
          %v1869 = vpop.f32.mrb[0].mxu0
          %v1870 = vadd.f32 0.0, %v1869
          %v1871 = vpop.f32.mrb[0].mxu0
          %1872 = vmatprep.mubr.f32.mxu0 0.0
          %1873 = vmatmul.mubr.f32.gmra.mrb[0].mxu0 %v1691
          %v1874 = vpop.f32.mrb[0].mxu0
          %v1875 = vadd.f32 0.0, %v1874
          %v1876 = vpop.f32.mrb[0].mxu0
          %1877 = vmatprep.mubr.f32.mxu0 0.0
          %1878 = vmatmul.mubr.f32.gmra.mrb[0].mxu0 %v1694
          %v1879 = vpop.f32.mrb[0].mxu0
          %v1880 = vadd.f32 0.0, %v1879
          %v1881 = vpop.f32.mrb[0].mxu0
          %1882 = vmatprep.mubr.f32.mxu0 0.0
          %1883 = vmatmul.mubr.f32.gmra.mrb[0].mxu0 %v1697
          %v1884 = vpop.f32.mrb[0].mxu0
          %v1885 = vadd.f32 0.0, %v1884
          %v1886 = vpop.f32.mrb[0].mxu0
          %1887 = vmatprep.mubr.f32.mxu0 0.0
          %1888 = vmatmul.mubr.f32.gmra.mrb[0].mxu0 %v1700
          %v1889 = vpop.f32.mrb[0].mxu0
          %v1890 = vadd.f32 0.0, %v1889
          %v1891 = vpop.f32.mrb[0].mxu0
          %1892 = vmatprep.mubr.f32.mxu0 0.0
          %1893 = vmatmul.mubr.f32.gmra.mrb[0].mxu0 %v1703
          %v1894 = vpop.f32.mrb[0].mxu0
          %v1895 = vadd.f32 0.0, %v1894
          %v1896 = vpop.f32.mrb[0].mxu0
          %1897 = vdwg.mxu0
          %v1899 = vsel %vm1415, %v1319, 0
          %v1902 = vsel %vm1415, %v1320, 0
          %v1905 = vsel %vm1415, %v1321, 0
          %v1908 = vsel %vm1415, %v1322, 0
          %v1911 = vsel %vm1415, %v1323, 0
          %v1914 = vsel %vm1415, %v1324, 0
          %v1917 = vsel %vm1415, %v1325, 0
          %v1920 = vsel %vm1415, %v1326, 0
          %v1923 = vsel %vm1415, %v1327, 0
          %v1926 = vsel %vm1415, %v1328, 0
          %v1929 = vsel %vm1415, %v1329, 0
          %v1932 = vsel %vm1415, %v1330, 0
          %v1935 = vsel %vm1415, %v1331, 0
          %v1938 = vsel %vm1415, %v1332, 0
          %v1941 = vsel %vm1415, %v1333, 0
          %v1944 = vsel %vm1415, %v1334, 0
          %v1947 = vsel %vm1415, %v1383, 0
          %v1950 = vsel %vm1415, %v1384, 0
          %v1953 = vsel %vm1415, %v1385, 0
          %v1956 = vsel %vm1415, %v1386, 0
          %v1959 = vsel %vm1415, %v1387, 0
          %v1962 = vsel %vm1415, %v1388, 0
          %v1965 = vsel %vm1415, %v1389, 0
          %v1968 = vsel %vm1415, %v1390, 0
          %v1971 = vsel %vm1415, %v1391, 0
          %v1974 = vsel %vm1415, %v1392, 0
          %v1977 = vsel %vm1415, %v1393, 0
          %v1980 = vsel %vm1415, %v1394, 0
          %v1983 = vsel %vm1415, %v1395, 0
          %v1986 = vsel %vm1415, %v1396, 0
          %v1989 = vsel %vm1415, %v1397, 0
          %v1992 = vsel %vm1415, %v1398, 0
          %1994 = vmatprep.subr.mxu0 0.0
          %1995 = vmatpush1.xpose.msra.mxu0 %v1947
          %1996 = vmatprep.subr.mxu0 0.0
          %1997 = vmatpush1.xpose.msra.mxu0 %v1950
          %1998 = vmatprep.subr.mxu0 0.0
          %1999 = vmatpush1.xpose.msra.mxu0 %v1953
          %2000 = vmatprep.subr.mxu0 0.0
          %2001 = vmatpush1.xpose.msra.mxu0 %v1956
          %2002 = vmatprep.subr.mxu0 0.0
          %2003 = vmatpush1.xpose.msra.mxu0 %v1959
          %2004 = vmatprep.subr.mxu0 0.0
          %2005 = vmatpush1.xpose.msra.mxu0 %v1962
          %2006 = vmatprep.subr.mxu0 0.0
          %2007 = vmatpush1.xpose.msra.mxu0 %v1965
          %2008 = vmatprep.subr.mxu0 0.0
          %2009 = vmatpush1.xpose.msra.mxu0 %v1968
          %2010 = vmatprep.subr.mxu0 0.0
          %2011 = vmatpush1.xpose.msra.mxu0 %v1971
          %2012 = vmatprep.subr.mxu0 0.0
          %2013 = vmatpush1.xpose.msra.mxu0 %v1974
          %2014 = vmatprep.subr.mxu0 0.0
          %2015 = vmatpush1.xpose.msra.mxu0 %v1977
          %2016 = vmatprep.subr.mxu0 0.0
          %2017 = vmatpush1.xpose.msra.mxu0 %v1980
          %2018 = vmatprep.subr.mxu0 0.0
          %2019 = vmatpush1.xpose.msra.mxu0 %v1983
          %2020 = vmatprep.subr.mxu0 0.0
          %2021 = vmatpush1.xpose.msra.mxu0 %v1986
          %2022 = vmatprep.subr.mxu0 0.0
          %2023 = vmatpush1.xpose.msra.mxu0 %v1989
          %2024 = vmatprep.subr.mxu0 0.0
          %2025 = vmatpush1.xpose.msra.mxu0 %v1992
          %2026 = vmatprep.subr.mxu0 0.0
          %2027 = vmatpush1.xpose.msra.mxu0 0.0
          %2028 = vmatprep.subr.mxu0 0.0
          %2029 = vmatpush1.xpose.msra.mxu0 0.0
          %2030 = vmatprep.subr.mxu0 0.0
          %2031 = vmatpush1.xpose.msra.mxu0 0.0
          %2032 = vmatprep.subr.mxu0 0.0
          %2033 = vmatpush1.xpose.msra.mxu0 0.0
          %2034 = vmatprep.subr.mxu0 0.0
          %2035 = vmatpush1.xpose.msra.mxu0 0.0
          %2036 = vmatprep.subr.mxu0 0.0
          %2037 = vmatpush1.xpose.msra.mxu0 0.0
          %2038 = vmatprep.subr.mxu0 0.0
          %2039 = vmatpush1.xpose.msra.mxu0 0.0
          %2040 = vmatprep.subr.mxu0 0.0
          %2041 = vmatpush1.xpose.msra.mxu0 0.0
          %2042 = vmatprep.subr.mxu0 0.0
          %2043 = vmatpush1.xpose.msra.mxu0 0.0
          %2044 = vmatprep.subr.mxu0 0.0
          %2045 = vmatpush1.xpose.msra.mxu0 0.0
          %2046 = vmatprep.subr.mxu0 0.0
          %2047 = vmatpush1.xpose.msra.mxu0 0.0
          %2048 = vmatprep.subr.mxu0 0.0
          %2049 = vmatpush1.xpose.msra.mxu0 0.0
          %2050 = vmatprep.subr.mxu0 0.0
          %2051 = vmatpush1.xpose.msra.mxu0 0.0
          %2052 = vmatprep.subr.mxu0 0.0
          %2053 = vmatpush1.xpose.msra.mxu0 0.0
          %2054 = vmatprep.subr.mxu0 0.0
          %2055 = vmatpush1.xpose.msra.mxu0 0.0
          %2056 = vmatprep.subr.mxu0 0.0
          %2057 = vmatpush1.xpose.msra.mxu0 0.0
          %2058 = vmatprep.mubr.f32.mxu0 0.0
          %2059 = vmatmul.mubr.f32.gmra.mrb[0].mxu0 %v1899
          %v2060 = vpop.f32.mrb[0].mxu0
          %v2061 = vadd.f32 0.0, %v2060
          %v2062 = vpop.f32.mrb[0].mxu0
          %2063 = vmatprep.mubr.f32.mxu0 0.0
          %2064 = vmatmul.mubr.f32.gmra.mrb[0].mxu0 %v1902
          %v2065 = vpop.f32.mrb[0].mxu0
          %v2066 = vadd.f32 0.0, %v2065
          %v2067 = vpop.f32.mrb[0].mxu0
          %2068 = vmatprep.mubr.f32.mxu0 0.0
          %2069 = vmatmul.mubr.f32.gmra.mrb[0].mxu0 %v1905
          %v2070 = vpop.f32.mrb[0].mxu0
          %v2071 = vadd.f32 0.0, %v2070
          %v2072 = vpop.f32.mrb[0].mxu0
          %2073 = vmatprep.mubr.f32.mxu0 0.0
          %2074 = vmatmul.mubr.f32.gmra.mrb[0].mxu0 %v1908
          %v2075 = vpop.f32.mrb[0].mxu0
          %v2076 = vadd.f32 0.0, %v2075
          %v2077 = vpop.f32.mrb[0].mxu0
          %2078 = vmatprep.mubr.f32.mxu0 0.0
          %2079 = vmatmul.mubr.f32.gmra.mrb[0].mxu0 %v1911
          %v2080 = vpop.f32.mrb[0].mxu0
          %v2081 = vadd.f32 0.0, %v2080
          %v2082 = vpop.f32.mrb[0].mxu0
          %2083 = vmatprep.mubr.f32.mxu0 0.0
          %2084 = vmatmul.mubr.f32.gmra.mrb[0].mxu0 %v1914
          %v2085 = vpop.f32.mrb[0].mxu0
          %v2086 = vadd.f32 0.0, %v2085
          %v2087 = vpop.f32.mrb[0].mxu0
          %2088 = vmatprep.mubr.f32.mxu0 0.0
          %2089 = vmatmul.mubr.f32.gmra.mrb[0].mxu0 %v1917
          %v2090 = vpop.f32.mrb[0].mxu0
          %v2091 = vadd.f32 0.0, %v2090
          %v2092 = vpop.f32.mrb[0].mxu0
          %2093 = vmatprep.mubr.f32.mxu0 0.0
          %2094 = vmatmul.mubr.f32.gmra.mrb[0].mxu0 %v1920
          %v2095 = vpop.f32.mrb[0].mxu0
          %v2096 = vadd.f32 0.0, %v2095
          %v2097 = vpop.f32.mrb[0].mxu0
          %2098 = vmatprep.mubr.f32.mxu0 0.0
          %2099 = vmatmul.mubr.f32.gmra.mrb[0].mxu0 %v1923
          %v2100 = vpop.f32.mrb[0].mxu0
          %v2101 = vadd.f32 0.0, %v2100
          %v2102 = vpop.f32.mrb[0].mxu0
          %2103 = vmatprep.mubr.f32.mxu0 0.0
          %2104 = vmatmul.mubr.f32.gmra.mrb[0].mxu0 %v1926
          %v2105 = vpop.f32.mrb[0].mxu0
          %v2106 = vadd.f32 0.0, %v2105
          %v2107 = vpop.f32.mrb[0].mxu0
          %2108 = vmatprep.mubr.f32.mxu0 0.0
          %2109 = vmatmul.mubr.f32.gmra.mrb[0].mxu0 %v1929
          %v2110 = vpop.f32.mrb[0].mxu0
          %v2111 = vadd.f32 0.0, %v2110
          %v2112 = vpop.f32.mrb[0].mxu0
          %2113 = vmatprep.mubr.f32.mxu0 0.0
          %2114 = vmatmul.mubr.f32.gmra.mrb[0].mxu0 %v1932
          %v2115 = vpop.f32.mrb[0].mxu0
          %v2116 = vadd.f32 0.0, %v2115
          %v2117 = vpop.f32.mrb[0].mxu0
          %2118 = vmatprep.mubr.f32.mxu0 0.0
          %2119 = vmatmul.mubr.f32.gmra.mrb[0].mxu0 %v1935
          %v2120 = vpop.f32.mrb[0].mxu0
          %v2121 = vadd.f32 0.0, %v2120
          %v2122 = vpop.f32.mrb[0].mxu0
          %2123 = vmatprep.mubr.f32.mxu0 0.0
          %2124 = vmatmul.mubr.f32.gmra.mrb[0].mxu0 %v1938
          %v2125 = vpop.f32.mrb[0].mxu0
          %v2126 = vadd.f32 0.0, %v2125
          %v2127 = vpop.f32.mrb[0].mxu0
          %2128 = vmatprep.mubr.f32.mxu0 0.0
          %2129 = vmatmul.mubr.f32.gmra.mrb[0].mxu0 %v1941
          %v2130 = vpop.f32.mrb[0].mxu0
          %v2131 = vadd.f32 0.0, %v2130
          %v2132 = vpop.f32.mrb[0].mxu0
          %2133 = vmatprep.mubr.f32.mxu0 0.0
          %2134 = vmatmul.mubr.f32.gmra.mrb[0].mxu0 %v1944
          %v2135 = vpop.f32.mrb[0].mxu0
          %v2136 = vadd.f32 0.0, %v2135
          %v2137 = vpop.f32.mrb[0].mxu0
          %2138 = vdwg.mxu0
          %v2140 = vsel %vm1415, %v1335, 0
          %v2143 = vsel %vm1415, %v1336, 0
          %v2146 = vsel %vm1415, %v1337, 0
          %v2149 = vsel %vm1415, %v1338, 0
          %v2152 = vsel %vm1415, %v1339, 0
          %v2155 = vsel %vm1415, %v1340, 0
          %v2158 = vsel %vm1415, %v1341, 0
          %v2161 = vsel %vm1415, %v1342, 0
          %v2164 = vsel %vm1415, %v1343, 0
          %v2167 = vsel %vm1415, %v1344, 0
          %v2170 = vsel %vm1415, %v1345, 0
          %v2173 = vsel %vm1415, %v1346, 0
          %v2176 = vsel %vm1415, %v1347, 0
          %v2179 = vsel %vm1415, %v1348, 0
          %v2182 = vsel %vm1415, %v1349, 0
          %v2185 = vsel %vm1415, %v1350, 0
          %v2188 = vsel %vm1415, %v1399, 0
          %v2191 = vsel %vm1415, %v1400, 0
          %v2194 = vsel %vm1415, %v1401, 0
          %v2197 = vsel %vm1415, %v1402, 0
          %v2200 = vsel %vm1415, %v1403, 0
          %v2203 = vsel %vm1415, %v1404, 0
          %v2206 = vsel %vm1415, %v1405, 0
          %v2209 = vsel %vm1415, %v1406, 0
          %v2212 = vsel %vm1415, %v1407, 0
          %v2215 = vsel %vm1415, %v1408, 0
          %v2218 = vsel %vm1415, %v1409, 0
          %v2221 = vsel %vm1415, %v1410, 0
          %v2224 = vsel %vm1415, %v1411, 0
          %v2227 = vsel %vm1415, %v1412, 0
          %v2230 = vsel %vm1415, %v1413, 0
          %v2233 = vsel %vm1415, %v1414, 0
          %2235 = vmatprep.subr.mxu0 0.0
          %2236 = vmatpush1.xpose.msra.mxu0 %v2188
          %2237 = vmatprep.subr.mxu0 0.0
          %2238 = vmatpush1.xpose.msra.mxu0 %v2191
          %2239 = vmatprep.subr.mxu0 0.0
          %2240 = vmatpush1.xpose.msra.mxu0 %v2194
          %2241 = vmatprep.subr.mxu0 0.0
          %2242 = vmatpush1.xpose.msra.mxu0 %v2197
          %2243 = vmatprep.subr.mxu0 0.0
          %2244 = vmatpush1.xpose.msra.mxu0 %v2200
          %2245 = vmatprep.subr.mxu0 0.0
          %2246 = vmatpush1.xpose.msra.mxu0 %v2203
          %2247 = vmatprep.subr.mxu0 0.0
          %2248 = vmatpush1.xpose.msra.mxu0 %v2206
          %2249 = vmatprep.subr.mxu0 0.0
          %2250 = vmatpush1.xpose.msra.mxu0 %v2209
          %2251 = vmatprep.subr.mxu0 0.0
          %2252 = vmatpush1.xpose.msra.mxu0 %v2212
          %2253 = vmatprep.subr.mxu0 0.0
          %2254 = vmatpush1.xpose.msra.mxu0 %v2215
          %2255 = vmatprep.subr.mxu0 0.0
          %2256 = vmatpush1.xpose.msra.mxu0 %v2218
          %2257 = vmatprep.subr.mxu0 0.0
          %2258 = vmatpush1.xpose.msra.mxu0 %v2221
          %2259 = vmatprep.subr.mxu0 0.0
          %2260 = vmatpush1.xpose.msra.mxu0 %v2224
          %2261 = vmatprep.subr.mxu0 0.0
          %2262 = vmatpush1.xpose.msra.mxu0 %v2227
          %2263 = vmatprep.subr.mxu0 0.0
          %2264 = vmatpush1.xpose.msra.mxu0 %v2230
          %2265 = vmatprep.subr.mxu0 0.0
          %2266 = vmatpush1.xpose.msra.mxu0 %v2233
          %2267 = vmatprep.subr.mxu0 0.0
          %2268 = vmatpush1.xpose.msra.mxu0 0.0
          %2269 = vmatprep.subr.mxu0 0.0
          %2270 = vmatpush1.xpose.msra.mxu0 0.0
          %2271 = vmatprep.subr.mxu0 0.0
          %2272 = vmatpush1.xpose.msra.mxu0 0.0
          %2273 = vmatprep.subr.mxu0 0.0
          %2274 = vmatpush1.xpose.msra.mxu0 0.0
          %2275 = vmatprep.subr.mxu0 0.0
          %2276 = vmatpush1.xpose.msra.mxu0 0.0
          %2277 = vmatprep.subr.mxu0 0.0
          %2278 = vmatpush1.xpose.msra.mxu0 0.0
          %2279 = vmatprep.subr.mxu0 0.0
          %2280 = vmatpush1.xpose.msra.mxu0 0.0
          %2281 = vmatprep.subr.mxu0 0.0
          %2282 = vmatpush1.xpose.msra.mxu0 0.0
          %2283 = vmatprep.subr.mxu0 0.0
          %2284 = vmatpush1.xpose.msra.mxu0 0.0
          %2285 = vmatprep.subr.mxu0 0.0
          %2286 = vmatpush1.xpose.msra.mxu0 0.0
          %2287 = vmatprep.subr.mxu0 0.0
          %2288 = vmatpush1.xpose.msra.mxu0 0.0
          %2289 = vmatprep.subr.mxu0 0.0
          %2290 = vmatpush1.xpose.msra.mxu0 0.0
          %2291 = vmatprep.subr.mxu0 0.0
          %2292 = vmatpush1.xpose.msra.mxu0 0.0
          %2293 = vmatprep.subr.mxu0 0.0
          %2294 = vmatpush1.xpose.msra.mxu0 0.0
          %2295 = vmatprep.subr.mxu0 0.0
          %2296 = vmatpush1.xpose.msra.mxu0 0.0
          %2297 = vmatprep.subr.mxu0 0.0
          %2298 = vmatpush1.xpose.msra.mxu0 0.0
          %2299 = vmatprep.mubr.f32.mxu0 0.0
          %2300 = vmatmul.mubr.f32.gmra.mrb[0].mxu0 %v2140
          %v2301 = vpop.f32.mrb[0].mxu0
          %v2302 = vadd.f32 0.0, %v2301
          %v2303 = vpop.f32.mrb[0].mxu0
          %2304 = vmatprep.mubr.f32.mxu0 0.0
          %2305 = vmatmul.mubr.f32.gmra.mrb[0].mxu0 %v2143
          %v2306 = vpop.f32.mrb[0].mxu0
          %v2307 = vadd.f32 0.0, %v2306
          %v2308 = vpop.f32.mrb[0].mxu0
          %2309 = vmatprep.mubr.f32.mxu0 0.0
          %2310 = vmatmul.mubr.f32.gmra.mrb[0].mxu0 %v2146
          %v2311 = vpop.f32.mrb[0].mxu0
          %v2312 = vadd.f32 0.0, %v2311
          %v2313 = vpop.f32.mrb[0].mxu0
          %2314 = vmatprep.mubr.f32.mxu0 0.0
          %2315 = vmatmul.mubr.f32.gmra.mrb[0].mxu0 %v2149
          %v2316 = vpop.f32.mrb[0].mxu0
          %v2317 = vadd.f32 0.0, %v2316
          %v2318 = vpop.f32.mrb[0].mxu0
          %2319 = vmatprep.mubr.f32.mxu0 0.0
          %2320 = vmatmul.mubr.f32.gmra.mrb[0].mxu0 %v2152
          %v2321 = vpop.f32.mrb[0].mxu0
          %v2322 = vadd.f32 0.0, %v2321
          %v2323 = vpop.f32.mrb[0].mxu0
          %2324 = vmatprep.mubr.f32.mxu0 0.0
          %2325 = vmatmul.mubr.f32.gmra.mrb[0].mxu0 %v2155
          %v2326 = vpop.f32.mrb[0].mxu0
          %v2327 = vadd.f32 0.0, %v2326
          %v2328 = vpop.f32.mrb[0].mxu0
          %2329 = vmatprep.mubr.f32.mxu0 0.0
          %2330 = vmatmul.mubr.f32.gmra.mrb[0].mxu0 %v2158
          %v2331 = vpop.f32.mrb[0].mxu0
          %v2332 = vadd.f32 0.0, %v2331
          %v2333 = vpop.f32.mrb[0].mxu0
          %2334 = vmatprep.mubr.f32.mxu0 0.0
          %2335 = vmatmul.mubr.f32.gmra.mrb[0].mxu0 %v2161
          %v2336 = vpop.f32.mrb[0].mxu0
          %v2337 = vadd.f32 0.0, %v2336
          %v2338 = vpop.f32.mrb[0].mxu0
          %2339 = vmatprep.mubr.f32.mxu0 0.0
          %2340 = vmatmul.mubr.f32.gmra.mrb[0].mxu0 %v2164
          %v2341 = vpop.f32.mrb[0].mxu0
          %v2342 = vadd.f32 0.0, %v2341
          %v2343 = vpop.f32.mrb[0].mxu0
          %2344 = vmatprep.mubr.f32.mxu0 0.0
          %2345 = vmatmul.mubr.f32.gmra.mrb[0].mxu0 %v2167
          %v2346 = vpop.f32.mrb[0].mxu0
          %v2347 = vadd.f32 0.0, %v2346
          %v2348 = vpop.f32.mrb[0].mxu0
          %2349 = vmatprep.mubr.f32.mxu0 0.0
          %2350 = vmatmul.mubr.f32.gmra.mrb[0].mxu0 %v2170
          %v2351 = vpop.f32.mrb[0].mxu0
          %v2352 = vadd.f32 0.0, %v2351
          %v2353 = vpop.f32.mrb[0].mxu0
          %2354 = vmatprep.mubr.f32.mxu0 0.0
          %2355 = vmatmul.mubr.f32.gmra.mrb[0].mxu0 %v2173
          %v2356 = vpop.f32.mrb[0].mxu0
          %v2357 = vadd.f32 0.0, %v2356
          %v2358 = vpop.f32.mrb[0].mxu0
          %2359 = vmatprep.mubr.f32.mxu0 0.0
          %2360 = vmatmul.mubr.f32.gmra.mrb[0].mxu0 %v2176
          %v2361 = vpop.f32.mrb[0].mxu0
          %v2362 = vadd.f32 0.0, %v2361
          %v2363 = vpop.f32.mrb[0].mxu0
          %2364 = vmatprep.mubr.f32.mxu0 0.0
          %2365 = vmatmul.mubr.f32.gmra.mrb[0].mxu0 %v2179
          %v2366 = vpop.f32.mrb[0].mxu0
          %v2367 = vadd.f32 0.0, %v2366
          %v2368 = vpop.f32.mrb[0].mxu0
          %2369 = vmatprep.mubr.f32.mxu0 0.0
          %2370 = vmatmul.mubr.f32.gmra.mrb[0].mxu0 %v2182
          %v2371 = vpop.f32.mrb[0].mxu0
          %v2372 = vadd.f32 0.0, %v2371
          %v2373 = vpop.f32.mrb[0].mxu0
          %2374 = vmatprep.mubr.f32.mxu0 0.0
          %2375 = vmatmul.mubr.f32.gmra.mrb[0].mxu0 %v2185
          %v2376 = vpop.f32.mrb[0].mxu0
          %v2377 = vadd.f32 0.0, %v2376
          %v2378 = vpop.f32.mrb[0].mxu0
          %2379 = vdwg.mxu0
          %v2380 = vmul.f32 %v1579, 0.17677669
          %v2381 = vmul.f32 %v1584, 0.17677669
          %v2382 = vmul.f32 %v1589, 0.17677669
          %v2383 = vmul.f32 %v1594, 0.17677669
          %v2384 = vmul.f32 %v1599, 0.17677669
          %v2385 = vmul.f32 %v1604, 0.17677669
          %v2386 = vmul.f32 %v1609, 0.17677669
          %v2387 = vmul.f32 %v1614, 0.17677669
          %v2388 = vmul.f32 %v1619, 0.17677669
          %v2389 = vmul.f32 %v1624, 0.17677669
          %v2390 = vmul.f32 %v1629, 0.17677669
          %v2391 = vmul.f32 %v1634, 0.17677669
          %v2392 = vmul.f32 %v1639, 0.17677669
          %v2393 = vmul.f32 %v1644, 0.17677669
          %v2394 = vmul.f32 %v1649, 0.17677669
          %v2395 = vmul.f32 %v1654, 0.17677669
          %v2396 = vmul.f32 %v1820, 0.17677669
          %v2397 = vmul.f32 %v1825, 0.17677669
          %v2398 = vmul.f32 %v1830, 0.17677669
          %v2399 = vmul.f32 %v1835, 0.17677669
          %v2400 = vmul.f32 %v1840, 0.17677669
          %v2401 = vmul.f32 %v1845, 0.17677669
          %v2402 = vmul.f32 %v1850, 0.17677669
          %v2403 = vmul.f32 %v1855, 0.17677669
          %v2404 = vmul.f32 %v1860, 0.17677669
          %v2405 = vmul.f32 %v1865, 0.17677669
          %v2406 = vmul.f32 %v1870, 0.17677669
          %v2407 = vmul.f32 %v1875, 0.17677669
          %v2408 = vmul.f32 %v1880, 0.17677669
          %v2409 = vmul.f32 %v1885, 0.17677669
          %v2410 = vmul.f32 %v1890, 0.17677669
          %v2411 = vmul.f32 %v1895, 0.17677669
          %v2412 = vmul.f32 %v2061, 0.17677669
          %v2413 = vmul.f32 %v2066, 0.17677669
          %v2414 = vmul.f32 %v2071, 0.17677669
          %v2415 = vmul.f32 %v2076, 0.17677669
          %v2416 = vmul.f32 %v2081, 0.17677669
          %v2417 = vmul.f32 %v2086, 0.17677669
          %v2418 = vmul.f32 %v2091, 0.17677669
          %v2419 = vmul.f32 %v2096, 0.17677669
          %v2420 = vmul.f32 %v2101, 0.17677669
          %v2421 = vmul.f32 %v2106, 0.17677669
          %v2422 = vmul.f32 %v2111, 0.17677669
          %v2423 = vmul.f32 %v2116, 0.17677669
          %v2424 = vmul.f32 %v2121, 0.17677669
          %v2425 = vmul.f32 %v2126, 0.17677669
          %v2426 = vmul.f32 %v2131, 0.17677669
          %v2427 = vmul.f32 %v2136, 0.17677669
          %v2428 = vmul.f32 %v2302, 0.17677669
          %v2429 = vmul.f32 %v2307, 0.17677669
          %v2430 = vmul.f32 %v2312, 0.17677669
          %v2431 = vmul.f32 %v2317, 0.17677669
          %v2432 = vmul.f32 %v2322, 0.17677669
          %v2433 = vmul.f32 %v2327, 0.17677669
          %v2434 = vmul.f32 %v2332, 0.17677669
          %v2435 = vmul.f32 %v2337, 0.17677669
          %v2436 = vmul.f32 %v2342, 0.17677669
          %v2437 = vmul.f32 %v2347, 0.17677669
          %v2438 = vmul.f32 %v2352, 0.17677669
          %v2439 = vmul.f32 %v2357, 0.17677669
          %v2440 = vmul.f32 %v2362, 0.17677669
          %v2441 = vmul.f32 %v2367, 0.17677669
          %v2442 = vmul.f32 %v2372, 0.17677669
          %v2443 = vmul.f32 %v2377, 0.17677669
          %s2444 = smul.u32 %s18, 128
          %v2445 = vlaneseq
          %v2446 = vshrl.u32 %v2445, 7
          %v2447 = vadd.s32 %v2446, 8
          %v2448 = vadd.s32 %v2446, 16
          %v2449 = vadd.s32 %v2446, 24
          %v2450 = vadd.s32 %v2446, 32
          %v2451 = vadd.s32 %v2446, 40
          %v2452 = vadd.s32 %v2446, 48
          %v2453 = vadd.s32 %v2446, 56
          %v2454 = vadd.s32 %v2446, 64
          %v2455 = vadd.s32 %v2446, 72
          %v2456 = vadd.s32 %v2446, 80
          %v2457 = vadd.s32 %v2446, 88
          %v2458 = vadd.s32 %v2446, 96
          %v2459 = vadd.s32 %v2446, 104
          %v2460 = vadd.s32 %v2446, 112
          %v2461 = vadd.s32 %v2446, 120
          %v2462 = vstv %s2444
          %v2463 = vadd.s32 %v2462, %v2446
          %v2464 = vadd.s32 %v2462, %v2447
          %v2465 = vadd.s32 %v2462, %v2448
          %v2466 = vadd.s32 %v2462, %v2449
          %v2467 = vadd.s32 %v2462, %v2450
          %v2468 = vadd.s32 %v2462, %v2451
          %v2469 = vadd.s32 %v2462, %v2452
          %v2470 = vadd.s32 %v2462, %v2453
          %v2471 = vadd.s32 %v2462, %v2454
          %v2472 = vadd.s32 %v2462, %v2455
          %v2473 = vadd.s32 %v2462, %v2456
          %v2474 = vadd.s32 %v2462, %v2457
          %v2475 = vadd.s32 %v2462, %v2458
          %v2476 = vadd.s32 %v2462, %v2459
          %v2477 = vadd.s32 %v2462, %v2460
          %v2478 = vadd.s32 %v2462, %v2461
          %v2479 = vlaneseq
          %v2480 = vand.u32 %v2479, 127
          %v2481 = vstv %s1280
          %v2482 = vadd.s32 %v2481, %v2480
          %vm2483 = vcmp.le.s32.totalorder %v2482, %v2463
          %vm2484 = vcmp.le.s32.totalorder %v2482, %v2464
          %vm2485 = vcmp.le.s32.totalorder %v2482, %v2465
          %vm2486 = vcmp.le.s32.totalorder %v2482, %v2466
          %vm2487 = vcmp.le.s32.totalorder %v2482, %v2467
          %vm2488 = vcmp.le.s32.totalorder %v2482, %v2468
          %vm2489 = vcmp.le.s32.totalorder %v2482, %v2469
          %vm2490 = vcmp.le.s32.totalorder %v2482, %v2470
          %vm2491 = vcmp.le.s32.totalorder %v2482, %v2471
          %vm2492 = vcmp.le.s32.totalorder %v2482, %v2472
          %vm2493 = vcmp.le.s32.totalorder %v2482, %v2473
          %vm2494 = vcmp.le.s32.totalorder %v2482, %v2474
          %vm2495 = vcmp.le.s32.totalorder %v2482, %v2475
          %vm2496 = vcmp.le.s32.totalorder %v2482, %v2476
          %vm2497 = vcmp.le.s32.totalorder %v2482, %v2477
          %vm2498 = vcmp.le.s32.totalorder %v2482, %v2478
          %v2499 = vsel %vm2483, %v2380, -1e+30
          %v2500 = vsel %vm2484, %v2381, -1e+30
          %v2501 = vsel %vm2485, %v2382, -1e+30
          %v2502 = vsel %vm2486, %v2383, -1e+30
          %v2503 = vsel %vm2487, %v2384, -1e+30
          %v2504 = vsel %vm2488, %v2385, -1e+30
          %v2505 = vsel %vm2489, %v2386, -1e+30
          %v2506 = vsel %vm2490, %v2387, -1e+30
          %v2507 = vsel %vm2491, %v2388, -1e+30
          %v2508 = vsel %vm2492, %v2389, -1e+30
          %v2509 = vsel %vm2493, %v2390, -1e+30
          %v2510 = vsel %vm2494, %v2391, -1e+30
          %v2511 = vsel %vm2495, %v2392, -1e+30
          %v2512 = vsel %vm2496, %v2393, -1e+30
          %v2513 = vsel %vm2497, %v2394, -1e+30
          %v2514 = vsel %vm2498, %v2395, -1e+30
          %v2515 = vsel %vm2483, %v2396, -1e+30
          %v2516 = vsel %vm2484, %v2397, -1e+30
          %v2517 = vsel %vm2485, %v2398, -1e+30
          %v2518 = vsel %vm2486, %v2399, -1e+30
          %v2519 = vsel %vm2487, %v2400, -1e+30
          %v2520 = vsel %vm2488, %v2401, -1e+30
          %v2521 = vsel %vm2489, %v2402, -1e+30
          %v2522 = vsel %vm2490, %v2403, -1e+30
          %v2523 = vsel %vm2491, %v2404, -1e+30
          %v2524 = vsel %vm2492, %v2405, -1e+30
          %v2525 = vsel %vm2493, %v2406, -1e+30
          %v2526 = vsel %vm2494, %v2407, -1e+30
          %v2527 = vsel %vm2495, %v2408, -1e+30
          %v2528 = vsel %vm2496, %v2409, -1e+30
          %v2529 = vsel %vm2497, %v2410, -1e+30
          %v2530 = vsel %vm2498, %v2411, -1e+30
          %v2531 = vsel %vm2483, %v2412, -1e+30
          %v2532 = vsel %vm2484, %v2413, -1e+30
          %v2533 = vsel %vm2485, %v2414, -1e+30
          %v2534 = vsel %vm2486, %v2415, -1e+30
          %v2535 = vsel %vm2487, %v2416, -1e+30
          %v2536 = vsel %vm2488, %v2417, -1e+30
          %v2537 = vsel %vm2489, %v2418, -1e+30
          %v2538 = vsel %vm2490, %v2419, -1e+30
          %v2539 = vsel %vm2491, %v2420, -1e+30
          %v2540 = vsel %vm2492, %v2421, -1e+30
          %v2541 = vsel %vm2493, %v2422, -1e+30
          %v2542 = vsel %vm2494, %v2423, -1e+30
          %v2543 = vsel %vm2495, %v2424, -1e+30
          %v2544 = vsel %vm2496, %v2425, -1e+30
          %v2545 = vsel %vm2497, %v2426, -1e+30
          %v2546 = vsel %vm2498, %v2427, -1e+30
          %v2547 = vsel %vm2483, %v2428, -1e+30
          %v2548 = vsel %vm2484, %v2429, -1e+30
          %v2549 = vsel %vm2485, %v2430, -1e+30
          %v2550 = vsel %vm2486, %v2431, -1e+30
          %v2551 = vsel %vm2487, %v2432, -1e+30
          %v2552 = vsel %vm2488, %v2433, -1e+30
          %v2553 = vsel %vm2489, %v2434, -1e+30
          %v2554 = vsel %vm2490, %v2435, -1e+30
          %v2555 = vsel %vm2491, %v2436, -1e+30
          %v2556 = vsel %vm2492, %v2437, -1e+30
          %v2557 = vsel %vm2493, %v2438, -1e+30
          %v2558 = vsel %vm2494, %v2439, -1e+30
          %v2559 = vsel %vm2495, %v2440, -1e+30
          %v2560 = vsel %vm2496, %v2441, -1e+30
          %v2561 = vsel %vm2497, %v2442, -1e+30
          %v2562 = vsel %vm2498, %v2443, -1e+30
          %v2563 = vld [vmem:[#allocation2] sm:$0xff]
          %v2564 = vld [vmem:[#allocation2 + $0x8] sm:$0xff]
          %v2565 = vld [vmem:[#allocation2 + $0x10] sm:$0xff]
          %v2566 = vld [vmem:[#allocation2 + $0x18] sm:$0xff]
          %v2567 = vld [vmem:[#allocation2 + $0x20] sm:$0xff]
          %v2568 = vld [vmem:[#allocation2 + $0x28] sm:$0xff]
          %v2569 = vld [vmem:[#allocation2 + $0x30] sm:$0xff]
          %v2570 = vld [vmem:[#allocation2 + $0x38] sm:$0xff]
          %v2571 = vld [vmem:[#allocation2 + $0x40] sm:$0xff]
          %v2572 = vld [vmem:[#allocation2 + $0x48] sm:$0xff]
          %v2573 = vld [vmem:[#allocation2 + $0x50] sm:$0xff]
          %v2574 = vld [vmem:[#allocation2 + $0x58] sm:$0xff]
          %v2575 = vld [vmem:[#allocation2 + $0x60] sm:$0xff]
          %v2576 = vld [vmem:[#allocation2 + $0x68] sm:$0xff]
          %v2577 = vld [vmem:[#allocation2 + $0x70] sm:$0xff]
          %v2578 = vld [vmem:[#allocation2 + $0x78] sm:$0xff]
          %v2579 = vld [vmem:[#allocation2 + $0x80] sm:$0xff]
          %v2580 = vld [vmem:[#allocation2 + $0x88] sm:$0xff]
          %v2581 = vld [vmem:[#allocation2 + $0x90] sm:$0xff]
          %v2582 = vld [vmem:[#allocation2 + $0x98] sm:$0xff]
          %v2583 = vld [vmem:[#allocation2 + $0xa0] sm:$0xff]
          %v2584 = vld [vmem:[#allocation2 + $0xa8] sm:$0xff]
          %v2585 = vld [vmem:[#allocation2 + $0xb0] sm:$0xff]
          %v2586 = vld [vmem:[#allocation2 + $0xb8] sm:$0xff]
          %v2587 = vld [vmem:[#allocation2 + $0xc0] sm:$0xff]
          %v2588 = vld [vmem:[#allocation2 + $0xc8] sm:$0xff]
          %v2589 = vld [vmem:[#allocation2 + $0xd0] sm:$0xff]
          %v2590 = vld [vmem:[#allocation2 + $0xd8] sm:$0xff]
          %v2591 = vld [vmem:[#allocation2 + $0xe0] sm:$0xff]
          %v2592 = vld [vmem:[#allocation2 + $0xe8] sm:$0xff]
          %v2593 = vld [vmem:[#allocation2 + $0xf0] sm:$0xff]
          %v2594 = vld [vmem:[#allocation2 + $0xf8] sm:$0xff]
          %v2595 = vld [vmem:[#allocation2 + $0x100] sm:$0xff]
          %v2596 = vld [vmem:[#allocation2 + $0x108] sm:$0xff]
          %v2597 = vld [vmem:[#allocation2 + $0x110] sm:$0xff]
          %v2598 = vld [vmem:[#allocation2 + $0x118] sm:$0xff]
          %v2599 = vld [vmem:[#allocation2 + $0x120] sm:$0xff]
          %v2600 = vld [vmem:[#allocation2 + $0x128] sm:$0xff]
          %v2601 = vld [vmem:[#allocation2 + $0x130] sm:$0xff]
          %v2602 = vld [vmem:[#allocation2 + $0x138] sm:$0xff]
          %v2603 = vld [vmem:[#allocation2 + $0x140] sm:$0xff]
          %v2604 = vld [vmem:[#allocation2 + $0x148] sm:$0xff]
          %v2605 = vld [vmem:[#allocation2 + $0x150] sm:$0xff]
          %v2606 = vld [vmem:[#allocation2 + $0x158] sm:$0xff]
          %v2607 = vld [vmem:[#allocation2 + $0x160] sm:$0xff]
          %v2608 = vld [vmem:[#allocation2 + $0x168] sm:$0xff]
          %v2609 = vld [vmem:[#allocation2 + $0x170] sm:$0xff]
          %v2610 = vld [vmem:[#allocation2 + $0x178] sm:$0xff]
          %v2611 = vld [vmem:[#allocation2 + $0x180] sm:$0xff]
          %v2612 = vld [vmem:[#allocation2 + $0x188] sm:$0xff]
          %v2613 = vld [vmem:[#allocation2 + $0x190] sm:$0xff]
          %v2614 = vld [vmem:[#allocation2 + $0x198] sm:$0xff]
          %v2615 = vld [vmem:[#allocation2 + $0x1a0] sm:$0xff]
          %v2616 = vld [vmem:[#allocation2 + $0x1a8] sm:$0xff]
          %v2617 = vld [vmem:[#allocation2 + $0x1b0] sm:$0xff]
          %v2618 = vld [vmem:[#allocation2 + $0x1b8] sm:$0xff]
          %v2619 = vld [vmem:[#allocation2 + $0x1c0] sm:$0xff]
          %v2620 = vld [vmem:[#allocation2 + $0x1c8] sm:$0xff]
          %v2621 = vld [vmem:[#allocation2 + $0x1d0] sm:$0xff]
          %v2622 = vld [vmem:[#allocation2 + $0x1d8] sm:$0xff]
          %v2623 = vld [vmem:[#allocation2 + $0x1e0] sm:$0xff]
          %v2624 = vld [vmem:[#allocation2 + $0x1e8] sm:$0xff]
          %v2625 = vld [vmem:[#allocation2 + $0x1f0] sm:$0xff]
          %v2626 = vld [vmem:[#allocation2 + $0x1f8] sm:$0xff]
          %2627 = vmax.xlane.f32.xlu0 %v2499
          %v2628 = vpop.xlane.xlu0 %2627
          %2629 = vmax.xlane.f32.xlu0 %v2500
          %v2630 = vpop.xlane.xlu0 %2629
          %2631 = vmax.xlane.f32.xlu0 %v2501
          %v2632 = vpop.xlane.xlu0 %2631
          %2633 = vmax.xlane.f32.xlu0 %v2502
          %v2634 = vpop.xlane.xlu0 %2633
          %2635 = vmax.xlane.f32.xlu0 %v2503
          %v2636 = vpop.xlane.xlu0 %2635
          %2637 = vmax.xlane.f32.xlu0 %v2504
          %v2638 = vpop.xlane.xlu0 %2637
          %2639 = vmax.xlane.f32.xlu0 %v2505
          %v2640 = vpop.xlane.xlu0 %2639
          %2641 = vmax.xlane.f32.xlu0 %v2506
          %v2642 = vpop.xlane.xlu0 %2641
          %2643 = vmax.xlane.f32.xlu0 %v2507
          %v2644 = vpop.xlane.xlu0 %2643
          %2645 = vmax.xlane.f32.xlu0 %v2508
          %v2646 = vpop.xlane.xlu0 %2645
          %2647 = vmax.xlane.f32.xlu0 %v2509
          %v2648 = vpop.xlane.xlu0 %2647
          %2649 = vmax.xlane.f32.xlu0 %v2510
          %v2650 = vpop.xlane.xlu0 %2649
          %2651 = vmax.xlane.f32.xlu0 %v2511
          %v2652 = vpop.xlane.xlu0 %2651
          %2653 = vmax.xlane.f32.xlu0 %v2512
          %v2654 = vpop.xlane.xlu0 %2653
          %2655 = vmax.xlane.f32.xlu0 %v2513
          %v2656 = vpop.xlane.xlu0 %2655
          %2657 = vmax.xlane.f32.xlu0 %v2514
          %v2658 = vpop.xlane.xlu0 %2657
          %2659 = vmax.xlane.f32.xlu0 %v2515
          %v2660 = vpop.xlane.xlu0 %2659
          %2661 = vmax.xlane.f32.xlu0 %v2516
          %v2662 = vpop.xlane.xlu0 %2661
          %2663 = vmax.xlane.f32.xlu0 %v2517
          %v2664 = vpop.xlane.xlu0 %2663
          %2665 = vmax.xlane.f32.xlu0 %v2518
          %v2666 = vpop.xlane.xlu0 %2665
          %2667 = vmax.xlane.f32.xlu0 %v2519
          %v2668 = vpop.xlane.xlu0 %2667
          %2669 = vmax.xlane.f32.xlu0 %v2520
          %v2670 = vpop.xlane.xlu0 %2669
          %2671 = vmax.xlane.f32.xlu0 %v2521
          %v2672 = vpop.xlane.xlu0 %2671
          %2673 = vmax.xlane.f32.xlu0 %v2522
          %v2674 = vpop.xlane.xlu0 %2673
          %2675 = vmax.xlane.f32.xlu0 %v2523
          %v2676 = vpop.xlane.xlu0 %2675
          %2677 = vmax.xlane.f32.xlu0 %v2524
          %v2678 = vpop.xlane.xlu0 %2677
          %2679 = vmax.xlane.f32.xlu0 %v2525
          %v2680 = vpop.xlane.xlu0 %2679
          %2681 = vmax.xlane.f32.xlu0 %v2526
          %v2682 = vpop.xlane.xlu0 %2681
          %2683 = vmax.xlane.f32.xlu0 %v2527
          %v2684 = vpop.xlane.xlu0 %2683
          %2685 = vmax.xlane.f32.xlu0 %v2528
          %v2686 = vpop.xlane.xlu0 %2685
          %2687 = vmax.xlane.f32.xlu0 %v2529
          %v2688 = vpop.xlane.xlu0 %2687
          %2689 = vmax.xlane.f32.xlu0 %v2530
          %v2690 = vpop.xlane.xlu0 %2689
          %2691 = vmax.xlane.f32.xlu0 %v2531
          %v2692 = vpop.xlane.xlu0 %2691
          %2693 = vmax.xlane.f32.xlu0 %v2532
          %v2694 = vpop.xlane.xlu0 %2693
          %2695 = vmax.xlane.f32.xlu0 %v2533
          %v2696 = vpop.xlane.xlu0 %2695
          %2697 = vmax.xlane.f32.xlu0 %v2534
          %v2698 = vpop.xlane.xlu0 %2697
          %2699 = vmax.xlane.f32.xlu0 %v2535
          %v2700 = vpop.xlane.xlu0 %2699
          %2701 = vmax.xlane.f32.xlu0 %v2536
          %v2702 = vpop.xlane.xlu0 %2701
          %2703 = vmax.xlane.f32.xlu0 %v2537
          %v2704 = vpop.xlane.xlu0 %2703
          %2705 = vmax.xlane.f32.xlu0 %v2538
          %v2706 = vpop.xlane.xlu0 %2705
          %2707 = vmax.xlane.f32.xlu0 %v2539
          %v2708 = vpop.xlane.xlu0 %2707
          %2709 = vmax.xlane.f32.xlu0 %v2540
          %v2710 = vpop.xlane.xlu0 %2709
          %2711 = vmax.xlane.f32.xlu0 %v2541
          %v2712 = vpop.xlane.xlu0 %2711
          %2713 = vmax.xlane.f32.xlu0 %v2542
          %v2714 = vpop.xlane.xlu0 %2713
          %2715 = vmax.xlane.f32.xlu0 %v2543
          %v2716 = vpop.xlane.xlu0 %2715
          %2717 = vmax.xlane.f32.xlu0 %v2544
          %v2718 = vpop.xlane.xlu0 %2717
          %2719 = vmax.xlane.f32.xlu0 %v2545
          %v2720 = vpop.xlane.xlu0 %2719
          %2721 = vmax.xlane.f32.xlu0 %v2546
          %v2722 = vpop.xlane.xlu0 %2721
          %2723 = vmax.xlane.f32.xlu0 %v2547
          %v2724 = vpop.xlane.xlu0 %2723
          %2725 = vmax.xlane.f32.xlu0 %v2548
          %v2726 = vpop.xlane.xlu0 %2725
          %2727 = vmax.xlane.f32.xlu0 %v2549
          %v2728 = vpop.xlane.xlu0 %2727
          %2729 = vmax.xlane.f32.xlu0 %v2550
          %v2730 = vpop.xlane.xlu0 %2729
          %2731 = vmax.xlane.f32.xlu0 %v2551
          %v2732 = vpop.xlane.xlu0 %2731
          %2733 = vmax.xlane.f32.xlu0 %v2552
          %v2734 = vpop.xlane.xlu0 %2733
          %2735 = vmax.xlane.f32.xlu0 %v2553
          %v2736 = vpop.xlane.xlu0 %2735
          %2737 = vmax.xlane.f32.xlu0 %v2554
          %v2738 = vpop.xlane.xlu0 %2737
          %2739 = vmax.xlane.f32.xlu0 %v2555
          %v2740 = vpop.xlane.xlu0 %2739
          %2741 = vmax.xlane.f32.xlu0 %v2556
          %v2742 = vpop.xlane.xlu0 %2741
          %2743 = vmax.xlane.f32.xlu0 %v2557
          %v2744 = vpop.xlane.xlu0 %2743
          %2745 = vmax.xlane.f32.xlu0 %v2558
          %v2746 = vpop.xlane.xlu0 %2745
          %2747 = vmax.xlane.f32.xlu0 %v2559
          %v2748 = vpop.xlane.xlu0 %2747
          %2749 = vmax.xlane.f32.xlu0 %v2560
          %v2750 = vpop.xlane.xlu0 %2749
          %2751 = vmax.xlane.f32.xlu0 %v2561
          %v2752 = vpop.xlane.xlu0 %2751
          %2753 = vmax.xlane.f32.xlu0 %v2562
          %v2754 = vpop.xlane.xlu0 %2753
          %v2755 = vmax.f32 %v2563, %v2628
          %v2756 = vmax.f32 %v2564, %v2630
          %v2757 = vmax.f32 %v2565, %v2632
          %v2758 = vmax.f32 %v2566, %v2634
          %v2759 = vmax.f32 %v2567, %v2636
          %v2760 = vmax.f32 %v2568, %v2638
          %v2761 = vmax.f32 %v2569, %v2640
          %v2762 = vmax.f32 %v2570, %v2642
          %v2763 = vmax.f32 %v2571, %v2644
          %v2764 = vmax.f32 %v2572, %v2646
          %v2765 = vmax.f32 %v2573, %v2648
          %v2766 = vmax.f32 %v2574, %v2650
          %v2767 = vmax.f32 %v2575, %v2652
          %v2768 = vmax.f32 %v2576, %v2654
          %v2769 = vmax.f32 %v2577, %v2656
          %v2770 = vmax.f32 %v2578, %v2658
          %v2771 = vmax.f32 %v2579, %v2660
          %v2772 = vmax.f32 %v2580, %v2662
          %v2773 = vmax.f32 %v2581, %v2664
          %v2774 = vmax.f32 %v2582, %v2666
          %v2775 = vmax.f32 %v2583, %v2668
          %v2776 = vmax.f32 %v2584, %v2670
          %v2777 = vmax.f32 %v2585, %v2672
          %v2778 = vmax.f32 %v2586, %v2674
          %v2779 = vmax.f32 %v2587, %v2676
          %v2780 = vmax.f32 %v2588, %v2678
          %v2781 = vmax.f32 %v2589, %v2680
          %v2782 = vmax.f32 %v2590, %v2682
          %v2783 = vmax.f32 %v2591, %v2684
          %v2784 = vmax.f32 %v2592, %v2686
          %v2785 = vmax.f32 %v2593, %v2688
          %v2786 = vmax.f32 %v2594, %v2690
          %v2787 = vmax.f32 %v2595, %v2692
          %v2788 = vmax.f32 %v2596, %v2694
          %v2789 = vmax.f32 %v2597, %v2696
          %v2790 = vmax.f32 %v2598, %v2698
          %v2791 = vmax.f32 %v2599, %v2700
          %v2792 = vmax.f32 %v2600, %v2702
          %v2793 = vmax.f32 %v2601, %v2704
          %v2794 = vmax.f32 %v2602, %v2706
          %v2795 = vmax.f32 %v2603, %v2708
          %v2796 = vmax.f32 %v2604, %v2710
          %v2797 = vmax.f32 %v2605, %v2712
          %v2798 = vmax.f32 %v2606, %v2714
          %v2799 = vmax.f32 %v2607, %v2716
          %v2800 = vmax.f32 %v2608, %v2718
          %v2801 = vmax.f32 %v2609, %v2720
          %v2802 = vmax.f32 %v2610, %v2722
          %v2803 = vmax.f32 %v2611, %v2724
          %v2804 = vmax.f32 %v2612, %v2726
          %v2805 = vmax.f32 %v2613, %v2728
          %v2806 = vmax.f32 %v2614, %v2730
          %v2807 = vmax.f32 %v2615, %v2732
          %v2808 = vmax.f32 %v2616, %v2734
          %v2809 = vmax.f32 %v2617, %v2736
          %v2810 = vmax.f32 %v2618, %v2738
          %v2811 = vmax.f32 %v2619, %v2740
          %v2812 = vmax.f32 %v2620, %v2742
          %v2813 = vmax.f32 %v2621, %v2744
          %v2814 = vmax.f32 %v2622, %v2746
          %v2815 = vmax.f32 %v2623, %v2748
          %v2816 = vmax.f32 %v2624, %v2750
          %v2817 = vmax.f32 %v2625, %v2752
          %v2818 = vmax.f32 %v2626, %v2754
          %v2819 = vsub.f32 %v2563, %v2755
          %v2820 = vsub.f32 %v2564, %v2756
          %v2821 = vsub.f32 %v2565, %v2757
          %v2822 = vsub.f32 %v2566, %v2758
          %v2823 = vsub.f32 %v2567, %v2759
          %v2824 = vsub.f32 %v2568, %v2760
          %v2825 = vsub.f32 %v2569, %v2761
          %v2826 = vsub.f32 %v2570, %v2762
          %v2827 = vsub.f32 %v2571, %v2763
          %v2828 = vsub.f32 %v2572, %v2764
          %v2829 = vsub.f32 %v2573, %v2765
          %v2830 = vsub.f32 %v2574, %v2766
          %v2831 = vsub.f32 %v2575, %v2767
          %v2832 = vsub.f32 %v2576, %v2768
          %v2833 = vsub.f32 %v2577, %v2769
          %v2834 = vsub.f32 %v2578, %v2770
          %v2835 = vsub.f32 %v2579, %v2771
          %v2836 = vsub.f32 %v2580, %v2772
          %v2837 = vsub.f32 %v2581, %v2773
          %v2838 = vsub.f32 %v2582, %v2774
          %v2839 = vsub.f32 %v2583, %v2775
          %v2840 = vsub.f32 %v2584, %v2776
          %v2841 = vsub.f32 %v2585, %v2777
          %v2842 = vsub.f32 %v2586, %v2778
          %v2843 = vsub.f32 %v2587, %v2779
          %v2844 = vsub.f32 %v2588, %v2780
          %v2845 = vsub.f32 %v2589, %v2781
          %v2846 = vsub.f32 %v2590, %v2782
          %v2847 = vsub.f32 %v2591, %v2783
          %v2848 = vsub.f32 %v2592, %v2784
          %v2849 = vsub.f32 %v2593, %v2785
          %v2850 = vsub.f32 %v2594, %v2786
          %v2851 = vsub.f32 %v2595, %v2787
          %v2852 = vsub.f32 %v2596, %v2788
          %v2853 = vsub.f32 %v2597, %v2789
          %v2854 = vsub.f32 %v2598, %v2790
          %v2855 = vsub.f32 %v2599, %v2791
          %v2856 = vsub.f32 %v2600, %v2792
          %v2857 = vsub.f32 %v2601, %v2793
          %v2858 = vsub.f32 %v2602, %v2794
          %v2859 = vsub.f32 %v2603, %v2795
          %v2860 = vsub.f32 %v2604, %v2796
          %v2861 = vsub.f32 %v2605, %v2797
          %v2862 = vsub.f32 %v2606, %v2798
          %v2863 = vsub.f32 %v2607, %v2799
          %v2864 = vsub.f32 %v2608, %v2800
          %v2865 = vsub.f32 %v2609, %v2801
          %v2866 = vsub.f32 %v2610, %v2802
          %v2867 = vsub.f32 %v2611, %v2803
          %v2868 = vsub.f32 %v2612, %v2804
          %v2869 = vsub.f32 %v2613, %v2805
          %v2870 = vsub.f32 %v2614, %v2806
          %v2871 = vsub.f32 %v2615, %v2807
          %v2872 = vsub.f32 %v2616, %v2808
          %v2873 = vsub.f32 %v2617, %v2809
          %v2874 = vsub.f32 %v2618, %v2810
          %v2875 = vsub.f32 %v2619, %v2811
          %v2876 = vsub.f32 %v2620, %v2812
          %v2877 = vsub.f32 %v2621, %v2813
          %v2878 = vsub.f32 %v2622, %v2814
          %v2879 = vsub.f32 %v2623, %v2815
          %v2880 = vsub.f32 %v2624, %v2816
          %v2881 = vsub.f32 %v2625, %v2817
          %v2882 = vsub.f32 %v2626, %v2818
          %v2883 = vmul.f32 %v2819, 1.442695
          %v2884 = vpow.pop %v2883
          %v2885 = vmul.f32 %v2820, 1.442695
          %v2886 = vpow.pop %v2885
          %v2887 = vmul.f32 %v2821, 1.442695
          %v2888 = vpow.pop %v2887
          %v2889 = vmul.f32 %v2822, 1.442695
          %v2890 = vpow.pop %v2889
          %v2891 = vmul.f32 %v2823, 1.442695
          %v2892 = vpow.pop %v2891
          %v2893 = vmul.f32 %v2824, 1.442695
          %v2894 = vpow.pop %v2893
          %v2895 = vmul.f32 %v2825, 1.442695
          %v2896 = vpow.pop %v2895
          %v2897 = vmul.f32 %v2826, 1.442695
          %v2898 = vpow.pop %v2897
          %v2899 = vmul.f32 %v2827, 1.442695
          %v2900 = vpow.pop %v2899
          %v2901 = vmul.f32 %v2828, 1.442695
          %v2902 = vpow.pop %v2901
          %v2903 = vmul.f32 %v2829, 1.442695
          %v2904 = vpow.pop %v2903
          %v2905 = vmul.f32 %v2830, 1.442695
          %v2906 = vpow.pop %v2905
          %v2907 = vmul.f32 %v2831, 1.442695
          %v2908 = vpow.pop %v2907
          %v2909 = vmul.f32 %v2832, 1.442695
          %v2910 = vpow.pop %v2909
          %v2911 = vmul.f32 %v2833, 1.442695
          %v2912 = vpow.pop %v2911
          %v2913 = vmul.f32 %v2834, 1.442695
          %v2914 = vpow.pop %v2913
          %v2915 = vmul.f32 %v2835, 1.442695
          %v2916 = vpow.pop %v2915
          %v2917 = vmul.f32 %v2836, 1.442695
          %v2918 = vpow.pop %v2917
          %v2919 = vmul.f32 %v2837, 1.442695
          %v2920 = vpow.pop %v2919
          %v2921 = vmul.f32 %v2838, 1.442695
          %v2922 = vpow.pop %v2921
          %v2923 = vmul.f32 %v2839, 1.442695
          %v2924 = vpow.pop %v2923
          %v2925 = vmul.f32 %v2840, 1.442695
          %v2926 = vpow.pop %v2925
          %v2927 = vmul.f32 %v2841, 1.442695
          %v2928 = vpow.pop %v2927
          %v2929 = vmul.f32 %v2842, 1.442695
          %v2930 = vpow.pop %v2929
          %v2931 = vmul.f32 %v2843, 1.442695
          %v2932 = vpow.pop %v2931
          %v2933 = vmul.f32 %v2844, 1.442695
          %v2934 = vpow.pop %v2933
          %v2935 = vmul.f32 %v2845, 1.442695
          %v2936 = vpow.pop %v2935
          %v2937 = vmul.f32 %v2846, 1.442695
          %v2938 = vpow.pop %v2937
          %v2939 = vmul.f32 %v2847, 1.442695
          %v2940 = vpow.pop %v2939
          %v2941 = vmul.f32 %v2848, 1.442695
          %v2942 = vpow.pop %v2941
          %v2943 = vmul.f32 %v2849, 1.442695
          %v2944 = vpow.pop %v2943
          %v2945 = vmul.f32 %v2850, 1.442695
          %v2946 = vpow.pop %v2945
          %v2947 = vmul.f32 %v2851, 1.442695
          %v2948 = vpow.pop %v2947
          %v2949 = vmul.f32 %v2852, 1.442695
          %v2950 = vpow.pop %v2949
          %v2951 = vmul.f32 %v2853, 1.442695
          %v2952 = vpow.pop %v2951
          %v2953 = vmul.f32 %v2854, 1.442695
          %v2954 = vpow.pop %v2953
          %v2955 = vmul.f32 %v2855, 1.442695
          %v2956 = vpow.pop %v2955
          %v2957 = vmul.f32 %v2856, 1.442695
          %v2958 = vpow.pop %v2957
          %v2959 = vmul.f32 %v2857, 1.442695
          %v2960 = vpow.pop %v2959
          %v2961 = vmul.f32 %v2858, 1.442695
          %v2962 = vpow.pop %v2961
          %v2963 = vmul.f32 %v2859, 1.442695
          %v2964 = vpow.pop %v2963
          %v2965 = vmul.f32 %v2860, 1.442695
          %v2966 = vpow.pop %v2965
          %v2967 = vmul.f32 %v2861, 1.442695
          %v2968 = vpow.pop %v2967
          %v2969 = vmul.f32 %v2862, 1.442695
          %v2970 = vpow.pop %v2969
          %v2971 = vmul.f32 %v2863, 1.442695
          %v2972 = vpow.pop %v2971
          %v2973 = vmul.f32 %v2864, 1.442695
          %v2974 = vpow.pop %v2973
          %v2975 = vmul.f32 %v2865, 1.442695
          %v2976 = vpow.pop %v2975
          %v2977 = vmul.f32 %v2866, 1.442695
          %v2978 = vpow.pop %v2977
          %v2979 = vmul.f32 %v2867, 1.442695
          %v2980 = vpow.pop %v2979
          %v2981 = vmul.f32 %v2868, 1.442695
          %v2982 = vpow.pop %v2981
          %v2983 = vmul.f32 %v2869, 1.442695
          %v2984 = vpow.pop %v2983
          %v2985 = vmul.f32 %v2870, 1.442695
          %v2986 = vpow.pop %v2985
          %v2987 = vmul.f32 %v2871, 1.442695
          %v2988 = vpow.pop %v2987
          %v2989 = vmul.f32 %v2872, 1.442695
          %v2990 = vpow.pop %v2989
          %v2991 = vmul.f32 %v2873, 1.442695
          %v2992 = vpow.pop %v2991
          %v2993 = vmul.f32 %v2874, 1.442695
          %v2994 = vpow.pop %v2993
          %v2995 = vmul.f32 %v2875, 1.442695
          %v2996 = vpow.pop %v2995
          %v2997 = vmul.f32 %v2876, 1.442695
          %v2998 = vpow.pop %v2997
          %v2999 = vmul.f32 %v2877, 1.442695
          %v3000 = vpow.pop %v2999
          %v3001 = vmul.f32 %v2878, 1.442695
          %v3002 = vpow.pop %v3001
          %v3003 = vmul.f32 %v2879, 1.442695
          %v3004 = vpow.pop %v3003
          %v3005 = vmul.f32 %v2880, 1.442695
          %v3006 = vpow.pop %v3005
          %v3007 = vmul.f32 %v2881, 1.442695
          %v3008 = vpow.pop %v3007
          %v3009 = vmul.f32 %v2882, 1.442695
          %v3010 = vpow.pop %v3009
          %3012 = vset.pattern.permute.xlu0 0
          %3013 = vperm.xlu0 %3012, %v2755
          %v3014 = vpop.permute.xlu0 %3013
          %3017 = vset.pattern.permute.xlu0 0
          %3018 = vperm.xlu0 %3017, %v2756
          %v3019 = vpop.permute.xlu0 %3018
          %3022 = vset.pattern.permute.xlu0 0
          %3023 = vperm.xlu0 %3022, %v2757
          %v3024 = vpop.permute.xlu0 %3023
          %3027 = vset.pattern.permute.xlu0 0
          %3028 = vperm.xlu0 %3027, %v2758
          %v3029 = vpop.permute.xlu0 %3028
          %3032 = vset.pattern.permute.xlu0 0
          %3033 = vperm.xlu0 %3032, %v2759
          %v3034 = vpop.permute.xlu0 %3033
          %3037 = vset.pattern.permute.xlu0 0
          %3038 = vperm.xlu0 %3037, %v2760
          %v3039 = vpop.permute.xlu0 %3038
          %3042 = vset.pattern.permute.xlu0 0
          %3043 = vperm.xlu0 %3042, %v2761
          %v3044 = vpop.permute.xlu0 %3043
          %3047 = vset.pattern.permute.xlu0 0
          %3048 = vperm.xlu0 %3047, %v2762
          %v3049 = vpop.permute.xlu0 %3048
          %3052 = vset.pattern.permute.xlu0 0
          %3053 = vperm.xlu0 %3052, %v2763
          %v3054 = vpop.permute.xlu0 %3053
          %3057 = vset.pattern.permute.xlu0 0
          %3058 = vperm.xlu0 %3057, %v2764
          %v3059 = vpop.permute.xlu0 %3058
          %3062 = vset.pattern.permute.xlu0 0
          %3063 = vperm.xlu0 %3062, %v2765
          %v3064 = vpop.permute.xlu0 %3063
          %3067 = vset.pattern.permute.xlu0 0
          %3068 = vperm.xlu0 %3067, %v2766
          %v3069 = vpop.permute.xlu0 %3068
          %3072 = vset.pattern.permute.xlu0 0
          %3073 = vperm.xlu0 %3072, %v2767
          %v3074 = vpop.permute.xlu0 %3073
          %3077 = vset.pattern.permute.xlu0 0
          %3078 = vperm.xlu0 %3077, %v2768
          %v3079 = vpop.permute.xlu0 %3078
          %3082 = vset.pattern.permute.xlu0 0
          %3083 = vperm.xlu0 %3082, %v2769
          %v3084 = vpop.permute.xlu0 %3083
          %3087 = vset.pattern.permute.xlu0 0
          %3088 = vperm.xlu0 %3087, %v2770
          %v3089 = vpop.permute.xlu0 %3088
          %3092 = vset.pattern.permute.xlu0 0
          %3093 = vperm.xlu0 %3092, %v2771
          %v3094 = vpop.permute.xlu0 %3093
          %3097 = vset.pattern.permute.xlu0 0
          %3098 = vperm.xlu0 %3097, %v2772
          %v3099 = vpop.permute.xlu0 %3098
          %3102 = vset.pattern.permute.xlu0 0
          %3103 = vperm.xlu0 %3102, %v2773
          %v3104 = vpop.permute.xlu0 %3103
          %3107 = vset.pattern.permute.xlu0 0
          %3108 = vperm.xlu0 %3107, %v2774
          %v3109 = vpop.permute.xlu0 %3108
          %3112 = vset.pattern.permute.xlu0 0
          %3113 = vperm.xlu0 %3112, %v2775
          %v3114 = vpop.permute.xlu0 %3113
          %3117 = vset.pattern.permute.xlu0 0
          %3118 = vperm.xlu0 %3117, %v2776
          %v3119 = vpop.permute.xlu0 %3118
          %3122 = vset.pattern.permute.xlu0 0
          %3123 = vperm.xlu0 %3122, %v2777
          %v3124 = vpop.permute.xlu0 %3123
          %3127 = vset.pattern.permute.xlu0 0
          %3128 = vperm.xlu0 %3127, %v2778
          %v3129 = vpop.permute.xlu0 %3128
          %3132 = vset.pattern.permute.xlu0 0
          %3133 = vperm.xlu0 %3132, %v2779
          %v3134 = vpop.permute.xlu0 %3133
          %3137 = vset.pattern.permute.xlu0 0
          %3138 = vperm.xlu0 %3137, %v2780
          %v3139 = vpop.permute.xlu0 %3138
          %3142 = vset.pattern.permute.xlu0 0
          %3143 = vperm.xlu0 %3142, %v2781
          %v3144 = vpop.permute.xlu0 %3143
          %3147 = vset.pattern.permute.xlu0 0
          %3148 = vperm.xlu0 %3147, %v2782
          %v3149 = vpop.permute.xlu0 %3148
          %3152 = vset.pattern.permute.xlu0 0
          %3153 = vperm.xlu0 %3152, %v2783
          %v3154 = vpop.permute.xlu0 %3153
          %3157 = vset.pattern.permute.xlu0 0
          %3158 = vperm.xlu0 %3157, %v2784
          %v3159 = vpop.permute.xlu0 %3158
          %3162 = vset.pattern.permute.xlu0 0
          %3163 = vperm.xlu0 %3162, %v2785
          %v3164 = vpop.permute.xlu0 %3163
          %3167 = vset.pattern.permute.xlu0 0
          %3168 = vperm.xlu0 %3167, %v2786
          %v3169 = vpop.permute.xlu0 %3168
          %3172 = vset.pattern.permute.xlu0 0
          %3173 = vperm.xlu0 %3172, %v2787
          %v3174 = vpop.permute.xlu0 %3173
          %3177 = vset.pattern.permute.xlu0 0
          %3178 = vperm.xlu0 %3177, %v2788
          %v3179 = vpop.permute.xlu0 %3178
          %3182 = vset.pattern.permute.xlu0 0
          %3183 = vperm.xlu0 %3182, %v2789
          %v3184 = vpop.permute.xlu0 %3183
          %3187 = vset.pattern.permute.xlu0 0
          %3188 = vperm.xlu0 %3187, %v2790
          %v3189 = vpop.permute.xlu0 %3188
          %3192 = vset.pattern.permute.xlu0 0
          %3193 = vperm.xlu0 %3192, %v2791
          %v3194 = vpop.permute.xlu0 %3193
          %3197 = vset.pattern.permute.xlu0 0
          %3198 = vperm.xlu0 %3197, %v2792
          %v3199 = vpop.permute.xlu0 %3198
          %3202 = vset.pattern.permute.xlu0 0
          %3203 = vperm.xlu0 %3202, %v2793
          %v3204 = vpop.permute.xlu0 %3203
          %3207 = vset.pattern.permute.xlu0 0
          %3208 = vperm.xlu0 %3207, %v2794
          %v3209 = vpop.permute.xlu0 %3208
          %3212 = vset.pattern.permute.xlu0 0
          %3213 = vperm.xlu0 %3212, %v2795
          %v3214 = vpop.permute.xlu0 %3213
          %3217 = vset.pattern.permute.xlu0 0
          %3218 = vperm.xlu0 %3217, %v2796
          %v3219 = vpop.permute.xlu0 %3218
          %3222 = vset.pattern.permute.xlu0 0
          %3223 = vperm.xlu0 %3222, %v2797
          %v3224 = vpop.permute.xlu0 %3223
          %3227 = vset.pattern.permute.xlu0 0
          %3228 = vperm.xlu0 %3227, %v2798
          %v3229 = vpop.permute.xlu0 %3228
          %3232 = vset.pattern.permute.xlu0 0
          %3233 = vperm.xlu0 %3232, %v2799
          %v3234 = vpop.permute.xlu0 %3233
          %3237 = vset.pattern.permute.xlu0 0
          %3238 = vperm.xlu0 %3237, %v2800
          %v3239 = vpop.permute.xlu0 %3238
          %3242 = vset.pattern.permute.xlu0 0
          %3243 = vperm.xlu0 %3242, %v2801
          %v3244 = vpop.permute.xlu0 %3243
          %3247 = vset.pattern.permute.xlu0 0
          %3248 = vperm.xlu0 %3247, %v2802
          %v3249 = vpop.permute.xlu0 %3248
          %3252 = vset.pattern.permute.xlu0 0
          %3253 = vperm.xlu0 %3252, %v2803
          %v3254 = vpop.permute.xlu0 %3253
          %3257 = vset.pattern.permute.xlu0 0
          %3258 = vperm.xlu0 %3257, %v2804
          %v3259 = vpop.permute.xlu0 %3258
          %3262 = vset.pattern.permute.xlu0 0
          %3263 = vperm.xlu0 %3262, %v2805
          %v3264 = vpop.permute.xlu0 %3263
          %3267 = vset.pattern.permute.xlu0 0
          %3268 = vperm.xlu0 %3267, %v2806
          %v3269 = vpop.permute.xlu0 %3268
          %3272 = vset.pattern.permute.xlu0 0
          %3273 = vperm.xlu0 %3272, %v2807
          %v3274 = vpop.permute.xlu0 %3273
          %3277 = vset.pattern.permute.xlu0 0
          %3278 = vperm.xlu0 %3277, %v2808
          %v3279 = vpop.permute.xlu0 %3278
          %3282 = vset.pattern.permute.xlu0 0
          %3283 = vperm.xlu0 %3282, %v2809
          %v3284 = vpop.permute.xlu0 %3283
          %3287 = vset.pattern.permute.xlu0 0
          %3288 = vperm.xlu0 %3287, %v2810
          %v3289 = vpop.permute.xlu0 %3288
          %3292 = vset.pattern.permute.xlu0 0
          %3293 = vperm.xlu0 %3292, %v2811
          %v3294 = vpop.permute.xlu0 %3293
          %3297 = vset.pattern.permute.xlu0 0
          %3298 = vperm.xlu0 %3297, %v2812
          %v3299 = vpop.permute.xlu0 %3298
          %3302 = vset.pattern.permute.xlu0 0
          %3303 = vperm.xlu0 %3302, %v2813
          %v3304 = vpop.permute.xlu0 %3303
          %3307 = vset.pattern.permute.xlu0 0
          %3308 = vperm.xlu0 %3307, %v2814
          %v3309 = vpop.permute.xlu0 %3308
          %3312 = vset.pattern.permute.xlu0 0
          %3313 = vperm.xlu0 %3312, %v2815
          %v3314 = vpop.permute.xlu0 %3313
          %3317 = vset.pattern.permute.xlu0 0
          %3318 = vperm.xlu0 %3317, %v2816
          %v3319 = vpop.permute.xlu0 %3318
          %3322 = vset.pattern.permute.xlu0 0
          %3323 = vperm.xlu0 %3322, %v2817
          %v3324 = vpop.permute.xlu0 %3323
          %3327 = vset.pattern.permute.xlu0 0
          %3328 = vperm.xlu0 %3327, %v2818
          %v3329 = vpop.permute.xlu0 %3328
          %v3331 = vsub.f32 %v2499, %v3014
          %v3332 = vsub.f32 %v2500, %v3019
          %v3333 = vsub.f32 %v2501, %v3024
          %v3334 = vsub.f32 %v2502, %v3029
          %v3335 = vsub.f32 %v2503, %v3034
          %v3336 = vsub.f32 %v2504, %v3039
          %v3337 = vsub.f32 %v2505, %v3044
          %v3338 = vsub.f32 %v2506, %v3049
          %v3339 = vsub.f32 %v2507, %v3054
          %v3340 = vsub.f32 %v2508, %v3059
          %v3341 = vsub.f32 %v2509, %v3064
          %v3342 = vsub.f32 %v2510, %v3069
          %v3343 = vsub.f32 %v2511, %v3074
          %v3344 = vsub.f32 %v2512, %v3079
          %v3345 = vsub.f32 %v2513, %v3084
          %v3346 = vsub.f32 %v2514, %v3089
          %v3347 = vsub.f32 %v2515, %v3094
          %v3348 = vsub.f32 %v2516, %v3099
          %v3349 = vsub.f32 %v2517, %v3104
          %v3350 = vsub.f32 %v2518, %v3109
          %v3351 = vsub.f32 %v2519, %v3114
          %v3352 = vsub.f32 %v2520, %v3119
          %v3353 = vsub.f32 %v2521, %v3124
          %v3354 = vsub.f32 %v2522, %v3129
          %v3355 = vsub.f32 %v2523, %v3134
          %v3356 = vsub.f32 %v2524, %v3139
          %v3357 = vsub.f32 %v2525, %v3144
          %v3358 = vsub.f32 %v2526, %v3149
          %v3359 = vsub.f32 %v2527, %v3154
          %v3360 = vsub.f32 %v2528, %v3159
          %v3361 = vsub.f32 %v2529, %v3164
          %v3362 = vsub.f32 %v2530, %v3169
          %v3363 = vsub.f32 %v2531, %v3174
          %v3364 = vsub.f32 %v2532, %v3179
          %v3365 = vsub.f32 %v2533, %v3184
          %v3366 = vsub.f32 %v2534, %v3189
          %v3367 = vsub.f32 %v2535, %v3194
          %v3368 = vsub.f32 %v2536, %v3199
          %v3369 = vsub.f32 %v2537, %v3204
          %v3370 = vsub.f32 %v2538, %v3209
          %v3371 = vsub.f32 %v2539, %v3214
          %v3372 = vsub.f32 %v2540, %v3219
          %v3373 = vsub.f32 %v2541, %v3224
          %v3374 = vsub.f32 %v2542, %v3229
          %v3375 = vsub.f32 %v2543, %v3234
          %v3376 = vsub.f32 %v2544, %v3239
          %v3377 = vsub.f32 %v2545, %v3244
          %v3378 = vsub.f32 %v2546, %v3249
          %v3379 = vsub.f32 %v2547, %v3254
          %v3380 = vsub.f32 %v2548, %v3259
          %v3381 = vsub.f32 %v2549, %v3264
          %v3382 = vsub.f32 %v2550, %v3269
          %v3383 = vsub.f32 %v2551, %v3274
          %v3384 = vsub.f32 %v2552, %v3279
          %v3385 = vsub.f32 %v2553, %v3284
          %v3386 = vsub.f32 %v2554, %v3289
          %v3387 = vsub.f32 %v2555, %v3294
          %v3388 = vsub.f32 %v2556, %v3299
          %v3389 = vsub.f32 %v2557, %v3304
          %v3390 = vsub.f32 %v2558, %v3309
          %v3391 = vsub.f32 %v2559, %v3314
          %v3392 = vsub.f32 %v2560, %v3319
          %v3393 = vsub.f32 %v2561, %v3324
          %v3394 = vsub.f32 %v2562, %v3329
          %v3395 = vmul.f32 %v3331, 1.442695
          %v3396 = vpow.pop %v3395
          %v3397 = vmul.f32 %v3332, 1.442695
          %v3398 = vpow.pop %v3397
          %v3399 = vmul.f32 %v3333, 1.442695
          %v3400 = vpow.pop %v3399
          %v3401 = vmul.f32 %v3334, 1.442695
          %v3402 = vpow.pop %v3401
          %v3403 = vmul.f32 %v3335, 1.442695
          %v3404 = vpow.pop %v3403
          %v3405 = vmul.f32 %v3336, 1.442695
          %v3406 = vpow.pop %v3405
          %v3407 = vmul.f32 %v3337, 1.442695
          %v3408 = vpow.pop %v3407
          %v3409 = vmul.f32 %v3338, 1.442695
          %v3410 = vpow.pop %v3409
          %v3411 = vmul.f32 %v3339, 1.442695
          %v3412 = vpow.pop %v3411
          %v3413 = vmul.f32 %v3340, 1.442695
          %v3414 = vpow.pop %v3413
          %v3415 = vmul.f32 %v3341, 1.442695
          %v3416 = vpow.pop %v3415
          %v3417 = vmul.f32 %v3342, 1.442695
          %v3418 = vpow.pop %v3417
          %v3419 = vmul.f32 %v3343, 1.442695
          %v3420 = vpow.pop %v3419
          %v3421 = vmul.f32 %v3344, 1.442695
          %v3422 = vpow.pop %v3421
          %v3423 = vmul.f32 %v3345, 1.442695
          %v3424 = vpow.pop %v3423
          %v3425 = vmul.f32 %v3346, 1.442695
          %v3426 = vpow.pop %v3425
          %v3427 = vmul.f32 %v3347, 1.442695
          %v3428 = vpow.pop %v3427
          %v3429 = vmul.f32 %v3348, 1.442695
          %v3430 = vpow.pop %v3429
          %v3431 = vmul.f32 %v3349, 1.442695
          %v3432 = vpow.pop %v3431
          %v3433 = vmul.f32 %v3350, 1.442695
          %v3434 = vpow.pop %v3433
          %v3435 = vmul.f32 %v3351, 1.442695
          %v3436 = vpow.pop %v3435
          %v3437 = vmul.f32 %v3352, 1.442695
          %v3438 = vpow.pop %v3437
          %v3439 = vmul.f32 %v3353, 1.442695
          %v3440 = vpow.pop %v3439
          %v3441 = vmul.f32 %v3354, 1.442695
          %v3442 = vpow.pop %v3441
          %v3443 = vmul.f32 %v3355, 1.442695
          %v3444 = vpow.pop %v3443
          %v3445 = vmul.f32 %v3356, 1.442695
          %v3446 = vpow.pop %v3445
          %v3447 = vmul.f32 %v3357, 1.442695
          %v3448 = vpow.pop %v3447
          %v3449 = vmul.f32 %v3358, 1.442695
          %v3450 = vpow.pop %v3449
          %v3451 = vmul.f32 %v3359, 1.442695
          %v3452 = vpow.pop %v3451
          %v3453 = vmul.f32 %v3360, 1.442695
          %v3454 = vpow.pop %v3453
          %v3455 = vmul.f32 %v3361, 1.442695
          %v3456 = vpow.pop %v3455
          %v3457 = vmul.f32 %v3362, 1.442695
          %v3458 = vpow.pop %v3457
          %v3459 = vmul.f32 %v3363, 1.442695
          %v3460 = vpow.pop %v3459
          %v3461 = vmul.f32 %v3364, 1.442695
          %v3462 = vpow.pop %v3461
          %v3463 = vmul.f32 %v3365, 1.442695
          %v3464 = vpow.pop %v3463
          %v3465 = vmul.f32 %v3366, 1.442695
          %v3466 = vpow.pop %v3465
          %v3467 = vmul.f32 %v3367, 1.442695
          %v3468 = vpow.pop %v3467
          %v3469 = vmul.f32 %v3368, 1.442695
          %v3470 = vpow.pop %v3469
          %v3471 = vmul.f32 %v3369, 1.442695
          %v3472 = vpow.pop %v3471
          %v3473 = vmul.f32 %v3370, 1.442695
          %v3474 = vpow.pop %v3473
          %v3475 = vmul.f32 %v3371, 1.442695
          %v3476 = vpow.pop %v3475
          %v3477 = vmul.f32 %v3372, 1.442695
          %v3478 = vpow.pop %v3477
          %v3479 = vmul.f32 %v3373, 1.442695
          %v3480 = vpow.pop %v3479
          %v3481 = vmul.f32 %v3374, 1.442695
          %v3482 = vpow.pop %v3481
          %v3483 = vmul.f32 %v3375, 1.442695
          %v3484 = vpow.pop %v3483
          %v3485 = vmul.f32 %v3376, 1.442695
          %v3486 = vpow.pop %v3485
          %v3487 = vmul.f32 %v3377, 1.442695
          %v3488 = vpow.pop %v3487
          %v3489 = vmul.f32 %v3378, 1.442695
          %v3490 = vpow.pop %v3489
          %v3491 = vmul.f32 %v3379, 1.442695
          %v3492 = vpow.pop %v3491
          %v3493 = vmul.f32 %v3380, 1.442695
          %v3494 = vpow.pop %v3493
          %v3495 = vmul.f32 %v3381, 1.442695
          %v3496 = vpow.pop %v3495
          %v3497 = vmul.f32 %v3382, 1.442695
          %v3498 = vpow.pop %v3497
          %v3499 = vmul.f32 %v3383, 1.442695
          %v3500 = vpow.pop %v3499
          %v3501 = vmul.f32 %v3384, 1.442695
          %v3502 = vpow.pop %v3501
          %v3503 = vmul.f32 %v3385, 1.442695
          %v3504 = vpow.pop %v3503
          %v3505 = vmul.f32 %v3386, 1.442695
          %v3506 = vpow.pop %v3505
          %v3507 = vmul.f32 %v3387, 1.442695
          %v3508 = vpow.pop %v3507
          %v3509 = vmul.f32 %v3388, 1.442695
          %v3510 = vpow.pop %v3509
          %v3511 = vmul.f32 %v3389, 1.442695
          %v3512 = vpow.pop %v3511
          %v3513 = vmul.f32 %v3390, 1.442695
          %v3514 = vpow.pop %v3513
          %v3515 = vmul.f32 %v3391, 1.442695
          %v3516 = vpow.pop %v3515
          %v3517 = vmul.f32 %v3392, 1.442695
          %v3518 = vpow.pop %v3517
          %v3519 = vmul.f32 %v3393, 1.442695
          %v3520 = vpow.pop %v3519
          %v3521 = vmul.f32 %v3394, 1.442695
          %v3522 = vpow.pop %v3521
          %v3523 = vld [vmem:[#allocation3] sm:$0xff]
          %v3524 = vld [vmem:[#allocation3 + $0x8] sm:$0xff]
          %v3525 = vld [vmem:[#allocation3 + $0x10] sm:$0xff]
          %v3526 = vld [vmem:[#allocation3 + $0x18] sm:$0xff]
          %v3527 = vld [vmem:[#allocation3 + $0x20] sm:$0xff]
          %v3528 = vld [vmem:[#allocation3 + $0x28] sm:$0xff]
          %v3529 = vld [vmem:[#allocation3 + $0x30] sm:$0xff]
          %v3530 = vld [vmem:[#allocation3 + $0x38] sm:$0xff]
          %v3531 = vld [vmem:[#allocation3 + $0x40] sm:$0xff]
          %v3532 = vld [vmem:[#allocation3 + $0x48] sm:$0xff]
          %v3533 = vld [vmem:[#allocation3 + $0x50] sm:$0xff]
          %v3534 = vld [vmem:[#allocation3 + $0x58] sm:$0xff]
          %v3535 = vld [vmem:[#allocation3 + $0x60] sm:$0xff]
          %v3536 = vld [vmem:[#allocation3 + $0x68] sm:$0xff]
          %v3537 = vld [vmem:[#allocation3 + $0x70] sm:$0xff]
          %v3538 = vld [vmem:[#allocation3 + $0x78] sm:$0xff]
          %v3539 = vld [vmem:[#allocation3 + $0x80] sm:$0xff]
          %v3540 = vld [vmem:[#allocation3 + $0x88] sm:$0xff]
          %v3541 = vld [vmem:[#allocation3 + $0x90] sm:$0xff]
          %v3542 = vld [vmem:[#allocation3 + $0x98] sm:$0xff]
          %v3543 = vld [vmem:[#allocation3 + $0xa0] sm:$0xff]
          %v3544 = vld [vmem:[#allocation3 + $0xa8] sm:$0xff]
          %v3545 = vld [vmem:[#allocation3 + $0xb0] sm:$0xff]
          %v3546 = vld [vmem:[#allocation3 + $0xb8] sm:$0xff]
          %v3547 = vld [vmem:[#allocation3 + $0xc0] sm:$0xff]
          %v3548 = vld [vmem:[#allocation3 + $0xc8] sm:$0xff]
          %v3549 = vld [vmem:[#allocation3 + $0xd0] sm:$0xff]
          %v3550 = vld [vmem:[#allocation3 + $0xd8] sm:$0xff]
          %v3551 = vld [vmem:[#allocation3 + $0xe0] sm:$0xff]
          %v3552 = vld [vmem:[#allocation3 + $0xe8] sm:$0xff]
          %v3553 = vld [vmem:[#allocation3 + $0xf0] sm:$0xff]
          %v3554 = vld [vmem:[#allocation3 + $0xf8] sm:$0xff]
          %v3555 = vld [vmem:[#allocation3 + $0x100] sm:$0xff]
          %v3556 = vld [vmem:[#allocation3 + $0x108] sm:$0xff]
          %v3557 = vld [vmem:[#allocation3 + $0x110] sm:$0xff]
          %v3558 = vld [vmem:[#allocation3 + $0x118] sm:$0xff]
          %v3559 = vld [vmem:[#allocation3 + $0x120] sm:$0xff]
          %v3560 = vld [vmem:[#allocation3 + $0x128] sm:$0xff]
          %v3561 = vld [vmem:[#allocation3 + $0x130] sm:$0xff]
          %v3562 = vld [vmem:[#allocation3 + $0x138] sm:$0xff]
          %v3563 = vld [vmem:[#allocation3 + $0x140] sm:$0xff]
          %v3564 = vld [vmem:[#allocation3 + $0x148] sm:$0xff]
          %v3565 = vld [vmem:[#allocation3 + $0x150] sm:$0xff]
          %v3566 = vld [vmem:[#allocation3 + $0x158] sm:$0xff]
          %v3567 = vld [vmem:[#allocation3 + $0x160] sm:$0xff]
          %v3568 = vld [vmem:[#allocation3 + $0x168] sm:$0xff]
          %v3569 = vld [vmem:[#allocation3 + $0x170] sm:$0xff]
          %v3570 = vld [vmem:[#allocation3 + $0x178] sm:$0xff]
          %v3571 = vld [vmem:[#allocation3 + $0x180] sm:$0xff]
          %v3572 = vld [vmem:[#allocation3 + $0x188] sm:$0xff]
          %v3573 = vld [vmem:[#allocation3 + $0x190] sm:$0xff]
          %v3574 = vld [vmem:[#allocation3 + $0x198] sm:$0xff]
          %v3575 = vld [vmem:[#allocation3 + $0x1a0] sm:$0xff]
          %v3576 = vld [vmem:[#allocation3 + $0x1a8] sm:$0xff]
          %v3577 = vld [vmem:[#allocation3 + $0x1b0] sm:$0xff]
          %v3578 = vld [vmem:[#allocation3 + $0x1b8] sm:$0xff]
          %v3579 = vld [vmem:[#allocation3 + $0x1c0] sm:$0xff]
          %v3580 = vld [vmem:[#allocation3 + $0x1c8] sm:$0xff]
          %v3581 = vld [vmem:[#allocation3 + $0x1d0] sm:$0xff]
          %v3582 = vld [vmem:[#allocation3 + $0x1d8] sm:$0xff]
          %v3583 = vld [vmem:[#allocation3 + $0x1e0] sm:$0xff]
          %v3584 = vld [vmem:[#allocation3 + $0x1e8] sm:$0xff]
          %v3585 = vld [vmem:[#allocation3 + $0x1f0] sm:$0xff]
          %v3586 = vld [vmem:[#allocation3 + $0x1f8] sm:$0xff]
          %v3587 = vmul.f32 %v2884, %v3523
          %v3588 = vmul.f32 %v2886, %v3524
          %v3589 = vmul.f32 %v2888, %v3525
          %v3590 = vmul.f32 %v2890, %v3526
          %v3591 = vmul.f32 %v2892, %v3527
          %v3592 = vmul.f32 %v2894, %v3528
          %v3593 = vmul.f32 %v2896, %v3529
          %v3594 = vmul.f32 %v2898, %v3530
          %v3595 = vmul.f32 %v2900, %v3531
          %v3596 = vmul.f32 %v2902, %v3532
          %v3597 = vmul.f32 %v2904, %v3533
          %v3598 = vmul.f32 %v2906, %v3534
          %v3599 = vmul.f32 %v2908, %v3535
          %v3600 = vmul.f32 %v2910, %v3536
          %v3601 = vmul.f32 %v2912, %v3537
          %v3602 = vmul.f32 %v2914, %v3538
          %v3603 = vmul.f32 %v2916, %v3539
          %v3604 = vmul.f32 %v2918, %v3540
          %v3605 = vmul.f32 %v2920, %v3541
          %v3606 = vmul.f32 %v2922, %v3542
          %v3607 = vmul.f32 %v2924, %v3543
          %v3608 = vmul.f32 %v2926, %v3544
          %v3609 = vmul.f32 %v2928, %v3545
          %v3610 = vmul.f32 %v2930, %v3546
          %v3611 = vmul.f32 %v2932, %v3547
          %v3612 = vmul.f32 %v2934, %v3548
          %v3613 = vmul.f32 %v2936, %v3549
          %v3614 = vmul.f32 %v2938, %v3550
          %v3615 = vmul.f32 %v2940, %v3551
          %v3616 = vmul.f32 %v2942, %v3552
          %v3617 = vmul.f32 %v2944, %v3553
          %v3618 = vmul.f32 %v2946, %v3554
          %v3619 = vmul.f32 %v2948, %v3555
          %v3620 = vmul.f32 %v2950, %v3556
          %v3621 = vmul.f32 %v2952, %v3557
          %v3622 = vmul.f32 %v2954, %v3558
          %v3623 = vmul.f32 %v2956, %v3559
          %v3624 = vmul.f32 %v2958, %v3560
          %v3625 = vmul.f32 %v2960, %v3561
          %v3626 = vmul.f32 %v2962, %v3562
          %v3627 = vmul.f32 %v2964, %v3563
          %v3628 = vmul.f32 %v2966, %v3564
          %v3629 = vmul.f32 %v2968, %v3565
          %v3630 = vmul.f32 %v2970, %v3566
          %v3631 = vmul.f32 %v2972, %v3567
          %v3632 = vmul.f32 %v2974, %v3568
          %v3633 = vmul.f32 %v2976, %v3569
          %v3634 = vmul.f32 %v2978, %v3570
          %v3635 = vmul.f32 %v2980, %v3571
          %v3636 = vmul.f32 %v2982, %v3572
          %v3637 = vmul.f32 %v2984, %v3573
          %v3638 = vmul.f32 %v2986, %v3574
          %v3639 = vmul.f32 %v2988, %v3575
          %v3640 = vmul.f32 %v2990, %v3576
          %v3641 = vmul.f32 %v2992, %v3577
          %v3642 = vmul.f32 %v2994, %v3578
          %v3643 = vmul.f32 %v2996, %v3579
          %v3644 = vmul.f32 %v2998, %v3580
          %v3645 = vmul.f32 %v3000, %v3581
          %v3646 = vmul.f32 %v3002, %v3582
          %v3647 = vmul.f32 %v3004, %v3583
          %v3648 = vmul.f32 %v3006, %v3584
          %v3649 = vmul.f32 %v3008, %v3585
          %v3650 = vmul.f32 %v3010, %v3586
          %3651 = vadd.xlane.f32.xlu0 %v3396
          %v3652 = vpop.xlane.xlu0 %3651
          %3653 = vadd.xlane.f32.xlu0 %v3398
          %v3654 = vpop.xlane.xlu0 %3653
          %3655 = vadd.xlane.f32.xlu0 %v3400
          %v3656 = vpop.xlane.xlu0 %3655
          %3657 = vadd.xlane.f32.xlu0 %v3402
          %v3658 = vpop.xlane.xlu0 %3657
          %3659 = vadd.xlane.f32.xlu0 %v3404
          %v3660 = vpop.xlane.xlu0 %3659
          %3661 = vadd.xlane.f32.xlu0 %v3406
          %v3662 = vpop.xlane.xlu0 %3661
          %3663 = vadd.xlane.f32.xlu0 %v3408
          %v3664 = vpop.xlane.xlu0 %3663
          %3665 = vadd.xlane.f32.xlu0 %v3410
          %v3666 = vpop.xlane.xlu0 %3665
          %3667 = vadd.xlane.f32.xlu0 %v3412
          %v3668 = vpop.xlane.xlu0 %3667
          %3669 = vadd.xlane.f32.xlu0 %v3414
          %v3670 = vpop.xlane.xlu0 %3669
          %3671 = vadd.xlane.f32.xlu0 %v3416
          %v3672 = vpop.xlane.xlu0 %3671
          %3673 = vadd.xlane.f32.xlu0 %v3418
          %v3674 = vpop.xlane.xlu0 %3673
          %3675 = vadd.xlane.f32.xlu0 %v3420
          %v3676 = vpop.xlane.xlu0 %3675
          %3677 = vadd.xlane.f32.xlu0 %v3422
          %v3678 = vpop.xlane.xlu0 %3677
          %3679 = vadd.xlane.f32.xlu0 %v3424
          %v3680 = vpop.xlane.xlu0 %3679
          %3681 = vadd.xlane.f32.xlu0 %v3426
          %v3682 = vpop.xlane.xlu0 %3681
          %3683 = vadd.xlane.f32.xlu0 %v3428
          %v3684 = vpop.xlane.xlu0 %3683
          %3685 = vadd.xlane.f32.xlu0 %v3430
          %v3686 = vpop.xlane.xlu0 %3685
          %3687 = vadd.xlane.f32.xlu0 %v3432
          %v3688 = vpop.xlane.xlu0 %3687
          %3689 = vadd.xlane.f32.xlu0 %v3434
          %v3690 = vpop.xlane.xlu0 %3689
          %3691 = vadd.xlane.f32.xlu0 %v3436
          %v3692 = vpop.xlane.xlu0 %3691
          %3693 = vadd.xlane.f32.xlu0 %v3438
          %v3694 = vpop.xlane.xlu0 %3693
          %3695 = vadd.xlane.f32.xlu0 %v3440
          %v3696 = vpop.xlane.xlu0 %3695
          %3697 = vadd.xlane.f32.xlu0 %v3442
          %v3698 = vpop.xlane.xlu0 %3697
          %3699 = vadd.xlane.f32.xlu0 %v3444
          %v3700 = vpop.xlane.xlu0 %3699
          %3701 = vadd.xlane.f32.xlu0 %v3446
          %v3702 = vpop.xlane.xlu0 %3701
          %3703 = vadd.xlane.f32.xlu0 %v3448
          %v3704 = vpop.xlane.xlu0 %3703
          %3705 = vadd.xlane.f32.xlu0 %v3450
          %v3706 = vpop.xlane.xlu0 %3705
          %3707 = vadd.xlane.f32.xlu0 %v3452
          %v3708 = vpop.xlane.xlu0 %3707
          %3709 = vadd.xlane.f32.xlu0 %v3454
          %v3710 = vpop.xlane.xlu0 %3709
          %3711 = vadd.xlane.f32.xlu0 %v3456
          %v3712 = vpop.xlane.xlu0 %3711
          %3713 = vadd.xlane.f32.xlu0 %v3458
          %v3714 = vpop.xlane.xlu0 %3713
          %3715 = vadd.xlane.f32.xlu0 %v3460
          %v3716 = vpop.xlane.xlu0 %3715
          %3717 = vadd.xlane.f32.xlu0 %v3462
          %v3718 = vpop.xlane.xlu0 %3717
          %3719 = vadd.xlane.f32.xlu0 %v3464
          %v3720 = vpop.xlane.xlu0 %3719
          %3721 = vadd.xlane.f32.xlu0 %v3466
          %v3722 = vpop.xlane.xlu0 %3721
          %3723 = vadd.xlane.f32.xlu0 %v3468
          %v3724 = vpop.xlane.xlu0 %3723
          %3725 = vadd.xlane.f32.xlu0 %v3470
          %v3726 = vpop.xlane.xlu0 %3725
          %3727 = vadd.xlane.f32.xlu0 %v3472
          %v3728 = vpop.xlane.xlu0 %3727
          %3729 = vadd.xlane.f32.xlu0 %v3474
          %v3730 = vpop.xlane.xlu0 %3729
          %3731 = vadd.xlane.f32.xlu0 %v3476
          %v3732 = vpop.xlane.xlu0 %3731
          %3733 = vadd.xlane.f32.xlu0 %v3478
          %v3734 = vpop.xlane.xlu0 %3733
          %3735 = vadd.xlane.f32.xlu0 %v3480
          %v3736 = vpop.xlane.xlu0 %3735
          %3737 = vadd.xlane.f32.xlu0 %v3482
          %v3738 = vpop.xlane.xlu0 %3737
          %3739 = vadd.xlane.f32.xlu0 %v3484
          %v3740 = vpop.xlane.xlu0 %3739
          %3741 = vadd.xlane.f32.xlu0 %v3486
          %v3742 = vpop.xlane.xlu0 %3741
          %3743 = vadd.xlane.f32.xlu0 %v3488
          %v3744 = vpop.xlane.xlu0 %3743
          %3745 = vadd.xlane.f32.xlu0 %v3490
          %v3746 = vpop.xlane.xlu0 %3745
          %3747 = vadd.xlane.f32.xlu0 %v3492
          %v3748 = vpop.xlane.xlu0 %3747
          %3749 = vadd.xlane.f32.xlu0 %v3494
          %v3750 = vpop.xlane.xlu0 %3749
          %3751 = vadd.xlane.f32.xlu0 %v3496
          %v3752 = vpop.xlane.xlu0 %3751
          %3753 = vadd.xlane.f32.xlu0 %v3498
          %v3754 = vpop.xlane.xlu0 %3753
          %3755 = vadd.xlane.f32.xlu0 %v3500
          %v3756 = vpop.xlane.xlu0 %3755
          %3757 = vadd.xlane.f32.xlu0 %v3502
          %v3758 = vpop.xlane.xlu0 %3757
          %3759 = vadd.xlane.f32.xlu0 %v3504
          %v3760 = vpop.xlane.xlu0 %3759
          %3761 = vadd.xlane.f32.xlu0 %v3506
          %v3762 = vpop.xlane.xlu0 %3761
          %3763 = vadd.xlane.f32.xlu0 %v3508
          %v3764 = vpop.xlane.xlu0 %3763
          %3765 = vadd.xlane.f32.xlu0 %v3510
          %v3766 = vpop.xlane.xlu0 %3765
          %3767 = vadd.xlane.f32.xlu0 %v3512
          %v3768 = vpop.xlane.xlu0 %3767
          %3769 = vadd.xlane.f32.xlu0 %v3514
          %v3770 = vpop.xlane.xlu0 %3769
          %3771 = vadd.xlane.f32.xlu0 %v3516
          %v3772 = vpop.xlane.xlu0 %3771
          %3773 = vadd.xlane.f32.xlu0 %v3518
          %v3774 = vpop.xlane.xlu0 %3773
          %3775 = vadd.xlane.f32.xlu0 %v3520
          %v3776 = vpop.xlane.xlu0 %3775
          %3777 = vadd.xlane.f32.xlu0 %v3522
          %v3778 = vpop.xlane.xlu0 %3777
          %v3779 = vadd.f32 %v3587, %v3652
          %v3780 = vadd.f32 %v3588, %v3654
          %v3781 = vadd.f32 %v3589, %v3656
          %v3782 = vadd.f32 %v3590, %v3658
          %v3783 = vadd.f32 %v3591, %v3660
          %v3784 = vadd.f32 %v3592, %v3662
          %v3785 = vadd.f32 %v3593, %v3664
          %v3786 = vadd.f32 %v3594, %v3666
          %v3787 = vadd.f32 %v3595, %v3668
          %v3788 = vadd.f32 %v3596, %v3670
          %v3789 = vadd.f32 %v3597, %v3672
          %v3790 = vadd.f32 %v3598, %v3674
          %v3791 = vadd.f32 %v3599, %v3676
          %v3792 = vadd.f32 %v3600, %v3678
          %v3793 = vadd.f32 %v3601, %v3680
          %v3794 = vadd.f32 %v3602, %v3682
          %v3795 = vadd.f32 %v3603, %v3684
          %v3796 = vadd.f32 %v3604, %v3686
          %v3797 = vadd.f32 %v3605, %v3688
          %v3798 = vadd.f32 %v3606, %v3690
          %v3799 = vadd.f32 %v3607, %v3692
          %v3800 = vadd.f32 %v3608, %v3694
          %v3801 = vadd.f32 %v3609, %v3696
          %v3802 = vadd.f32 %v3610, %v3698
          %v3803 = vadd.f32 %v3611, %v3700
          %v3804 = vadd.f32 %v3612, %v3702
          %v3805 = vadd.f32 %v3613, %v3704
          %v3806 = vadd.f32 %v3614, %v3706
          %v3807 = vadd.f32 %v3615, %v3708
          %v3808 = vadd.f32 %v3616, %v3710
          %v3809 = vadd.f32 %v3617, %v3712
          %v3810 = vadd.f32 %v3618, %v3714
          %v3811 = vadd.f32 %v3619, %v3716
          %v3812 = vadd.f32 %v3620, %v3718
          %v3813 = vadd.f32 %v3621, %v3720
          %v3814 = vadd.f32 %v3622, %v3722
          %v3815 = vadd.f32 %v3623, %v3724
          %v3816 = vadd.f32 %v3624, %v3726
          %v3817 = vadd.f32 %v3625, %v3728
          %v3818 = vadd.f32 %v3626, %v3730
          %v3819 = vadd.f32 %v3627, %v3732
          %v3820 = vadd.f32 %v3628, %v3734
          %v3821 = vadd.f32 %v3629, %v3736
          %v3822 = vadd.f32 %v3630, %v3738
          %v3823 = vadd.f32 %v3631, %v3740
          %v3824 = vadd.f32 %v3632, %v3742
          %v3825 = vadd.f32 %v3633, %v3744
          %v3826 = vadd.f32 %v3634, %v3746
          %v3827 = vadd.f32 %v3635, %v3748
          %v3828 = vadd.f32 %v3636, %v3750
          %v3829 = vadd.f32 %v3637, %v3752
          %v3830 = vadd.f32 %v3638, %v3754
          %v3831 = vadd.f32 %v3639, %v3756
          %v3832 = vadd.f32 %v3640, %v3758
          %v3833 = vadd.f32 %v3641, %v3760
          %v3834 = vadd.f32 %v3642, %v3762
          %v3835 = vadd.f32 %v3643, %v3764
          %v3836 = vadd.f32 %v3644, %v3766
          %v3837 = vadd.f32 %v3645, %v3768
          %v3838 = vadd.f32 %v3646, %v3770
          %v3839 = vadd.f32 %v3647, %v3772
          %v3840 = vadd.f32 %v3648, %v3774
          %v3841 = vadd.f32 %v3649, %v3776
          %v3842 = vadd.f32 %v3650, %v3778
          %vm3843 = vcmask 7168
          %3844 = vst.msk [vmem:[#allocation3] sm:$0xff] %vm3843, %v3779
          %3845 = vst.msk [vmem:[#allocation3 + $0x8] sm:$0xff] %vm3843, %v3780
          %3846 = vst.msk [vmem:[#allocation3 + $0x10] sm:$0xff] %vm3843, %v3781
          %3847 = vst.msk [vmem:[#allocation3 + $0x18] sm:$0xff] %vm3843, %v3782
          %3848 = vst.msk [vmem:[#allocation3 + $0x20] sm:$0xff] %vm3843, %v3783
          %3849 = vst.msk [vmem:[#allocation3 + $0x28] sm:$0xff] %vm3843, %v3784
          %3850 = vst.msk [vmem:[#allocation3 + $0x30] sm:$0xff] %vm3843, %v3785
          %3851 = vst.msk [vmem:[#allocation3 + $0x38] sm:$0xff] %vm3843, %v3786
          %3852 = vst.msk [vmem:[#allocation3 + $0x40] sm:$0xff] %vm3843, %v3787
          %3853 = vst.msk [vmem:[#allocation3 + $0x48] sm:$0xff] %vm3843, %v3788
          %3854 = vst.msk [vmem:[#allocation3 + $0x50] sm:$0xff] %vm3843, %v3789
          %3855 = vst.msk [vmem:[#allocation3 + $0x58] sm:$0xff] %vm3843, %v3790
          %3856 = vst.msk [vmem:[#allocation3 + $0x60] sm:$0xff] %vm3843, %v3791
          %3857 = vst.msk [vmem:[#allocation3 + $0x68] sm:$0xff] %vm3843, %v3792
          %3858 = vst.msk [vmem:[#allocation3 + $0x70] sm:$0xff] %vm3843, %v3793
          %3859 = vst.msk [vmem:[#allocation3 + $0x78] sm:$0xff] %vm3843, %v3794
          %3860 = vst.msk [vmem:[#allocation3 + $0x80] sm:$0xff] %vm3843, %v3795
          %3861 = vst.msk [vmem:[#allocation3 + $0x88] sm:$0xff] %vm3843, %v3796
          %3862 = vst.msk [vmem:[#allocation3 + $0x90] sm:$0xff] %vm3843, %v3797
          %3863 = vst.msk [vmem:[#allocation3 + $0x98] sm:$0xff] %vm3843, %v3798
          %3864 = vst.msk [vmem:[#allocation3 + $0xa0] sm:$0xff] %vm3843, %v3799
          %3865 = vst.msk [vmem:[#allocation3 + $0xa8] sm:$0xff] %vm3843, %v3800
          %3866 = vst.msk [vmem:[#allocation3 + $0xb0] sm:$0xff] %vm3843, %v3801
          %3867 = vst.msk [vmem:[#allocation3 + $0xb8] sm:$0xff] %vm3843, %v3802
          %3868 = vst.msk [vmem:[#allocation3 + $0xc0] sm:$0xff] %vm3843, %v3803
          %3869 = vst.msk [vmem:[#allocation3 + $0xc8] sm:$0xff] %vm3843, %v3804
          %3870 = vst.msk [vmem:[#allocation3 + $0xd0] sm:$0xff] %vm3843, %v3805
          %3871 = vst.msk [vmem:[#allocation3 + $0xd8] sm:$0xff] %vm3843, %v3806
          %3872 = vst.msk [vmem:[#allocation3 + $0xe0] sm:$0xff] %vm3843, %v3807
          %3873 = vst.msk [vmem:[#allocation3 + $0xe8] sm:$0xff] %vm3843, %v3808
          %3874 = vst.msk [vmem:[#allocation3 + $0xf0] sm:$0xff] %vm3843, %v3809
          %3875 = vst.msk [vmem:[#allocation3 + $0xf8] sm:$0xff] %vm3843, %v3810
          %3876 = vst.msk [vmem:[#allocation3 + $0x100] sm:$0xff] %vm3843, %v3811
          %3877 = vst.msk [vmem:[#allocation3 + $0x108] sm:$0xff] %vm3843, %v3812
          %3878 = vst.msk [vmem:[#allocation3 + $0x110] sm:$0xff] %vm3843, %v3813
          %3879 = vst.msk [vmem:[#allocation3 + $0x118] sm:$0xff] %vm3843, %v3814
          %3880 = vst.msk [vmem:[#allocation3 + $0x120] sm:$0xff] %vm3843, %v3815
          %3881 = vst.msk [vmem:[#allocation3 + $0x128] sm:$0xff] %vm3843, %v3816
          %3882 = vst.msk [vmem:[#allocation3 + $0x130] sm:$0xff] %vm3843, %v3817
          %3883 = vst.msk [vmem:[#allocation3 + $0x138] sm:$0xff] %vm3843, %v3818
          %3884 = vst.msk [vmem:[#allocation3 + $0x140] sm:$0xff] %vm3843, %v3819
          %3885 = vst.msk [vmem:[#allocation3 + $0x148] sm:$0xff] %vm3843, %v3820
          %3886 = vst.msk [vmem:[#allocation3 + $0x150] sm:$0xff] %vm3843, %v3821
          %3887 = vst.msk [vmem:[#allocation3 + $0x158] sm:$0xff] %vm3843, %v3822
          %3888 = vst.msk [vmem:[#allocation3 + $0x160] sm:$0xff] %vm3843, %v3823
          %3889 = vst.msk [vmem:[#allocation3 + $0x168] sm:$0xff] %vm3843, %v3824
          %3890 = vst.msk [vmem:[#allocation3 + $0x170] sm:$0xff] %vm3843, %v3825
          %3891 = vst.msk [vmem:[#allocation3 + $0x178] sm:$0xff] %vm3843, %v3826
          %3892 = vst.msk [vmem:[#allocation3 + $0x180] sm:$0xff] %vm3843, %v3827
          %3893 = vst.msk [vmem:[#allocation3 + $0x188] sm:$0xff] %vm3843, %v3828
          %3894 = vst.msk [vmem:[#allocation3 + $0x190] sm:$0xff] %vm3843, %v3829
          %3895 = vst.msk [vmem:[#allocation3 + $0x198] sm:$0xff] %vm3843, %v3830
          %3896 = vst.msk [vmem:[#allocation3 + $0x1a0] sm:$0xff] %vm3843, %v3831
          %3897 = vst.msk [vmem:[#allocation3 + $0x1a8] sm:$0xff] %vm3843, %v3832
          %3898 = vst.msk [vmem:[#allocation3 + $0x1b0] sm:$0xff] %vm3843, %v3833
          %3899 = vst.msk [vmem:[#allocation3 + $0x1b8] sm:$0xff] %vm3843, %v3834
          %3900 = vst.msk [vmem:[#allocation3 + $0x1c0] sm:$0xff] %vm3843, %v3835
          %3901 = vst.msk [vmem:[#allocation3 + $0x1c8] sm:$0xff] %vm3843, %v3836
          %3902 = vst.msk [vmem:[#allocation3 + $0x1d0] sm:$0xff] %vm3843, %v3837
          %3903 = vst.msk [vmem:[#allocation3 + $0x1d8] sm:$0xff] %vm3843, %v3838
          %3904 = vst.msk [vmem:[#allocation3 + $0x1e0] sm:$0xff] %vm3843, %v3839
          %3905 = vst.msk [vmem:[#allocation3 + $0x1e8] sm:$0xff] %vm3843, %v3840
          %3906 = vst.msk [vmem:[#allocation3 + $0x1f0] sm:$0xff] %vm3843, %v3841
          %3907 = vst.msk [vmem:[#allocation3 + $0x1f8] sm:$0xff] %vm3843, %v3842
          %v3908 = vld [vmem:[#allocation4] sm:$0xff]
          %v3909 = vld [vmem:[#allocation4 + $0x8] sm:$0xff]
          %v3910 = vld [vmem:[#allocation4 + $0x10] sm:$0xff]
          %v3911 = vld [vmem:[#allocation4 + $0x18] sm:$0xff]
          %v3912 = vld [vmem:[#allocation4 + $0x20] sm:$0xff]
          %v3913 = vld [vmem:[#allocation4 + $0x28] sm:$0xff]
          %v3914 = vld [vmem:[#allocation4 + $0x30] sm:$0xff]
          %v3915 = vld [vmem:[#allocation4 + $0x38] sm:$0xff]
          %v3916 = vld [vmem:[#allocation4 + $0x40] sm:$0xff]
          %v3917 = vld [vmem:[#allocation4 + $0x48] sm:$0xff]
          %v3918 = vld [vmem:[#allocation4 + $0x50] sm:$0xff]
          %v3919 = vld [vmem:[#allocation4 + $0x58] sm:$0xff]
          %v3920 = vld [vmem:[#allocation4 + $0x60] sm:$0xff]
          %v3921 = vld [vmem:[#allocation4 + $0x68] sm:$0xff]
          %v3922 = vld [vmem:[#allocation4 + $0x70] sm:$0xff]
          %v3923 = vld [vmem:[#allocation4 + $0x78] sm:$0xff]
          %v3924 = vld [vmem:[#allocation4 + $0x80] sm:$0xff]
          %v3925 = vld [vmem:[#allocation4 + $0x88] sm:$0xff]
          %v3926 = vld [vmem:[#allocation4 + $0x90] sm:$0xff]
          %v3927 = vld [vmem:[#allocation4 + $0x98] sm:$0xff]
          %v3928 = vld [vmem:[#allocation4 + $0xa0] sm:$0xff]
          %v3929 = vld [vmem:[#allocation4 + $0xa8] sm:$0xff]
          %v3930 = vld [vmem:[#allocation4 + $0xb0] sm:$0xff]
          %v3931 = vld [vmem:[#allocation4 + $0xb8] sm:$0xff]
          %v3932 = vld [vmem:[#allocation4 + $0xc0] sm:$0xff]
          %v3933 = vld [vmem:[#allocation4 + $0xc8] sm:$0xff]
          %v3934 = vld [vmem:[#allocation4 + $0xd0] sm:$0xff]
          %v3935 = vld [vmem:[#allocation4 + $0xd8] sm:$0xff]
          %v3936 = vld [vmem:[#allocation4 + $0xe0] sm:$0xff]
          %v3937 = vld [vmem:[#allocation4 + $0xe8] sm:$0xff]
          %v3938 = vld [vmem:[#allocation4 + $0xf0] sm:$0xff]
          %v3939 = vld [vmem:[#allocation4 + $0xf8] sm:$0xff]
          %v3940 = vld [vmem:[#allocation4 + $0x100] sm:$0xff]
          %v3941 = vld [vmem:[#allocation4 + $0x108] sm:$0xff]
          %v3942 = vld [vmem:[#allocation4 + $0x110] sm:$0xff]
          %v3943 = vld [vmem:[#allocation4 + $0x118] sm:$0xff]
          %v3944 = vld [vmem:[#allocation4 + $0x120] sm:$0xff]
          %v3945 = vld [vmem:[#allocation4 + $0x128] sm:$0xff]
          %v3946 = vld [vmem:[#allocation4 + $0x130] sm:$0xff]
          %v3947 = vld [vmem:[#allocation4 + $0x138] sm:$0xff]
          %v3948 = vld [vmem:[#allocation4 + $0x140] sm:$0xff]
          %v3949 = vld [vmem:[#allocation4 + $0x148] sm:$0xff]
          %v3950 = vld [vmem:[#allocation4 + $0x150] sm:$0xff]
          %v3951 = vld [vmem:[#allocation4 + $0x158] sm:$0xff]
          %v3952 = vld [vmem:[#allocation4 + $0x160] sm:$0xff]
          %v3953 = vld [vmem:[#allocation4 + $0x168] sm:$0xff]
          %v3954 = vld [vmem:[#allocation4 + $0x170] sm:$0xff]
          %v3955 = vld [vmem:[#allocation4 + $0x178] sm:$0xff]
          %v3956 = vld [vmem:[#allocation4 + $0x180] sm:$0xff]
          %v3957 = vld [vmem:[#allocation4 + $0x188] sm:$0xff]
          %v3958 = vld [vmem:[#allocation4 + $0x190] sm:$0xff]
          %v3959 = vld [vmem:[#allocation4 + $0x198] sm:$0xff]
          %v3960 = vld [vmem:[#allocation4 + $0x1a0] sm:$0xff]
          %v3961 = vld [vmem:[#allocation4 + $0x1a8] sm:$0xff]
          %v3962 = vld [vmem:[#allocation4 + $0x1b0] sm:$0xff]
          %v3963 = vld [vmem:[#allocation4 + $0x1b8] sm:$0xff]
          %v3964 = vld [vmem:[#allocation4 + $0x1c0] sm:$0xff]
          %v3965 = vld [vmem:[#allocation4 + $0x1c8] sm:$0xff]
          %v3966 = vld [vmem:[#allocation4 + $0x1d0] sm:$0xff]
          %v3967 = vld [vmem:[#allocation4 + $0x1d8] sm:$0xff]
          %v3968 = vld [vmem:[#allocation4 + $0x1e0] sm:$0xff]
          %v3969 = vld [vmem:[#allocation4 + $0x1e8] sm:$0xff]
          %v3970 = vld [vmem:[#allocation4 + $0x1f0] sm:$0xff]
          %v3971 = vld [vmem:[#allocation4 + $0x1f8] sm:$0xff]
          %3973 = vset.pattern.permute.xlu0 0
          %3974 = vperm.xlu0 %3973, %v2884
          %v3975 = vpop.permute.xlu0 %3974
          %3978 = vset.pattern.permute.xlu0 0
          %3979 = vperm.xlu0 %3978, %v2886
          %v3980 = vpop.permute.xlu0 %3979
          %3983 = vset.pattern.permute.xlu0 0
          %3984 = vperm.xlu0 %3983, %v2888
          %v3985 = vpop.permute.xlu0 %3984
          %3988 = vset.pattern.permute.xlu0 0
          %3989 = vperm.xlu0 %3988, %v2890
          %v3990 = vpop.permute.xlu0 %3989
          %3993 = vset.pattern.permute.xlu0 0
          %3994 = vperm.xlu0 %3993, %v2892
          %v3995 = vpop.permute.xlu0 %3994
          %3998 = vset.pattern.permute.xlu0 0
          %3999 = vperm.xlu0 %3998, %v2894
          %v4000 = vpop.permute.xlu0 %3999
          %4003 = vset.pattern.permute.xlu0 0
          %4004 = vperm.xlu0 %4003, %v2896
          %v4005 = vpop.permute.xlu0 %4004
          %4008 = vset.pattern.permute.xlu0 0
          %4009 = vperm.xlu0 %4008, %v2898
          %v4010 = vpop.permute.xlu0 %4009
          %4013 = vset.pattern.permute.xlu0 0
          %4014 = vperm.xlu0 %4013, %v2900
          %v4015 = vpop.permute.xlu0 %4014
          %4018 = vset.pattern.permute.xlu0 0
          %4019 = vperm.xlu0 %4018, %v2902
          %v4020 = vpop.permute.xlu0 %4019
          %4023 = vset.pattern.permute.xlu0 0
          %4024 = vperm.xlu0 %4023, %v2904
          %v4025 = vpop.permute.xlu0 %4024
          %4028 = vset.pattern.permute.xlu0 0
          %4029 = vperm.xlu0 %4028, %v2906
          %v4030 = vpop.permute.xlu0 %4029
          %4033 = vset.pattern.permute.xlu0 0
          %4034 = vperm.xlu0 %4033, %v2908
          %v4035 = vpop.permute.xlu0 %4034
          %4038 = vset.pattern.permute.xlu0 0
          %4039 = vperm.xlu0 %4038, %v2910
          %v4040 = vpop.permute.xlu0 %4039
          %4043 = vset.pattern.permute.xlu0 0
          %4044 = vperm.xlu0 %4043, %v2912
          %v4045 = vpop.permute.xlu0 %4044
          %4048 = vset.pattern.permute.xlu0 0
          %4049 = vperm.xlu0 %4048, %v2914
          %v4050 = vpop.permute.xlu0 %4049
          %4053 = vset.pattern.permute.xlu0 0
          %4054 = vperm.xlu0 %4053, %v2916
          %v4055 = vpop.permute.xlu0 %4054
          %4058 = vset.pattern.permute.xlu0 0
          %4059 = vperm.xlu0 %4058, %v2918
          %v4060 = vpop.permute.xlu0 %4059
          %4063 = vset.pattern.permute.xlu0 0
          %4064 = vperm.xlu0 %4063, %v2920
          %v4065 = vpop.permute.xlu0 %4064
          %4068 = vset.pattern.permute.xlu0 0
          %4069 = vperm.xlu0 %4068, %v2922
          %v4070 = vpop.permute.xlu0 %4069
          %4073 = vset.pattern.permute.xlu0 0
          %4074 = vperm.xlu0 %4073, %v2924
          %v4075 = vpop.permute.xlu0 %4074
          %4078 = vset.pattern.permute.xlu0 0
          %4079 = vperm.xlu0 %4078, %v2926
          %v4080 = vpop.permute.xlu0 %4079
          %4083 = vset.pattern.permute.xlu0 0
          %4084 = vperm.xlu0 %4083, %v2928
          %v4085 = vpop.permute.xlu0 %4084
          %4088 = vset.pattern.permute.xlu0 0
          %4089 = vperm.xlu0 %4088, %v2930
          %v4090 = vpop.permute.xlu0 %4089
          %4093 = vset.pattern.permute.xlu0 0
          %4094 = vperm.xlu0 %4093, %v2932
          %v4095 = vpop.permute.xlu0 %4094
          %4098 = vset.pattern.permute.xlu0 0
          %4099 = vperm.xlu0 %4098, %v2934
          %v4100 = vpop.permute.xlu0 %4099
          %4103 = vset.pattern.permute.xlu0 0
          %4104 = vperm.xlu0 %4103, %v2936
          %v4105 = vpop.permute.xlu0 %4104
          %4108 = vset.pattern.permute.xlu0 0
          %4109 = vperm.xlu0 %4108, %v2938
          %v4110 = vpop.permute.xlu0 %4109
          %4113 = vset.pattern.permute.xlu0 0
          %4114 = vperm.xlu0 %4113, %v2940
          %v4115 = vpop.permute.xlu0 %4114
          %4118 = vset.pattern.permute.xlu0 0
          %4119 = vperm.xlu0 %4118, %v2942
          %v4120 = vpop.permute.xlu0 %4119
          %4123 = vset.pattern.permute.xlu0 0
          %4124 = vperm.xlu0 %4123, %v2944
          %v4125 = vpop.permute.xlu0 %4124
          %4128 = vset.pattern.permute.xlu0 0
          %4129 = vperm.xlu0 %4128, %v2946
          %v4130 = vpop.permute.xlu0 %4129
          %4133 = vset.pattern.permute.xlu0 0
          %4134 = vperm.xlu0 %4133, %v2948
          %v4135 = vpop.permute.xlu0 %4134
          %4138 = vset.pattern.permute.xlu0 0
          %4139 = vperm.xlu0 %4138, %v2950
          %v4140 = vpop.permute.xlu0 %4139
          %4143 = vset.pattern.permute.xlu0 0
          %4144 = vperm.xlu0 %4143, %v2952
          %v4145 = vpop.permute.xlu0 %4144
          %4148 = vset.pattern.permute.xlu0 0
          %4149 = vperm.xlu0 %4148, %v2954
          %v4150 = vpop.permute.xlu0 %4149
          %4153 = vset.pattern.permute.xlu0 0
          %4154 = vperm.xlu0 %4153, %v2956
          %v4155 = vpop.permute.xlu0 %4154
          %4158 = vset.pattern.permute.xlu0 0
          %4159 = vperm.xlu0 %4158, %v2958
          %v4160 = vpop.permute.xlu0 %4159
          %4163 = vset.pattern.permute.xlu0 0
          %4164 = vperm.xlu0 %4163, %v2960
          %v4165 = vpop.permute.xlu0 %4164
          %4168 = vset.pattern.permute.xlu0 0
          %4169 = vperm.xlu0 %4168, %v2962
          %v4170 = vpop.permute.xlu0 %4169
          %4173 = vset.pattern.permute.xlu0 0
          %4174 = vperm.xlu0 %4173, %v2964
          %v4175 = vpop.permute.xlu0 %4174
          %4178 = vset.pattern.permute.xlu0 0
          %4179 = vperm.xlu0 %4178, %v2966
          %v4180 = vpop.permute.xlu0 %4179
          %4183 = vset.pattern.permute.xlu0 0
          %4184 = vperm.xlu0 %4183, %v2968
          %v4185 = vpop.permute.xlu0 %4184
          %4188 = vset.pattern.permute.xlu0 0
          %4189 = vperm.xlu0 %4188, %v2970
          %v4190 = vpop.permute.xlu0 %4189
          %4193 = vset.pattern.permute.xlu0 0
          %4194 = vperm.xlu0 %4193, %v2972
          %v4195 = vpop.permute.xlu0 %4194
          %4198 = vset.pattern.permute.xlu0 0
          %4199 = vperm.xlu0 %4198, %v2974
          %v4200 = vpop.permute.xlu0 %4199
          %4203 = vset.pattern.permute.xlu0 0
          %4204 = vperm.xlu0 %4203, %v2976
          %v4205 = vpop.permute.xlu0 %4204
          %4208 = vset.pattern.permute.xlu0 0
          %4209 = vperm.xlu0 %4208, %v2978
          %v4210 = vpop.permute.xlu0 %4209
          %4213 = vset.pattern.permute.xlu0 0
          %4214 = vperm.xlu0 %4213, %v2980
          %v4215 = vpop.permute.xlu0 %4214
          %4218 = vset.pattern.permute.xlu0 0
          %4219 = vperm.xlu0 %4218, %v2982
          %v4220 = vpop.permute.xlu0 %4219
          %4223 = vset.pattern.permute.xlu0 0
          %4224 = vperm.xlu0 %4223, %v2984
          %v4225 = vpop.permute.xlu0 %4224
          %4228 = vset.pattern.permute.xlu0 0
          %4229 = vperm.xlu0 %4228, %v2986
          %v4230 = vpop.permute.xlu0 %4229
          %4233 = vset.pattern.permute.xlu0 0
          %4234 = vperm.xlu0 %4233, %v2988
          %v4235 = vpop.permute.xlu0 %4234
          %4238 = vset.pattern.permute.xlu0 0
          %4239 = vperm.xlu0 %4238, %v2990
          %v4240 = vpop.permute.xlu0 %4239
          %4243 = vset.pattern.permute.xlu0 0
          %4244 = vperm.xlu0 %4243, %v2992
          %v4245 = vpop.permute.xlu0 %4244
          %4248 = vset.pattern.permute.xlu0 0
          %4249 = vperm.xlu0 %4248, %v2994
          %v4250 = vpop.permute.xlu0 %4249
          %4253 = vset.pattern.permute.xlu0 0
          %4254 = vperm.xlu0 %4253, %v2996
          %v4255 = vpop.permute.xlu0 %4254
          %4258 = vset.pattern.permute.xlu0 0
          %4259 = vperm.xlu0 %4258, %v2998
          %v4260 = vpop.permute.xlu0 %4259
          %4263 = vset.pattern.permute.xlu0 0
          %4264 = vperm.xlu0 %4263, %v3000
          %v4265 = vpop.permute.xlu0 %4264
          %4268 = vset.pattern.permute.xlu0 0
          %4269 = vperm.xlu0 %4268, %v3002
          %v4270 = vpop.permute.xlu0 %4269
          %4273 = vset.pattern.permute.xlu0 0
          %4274 = vperm.xlu0 %4273, %v3004
          %v4275 = vpop.permute.xlu0 %4274
          %4278 = vset.pattern.permute.xlu0 0
          %4279 = vperm.xlu0 %4278, %v3006
          %v4280 = vpop.permute.xlu0 %4279
          %4283 = vset.pattern.permute.xlu0 0
          %4284 = vperm.xlu0 %4283, %v3008
          %v4285 = vpop.permute.xlu0 %4284
          %4288 = vset.pattern.permute.xlu0 0
          %4289 = vperm.xlu0 %4288, %v3010
          %v4290 = vpop.permute.xlu0 %4289
          %v4292 = vmul.f32 %v3975, %v3908
          %v4293 = vmul.f32 %v3980, %v3909
          %v4294 = vmul.f32 %v3985, %v3910
          %v4295 = vmul.f32 %v3990, %v3911
          %v4296 = vmul.f32 %v3995, %v3912
          %v4297 = vmul.f32 %v4000, %v3913
          %v4298 = vmul.f32 %v4005, %v3914
          %v4299 = vmul.f32 %v4010, %v3915
          %v4300 = vmul.f32 %v4015, %v3916
          %v4301 = vmul.f32 %v4020, %v3917
          %v4302 = vmul.f32 %v4025, %v3918
          %v4303 = vmul.f32 %v4030, %v3919
          %v4304 = vmul.f32 %v4035, %v3920
          %v4305 = vmul.f32 %v4040, %v3921
          %v4306 = vmul.f32 %v4045, %v3922
          %v4307 = vmul.f32 %v4050, %v3923
          %v4308 = vmul.f32 %v4055, %v3924
          %v4309 = vmul.f32 %v4060, %v3925
          %v4310 = vmul.f32 %v4065, %v3926
          %v4311 = vmul.f32 %v4070, %v3927
          %v4312 = vmul.f32 %v4075, %v3928
          %v4313 = vmul.f32 %v4080, %v3929
          %v4314 = vmul.f32 %v4085, %v3930
          %v4315 = vmul.f32 %v4090, %v3931
          %v4316 = vmul.f32 %v4095, %v3932
          %v4317 = vmul.f32 %v4100, %v3933
          %v4318 = vmul.f32 %v4105, %v3934
          %v4319 = vmul.f32 %v4110, %v3935
          %v4320 = vmul.f32 %v4115, %v3936
          %v4321 = vmul.f32 %v4120, %v3937
          %v4322 = vmul.f32 %v4125, %v3938
          %v4323 = vmul.f32 %v4130, %v3939
          %v4324 = vmul.f32 %v4135, %v3940
          %v4325 = vmul.f32 %v4140, %v3941
          %v4326 = vmul.f32 %v4145, %v3942
          %v4327 = vmul.f32 %v4150, %v3943
          %v4328 = vmul.f32 %v4155, %v3944
          %v4329 = vmul.f32 %v4160, %v3945
          %v4330 = vmul.f32 %v4165, %v3946
          %v4331 = vmul.f32 %v4170, %v3947
          %v4332 = vmul.f32 %v4175, %v3948
          %v4333 = vmul.f32 %v4180, %v3949
          %v4334 = vmul.f32 %v4185, %v3950
          %v4335 = vmul.f32 %v4190, %v3951
          %v4336 = vmul.f32 %v4195, %v3952
          %v4337 = vmul.f32 %v4200, %v3953
          %v4338 = vmul.f32 %v4205, %v3954
          %v4339 = vmul.f32 %v4210, %v3955
          %v4340 = vmul.f32 %v4215, %v3956
          %v4341 = vmul.f32 %v4220, %v3957
          %v4342 = vmul.f32 %v4225, %v3958
          %v4343 = vmul.f32 %v4230, %v3959
          %v4344 = vmul.f32 %v4235, %v3960
          %v4345 = vmul.f32 %v4240, %v3961
          %v4346 = vmul.f32 %v4245, %v3962
          %v4347 = vmul.f32 %v4250, %v3963
          %v4348 = vmul.f32 %v4255, %v3964
          %v4349 = vmul.f32 %v4260, %v3965
          %v4350 = vmul.f32 %v4265, %v3966
          %v4351 = vmul.f32 %v4270, %v3967
          %v4352 = vmul.f32 %v4275, %v3968
          %v4353 = vmul.f32 %v4280, %v3969
          %v4354 = vmul.f32 %v4285, %v3970
          %v4355 = vmul.f32 %v4290, %v3971
          %v4356 = vld [vmem:[%s1050] sm:$0xff]
          %v4357 = vld [vmem:[%s1050 + $0x8] sm:$0xff]
          %v4358 = vld [vmem:[%s1050 + $0x10] sm:$0xff]
          %v4359 = vld [vmem:[%s1050 + $0x18] sm:$0xff]
          %v4360 = vld [vmem:[%s1050 + $0x20] sm:$0xff]
          %v4361 = vld [vmem:[%s1050 + $0x28] sm:$0xff]
          %v4362 = vld [vmem:[%s1050 + $0x30] sm:$0xff]
          %v4363 = vld [vmem:[%s1050 + $0x38] sm:$0xff]
          %v4364 = vld [vmem:[%s1050 + $0x40] sm:$0xff]
          %v4365 = vld [vmem:[%s1050 + $0x48] sm:$0xff]
          %v4366 = vld [vmem:[%s1050 + $0x50] sm:$0xff]
          %v4367 = vld [vmem:[%s1050 + $0x58] sm:$0xff]
          %v4368 = vld [vmem:[%s1050 + $0x60] sm:$0xff]
          %v4369 = vld [vmem:[%s1050 + $0x68] sm:$0xff]
          %v4370 = vld [vmem:[%s1050 + $0x70] sm:$0xff]
          %v4371 = vld [vmem:[%s1050 + $0x78] sm:$0xff]
          %v4372 = vld [vmem:[%s1050 + $0x80] sm:$0xff]
          %v4373 = vld [vmem:[%s1050 + $0x88] sm:$0xff]
          %v4374 = vld [vmem:[%s1050 + $0x90] sm:$0xff]
          %v4375 = vld [vmem:[%s1050 + $0x98] sm:$0xff]
          %v4376 = vld [vmem:[%s1050 + $0xa0] sm:$0xff]
          %v4377 = vld [vmem:[%s1050 + $0xa8] sm:$0xff]
          %v4378 = vld [vmem:[%s1050 + $0xb0] sm:$0xff]
          %v4379 = vld [vmem:[%s1050 + $0xb8] sm:$0xff]
          %v4380 = vld [vmem:[%s1050 + $0xc0] sm:$0xff]
          %v4381 = vld [vmem:[%s1050 + $0xc8] sm:$0xff]
          %v4382 = vld [vmem:[%s1050 + $0xd0] sm:$0xff]
          %v4383 = vld [vmem:[%s1050 + $0xd8] sm:$0xff]
          %v4384 = vld [vmem:[%s1050 + $0xe0] sm:$0xff]
          %v4385 = vld [vmem:[%s1050 + $0xe8] sm:$0xff]
          %v4386 = vld [vmem:[%s1050 + $0xf0] sm:$0xff]
          %v4387 = vld [vmem:[%s1050 + $0xf8] sm:$0xff]
          %v4388 = vld [vmem:[%s1050 + $0x100] sm:$0xff]
          %v4389 = vld [vmem:[%s1050 + $0x108] sm:$0xff]
          %v4390 = vld [vmem:[%s1050 + $0x110] sm:$0xff]
          %v4391 = vld [vmem:[%s1050 + $0x118] sm:$0xff]
          %v4392 = vld [vmem:[%s1050 + $0x120] sm:$0xff]
          %v4393 = vld [vmem:[%s1050 + $0x128] sm:$0xff]
          %v4394 = vld [vmem:[%s1050 + $0x130] sm:$0xff]
          %v4395 = vld [vmem:[%s1050 + $0x138] sm:$0xff]
          %v4396 = vld [vmem:[%s1050 + $0x140] sm:$0xff]
          %v4397 = vld [vmem:[%s1050 + $0x148] sm:$0xff]
          %v4398 = vld [vmem:[%s1050 + $0x150] sm:$0xff]
          %v4399 = vld [vmem:[%s1050 + $0x158] sm:$0xff]
          %v4400 = vld [vmem:[%s1050 + $0x160] sm:$0xff]
          %v4401 = vld [vmem:[%s1050 + $0x168] sm:$0xff]
          %v4402 = vld [vmem:[%s1050 + $0x170] sm:$0xff]
          %v4403 = vld [vmem:[%s1050 + $0x178] sm:$0xff]
          %v4404 = vld [vmem:[%s1050 + $0x180] sm:$0xff]
          %v4405 = vld [vmem:[%s1050 + $0x188] sm:$0xff]
          %v4406 = vld [vmem:[%s1050 + $0x190] sm:$0xff]
          %v4407 = vld [vmem:[%s1050 + $0x198] sm:$0xff]
          %v4408 = vld [vmem:[%s1050 + $0x1a0] sm:$0xff]
          %v4409 = vld [vmem:[%s1050 + $0x1a8] sm:$0xff]
          %v4410 = vld [vmem:[%s1050 + $0x1b0] sm:$0xff]
          %v4411 = vld [vmem:[%s1050 + $0x1b8] sm:$0xff]
          %v4412 = vld [vmem:[%s1050 + $0x1c0] sm:$0xff]
          %v4413 = vld [vmem:[%s1050 + $0x1c8] sm:$0xff]
          %v4414 = vld [vmem:[%s1050 + $0x1d0] sm:$0xff]
          %v4415 = vld [vmem:[%s1050 + $0x1d8] sm:$0xff]
          %v4416 = vld [vmem:[%s1050 + $0x1e0] sm:$0xff]
          %v4417 = vld [vmem:[%s1050 + $0x1e8] sm:$0xff]
          %v4418 = vld [vmem:[%s1050 + $0x1f0] sm:$0xff]
          %v4419 = vld [vmem:[%s1050 + $0x1f8] sm:$0xff]
          %4420 = vmatprep.subr.mxu0 0.0
          %4421 = vmatpush1.msra.mxu0 %v4356
          %4422 = vmatprep.subr.mxu0 0.0
          %4423 = vmatpush1.msra.mxu0 %v4357
          %4424 = vmatprep.subr.mxu0 0.0
          %4425 = vmatpush1.msra.mxu0 %v4358
          %4426 = vmatprep.subr.mxu0 0.0
          %4427 = vmatpush1.msra.mxu0 %v4359
          %4428 = vmatprep.subr.mxu0 0.0
          %4429 = vmatpush1.msra.mxu0 %v4360
          %4430 = vmatprep.subr.mxu0 0.0
          %4431 = vmatpush1.msra.mxu0 %v4361
          %4432 = vmatprep.subr.mxu0 0.0
          %4433 = vmatpush1.msra.mxu0 %v4362
          %4434 = vmatprep.subr.mxu0 0.0
          %4435 = vmatpush1.msra.mxu0 %v4363
          %4436 = vmatprep.subr.mxu0 0.0
          %4437 = vmatpush1.msra.mxu0 %v4364
          %4438 = vmatprep.subr.mxu0 0.0
          %4439 = vmatpush1.msra.mxu0 %v4365
          %4440 = vmatprep.subr.mxu0 0.0
          %4441 = vmatpush1.msra.mxu0 %v4366
          %4442 = vmatprep.subr.mxu0 0.0
          %4443 = vmatpush1.msra.mxu0 %v4367
          %4444 = vmatprep.subr.mxu0 0.0
          %4445 = vmatpush1.msra.mxu0 %v4368
          %4446 = vmatprep.subr.mxu0 0.0
          %4447 = vmatpush1.msra.mxu0 %v4369
          %4448 = vmatprep.subr.mxu0 0.0
          %4449 = vmatpush1.msra.mxu0 %v4370
          %4450 = vmatprep.subr.mxu0 0.0
          %4451 = vmatpush1.msra.mxu0 %v4371
          %4452 = vmatprep.subr.mxu0 0.0
          %4453 = vmatpush1.msra.mxu0 0.0
          %4454 = vmatprep.subr.mxu0 0.0
          %4455 = vmatpush1.msra.mxu0 0.0
          %4456 = vmatprep.subr.mxu0 0.0
          %4457 = vmatpush1.msra.mxu0 0.0
          %4458 = vmatprep.subr.mxu0 0.0
          %4459 = vmatpush1.msra.mxu0 0.0
          %4460 = vmatprep.subr.mxu0 0.0
          %4461 = vmatpush1.msra.mxu0 0.0
          %4462 = vmatprep.subr.mxu0 0.0
          %4463 = vmatpush1.msra.mxu0 0.0
          %4464 = vmatprep.subr.mxu0 0.0
          %4465 = vmatpush1.msra.mxu0 0.0
          %4466 = vmatprep.subr.mxu0 0.0
          %4467 = vmatpush1.msra.mxu0 0.0
          %4468 = vmatprep.subr.mxu0 0.0
          %4469 = vmatpush1.msra.mxu0 0.0
          %4470 = vmatprep.subr.mxu0 0.0
          %4471 = vmatpush1.msra.mxu0 0.0
          %4472 = vmatprep.subr.mxu0 0.0
          %4473 = vmatpush1.msra.mxu0 0.0
          %4474 = vmatprep.subr.mxu0 0.0
          %4475 = vmatpush1.msra.mxu0 0.0
          %4476 = vmatprep.subr.mxu0 0.0
          %4477 = vmatpush1.msra.mxu0 0.0
          %4478 = vmatprep.subr.mxu0 0.0
          %4479 = vmatpush1.msra.mxu0 0.0
          %4480 = vmatprep.subr.mxu0 0.0
          %4481 = vmatpush1.msra.mxu0 0.0
          %4482 = vmatprep.subr.mxu0 0.0
          %4483 = vmatpush1.msra.mxu0 0.0
          %4484 = vmatprep.mubr.f32.mxu0 0.0
          %4485 = vmatmul.mubr.f32.gmra.mrb[0].mxu0 %v3396
          %v4486 = vpop.f32.mrb[0].mxu0
          %v4487 = vadd.f32 0.0, %v4486
          %v4488 = vpop.f32.mrb[0].mxu0
          %4489 = vmatprep.mubr.f32.mxu0 0.0
          %4490 = vmatmul.mubr.f32.gmra.mrb[0].mxu0 %v3398
          %v4491 = vpop.f32.mrb[0].mxu0
          %v4492 = vadd.f32 0.0, %v4491
          %v4493 = vpop.f32.mrb[0].mxu0
          %4494 = vmatprep.mubr.f32.mxu0 0.0
          %4495 = vmatmul.mubr.f32.gmra.mrb[0].mxu0 %v3400
          %v4496 = vpop.f32.mrb[0].mxu0
          %v4497 = vadd.f32 0.0, %v4496
          %v4498 = vpop.f32.mrb[0].mxu0
          %4499 = vmatprep.mubr.f32.mxu0 0.0
          %4500 = vmatmul.mubr.f32.gmra.mrb[0].mxu0 %v3402
          %v4501 = vpop.f32.mrb[0].mxu0
          %v4502 = vadd.f32 0.0, %v4501
          %v4503 = vpop.f32.mrb[0].mxu0
          %4504 = vmatprep.mubr.f32.mxu0 0.0
          %4505 = vmatmul.mubr.f32.gmra.mrb[0].mxu0 %v3404
          %v4506 = vpop.f32.mrb[0].mxu0
          %v4507 = vadd.f32 0.0, %v4506
          %v4508 = vpop.f32.mrb[0].mxu0
          %4509 = vmatprep.mubr.f32.mxu0 0.0
          %4510 = vmatmul.mubr.f32.gmra.mrb[0].mxu0 %v3406
          %v4511 = vpop.f32.mrb[0].mxu0
          %v4512 = vadd.f32 0.0, %v4511
          %v4513 = vpop.f32.mrb[0].mxu0
          %4514 = vmatprep.mubr.f32.mxu0 0.0
          %4515 = vmatmul.mubr.f32.gmra.mrb[0].mxu0 %v3408
          %v4516 = vpop.f32.mrb[0].mxu0
          %v4517 = vadd.f32 0.0, %v4516
          %v4518 = vpop.f32.mrb[0].mxu0
          %4519 = vmatprep.mubr.f32.mxu0 0.0
          %4520 = vmatmul.mubr.f32.gmra.mrb[0].mxu0 %v3410
          %v4521 = vpop.f32.mrb[0].mxu0
          %v4522 = vadd.f32 0.0, %v4521
          %v4523 = vpop.f32.mrb[0].mxu0
          %4524 = vmatprep.mubr.f32.mxu0 0.0
          %4525 = vmatmul.mubr.f32.gmra.mrb[0].mxu0 %v3412
          %v4526 = vpop.f32.mrb[0].mxu0
          %v4527 = vadd.f32 0.0, %v4526
          %v4528 = vpop.f32.mrb[0].mxu0
          %4529 = vmatprep.mubr.f32.mxu0 0.0
          %4530 = vmatmul.mubr.f32.gmra.mrb[0].mxu0 %v3414
          %v4531 = vpop.f32.mrb[0].mxu0
          %v4532 = vadd.f32 0.0, %v4531
          %v4533 = vpop.f32.mrb[0].mxu0
          %4534 = vmatprep.mubr.f32.mxu0 0.0
          %4535 = vmatmul.mubr.f32.gmra.mrb[0].mxu0 %v3416
          %v4536 = vpop.f32.mrb[0].mxu0
          %v4537 = vadd.f32 0.0, %v4536
          %v4538 = vpop.f32.mrb[0].mxu0
          %4539 = vmatprep.mubr.f32.mxu0 0.0
          %4540 = vmatmul.mubr.f32.gmra.mrb[0].mxu0 %v3418
          %v4541 = vpop.f32.mrb[0].mxu0
          %v4542 = vadd.f32 0.0, %v4541
          %v4543 = vpop.f32.mrb[0].mxu0
          %4544 = vmatprep.mubr.f32.mxu0 0.0
          %4545 = vmatmul.mubr.f32.gmra.mrb[0].mxu0 %v3420
          %v4546 = vpop.f32.mrb[0].mxu0
          %v4547 = vadd.f32 0.0, %v4546
          %v4548 = vpop.f32.mrb[0].mxu0
          %4549 = vmatprep.mubr.f32.mxu0 0.0
          %4550 = vmatmul.mubr.f32.gmra.mrb[0].mxu0 %v3422
          %v4551 = vpop.f32.mrb[0].mxu0
          %v4552 = vadd.f32 0.0, %v4551
          %v4553 = vpop.f32.mrb[0].mxu0
          %4554 = vmatprep.mubr.f32.mxu0 0.0
          %4555 = vmatmul.mubr.f32.gmra.mrb[0].mxu0 %v3424
          %v4556 = vpop.f32.mrb[0].mxu0
          %v4557 = vadd.f32 0.0, %v4556
          %v4558 = vpop.f32.mrb[0].mxu0
          %4559 = vmatprep.mubr.f32.mxu0 0.0
          %4560 = vmatmul.mubr.f32.gmra.mrb[0].mxu0 %v3426
          %v4561 = vpop.f32.mrb[0].mxu0
          %v4562 = vadd.f32 0.0, %v4561
          %v4563 = vpop.f32.mrb[0].mxu0
          %4564 = vdwg.mxu0
          %4565 = vmatprep.subr.mxu0 0.0
          %4566 = vmatpush1.msra.mxu0 %v4372
          %4567 = vmatprep.subr.mxu0 0.0
          %4568 = vmatpush1.msra.mxu0 %v4373
          %4569 = vmatprep.subr.mxu0 0.0
          %4570 = vmatpush1.msra.mxu0 %v4374
          %4571 = vmatprep.subr.mxu0 0.0
          %4572 = vmatpush1.msra.mxu0 %v4375
          %4573 = vmatprep.subr.mxu0 0.0
          %4574 = vmatpush1.msra.mxu0 %v4376
          %4575 = vmatprep.subr.mxu0 0.0
          %4576 = vmatpush1.msra.mxu0 %v4377
          %4577 = vmatprep.subr.mxu0 0.0
          %4578 = vmatpush1.msra.mxu0 %v4378
          %4579 = vmatprep.subr.mxu0 0.0
          %4580 = vmatpush1.msra.mxu0 %v4379
          %4581 = vmatprep.subr.mxu0 0.0
          %4582 = vmatpush1.msra.mxu0 %v4380
          %4583 = vmatprep.subr.mxu0 0.0
          %4584 = vmatpush1.msra.mxu0 %v4381
          %4585 = vmatprep.subr.mxu0 0.0
          %4586 = vmatpush1.msra.mxu0 %v4382
          %4587 = vmatprep.subr.mxu0 0.0
          %4588 = vmatpush1.msra.mxu0 %v4383
          %4589 = vmatprep.subr.mxu0 0.0
          %4590 = vmatpush1.msra.mxu0 %v4384
          %4591 = vmatprep.subr.mxu0 0.0
          %4592 = vmatpush1.msra.mxu0 %v4385
          %4593 = vmatprep.subr.mxu0 0.0
          %4594 = vmatpush1.msra.mxu0 %v4386
          %4595 = vmatprep.subr.mxu0 0.0
          %4596 = vmatpush1.msra.mxu0 %v4387
          %4597 = vmatprep.subr.mxu0 0.0
          %4598 = vmatpush1.msra.mxu0 0.0
          %4599 = vmatprep.subr.mxu0 0.0
          %4600 = vmatpush1.msra.mxu0 0.0
          %4601 = vmatprep.subr.mxu0 0.0
          %4602 = vmatpush1.msra.mxu0 0.0
          %4603 = vmatprep.subr.mxu0 0.0
          %4604 = vmatpush1.msra.mxu0 0.0
          %4605 = vmatprep.subr.mxu0 0.0
          %4606 = vmatpush1.msra.mxu0 0.0
          %4607 = vmatprep.subr.mxu0 0.0
          %4608 = vmatpush1.msra.mxu0 0.0
          %4609 = vmatprep.subr.mxu0 0.0
          %4610 = vmatpush1.msra.mxu0 0.0
          %4611 = vmatprep.subr.mxu0 0.0
          %4612 = vmatpush1.msra.mxu0 0.0
          %4613 = vmatprep.subr.mxu0 0.0
          %4614 = vmatpush1.msra.mxu0 0.0
          %4615 = vmatprep.subr.mxu0 0.0
          %4616 = vmatpush1.msra.mxu0 0.0
          %4617 = vmatprep.subr.mxu0 0.0
          %4618 = vmatpush1.msra.mxu0 0.0
          %4619 = vmatprep.subr.mxu0 0.0
          %4620 = vmatpush1.msra.mxu0 0.0
          %4621 = vmatprep.subr.mxu0 0.0
          %4622 = vmatpush1.msra.mxu0 0.0
          %4623 = vmatprep.subr.mxu0 0.0
          %4624 = vmatpush1.msra.mxu0 0.0
          %4625 = vmatprep.subr.mxu0 0.0
          %4626 = vmatpush1.msra.mxu0 0.0
          %4627 = vmatprep.subr.mxu0 0.0
          %4628 = vmatpush1.msra.mxu0 0.0
          %4629 = vmatprep.mubr.f32.mxu0 0.0
          %4630 = vmatmul.mubr.f32.gmra.mrb[0].mxu0 %v3428
          %v4631 = vpop.f32.mrb[0].mxu0
          %v4632 = vadd.f32 0.0, %v4631
          %v4633 = vpop.f32.mrb[0].mxu0
          %4634 = vmatprep.mubr.f32.mxu0 0.0
          %4635 = vmatmul.mubr.f32.gmra.mrb[0].mxu0 %v3430
          %v4636 = vpop.f32.mrb[0].mxu0
          %v4637 = vadd.f32 0.0, %v4636
          %v4638 = vpop.f32.mrb[0].mxu0
          %4639 = vmatprep.mubr.f32.mxu0 0.0
          %4640 = vmatmul.mubr.f32.gmra.mrb[0].mxu0 %v3432
          %v4641 = vpop.f32.mrb[0].mxu0
          %v4642 = vadd.f32 0.0, %v4641
          %v4643 = vpop.f32.mrb[0].mxu0
          %4644 = vmatprep.mubr.f32.mxu0 0.0
          %4645 = vmatmul.mubr.f32.gmra.mrb[0].mxu0 %v3434
          %v4646 = vpop.f32.mrb[0].mxu0
          %v4647 = vadd.f32 0.0, %v4646
          %v4648 = vpop.f32.mrb[0].mxu0
          %4649 = vmatprep.mubr.f32.mxu0 0.0
          %4650 = vmatmul.mubr.f32.gmra.mrb[0].mxu0 %v3436
          %v4651 = vpop.f32.mrb[0].mxu0
          %v4652 = vadd.f32 0.0, %v4651
          %v4653 = vpop.f32.mrb[0].mxu0
          %4654 = vmatprep.mubr.f32.mxu0 0.0
          %4655 = vmatmul.mubr.f32.gmra.mrb[0].mxu0 %v3438
          %v4656 = vpop.f32.mrb[0].mxu0
          %v4657 = vadd.f32 0.0, %v4656
          %v4658 = vpop.f32.mrb[0].mxu0
          %4659 = vmatprep.mubr.f32.mxu0 0.0
          %4660 = vmatmul.mubr.f32.gmra.mrb[0].mxu0 %v3440
          %v4661 = vpop.f32.mrb[0].mxu0
          %v4662 = vadd.f32 0.0, %v4661
          %v4663 = vpop.f32.mrb[0].mxu0
          %4664 = vmatprep.mubr.f32.mxu0 0.0
          %4665 = vmatmul.mubr.f32.gmra.mrb[0].mxu0 %v3442
          %v4666 = vpop.f32.mrb[0].mxu0
          %v4667 = vadd.f32 0.0, %v4666
          %v4668 = vpop.f32.mrb[0].mxu0
          %4669 = vmatprep.mubr.f32.mxu0 0.0
          %4670 = vmatmul.mubr.f32.gmra.mrb[0].mxu0 %v3444
          %v4671 = vpop.f32.mrb[0].mxu0
          %v4672 = vadd.f32 0.0, %v4671
          %v4673 = vpop.f32.mrb[0].mxu0
          %4674 = vmatprep.mubr.f32.mxu0 0.0
          %4675 = vmatmul.mubr.f32.gmra.mrb[0].mxu0 %v3446
          %v4676 = vpop.f32.mrb[0].mxu0
          %v4677 = vadd.f32 0.0, %v4676
          %v4678 = vpop.f32.mrb[0].mxu0
          %4679 = vmatprep.mubr.f32.mxu0 0.0
          %4680 = vmatmul.mubr.f32.gmra.mrb[0].mxu0 %v3448
          %v4681 = vpop.f32.mrb[0].mxu0
          %v4682 = vadd.f32 0.0, %v4681
          %v4683 = vpop.f32.mrb[0].mxu0
          %4684 = vmatprep.mubr.f32.mxu0 0.0
          %4685 = vmatmul.mubr.f32.gmra.mrb[0].mxu0 %v3450
          %v4686 = vpop.f32.mrb[0].mxu0
          %v4687 = vadd.f32 0.0, %v4686
          %v4688 = vpop.f32.mrb[0].mxu0
          %4689 = vmatprep.mubr.f32.mxu0 0.0
          %4690 = vmatmul.mubr.f32.gmra.mrb[0].mxu0 %v3452
          %v4691 = vpop.f32.mrb[0].mxu0
          %v4692 = vadd.f32 0.0, %v4691
          %v4693 = vpop.f32.mrb[0].mxu0
          %4694 = vmatprep.mubr.f32.mxu0 0.0
          %4695 = vmatmul.mubr.f32.gmra.mrb[0].mxu0 %v3454
          %v4696 = vpop.f32.mrb[0].mxu0
          %v4697 = vadd.f32 0.0, %v4696
          %v4698 = vpop.f32.mrb[0].mxu0
          %4699 = vmatprep.mubr.f32.mxu0 0.0
          %4700 = vmatmul.mubr.f32.gmra.mrb[0].mxu0 %v3456
          %v4701 = vpop.f32.mrb[0].mxu0
          %v4702 = vadd.f32 0.0, %v4701
          %v4703 = vpop.f32.mrb[0].mxu0
          %4704 = vmatprep.mubr.f32.mxu0 0.0
          %4705 = vmatmul.mubr.f32.gmra.mrb[0].mxu0 %v3458
          %v4706 = vpop.f32.mrb[0].mxu0
          %v4707 = vadd.f32 0.0, %v4706
          %v4708 = vpop.f32.mrb[0].mxu0
          %4709 = vdwg.mxu0
          %4710 = vmatprep.subr.mxu0 0.0
          %4711 = vmatpush1.msra.mxu0 %v4388
          %4712 = vmatprep.subr.mxu0 0.0
          %4713 = vmatpush1.msra.mxu0 %v4389
          %4714 = vmatprep.subr.mxu0 0.0
          %4715 = vmatpush1.msra.mxu0 %v4390
          %4716 = vmatprep.subr.mxu0 0.0
          %4717 = vmatpush1.msra.mxu0 %v4391
          %4718 = vmatprep.subr.mxu0 0.0
          %4719 = vmatpush1.msra.mxu0 %v4392
          %4720 = vmatprep.subr.mxu0 0.0
          %4721 = vmatpush1.msra.mxu0 %v4393
          %4722 = vmatprep.subr.mxu0 0.0
          %4723 = vmatpush1.msra.mxu0 %v4394
          %4724 = vmatprep.subr.mxu0 0.0
          %4725 = vmatpush1.msra.mxu0 %v4395
          %4726 = vmatprep.subr.mxu0 0.0
          %4727 = vmatpush1.msra.mxu0 %v4396
          %4728 = vmatprep.subr.mxu0 0.0
          %4729 = vmatpush1.msra.mxu0 %v4397
          %4730 = vmatprep.subr.mxu0 0.0
          %4731 = vmatpush1.msra.mxu0 %v4398
          %4732 = vmatprep.subr.mxu0 0.0
          %4733 = vmatpush1.msra.mxu0 %v4399
          %4734 = vmatprep.subr.mxu0 0.0
          %4735 = vmatpush1.msra.mxu0 %v4400
          %4736 = vmatprep.subr.mxu0 0.0
          %4737 = vmatpush1.msra.mxu0 %v4401
          %4738 = vmatprep.subr.mxu0 0.0
          %4739 = vmatpush1.msra.mxu0 %v4402
          %4740 = vmatprep.subr.mxu0 0.0
          %4741 = vmatpush1.msra.mxu0 %v4403
          %4742 = vmatprep.subr.mxu0 0.0
          %4743 = vmatpush1.msra.mxu0 0.0
          %4744 = vmatprep.subr.mxu0 0.0
          %4745 = vmatpush1.msra.mxu0 0.0
          %4746 = vmatprep.subr.mxu0 0.0
          %4747 = vmatpush1.msra.mxu0 0.0
          %4748 = vmatprep.subr.mxu0 0.0
          %4749 = vmatpush1.msra.mxu0 0.0
          %4750 = vmatprep.subr.mxu0 0.0
          %4751 = vmatpush1.msra.mxu0 0.0
          %4752 = vmatprep.subr.mxu0 0.0
          %4753 = vmatpush1.msra.mxu0 0.0
          %4754 = vmatprep.subr.mxu0 0.0
          %4755 = vmatpush1.msra.mxu0 0.0
          %4756 = vmatprep.subr.mxu0 0.0
          %4757 = vmatpush1.msra.mxu0 0.0
          %4758 = vmatprep.subr.mxu0 0.0
          %4759 = vmatpush1.msra.mxu0 0.0
          %4760 = vmatprep.subr.mxu0 0.0
          %4761 = vmatpush1.msra.mxu0 0.0
          %4762 = vmatprep.subr.mxu0 0.0
          %4763 = vmatpush1.msra.mxu0 0.0
          %4764 = vmatprep.subr.mxu0 0.0
          %4765 = vmatpush1.msra.mxu0 0.0
          %4766 = vmatprep.subr.mxu0 0.0
          %4767 = vmatpush1.msra.mxu0 0.0
          %4768 = vmatprep.subr.mxu0 0.0
          %4769 = vmatpush1.msra.mxu0 0.0
          %4770 = vmatprep.subr.mxu0 0.0
          %4771 = vmatpush1.msra.mxu0 0.0
          %4772 = vmatprep.subr.mxu0 0.0
          %4773 = vmatpush1.msra.mxu0 0.0
          %4774 = vmatprep.mubr.f32.mxu0 0.0
          %4775 = vmatmul.mubr.f32.gmra.mrb[0].mxu0 %v3460
          %v4776 = vpop.f32.mrb[0].mxu0
          %v4777 = vadd.f32 0.0, %v4776
          %v4778 = vpop.f32.mrb[0].mxu0
          %4779 = vmatprep.mubr.f32.mxu0 0.0
          %4780 = vmatmul.mubr.f32.gmra.mrb[0].mxu0 %v3462
          %v4781 = vpop.f32.mrb[0].mxu0
          %v4782 = vadd.f32 0.0, %v4781
          %v4783 = vpop.f32.mrb[0].mxu0
          %4784 = vmatprep.mubr.f32.mxu0 0.0
          %4785 = vmatmul.mubr.f32.gmra.mrb[0].mxu0 %v3464
          %v4786 = vpop.f32.mrb[0].mxu0
          %v4787 = vadd.f32 0.0, %v4786
          %v4788 = vpop.f32.mrb[0].mxu0
          %4789 = vmatprep.mubr.f32.mxu0 0.0
          %4790 = vmatmul.mubr.f32.gmra.mrb[0].mxu0 %v3466
          %v4791 = vpop.f32.mrb[0].mxu0
          %v4792 = vadd.f32 0.0, %v4791
          %v4793 = vpop.f32.mrb[0].mxu0
          %4794 = vmatprep.mubr.f32.mxu0 0.0
          %4795 = vmatmul.mubr.f32.gmra.mrb[0].mxu0 %v3468
          %v4796 = vpop.f32.mrb[0].mxu0
          %v4797 = vadd.f32 0.0, %v4796
          %v4798 = vpop.f32.mrb[0].mxu0
          %4799 = vmatprep.mubr.f32.mxu0 0.0
          %4800 = vmatmul.mubr.f32.gmra.mrb[0].mxu0 %v3470
          %v4801 = vpop.f32.mrb[0].mxu0
          %v4802 = vadd.f32 0.0, %v4801
          %v4803 = vpop.f32.mrb[0].mxu0
          %4804 = vmatprep.mubr.f32.mxu0 0.0
          %4805 = vmatmul.mubr.f32.gmra.mrb[0].mxu0 %v3472
          %v4806 = vpop.f32.mrb[0].mxu0
          %v4807 = vadd.f32 0.0, %v4806
          %v4808 = vpop.f32.mrb[0].mxu0
          %4809 = vmatprep.mubr.f32.mxu0 0.0
          %4810 = vmatmul.mubr.f32.gmra.mrb[0].mxu0 %v3474
          %v4811 = vpop.f32.mrb[0].mxu0
          %v4812 = vadd.f32 0.0, %v4811
          %v4813 = vpop.f32.mrb[0].mxu0
          %4814 = vmatprep.mubr.f32.mxu0 0.0
          %4815 = vmatmul.mubr.f32.gmra.mrb[0].mxu0 %v3476
          %v4816 = vpop.f32.mrb[0].mxu0
          %v4817 = vadd.f32 0.0, %v4816
          %v4818 = vpop.f32.mrb[0].mxu0
          %4819 = vmatprep.mubr.f32.mxu0 0.0
          %4820 = vmatmul.mubr.f32.gmra.mrb[0].mxu0 %v3478
          %v4821 = vpop.f32.mrb[0].mxu0
          %v4822 = vadd.f32 0.0, %v4821
          %v4823 = vpop.f32.mrb[0].mxu0
          %4824 = vmatprep.mubr.f32.mxu0 0.0
          %4825 = vmatmul.mubr.f32.gmra.mrb[0].mxu0 %v3480
          %v4826 = vpop.f32.mrb[0].mxu0
          %v4827 = vadd.f32 0.0, %v4826
          %v4828 = vpop.f32.mrb[0].mxu0
          %4829 = vmatprep.mubr.f32.mxu0 0.0
          %4830 = vmatmul.mubr.f32.gmra.mrb[0].mxu0 %v3482
          %v4831 = vpop.f32.mrb[0].mxu0
          %v4832 = vadd.f32 0.0, %v4831
          %v4833 = vpop.f32.mrb[0].mxu0
          %4834 = vmatprep.mubr.f32.mxu0 0.0
          %4835 = vmatmul.mubr.f32.gmra.mrb[0].mxu0 %v3484
          %v4836 = vpop.f32.mrb[0].mxu0
          %v4837 = vadd.f32 0.0, %v4836
          %v4838 = vpop.f32.mrb[0].mxu0
          %4839 = vmatprep.mubr.f32.mxu0 0.0
          %4840 = vmatmul.mubr.f32.gmra.mrb[0].mxu0 %v3486
          %v4841 = vpop.f32.mrb[0].mxu0
          %v4842 = vadd.f32 0.0, %v4841
          %v4843 = vpop.f32.mrb[0].mxu0
          %4844 = vmatprep.mubr.f32.mxu0 0.0
          %4845 = vmatmul.mubr.f32.gmra.mrb[0].mxu0 %v3488
          %v4846 = vpop.f32.mrb[0].mxu0
          %v4847 = vadd.f32 0.0, %v4846
          %v4848 = vpop.f32.mrb[0].mxu0
          %4849 = vmatprep.mubr.f32.mxu0 0.0
          %4850 = vmatmul.mubr.f32.gmra.mrb[0].mxu0 %v3490
          %v4851 = vpop.f32.mrb[0].mxu0
          %v4852 = vadd.f32 0.0, %v4851
          %v4853 = vpop.f32.mrb[0].mxu0
          %4854 = vdwg.mxu0
          %4855 = vmatprep.subr.mxu0 0.0
          %4856 = vmatpush1.msra.mxu0 %v4404
          %4857 = vmatprep.subr.mxu0 0.0
          %4858 = vmatpush1.msra.mxu0 %v4405
          %4859 = vmatprep.subr.mxu0 0.0
          %4860 = vmatpush1.msra.mxu0 %v4406
          %4861 = vmatprep.subr.mxu0 0.0
          %4862 = vmatpush1.msra.mxu0 %v4407
          %4863 = vmatprep.subr.mxu0 0.0
          %4864 = vmatpush1.msra.mxu0 %v4408
          %4865 = vmatprep.subr.mxu0 0.0
          %4866 = vmatpush1.msra.mxu0 %v4409
          %4867 = vmatprep.subr.mxu0 0.0
          %4868 = vmatpush1.msra.mxu0 %v4410
          %4869 = vmatprep.subr.mxu0 0.0
          %4870 = vmatpush1.msra.mxu0 %v4411
          %4871 = vmatprep.subr.mxu0 0.0
          %4872 = vmatpush1.msra.mxu0 %v4412
          %4873 = vmatprep.subr.mxu0 0.0
          %4874 = vmatpush1.msra.mxu0 %v4413
          %4875 = vmatprep.subr.mxu0 0.0
          %4876 = vmatpush1.msra.mxu0 %v4414
          %4877 = vmatprep.subr.mxu0 0.0
          %4878 = vmatpush1.msra.mxu0 %v4415
          %4879 = vmatprep.subr.mxu0 0.0
          %4880 = vmatpush1.msra.mxu0 %v4416
          %4881 = vmatprep.subr.mxu0 0.0
          %4882 = vmatpush1.msra.mxu0 %v4417
          %4883 = vmatprep.subr.mxu0 0.0
          %4884 = vmatpush1.msra.mxu0 %v4418
          %4885 = vmatprep.subr.mxu0 0.0
          %4886 = vmatpush1.msra.mxu0 %v4419
          %4887 = vmatprep.subr.mxu0 0.0
          %4888 = vmatpush1.msra.mxu0 0.0
          %4889 = vmatprep.subr.mxu0 0.0
          %4890 = vmatpush1.msra.mxu0 0.0
          %4891 = vmatprep.subr.mxu0 0.0
          %4892 = vmatpush1.msra.mxu0 0.0
          %4893 = vmatprep.subr.mxu0 0.0
          %4894 = vmatpush1.msra.mxu0 0.0
          %4895 = vmatprep.subr.mxu0 0.0
          %4896 = vmatpush1.msra.mxu0 0.0
          %4897 = vmatprep.subr.mxu0 0.0
          %4898 = vmatpush1.msra.mxu0 0.0
          %4899 = vmatprep.subr.mxu0 0.0
          %4900 = vmatpush1.msra.mxu0 0.0
          %4901 = vmatprep.subr.mxu0 0.0
          %4902 = vmatpush1.msra.mxu0 0.0
          %4903 = vmatprep.subr.mxu0 0.0
          %4904 = vmatpush1.msra.mxu0 0.0
          %4905 = vmatprep.subr.mxu0 0.0
          %4906 = vmatpush1.msra.mxu0 0.0
          %4907 = vmatprep.subr.mxu0 0.0
          %4908 = vmatpush1.msra.mxu0 0.0
          %4909 = vmatprep.subr.mxu0 0.0
          %4910 = vmatpush1.msra.mxu0 0.0
          %4911 = vmatprep.subr.mxu0 0.0
          %4912 = vmatpush1.msra.mxu0 0.0
          %4913 = vmatprep.subr.mxu0 0.0
          %4914 = vmatpush1.msra.mxu0 0.0
          %4915 = vmatprep.subr.mxu0 0.0
          %4916 = vmatpush1.msra.mxu0 0.0
          %4917 = vmatprep.subr.mxu0 0.0
          %4918 = vmatpush1.msra.mxu0 0.0
          %4919 = vmatprep.mubr.f32.mxu0 0.0
          %4920 = vmatmul.mubr.f32.gmra.mrb[0].mxu0 %v3492
          %v4921 = vpop.f32.mrb[0].mxu0
          %v4922 = vadd.f32 0.0, %v4921
          %v4923 = vpop.f32.mrb[0].mxu0
          %4924 = vmatprep.mubr.f32.mxu0 0.0
          %4925 = vmatmul.mubr.f32.gmra.mrb[0].mxu0 %v3494
          %v4926 = vpop.f32.mrb[0].mxu0
          %v4927 = vadd.f32 0.0, %v4926
          %v4928 = vpop.f32.mrb[0].mxu0
          %4929 = vmatprep.mubr.f32.mxu0 0.0
          %4930 = vmatmul.mubr.f32.gmra.mrb[0].mxu0 %v3496
          %v4931 = vpop.f32.mrb[0].mxu0
          %v4932 = vadd.f32 0.0, %v4931
          %v4933 = vpop.f32.mrb[0].mxu0
          %4934 = vmatprep.mubr.f32.mxu0 0.0
          %4935 = vmatmul.mubr.f32.gmra.mrb[0].mxu0 %v3498
          %v4936 = vpop.f32.mrb[0].mxu0
          %v4937 = vadd.f32 0.0, %v4936
          %v4938 = vpop.f32.mrb[0].mxu0
          %4939 = vmatprep.mubr.f32.mxu0 0.0
          %4940 = vmatmul.mubr.f32.gmra.mrb[0].mxu0 %v3500
          %v4941 = vpop.f32.mrb[0].mxu0
          %v4942 = vadd.f32 0.0, %v4941
          %v4943 = vpop.f32.mrb[0].mxu0
          %4944 = vmatprep.mubr.f32.mxu0 0.0
          %4945 = vmatmul.mubr.f32.gmra.mrb[0].mxu0 %v3502
          %v4946 = vpop.f32.mrb[0].mxu0
          %v4947 = vadd.f32 0.0, %v4946
          %v4948 = vpop.f32.mrb[0].mxu0
          %4949 = vmatprep.mubr.f32.mxu0 0.0
          %4950 = vmatmul.mubr.f32.gmra.mrb[0].mxu0 %v3504
          %v4951 = vpop.f32.mrb[0].mxu0
          %v4952 = vadd.f32 0.0, %v4951
          %v4953 = vpop.f32.mrb[0].mxu0
          %4954 = vmatprep.mubr.f32.mxu0 0.0
          %4955 = vmatmul.mubr.f32.gmra.mrb[0].mxu0 %v3506
          %v4956 = vpop.f32.mrb[0].mxu0
          %v4957 = vadd.f32 0.0, %v4956
          %v4958 = vpop.f32.mrb[0].mxu0
          %4959 = vmatprep.mubr.f32.mxu0 0.0
          %4960 = vmatmul.mubr.f32.gmra.mrb[0].mxu0 %v3508
          %v4961 = vpop.f32.mrb[0].mxu0
          %v4962 = vadd.f32 0.0, %v4961
          %v4963 = vpop.f32.mrb[0].mxu0
          %4964 = vmatprep.mubr.f32.mxu0 0.0
          %4965 = vmatmul.mubr.f32.gmra.mrb[0].mxu0 %v3510
          %v4966 = vpop.f32.mrb[0].mxu0
          %v4967 = vadd.f32 0.0, %v4966
          %v4968 = vpop.f32.mrb[0].mxu0
          %4969 = vmatprep.mubr.f32.mxu0 0.0
          %4970 = vmatmul.mubr.f32.gmra.mrb[0].mxu0 %v3512
          %v4971 = vpop.f32.mrb[0].mxu0
          %v4972 = vadd.f32 0.0, %v4971
          %v4973 = vpop.f32.mrb[0].mxu0
          %4974 = vmatprep.mubr.f32.mxu0 0.0
          %4975 = vmatmul.mubr.f32.gmra.mrb[0].mxu0 %v3514
          %v4976 = vpop.f32.mrb[0].mxu0
          %v4977 = vadd.f32 0.0, %v4976
          %v4978 = vpop.f32.mrb[0].mxu0
          %4979 = vmatprep.mubr.f32.mxu0 0.0
          %4980 = vmatmul.mubr.f32.gmra.mrb[0].mxu0 %v3516
          %v4981 = vpop.f32.mrb[0].mxu0
          %v4982 = vadd.f32 0.0, %v4981
          %v4983 = vpop.f32.mrb[0].mxu0
          %4984 = vmatprep.mubr.f32.mxu0 0.0
          %4985 = vmatmul.mubr.f32.gmra.mrb[0].mxu0 %v3518
          %v4986 = vpop.f32.mrb[0].mxu0
          %v4987 = vadd.f32 0.0, %v4986
          %v4988 = vpop.f32.mrb[0].mxu0
          %4989 = vmatprep.mubr.f32.mxu0 0.0
          %4990 = vmatmul.mubr.f32.gmra.mrb[0].mxu0 %v3520
          %v4991 = vpop.f32.mrb[0].mxu0
          %v4992 = vadd.f32 0.0, %v4991
          %v4993 = vpop.f32.mrb[0].mxu0
          %4994 = vmatprep.mubr.f32.mxu0 0.0
          %4995 = vmatmul.mubr.f32.gmra.mrb[0].mxu0 %v3522
          %v4996 = vpop.f32.mrb[0].mxu0
          %v4997 = vadd.f32 0.0, %v4996
          %v4998 = vpop.f32.mrb[0].mxu0
          %4999 = vdwg.mxu0
          %v5000 = vadd.f32 %v4292, %v4487
          %v5001 = vadd.f32 %v4293, %v4492
          %v5002 = vadd.f32 %v4294, %v4497
          %v5003 = vadd.f32 %v4295, %v4502
          %v5004 = vadd.f32 %v4296, %v4507
          %v5005 = vadd.f32 %v4297, %v4512
          %v5006 = vadd.f32 %v4298, %v4517
          %v5007 = vadd.f32 %v4299, %v4522
          %v5008 = vadd.f32 %v4300, %v4527
          %v5009 = vadd.f32 %v4301, %v4532
          %v5010 = vadd.f32 %v4302, %v4537
          %v5011 = vadd.f32 %v4303, %v4542
          %v5012 = vadd.f32 %v4304, %v4547
          %v5013 = vadd.f32 %v4305, %v4552
          %v5014 = vadd.f32 %v4306, %v4557
          %v5015 = vadd.f32 %v4307, %v4562
          %v5016 = vadd.f32 %v4308, %v4632
          %v5017 = vadd.f32 %v4309, %v4637
          %v5018 = vadd.f32 %v4310, %v4642
          %v5019 = vadd.f32 %v4311, %v4647
          %v5020 = vadd.f32 %v4312, %v4652
          %v5021 = vadd.f32 %v4313, %v4657
          %v5022 = vadd.f32 %v4314, %v4662
          %v5023 = vadd.f32 %v4315, %v4667
          %v5024 = vadd.f32 %v4316, %v4672
          %v5025 = vadd.f32 %v4317, %v4677
          %v5026 = vadd.f32 %v4318, %v4682
          %v5027 = vadd.f32 %v4319, %v4687
          %v5028 = vadd.f32 %v4320, %v4692
          %v5029 = vadd.f32 %v4321, %v4697
          %v5030 = vadd.f32 %v4322, %v4702
          %v5031 = vadd.f32 %v4323, %v4707
          %v5032 = vadd.f32 %v4324, %v4777
          %v5033 = vadd.f32 %v4325, %v4782
          %v5034 = vadd.f32 %v4326, %v4787
          %v5035 = vadd.f32 %v4327, %v4792
          %v5036 = vadd.f32 %v4328, %v4797
          %v5037 = vadd.f32 %v4329, %v4802
          %v5038 = vadd.f32 %v4330, %v4807
          %v5039 = vadd.f32 %v4331, %v4812
          %v5040 = vadd.f32 %v4332, %v4817
          %v5041 = vadd.f32 %v4333, %v4822
          %v5042 = vadd.f32 %v4334, %v4827
          %v5043 = vadd.f32 %v4335, %v4832
          %v5044 = vadd.f32 %v4336, %v4837
          %v5045 = vadd.f32 %v4337, %v4842
          %v5046 = vadd.f32 %v4338, %v4847
          %v5047 = vadd.f32 %v4339, %v4852
          %v5048 = vadd.f32 %v4340, %v4922
          %v5049 = vadd.f32 %v4341, %v4927
          %v5050 = vadd.f32 %v4342, %v4932
          %v5051 = vadd.f32 %v4343, %v4937
          %v5052 = vadd.f32 %v4344, %v4942
          %v5053 = vadd.f32 %v4345, %v4947
          %v5054 = vadd.f32 %v4346, %v4952
          %v5055 = vadd.f32 %v4347, %v4957
          %v5056 = vadd.f32 %v4348, %v4962
          %v5057 = vadd.f32 %v4349, %v4967
          %v5058 = vadd.f32 %v4350, %v4972
          %v5059 = vadd.f32 %v4351, %v4977
          %v5060 = vadd.f32 %v4352, %v4982
          %v5061 = vadd.f32 %v4353, %v4987
          %v5062 = vadd.f32 %v4354, %v4992
          %v5063 = vadd.f32 %v4355, %v4997
          %5064 = vst.msk [vmem:[#allocation4] sm:$0xff] %vm1415, %v5000
          %5065 = vst.msk [vmem:[#allocation4 + $0x8] sm:$0xff] %vm1415, %v5001
          %5066 = vst.msk [vmem:[#allocation4 + $0x10] sm:$0xff] %vm1415, %v5002
          %5067 = vst.msk [vmem:[#allocation4 + $0x18] sm:$0xff] %vm1415, %v5003
          %5068 = vst.msk [vmem:[#allocation4 + $0x20] sm:$0xff] %vm1415, %v5004
          %5069 = vst.msk [vmem:[#allocation4 + $0x28] sm:$0xff] %vm1415, %v5005
          %5070 = vst.msk [vmem:[#allocation4 + $0x30] sm:$0xff] %vm1415, %v5006
          %5071 = vst.msk [vmem:[#allocation4 + $0x38] sm:$0xff] %vm1415, %v5007
          %5072 = vst.msk [vmem:[#allocation4 + $0x40] sm:$0xff] %vm1415, %v5008
          %5073 = vst.msk [vmem:[#allocation4 + $0x48] sm:$0xff] %vm1415, %v5009
          %5074 = vst.msk [vmem:[#allocation4 + $0x50] sm:$0xff] %vm1415, %v5010
          %5075 = vst.msk [vmem:[#allocation4 + $0x58] sm:$0xff] %vm1415, %v5011
          %5076 = vst.msk [vmem:[#allocation4 + $0x60] sm:$0xff] %vm1415, %v5012
          %5077 = vst.msk [vmem:[#allocation4 + $0x68] sm:$0xff] %vm1415, %v5013
          %5078 = vst.msk [vmem:[#allocation4 + $0x70] sm:$0xff] %vm1415, %v5014
          %5079 = vst.msk [vmem:[#allocation4 + $0x78] sm:$0xff] %vm1415, %v5015
          %5080 = vst.msk [vmem:[#allocation4 + $0x80] sm:$0xff] %vm1415, %v5016
          %5081 = vst.msk [vmem:[#allocation4 + $0x88] sm:$0xff] %vm1415, %v5017
          %5082 = vst.msk [vmem:[#allocation4 + $0x90] sm:$0xff] %vm1415, %v5018
          %5083 = vst.msk [vmem:[#allocation4 + $0x98] sm:$0xff] %vm1415, %v5019
          %5084 = vst.msk [vmem:[#allocation4 + $0xa0] sm:$0xff] %vm1415, %v5020
          %5085 = vst.msk [vmem:[#allocation4 + $0xa8] sm:$0xff] %vm1415, %v5021
          %5086 = vst.msk [vmem:[#allocation4 + $0xb0] sm:$0xff] %vm1415, %v5022
          %5087 = vst.msk [vmem:[#allocation4 + $0xb8] sm:$0xff] %vm1415, %v5023
          %5088 = vst.msk [vmem:[#allocation4 + $0xc0] sm:$0xff] %vm1415, %v5024
          %5089 = vst.msk [vmem:[#allocation4 + $0xc8] sm:$0xff] %vm1415, %v5025
          %5090 = vst.msk [vmem:[#allocation4 + $0xd0] sm:$0xff] %vm1415, %v5026
          %5091 = vst.msk [vmem:[#allocation4 + $0xd8] sm:$0xff] %vm1415, %v5027
          %5092 = vst.msk [vmem:[#allocation4 + $0xe0] sm:$0xff] %vm1415, %v5028
          %5093 = vst.msk [vmem:[#allocation4 + $0xe8] sm:$0xff] %vm1415, %v5029
          %5094 = vst.msk [vmem:[#allocation4 + $0xf0] sm:$0xff] %vm1415, %v5030
          %5095 = vst.msk [vmem:[#allocation4 + $0xf8] sm:$0xff] %vm1415, %v5031
          %5096 = vst.msk [vmem:[#allocation4 + $0x100] sm:$0xff] %vm1415, %v5032
          %5097 = vst.msk [vmem:[#allocation4 + $0x108] sm:$0xff] %vm1415, %v5033
          %5098 = vst.msk [vmem:[#allocation4 + $0x110] sm:$0xff] %vm1415, %v5034
          %5099 = vst.msk [vmem:[#allocation4 + $0x118] sm:$0xff] %vm1415, %v5035
          %5100 = vst.msk [vmem:[#allocation4 + $0x120] sm:$0xff] %vm1415, %v5036
          %5101 = vst.msk [vmem:[#allocation4 + $0x128] sm:$0xff] %vm1415, %v5037
          %5102 = vst.msk [vmem:[#allocation4 + $0x130] sm:$0xff] %vm1415, %v5038
          %5103 = vst.msk [vmem:[#allocation4 + $0x138] sm:$0xff] %vm1415, %v5039
          %5104 = vst.msk [vmem:[#allocation4 + $0x140] sm:$0xff] %vm1415, %v5040
          %5105 = vst.msk [vmem:[#allocation4 + $0x148] sm:$0xff] %vm1415, %v5041
          %5106 = vst.msk [vmem:[#allocation4 + $0x150] sm:$0xff] %vm1415, %v5042
          %5107 = vst.msk [vmem:[#allocation4 + $0x158] sm:$0xff] %vm1415, %v5043
          %5108 = vst.msk [vmem:[#allocation4 + $0x160] sm:$0xff] %vm1415, %v5044
          %5109 = vst.msk [vmem:[#allocation4 + $0x168] sm:$0xff] %vm1415, %v5045
          %5110 = vst.msk [vmem:[#allocation4 + $0x170] sm:$0xff] %vm1415, %v5046
          %5111 = vst.msk [vmem:[#allocation4 + $0x178] sm:$0xff] %vm1415, %v5047
          %5112 = vst.msk [vmem:[#allocation4 + $0x180] sm:$0xff] %vm1415, %v5048
          %5113 = vst.msk [vmem:[#allocation4 + $0x188] sm:$0xff] %vm1415, %v5049
          %5114 = vst.msk [vmem:[#allocation4 + $0x190] sm:$0xff] %vm1415, %v5050
          %5115 = vst.msk [vmem:[#allocation4 + $0x198] sm:$0xff] %vm1415, %v5051
          %5116 = vst.msk [vmem:[#allocation4 + $0x1a0] sm:$0xff] %vm1415, %v5052
          %5117 = vst.msk [vmem:[#allocation4 + $0x1a8] sm:$0xff] %vm1415, %v5053
          %5118 = vst.msk [vmem:[#allocation4 + $0x1b0] sm:$0xff] %vm1415, %v5054
          %5119 = vst.msk [vmem:[#allocation4 + $0x1b8] sm:$0xff] %vm1415, %v5055
          %5120 = vst.msk [vmem:[#allocation4 + $0x1c0] sm:$0xff] %vm1415, %v5056
          %5121 = vst.msk [vmem:[#allocation4 + $0x1c8] sm:$0xff] %vm1415, %v5057
          %5122 = vst.msk [vmem:[#allocation4 + $0x1d0] sm:$0xff] %vm1415, %v5058
          %5123 = vst.msk [vmem:[#allocation4 + $0x1d8] sm:$0xff] %vm1415, %v5059
          %5124 = vst.msk [vmem:[#allocation4 + $0x1e0] sm:$0xff] %vm1415, %v5060
          %5125 = vst.msk [vmem:[#allocation4 + $0x1e8] sm:$0xff] %vm1415, %v5061
          %5126 = vst.msk [vmem:[#allocation4 + $0x1f0] sm:$0xff] %vm1415, %v5062
          %5127 = vst.msk [vmem:[#allocation4 + $0x1f8] sm:$0xff] %vm1415, %v5063
          %5128 = vst.msk [vmem:[#allocation2] sm:$0xff] %vm3843, %v2755
          %5129 = vst.msk [vmem:[#allocation2 + $0x8] sm:$0xff] %vm3843, %v2756
          %5130 = vst.msk [vmem:[#allocation2 + $0x10] sm:$0xff] %vm3843, %v2757
          %5131 = vst.msk [vmem:[#allocation2 + $0x18] sm:$0xff] %vm3843, %v2758
          %5132 = vst.msk [vmem:[#allocation2 + $0x20] sm:$0xff] %vm3843, %v2759
          %5133 = vst.msk [vmem:[#allocation2 + $0x28] sm:$0xff] %vm3843, %v2760
          %5134 = vst.msk [vmem:[#allocation2 + $0x30] sm:$0xff] %vm3843, %v2761
          %5135 = vst.msk [vmem:[#allocation2 + $0x38] sm:$0xff] %vm3843, %v2762
          %5136 = vst.msk [vmem:[#allocation2 + $0x40] sm:$0xff] %vm3843, %v2763
          %5137 = vst.msk [vmem:[#allocation2 + $0x48] sm:$0xff] %vm3843, %v2764
          %5138 = vst.msk [vmem:[#allocation2 + $0x50] sm:$0xff] %vm3843, %v2765
          %5139 = vst.msk [vmem:[#allocation2 + $0x58] sm:$0xff] %vm3843, %v2766
          %5140 = vst.msk [vmem:[#allocation2 + $0x60] sm:$0xff] %vm3843, %v2767
          %5141 = vst.msk [vmem:[#allocation2 + $0x68] sm:$0xff] %vm3843, %v2768
          %5142 = vst.msk [vmem:[#allocation2 + $0x70] sm:$0xff] %vm3843, %v2769
          %5143 = vst.msk [vmem:[#allocation2 + $0x78] sm:$0xff] %vm3843, %v2770
          %5144 = vst.msk [vmem:[#allocation2 + $0x80] sm:$0xff] %vm3843, %v2771
          %5145 = vst.msk [vmem:[#allocation2 + $0x88] sm:$0xff] %vm3843, %v2772
          %5146 = vst.msk [vmem:[#allocation2 + $0x90] sm:$0xff] %vm3843, %v2773
          %5147 = vst.msk [vmem:[#allocation2 + $0x98] sm:$0xff] %vm3843, %v2774
          %5148 = vst.msk [vmem:[#allocation2 + $0xa0] sm:$0xff] %vm3843, %v2775
          %5149 = vst.msk [vmem:[#allocation2 + $0xa8] sm:$0xff] %vm3843, %v2776
          %5150 = vst.msk [vmem:[#allocation2 + $0xb0] sm:$0xff] %vm3843, %v2777
          %5151 = vst.msk [vmem:[#allocation2 + $0xb8] sm:$0xff] %vm3843, %v2778
          %5152 = vst.msk [vmem:[#allocation2 + $0xc0] sm:$0xff] %vm3843, %v2779
          %5153 = vst.msk [vmem:[#allocation2 + $0xc8] sm:$0xff] %vm3843, %v2780
          %5154 = vst.msk [vmem:[#allocation2 + $0xd0] sm:$0xff] %vm3843, %v2781
          %5155 = vst.msk [vmem:[#allocation2 + $0xd8] sm:$0xff] %vm3843, %v2782
          %5156 = vst.msk [vmem:[#allocation2 + $0xe0] sm:$0xff] %vm3843, %v2783
          %5157 = vst.msk [vmem:[#allocation2 + $0xe8] sm:$0xff] %vm3843, %v2784
          %5158 = vst.msk [vmem:[#allocation2 + $0xf0] sm:$0xff] %vm3843, %v2785
          %5159 = vst.msk [vmem:[#allocation2 + $0xf8] sm:$0xff] %vm3843, %v2786
          %5160 = vst.msk [vmem:[#allocation2 + $0x100] sm:$0xff] %vm3843, %v2787
          %5161 = vst.msk [vmem:[#allocation2 + $0x108] sm:$0xff] %vm3843, %v2788
          %5162 = vst.msk [vmem:[#allocation2 + $0x110] sm:$0xff] %vm3843, %v2789
          %5163 = vst.msk [vmem:[#allocation2 + $0x118] sm:$0xff] %vm3843, %v2790
          %5164 = vst.msk [vmem:[#allocation2 + $0x120] sm:$0xff] %vm3843, %v2791
          %5165 = vst.msk [vmem:[#allocation2 + $0x128] sm:$0xff] %vm3843, %v2792
          %5166 = vst.msk [vmem:[#allocation2 + $0x130] sm:$0xff] %vm3843, %v2793
          %5167 = vst.msk [vmem:[#allocation2 + $0x138] sm:$0xff] %vm3843, %v2794
          %5168 = vst.msk [vmem:[#allocation2 + $0x140] sm:$0xff] %vm3843, %v2795
          %5169 = vst.msk [vmem:[#allocation2 + $0x148] sm:$0xff] %vm3843, %v2796
          %5170 = vst.msk [vmem:[#allocation2 + $0x150] sm:$0xff] %vm3843, %v2797
          %5171 = vst.msk [vmem:[#allocation2 + $0x158] sm:$0xff] %vm3843, %v2798
          %5172 = vst.msk [vmem:[#allocation2 + $0x160] sm:$0xff] %vm3843, %v2799
          %5173 = vst.msk [vmem:[#allocation2 + $0x168] sm:$0xff] %vm3843, %v2800
          %5174 = vst.msk [vmem:[#allocation2 + $0x170] sm:$0xff] %vm3843, %v2801
          %5175 = vst.msk [vmem:[#allocation2 + $0x178] sm:$0xff] %vm3843, %v2802
          %5176 = vst.msk [vmem:[#allocation2 + $0x180] sm:$0xff] %vm3843, %v2803
          %5177 = vst.msk [vmem:[#allocation2 + $0x188] sm:$0xff] %vm3843, %v2804
          %5178 = vst.msk [vmem:[#allocation2 + $0x190] sm:$0xff] %vm3843, %v2805
          %5179 = vst.msk [vmem:[#allocation2 + $0x198] sm:$0xff] %vm3843, %v2806
          %5180 = vst.msk [vmem:[#allocation2 + $0x1a0] sm:$0xff] %vm3843, %v2807
          %5181 = vst.msk [vmem:[#allocation2 + $0x1a8] sm:$0xff] %vm3843, %v2808
          %5182 = vst.msk [vmem:[#allocation2 + $0x1b0] sm:$0xff] %vm3843, %v2809
          %5183 = vst.msk [vmem:[#allocation2 + $0x1b8] sm:$0xff] %vm3843, %v2810
          %5184 = vst.msk [vmem:[#allocation2 + $0x1c0] sm:$0xff] %vm3843, %v2811
          %5185 = vst.msk [vmem:[#allocation2 + $0x1c8] sm:$0xff] %vm3843, %v2812
          %5186 = vst.msk [vmem:[#allocation2 + $0x1d0] sm:$0xff] %vm3843, %v2813
          %5187 = vst.msk [vmem:[#allocation2 + $0x1d8] sm:$0xff] %vm3843, %v2814
          %5188 = vst.msk [vmem:[#allocation2 + $0x1e0] sm:$0xff] %vm3843, %v2815
          %5189 = vst.msk [vmem:[#allocation2 + $0x1e8] sm:$0xff] %vm3843, %v2816
          %5190 = vst.msk [vmem:[#allocation2 + $0x1f0] sm:$0xff] %vm3843, %v2817
          %5191 = vst.msk [vmem:[#allocation2 + $0x1f8] sm:$0xff] %vm3843, %v2818
        $region154: #{block_forward_pallas.5} parent=133 // pred_fallthru
          _
        %p5192 = scmp.eq.s32.totalorder %s19, 1
        // Predicated region
        $region155: #{block_forward_pallas.5} parent=133 // pred_check
          %p5193 = pneg %p5192
        $region156: #{block_forward_pallas.5} parent=133 // pred_check_branch
          %5195 = sbr.rel (%p5193) target = $region158
        $region157: #{block_forward_pallas.5} parent=133 // pred_region
          %v5196 = vld [vmem:[#allocation4] sm:$0xff]
          %v5197 = vld [vmem:[#allocation4 + $0x8] sm:$0xff]
          %v5198 = vld [vmem:[#allocation4 + $0x10] sm:$0xff]
          %v5199 = vld [vmem:[#allocation4 + $0x18] sm:$0xff]
          %v5200 = vld [vmem:[#allocation4 + $0x20] sm:$0xff]
          %v5201 = vld [vmem:[#allocation4 + $0x28] sm:$0xff]
          %v5202 = vld [vmem:[#allocation4 + $0x30] sm:$0xff]
          %v5203 = vld [vmem:[#allocation4 + $0x38] sm:$0xff]
          %v5204 = vld [vmem:[#allocation4 + $0x40] sm:$0xff]
          %v5205 = vld [vmem:[#allocation4 + $0x48] sm:$0xff]
          %v5206 = vld [vmem:[#allocation4 + $0x50] sm:$0xff]
          %v5207 = vld [vmem:[#allocation4 + $0x58] sm:$0xff]
          %v5208 = vld [vmem:[#allocation4 + $0x60] sm:$0xff]
          %v5209 = vld [vmem:[#allocation4 + $0x68] sm:$0xff]
          %v5210 = vld [vmem:[#allocation4 + $0x70] sm:$0xff]
          %v5211 = vld [vmem:[#allocation4 + $0x78] sm:$0xff]
          %v5212 = vld [vmem:[#allocation4 + $0x80] sm:$0xff]
          %v5213 = vld [vmem:[#allocation4 + $0x88] sm:$0xff]
          %v5214 = vld [vmem:[#allocation4 + $0x90] sm:$0xff]
          %v5215 = vld [vmem:[#allocation4 + $0x98] sm:$0xff]
          %v5216 = vld [vmem:[#allocation4 + $0xa0] sm:$0xff]
          %v5217 = vld [vmem:[#allocation4 + $0xa8] sm:$0xff]
          %v5218 = vld [vmem:[#allocation4 + $0xb0] sm:$0xff]
          %v5219 = vld [vmem:[#allocation4 + $0xb8] sm:$0xff]
          %v5220 = vld [vmem:[#allocation4 + $0xc0] sm:$0xff]
          %v5221 = vld [vmem:[#allocation4 + $0xc8] sm:$0xff]
          %v5222 = vld [vmem:[#allocation4 + $0xd0] sm:$0xff]
          %v5223 = vld [vmem:[#allocation4 + $0xd8] sm:$0xff]
          %v5224 = vld [vmem:[#allocation4 + $0xe0] sm:$0xff]
          %v5225 = vld [vmem:[#allocation4 + $0xe8] sm:$0xff]
          %v5226 = vld [vmem:[#allocation4 + $0xf0] sm:$0xff]
          %v5227 = vld [vmem:[#allocation4 + $0xf8] sm:$0xff]
          %v5228 = vld [vmem:[#allocation4 + $0x100] sm:$0xff]
          %v5229 = vld [vmem:[#allocation4 + $0x108] sm:$0xff]
          %v5230 = vld [vmem:[#allocation4 + $0x110] sm:$0xff]
          %v5231 = vld [vmem:[#allocation4 + $0x118] sm:$0xff]
          %v5232 = vld [vmem:[#allocation4 + $0x120] sm:$0xff]
          %v5233 = vld [vmem:[#allocation4 + $0x128] sm:$0xff]
          %v5234 = vld [vmem:[#allocation4 + $0x130] sm:$0xff]
          %v5235 = vld [vmem:[#allocation4 + $0x138] sm:$0xff]
          %v5236 = vld [vmem:[#allocation4 + $0x140] sm:$0xff]
          %v5237 = vld [vmem:[#allocation4 + $0x148] sm:$0xff]
          %v5238 = vld [vmem:[#allocation4 + $0x150] sm:$0xff]
          %v5239 = vld [vmem:[#allocation4 + $0x158] sm:$0xff]
          %v5240 = vld [vmem:[#allocation4 + $0x160] sm:$0xff]
          %v5241 = vld [vmem:[#allocation4 + $0x168] sm:$0xff]
          %v5242 = vld [vmem:[#allocation4 + $0x170] sm:$0xff]
          %v5243 = vld [vmem:[#allocation4 + $0x178] sm:$0xff]
          %v5244 = vld [vmem:[#allocation4 + $0x180] sm:$0xff]
          %v5245 = vld [vmem:[#allocation4 + $0x188] sm:$0xff]
          %v5246 = vld [vmem:[#allocation4 + $0x190] sm:$0xff]
          %v5247 = vld [vmem:[#allocation4 + $0x198] sm:$0xff]
          %v5248 = vld [vmem:[#allocation4 + $0x1a0] sm:$0xff]
          %v5249 = vld [vmem:[#allocation4 + $0x1a8] sm:$0xff]
          %v5250 = vld [vmem:[#allocation4 + $0x1b0] sm:$0xff]
          %v5251 = vld [vmem:[#allocation4 + $0x1b8] sm:$0xff]
          %v5252 = vld [vmem:[#allocation4 + $0x1c0] sm:$0xff]
          %v5253 = vld [vmem:[#allocation4 + $0x1c8] sm:$0xff]
          %v5254 = vld [vmem:[#allocation4 + $0x1d0] sm:$0xff]
          %v5255 = vld [vmem:[#allocation4 + $0x1d8] sm:$0xff]
          %v5256 = vld [vmem:[#allocation4 + $0x1e0] sm:$0xff]
          %v5257 = vld [vmem:[#allocation4 + $0x1e8] sm:$0xff]
          %v5258 = vld [vmem:[#allocation4 + $0x1f0] sm:$0xff]
          %v5259 = vld [vmem:[#allocation4 + $0x1f8] sm:$0xff]
          %v5260 = vld [vmem:[#allocation3] sm:$0xff]
          %v5261 = vld [vmem:[#allocation3 + $0x8] sm:$0xff]
          %v5262 = vld [vmem:[#allocation3 + $0x10] sm:$0xff]
          %v5263 = vld [vmem:[#allocation3 + $0x18] sm:$0xff]
          %v5264 = vld [vmem:[#allocation3 + $0x20] sm:$0xff]
          %v5265 = vld [vmem:[#allocation3 + $0x28] sm:$0xff]
          %v5266 = vld [vmem:[#allocation3 + $0x30] sm:$0xff]
          %v5267 = vld [vmem:[#allocation3 + $0x38] sm:$0xff]
          %v5268 = vld [vmem:[#allocation3 + $0x40] sm:$0xff]
          %v5269 = vld [vmem:[#allocation3 + $0x48] sm:$0xff]
          %v5270 = vld [vmem:[#allocation3 + $0x50] sm:$0xff]
          %v5271 = vld [vmem:[#allocation3 + $0x58] sm:$0xff]
          %v5272 = vld [vmem:[#allocation3 + $0x60] sm:$0xff]
          %v5273 = vld [vmem:[#allocation3 + $0x68] sm:$0xff]
          %v5274 = vld [vmem:[#allocation3 + $0x70] sm:$0xff]
          %v5275 = vld [vmem:[#allocation3 + $0x78] sm:$0xff]
          %v5276 = vld [vmem:[#allocation3 + $0x80] sm:$0xff]
          %v5277 = vld [vmem:[#allocation3 + $0x88] sm:$0xff]
          %v5278 = vld [vmem:[#allocation3 + $0x90] sm:$0xff]
          %v5279 = vld [vmem:[#allocation3 + $0x98] sm:$0xff]
          %v5280 = vld [vmem:[#allocation3 + $0xa0] sm:$0xff]
          %v5281 = vld [vmem:[#allocation3 + $0xa8] sm:$0xff]
          %v5282 = vld [vmem:[#allocation3 + $0xb0] sm:$0xff]
          %v5283 = vld [vmem:[#allocation3 + $0xb8] sm:$0xff]
          %v5284 = vld [vmem:[#allocation3 + $0xc0] sm:$0xff]
          %v5285 = vld [vmem:[#allocation3 + $0xc8] sm:$0xff]
          %v5286 = vld [vmem:[#allocation3 + $0xd0] sm:$0xff]
          %v5287 = vld [vmem:[#allocation3 + $0xd8] sm:$0xff]
          %v5288 = vld [vmem:[#allocation3 + $0xe0] sm:$0xff]
          %v5289 = vld [vmem:[#allocation3 + $0xe8] sm:$0xff]
          %v5290 = vld [vmem:[#allocation3 + $0xf0] sm:$0xff]
          %v5291 = vld [vmem:[#allocation3 + $0xf8] sm:$0xff]
          %v5292 = vld [vmem:[#allocation3 + $0x100] sm:$0xff]
          %v5293 = vld [vmem:[#allocation3 + $0x108] sm:$0xff]
          %v5294 = vld [vmem:[#allocation3 + $0x110] sm:$0xff]
          %v5295 = vld [vmem:[#allocation3 + $0x118] sm:$0xff]
          %v5296 = vld [vmem:[#allocation3 + $0x120] sm:$0xff]
          %v5297 = vld [vmem:[#allocation3 + $0x128] sm:$0xff]
          %v5298 = vld [vmem:[#allocation3 + $0x130] sm:$0xff]
          %v5299 = vld [vmem:[#allocation3 + $0x138] sm:$0xff]
          %v5300 = vld [vmem:[#allocation3 + $0x140] sm:$0xff]
          %v5301 = vld [vmem:[#allocation3 + $0x148] sm:$0xff]
          %v5302 = vld [vmem:[#allocation3 + $0x150] sm:$0xff]
          %v5303 = vld [vmem:[#allocation3 + $0x158] sm:$0xff]
          %v5304 = vld [vmem:[#allocation3 + $0x160] sm:$0xff]
          %v5305 = vld [vmem:[#allocation3 + $0x168] sm:$0xff]
          %v5306 = vld [vmem:[#allocation3 + $0x170] sm:$0xff]
          %v5307 = vld [vmem:[#allocation3 + $0x178] sm:$0xff]
          %v5308 = vld [vmem:[#allocation3 + $0x180] sm:$0xff]
          %v5309 = vld [vmem:[#allocation3 + $0x188] sm:$0xff]
          %v5310 = vld [vmem:[#allocation3 + $0x190] sm:$0xff]
          %v5311 = vld [vmem:[#allocation3 + $0x198] sm:$0xff]
          %v5312 = vld [vmem:[#allocation3 + $0x1a0] sm:$0xff]
          %v5313 = vld [vmem:[#allocation3 + $0x1a8] sm:$0xff]
          %v5314 = vld [vmem:[#allocation3 + $0x1b0] sm:$0xff]
          %v5315 = vld [vmem:[#allocation3 + $0x1b8] sm:$0xff]
          %v5316 = vld [vmem:[#allocation3 + $0x1c0] sm:$0xff]
          %v5317 = vld [vmem:[#allocation3 + $0x1c8] sm:$0xff]
          %v5318 = vld [vmem:[#allocation3 + $0x1d0] sm:$0xff]
          %v5319 = vld [vmem:[#allocation3 + $0x1d8] sm:$0xff]
          %v5320 = vld [vmem:[#allocation3 + $0x1e0] sm:$0xff]
          %v5321 = vld [vmem:[#allocation3 + $0x1e8] sm:$0xff]
          %v5322 = vld [vmem:[#allocation3 + $0x1f0] sm:$0xff]
          %v5323 = vld [vmem:[#allocation3 + $0x1f8] sm:$0xff]
          %5325 = vset.pattern.permute.xlu0 0
          %5326 = vperm.xlu0 %5325, %v5260
          %v5327 = vpop.permute.xlu0 %5326
          %5330 = vset.pattern.permute.xlu0 0
          %5331 = vperm.xlu0 %5330, %v5261
          %v5332 = vpop.permute.xlu0 %5331
          %5335 = vset.pattern.permute.xlu0 0
          %5336 = vperm.xlu0 %5335, %v5262
          %v5337 = vpop.permute.xlu0 %5336
          %5340 = vset.pattern.permute.xlu0 0
          %5341 = vperm.xlu0 %5340, %v5263
          %v5342 = vpop.permute.xlu0 %5341
          %5345 = vset.pattern.permute.xlu0 0
          %5346 = vperm.xlu0 %5345, %v5264
          %v5347 = vpop.permute.xlu0 %5346
          %5350 = vset.pattern.permute.xlu0 0
          %5351 = vperm.xlu0 %5350, %v5265
          %v5352 = vpop.permute.xlu0 %5351
          %5355 = vset.pattern.permute.xlu0 0
          %5356 = vperm.xlu0 %5355, %v5266
          %v5357 = vpop.permute.xlu0 %5356
          %5360 = vset.pattern.permute.xlu0 0
          %5361 = vperm.xlu0 %5360, %v5267
          %v5362 = vpop.permute.xlu0 %5361
          %5365 = vset.pattern.permute.xlu0 0
          %5366 = vperm.xlu0 %5365, %v5268
          %v5367 = vpop.permute.xlu0 %5366
          %5370 = vset.pattern.permute.xlu0 0
          %5371 = vperm.xlu0 %5370, %v5269
          %v5372 = vpop.permute.xlu0 %5371
          %5375 = vset.pattern.permute.xlu0 0
          %5376 = vperm.xlu0 %5375, %v5270
          %v5377 = vpop.permute.xlu0 %5376
          %5380 = vset.pattern.permute.xlu0 0
          %5381 = vperm.xlu0 %5380, %v5271
          %v5382 = vpop.permute.xlu0 %5381
          %5385 = vset.pattern.permute.xlu0 0
          %5386 = vperm.xlu0 %5385, %v5272
          %v5387 = vpop.permute.xlu0 %5386
          %5390 = vset.pattern.permute.xlu0 0
          %5391 = vperm.xlu0 %5390, %v5273
          %v5392 = vpop.permute.xlu0 %5391
          %5395 = vset.pattern.permute.xlu0 0
          %5396 = vperm.xlu0 %5395, %v5274
          %v5397 = vpop.permute.xlu0 %5396
          %5400 = vset.pattern.permute.xlu0 0
          %5401 = vperm.xlu0 %5400, %v5275
          %v5402 = vpop.permute.xlu0 %5401
          %5405 = vset.pattern.permute.xlu0 0
          %5406 = vperm.xlu0 %5405, %v5276
          %v5407 = vpop.permute.xlu0 %5406
          %5410 = vset.pattern.permute.xlu0 0
          %5411 = vperm.xlu0 %5410, %v5277
          %v5412 = vpop.permute.xlu0 %5411
          %5415 = vset.pattern.permute.xlu0 0
          %5416 = vperm.xlu0 %5415, %v5278
          %v5417 = vpop.permute.xlu0 %5416
          %5420 = vset.pattern.permute.xlu0 0
          %5421 = vperm.xlu0 %5420, %v5279
          %v5422 = vpop.permute.xlu0 %5421
          %5425 = vset.pattern.permute.xlu0 0
          %5426 = vperm.xlu0 %5425, %v5280
          %v5427 = vpop.permute.xlu0 %5426
          %5430 = vset.pattern.permute.xlu0 0
          %5431 = vperm.xlu0 %5430, %v5281
          %v5432 = vpop.permute.xlu0 %5431
          %5435 = vset.pattern.permute.xlu0 0
          %5436 = vperm.xlu0 %5435, %v5282
          %v5437 = vpop.permute.xlu0 %5436
          %5440 = vset.pattern.permute.xlu0 0
          %5441 = vperm.xlu0 %5440, %v5283
          %v5442 = vpop.permute.xlu0 %5441
          %5445 = vset.pattern.permute.xlu0 0
          %5446 = vperm.xlu0 %5445, %v5284
          %v5447 = vpop.permute.xlu0 %5446
          %5450 = vset.pattern.permute.xlu0 0
          %5451 = vperm.xlu0 %5450, %v5285
          %v5452 = vpop.permute.xlu0 %5451
          %5455 = vset.pattern.permute.xlu0 0
          %5456 = vperm.xlu0 %5455, %v5286
          %v5457 = vpop.permute.xlu0 %5456
          %5460 = vset.pattern.permute.xlu0 0
          %5461 = vperm.xlu0 %5460, %v5287
          %v5462 = vpop.permute.xlu0 %5461
          %5465 = vset.pattern.permute.xlu0 0
          %5466 = vperm.xlu0 %5465, %v5288
          %v5467 = vpop.permute.xlu0 %5466
          %5470 = vset.pattern.permute.xlu0 0
          %5471 = vperm.xlu0 %5470, %v5289
          %v5472 = vpop.permute.xlu0 %5471
          %5475 = vset.pattern.permute.xlu0 0
          %5476 = vperm.xlu0 %5475, %v5290
          %v5477 = vpop.permute.xlu0 %5476
          %5480 = vset.pattern.permute.xlu0 0
          %5481 = vperm.xlu0 %5480, %v5291
          %v5482 = vpop.permute.xlu0 %5481
          %5485 = vset.pattern.permute.xlu0 0
          %5486 = vperm.xlu0 %5485, %v5292
          %v5487 = vpop.permute.xlu0 %5486
          %5490 = vset.pattern.permute.xlu0 0
          %5491 = vperm.xlu0 %5490, %v5293
          %v5492 = vpop.permute.xlu0 %5491
          %5495 = vset.pattern.permute.xlu0 0
          %5496 = vperm.xlu0 %5495, %v5294
          %v5497 = vpop.permute.xlu0 %5496
          %5500 = vset.pattern.permute.xlu0 0
          %5501 = vperm.xlu0 %5500, %v5295
          %v5502 = vpop.permute.xlu0 %5501
          %5505 = vset.pattern.permute.xlu0 0
          %5506 = vperm.xlu0 %5505, %v5296
          %v5507 = vpop.permute.xlu0 %5506
          %5510 = vset.pattern.permute.xlu0 0
          %5511 = vperm.xlu0 %5510, %v5297
          %v5512 = vpop.permute.xlu0 %5511
          %5515 = vset.pattern.permute.xlu0 0
          %5516 = vperm.xlu0 %5515, %v5298
          %v5517 = vpop.permute.xlu0 %5516
          %5520 = vset.pattern.permute.xlu0 0
          %5521 = vperm.xlu0 %5520, %v5299
          %v5522 = vpop.permute.xlu0 %5521
          %5525 = vset.pattern.permute.xlu0 0
          %5526 = vperm.xlu0 %5525, %v5300
          %v5527 = vpop.permute.xlu0 %5526
          %5530 = vset.pattern.permute.xlu0 0
          %5531 = vperm.xlu0 %5530, %v5301
          %v5532 = vpop.permute.xlu0 %5531
          %5535 = vset.pattern.permute.xlu0 0
          %5536 = vperm.xlu0 %5535, %v5302
          %v5537 = vpop.permute.xlu0 %5536
          %5540 = vset.pattern.permute.xlu0 0
          %5541 = vperm.xlu0 %5540, %v5303
          %v5542 = vpop.permute.xlu0 %5541
          %5545 = vset.pattern.permute.xlu0 0
          %5546 = vperm.xlu0 %5545, %v5304
          %v5547 = vpop.permute.xlu0 %5546
          %5550 = vset.pattern.permute.xlu0 0
          %5551 = vperm.xlu0 %5550, %v5305
          %v5552 = vpop.permute.xlu0 %5551
          %5555 = vset.pattern.permute.xlu0 0
          %5556 = vperm.xlu0 %5555, %v5306
          %v5557 = vpop.permute.xlu0 %5556
          %5560 = vset.pattern.permute.xlu0 0
          %5561 = vperm.xlu0 %5560, %v5307
          %v5562 = vpop.permute.xlu0 %5561
          %5565 = vset.pattern.permute.xlu0 0
          %5566 = vperm.xlu0 %5565, %v5308
          %v5567 = vpop.permute.xlu0 %5566
          %5570 = vset.pattern.permute.xlu0 0
          %5571 = vperm.xlu0 %5570, %v5309
          %v5572 = vpop.permute.xlu0 %5571
          %5575 = vset.pattern.permute.xlu0 0
          %5576 = vperm.xlu0 %5575, %v5310
          %v5577 = vpop.permute.xlu0 %5576
          %5580 = vset.pattern.permute.xlu0 0
          %5581 = vperm.xlu0 %5580, %v5311
          %v5582 = vpop.permute.xlu0 %5581
          %5585 = vset.pattern.permute.xlu0 0
          %5586 = vperm.xlu0 %5585, %v5312
          %v5587 = vpop.permute.xlu0 %5586
          %5590 = vset.pattern.permute.xlu0 0
          %5591 = vperm.xlu0 %5590, %v5313
          %v5592 = vpop.permute.xlu0 %5591
          %5595 = vset.pattern.permute.xlu0 0
          %5596 = vperm.xlu0 %5595, %v5314
          %v5597 = vpop.permute.xlu0 %5596
          %5600 = vset.pattern.permute.xlu0 0
          %5601 = vperm.xlu0 %5600, %v5315
          %v5602 = vpop.permute.xlu0 %5601
          %5605 = vset.pattern.permute.xlu0 0
          %5606 = vperm.xlu0 %5605, %v5316
          %v5607 = vpop.permute.xlu0 %5606
          %5610 = vset.pattern.permute.xlu0 0
          %5611 = vperm.xlu0 %5610, %v5317
          %v5612 = vpop.permute.xlu0 %5611
          %5615 = vset.pattern.permute.xlu0 0
          %5616 = vperm.xlu0 %5615, %v5318
          %v5617 = vpop.permute.xlu0 %5616
          %5620 = vset.pattern.permute.xlu0 0
          %5621 = vperm.xlu0 %5620, %v5319
          %v5622 = vpop.permute.xlu0 %5621
          %5625 = vset.pattern.permute.xlu0 0
          %5626 = vperm.xlu0 %5625, %v5320
          %v5627 = vpop.permute.xlu0 %5626
          %5630 = vset.pattern.permute.xlu0 0
          %5631 = vperm.xlu0 %5630, %v5321
          %v5632 = vpop.permute.xlu0 %5631
          %5635 = vset.pattern.permute.xlu0 0
          %5636 = vperm.xlu0 %5635, %v5322
          %v5637 = vpop.permute.xlu0 %5636
          %5640 = vset.pattern.permute.xlu0 0
          %5641 = vperm.xlu0 %5640, %v5323
          %v5642 = vpop.permute.xlu0 %5641
          %v5644 = vrcp.pop %v5327
          %v5645 = vmul.f32 %v5196, %v5644
          %v5646 = vrcp.pop %v5332
          %v5647 = vmul.f32 %v5197, %v5646
          %v5648 = vrcp.pop %v5337
          %v5649 = vmul.f32 %v5198, %v5648
          %v5650 = vrcp.pop %v5342
          %v5651 = vmul.f32 %v5199, %v5650
          %v5652 = vrcp.pop %v5347
          %v5653 = vmul.f32 %v5200, %v5652
          %v5654 = vrcp.pop %v5352
          %v5655 = vmul.f32 %v5201, %v5654
          %v5656 = vrcp.pop %v5357
          %v5657 = vmul.f32 %v5202, %v5656
          %v5658 = vrcp.pop %v5362
          %v5659 = vmul.f32 %v5203, %v5658
          %v5660 = vrcp.pop %v5367
          %v5661 = vmul.f32 %v5204, %v5660
          %v5662 = vrcp.pop %v5372
          %v5663 = vmul.f32 %v5205, %v5662
          %v5664 = vrcp.pop %v5377
          %v5665 = vmul.f32 %v5206, %v5664
          %v5666 = vrcp.pop %v5382
          %v5667 = vmul.f32 %v5207, %v5666
          %v5668 = vrcp.pop %v5387
          %v5669 = vmul.f32 %v5208, %v5668
          %v5670 = vrcp.pop %v5392
          %v5671 = vmul.f32 %v5209, %v5670
          %v5672 = vrcp.pop %v5397
          %v5673 = vmul.f32 %v5210, %v5672
          %v5674 = vrcp.pop %v5402
          %v5675 = vmul.f32 %v5211, %v5674
          %v5676 = vrcp.pop %v5407
          %v5677 = vmul.f32 %v5212, %v5676
          %v5678 = vrcp.pop %v5412
          %v5679 = vmul.f32 %v5213, %v5678
          %v5680 = vrcp.pop %v5417
          %v5681 = vmul.f32 %v5214, %v5680
          %v5682 = vrcp.pop %v5422
          %v5683 = vmul.f32 %v5215, %v5682
          %v5684 = vrcp.pop %v5427
          %v5685 = vmul.f32 %v5216, %v5684
          %v5686 = vrcp.pop %v5432
          %v5687 = vmul.f32 %v5217, %v5686
          %v5688 = vrcp.pop %v5437
          %v5689 = vmul.f32 %v5218, %v5688
          %v5690 = vrcp.pop %v5442
          %v5691 = vmul.f32 %v5219, %v5690
          %v5692 = vrcp.pop %v5447
          %v5693 = vmul.f32 %v5220, %v5692
          %v5694 = vrcp.pop %v5452
          %v5695 = vmul.f32 %v5221, %v5694
          %v5696 = vrcp.pop %v5457
          %v5697 = vmul.f32 %v5222, %v5696
          %v5698 = vrcp.pop %v5462
          %v5699 = vmul.f32 %v5223, %v5698
          %v5700 = vrcp.pop %v5467
          %v5701 = vmul.f32 %v5224, %v5700
          %v5702 = vrcp.pop %v5472
          %v5703 = vmul.f32 %v5225, %v5702
          %v5704 = vrcp.pop %v5477
          %v5705 = vmul.f32 %v5226, %v5704
          %v5706 = vrcp.pop %v5482
          %v5707 = vmul.f32 %v5227, %v5706
          %v5708 = vrcp.pop %v5487
          %v5709 = vmul.f32 %v5228, %v5708
          %v5710 = vrcp.pop %v5492
          %v5711 = vmul.f32 %v5229, %v5710
          %v5712 = vrcp.pop %v5497
          %v5713 = vmul.f32 %v5230, %v5712
          %v5714 = vrcp.pop %v5502
          %v5715 = vmul.f32 %v5231, %v5714
          %v5716 = vrcp.pop %v5507
          %v5717 = vmul.f32 %v5232, %v5716
          %v5718 = vrcp.pop %v5512
          %v5719 = vmul.f32 %v5233, %v5718
          %v5720 = vrcp.pop %v5517
          %v5721 = vmul.f32 %v5234, %v5720
          %v5722 = vrcp.pop %v5522
          %v5723 = vmul.f32 %v5235, %v5722
          %v5724 = vrcp.pop %v5527
          %v5725 = vmul.f32 %v5236, %v5724
          %v5726 = vrcp.pop %v5532
          %v5727 = vmul.f32 %v5237, %v5726
          %v5728 = vrcp.pop %v5537
          %v5729 = vmul.f32 %v5238, %v5728
          %v5730 = vrcp.pop %v5542
          %v5731 = vmul.f32 %v5239, %v5730
          %v5732 = vrcp.pop %v5547
          %v5733 = vmul.f32 %v5240, %v5732
          %v5734 = vrcp.pop %v5552
          %v5735 = vmul.f32 %v5241, %v5734
          %v5736 = vrcp.pop %v5557
          %v5737 = vmul.f32 %v5242, %v5736
          %v5738 = vrcp.pop %v5562
          %v5739 = vmul.f32 %v5243, %v5738
          %v5740 = vrcp.pop %v5567
          %v5741 = vmul.f32 %v5244, %v5740
          %v5742 = vrcp.pop %v5572
          %v5743 = vmul.f32 %v5245, %v5742
          %v5744 = vrcp.pop %v5577
          %v5745 = vmul.f32 %v5246, %v5744
          %v5746 = vrcp.pop %v5582
          %v5747 = vmul.f32 %v5247, %v5746
          %v5748 = vrcp.pop %v5587
          %v5749 = vmul.f32 %v5248, %v5748
          %v5750 = vrcp.pop %v5592
          %v5751 = vmul.f32 %v5249, %v5750
          %v5752 = vrcp.pop %v5597
          %v5753 = vmul.f32 %v5250, %v5752
          %v5754 = vrcp.pop %v5602
          %v5755 = vmul.f32 %v5251, %v5754
          %v5756 = vrcp.pop %v5607
          %v5757 = vmul.f32 %v5252, %v5756
          %v5758 = vrcp.pop %v5612
          %v5759 = vmul.f32 %v5253, %v5758
          %v5760 = vrcp.pop %v5617
          %v5761 = vmul.f32 %v5254, %v5760
          %v5762 = vrcp.pop %v5622
          %v5763 = vmul.f32 %v5255, %v5762
          %v5764 = vrcp.pop %v5627
          %v5765 = vmul.f32 %v5256, %v5764
          %v5766 = vrcp.pop %v5632
          %v5767 = vmul.f32 %v5257, %v5766
          %v5768 = vrcp.pop %v5637
          %v5769 = vmul.f32 %v5258, %v5768
          %v5770 = vrcp.pop %v5642
          %v5771 = vmul.f32 %v5259, %v5770
          %vm5772 = vcmask 261120
          %5773 = vst.msk [vmem:[%s1077] sm:$0xff] %vm5772, %v5645
          %5774 = vst.msk [vmem:[%s1077 + $0x8] sm:$0xff] %vm5772, %v5647
          %5775 = vst.msk [vmem:[%s1077 + $0x10] sm:$0xff] %vm5772, %v5649
          %5776 = vst.msk [vmem:[%s1077 + $0x18] sm:$0xff] %vm5772, %v5651
          %5777 = vst.msk [vmem:[%s1077 + $0x20] sm:$0xff] %vm5772, %v5653
          %5778 = vst.msk [vmem:[%s1077 + $0x28] sm:$0xff] %vm5772, %v5655
          %5779 = vst.msk [vmem:[%s1077 + $0x30] sm:$0xff] %vm5772, %v5657
          %5780 = vst.msk [vmem:[%s1077 + $0x38] sm:$0xff] %vm5772, %v5659
          %5781 = vst.msk [vmem:[%s1077 + $0x40] sm:$0xff] %vm5772, %v5661
          %5782 = vst.msk [vmem:[%s1077 + $0x48] sm:$0xff] %vm5772, %v5663
          %5783 = vst.msk [vmem:[%s1077 + $0x50] sm:$0xff] %vm5772, %v5665
          %5784 = vst.msk [vmem:[%s1077 + $0x58] sm:$0xff] %vm5772, %v5667
          %5785 = vst.msk [vmem:[%s1077 + $0x60] sm:$0xff] %vm5772, %v5669
          %5786 = vst.msk [vmem:[%s1077 + $0x68] sm:$0xff] %vm5772, %v5671
          %5787 = vst.msk [vmem:[%s1077 + $0x70] sm:$0xff] %vm5772, %v5673
          %5788 = vst.msk [vmem:[%s1077 + $0x78] sm:$0xff] %vm5772, %v5675
          %5789 = vst.msk [vmem:[%s1077 + $0x80] sm:$0xff] %vm5772, %v5677
          %5790 = vst.msk [vmem:[%s1077 + $0x88] sm:$0xff] %vm5772, %v5679
          %5791 = vst.msk [vmem:[%s1077 + $0x90] sm:$0xff] %vm5772, %v5681
          %5792 = vst.msk [vmem:[%s1077 + $0x98] sm:$0xff] %vm5772, %v5683
          %5793 = vst.msk [vmem:[%s1077 + $0xa0] sm:$0xff] %vm5772, %v5685
          %5794 = vst.msk [vmem:[%s1077 + $0xa8] sm:$0xff] %vm5772, %v5687
          %5795 = vst.msk [vmem:[%s1077 + $0xb0] sm:$0xff] %vm5772, %v5689
          %5796 = vst.msk [vmem:[%s1077 + $0xb8] sm:$0xff] %vm5772, %v5691
          %5797 = vst.msk [vmem:[%s1077 + $0xc0] sm:$0xff] %vm5772, %v5693
          %5798 = vst.msk [vmem:[%s1077 + $0xc8] sm:$0xff] %vm5772, %v5695
          %5799 = vst.msk [vmem:[%s1077 + $0xd0] sm:$0xff] %vm5772, %v5697
          %5800 = vst.msk [vmem:[%s1077 + $0xd8] sm:$0xff] %vm5772, %v5699
          %5801 = vst.msk [vmem:[%s1077 + $0xe0] sm:$0xff] %vm5772, %v5701
          %5802 = vst.msk [vmem:[%s1077 + $0xe8] sm:$0xff] %vm5772, %v5703
          %5803 = vst.msk [vmem:[%s1077 + $0xf0] sm:$0xff] %vm5772, %v5705
          %5804 = vst.msk [vmem:[%s1077 + $0xf8] sm:$0xff] %vm5772, %v5707
          %5805 = vst.msk [vmem:[%s1077 + $0x100] sm:$0xff] %vm5772, %v5709
          %5806 = vst.msk [vmem:[%s1077 + $0x108] sm:$0xff] %vm5772, %v5711
          %5807 = vst.msk [vmem:[%s1077 + $0x110] sm:$0xff] %vm5772, %v5713
          %5808 = vst.msk [vmem:[%s1077 + $0x118] sm:$0xff] %vm5772, %v5715
          %5809 = vst.msk [vmem:[%s1077 + $0x120] sm:$0xff] %vm5772, %v5717
          %5810 = vst.msk [vmem:[%s1077 + $0x128] sm:$0xff] %vm5772, %v5719
          %5811 = vst.msk [vmem:[%s1077 + $0x130] sm:$0xff] %vm5772, %v5721
          %5812 = vst.msk [vmem:[%s1077 + $0x138] sm:$0xff] %vm5772, %v5723
          %5813 = vst.msk [vmem:[%s1077 + $0x140] sm:$0xff] %vm5772, %v5725
          %5814 = vst.msk [vmem:[%s1077 + $0x148] sm:$0xff] %vm5772, %v5727
          %5815 = vst.msk [vmem:[%s1077 + $0x150] sm:$0xff] %vm5772, %v5729
          %5816 = vst.msk [vmem:[%s1077 + $0x158] sm:$0xff] %vm5772, %v5731
          %5817 = vst.msk [vmem:[%s1077 + $0x160] sm:$0xff] %vm5772, %v5733
          %5818 = vst.msk [vmem:[%s1077 + $0x168] sm:$0xff] %vm5772, %v5735
          %5819 = vst.msk [vmem:[%s1077 + $0x170] sm:$0xff] %vm5772, %v5737
          %5820 = vst.msk [vmem:[%s1077 + $0x178] sm:$0xff] %vm5772, %v5739
          %5821 = vst.msk [vmem:[%s1077 + $0x180] sm:$0xff] %vm5772, %v5741
          %5822 = vst.msk [vmem:[%s1077 + $0x188] sm:$0xff] %vm5772, %v5743
          %5823 = vst.msk [vmem:[%s1077 + $0x190] sm:$0xff] %vm5772, %v5745
          %5824 = vst.msk [vmem:[%s1077 + $0x198] sm:$0xff] %vm5772, %v5747
          %5825 = vst.msk [vmem:[%s1077 + $0x1a0] sm:$0xff] %vm5772, %v5749
          %5826 = vst.msk [vmem:[%s1077 + $0x1a8] sm:$0xff] %vm5772, %v5751
          %5827 = vst.msk [vmem:[%s1077 + $0x1b0] sm:$0xff] %vm5772, %v5753
          %5828 = vst.msk [vmem:[%s1077 + $0x1b8] sm:$0xff] %vm5772, %v5755
          %5829 = vst.msk [vmem:[%s1077 + $0x1c0] sm:$0xff] %vm5772, %v5757
          %5830 = vst.msk [vmem:[%s1077 + $0x1c8] sm:$0xff] %vm5772, %v5759
          %5831 = vst.msk [vmem:[%s1077 + $0x1d0] sm:$0xff] %vm5772, %v5761
          %5832 = vst.msk [vmem:[%s1077 + $0x1d8] sm:$0xff] %vm5772, %v5763
          %5833 = vst.msk [vmem:[%s1077 + $0x1e0] sm:$0xff] %vm5772, %v5765
          %5834 = vst.msk [vmem:[%s1077 + $0x1e8] sm:$0xff] %vm5772, %v5767
          %5835 = vst.msk [vmem:[%s1077 + $0x1f0] sm:$0xff] %vm5772, %v5769
          %5836 = vst.msk [vmem:[%s1077 + $0x1f8] sm:$0xff] %vm5772, %v5771
        $region158: #{block_forward_pallas.5} parent=133 // pred_fallthru
          _
        %s5837 = sand.u32 %s112, 1
        %s5838 = sand.u32 %s112, 1
        %s5839 = smul.addr %s5838, 512
        %s5840 = scalar_lea.vmem [#allocation8], %s5839
        // Predicated region
        $region159: #{block_forward_pallas.5} parent=133 // pred_check
          %p5841 = pneg %p122
        $region160: #{block_forward_pallas.5} parent=133 // pred_check_branch
          %5843 = sbr.rel (%p5841) target = $region162
        $region161: #{block_forward_pallas.5} parent=133 // pred_region
          %s5844 = smul.u32 16, %s18
          %s5845 = smul.addr %s5844, 8
          %s5846 = scalar_lea.vmem %s3, %s5845
          // Predicated region
          $region163: #{block_forward_pallas.5} parent=161 // pred_check
            _
          $region164: #{block_forward_pallas.5} parent=161 // pred_check_branch
            %5848 = sbr.rel (0) target = $region166
          $region165: #{block_forward_pallas.5} parent=161 // pred_region
            // Predicated region
            $region167: #{block_forward_pallas.5} parent=165 // pred_check
              _
            $region168: #{block_forward_pallas.5} parent=165 // pred_check_branch
              %5850 = sbr.rel (0) target = $region170
            $region169: #{block_forward_pallas.5} parent=165 // pred_region
              // Predicated region
              $region182: #{block_forward_pallas.5} parent=169 // pred_check
                _
              $region183: #{block_forward_pallas.5} parent=169 // pred_check_branch
                %5991 = sbr.rel (0) target = $region185
              $region184: #{block_forward_pallas.5} parent=169 // pred_region
                loop: start=0, step=1, limit=1
                $region186: #{block_forward_pallas.5} parent=184 // loop_pre_header
                  _
                $region187: #{block_forward_pallas.5} parent=184 // loop_header
                  %s5993 = sphi 0, %s5997
                  %p5994 = scmp.ge.s32.totalorder %s5993, 1
                  %s5998 = sphi %s5840, %s5840
                  %s5999 = sphi %s5846, %s5846
                $region188: #{block_forward_pallas.5} parent=184 // loop_header_branch
                  %5996 = sbr.rel (%p5994) target = $region192
                $region189: #{block_forward_pallas.5} parent=184 // loop_body
                  %v6000 = vld [vmem:[%s5998] sm:$0xff]
                  %6001 = vst [vmem:[%s5999] sm:$0xff] %v6000
                  %v6002 = vld [vmem:[%s5998 + $0x8] sm:$0xff]
                  %6003 = vst [vmem:[%s5999 + $0x8] sm:$0xff] %v6002
                  %v6004 = vld [vmem:[%s5998 + $0x10] sm:$0xff]
                  %6005 = vst [vmem:[%s5999 + $0x10] sm:$0xff] %v6004
                  %v6006 = vld [vmem:[%s5998 + $0x18] sm:$0xff]
                  %6007 = vst [vmem:[%s5999 + $0x18] sm:$0xff] %v6006
                  %v6008 = vld [vmem:[%s5998 + $0x20] sm:$0xff]
                  %6009 = vst [vmem:[%s5999 + $0x20] sm:$0xff] %v6008
                  %v6010 = vld [vmem:[%s5998 + $0x28] sm:$0xff]
                  %6011 = vst [vmem:[%s5999 + $0x28] sm:$0xff] %v6010
                  %v6012 = vld [vmem:[%s5998 + $0x30] sm:$0xff]
                  %6013 = vst [vmem:[%s5999 + $0x30] sm:$0xff] %v6012
                  %v6014 = vld [vmem:[%s5998 + $0x38] sm:$0xff]
                  %6015 = vst [vmem:[%s5999 + $0x38] sm:$0xff] %v6014
                  %v6016 = vld [vmem:[%s5998 + $0x40] sm:$0xff]
                  %6017 = vst [vmem:[%s5999 + $0x40] sm:$0xff] %v6016
                  %v6018 = vld [vmem:[%s5998 + $0x48] sm:$0xff]
                  %6019 = vst [vmem:[%s5999 + $0x48] sm:$0xff] %v6018
                  %v6020 = vld [vmem:[%s5998 + $0x50] sm:$0xff]
                  %6021 = vst [vmem:[%s5999 + $0x50] sm:$0xff] %v6020
                  %v6022 = vld [vmem:[%s5998 + $0x58] sm:$0xff]
                  %6023 = vst [vmem:[%s5999 + $0x58] sm:$0xff] %v6022
                  %v6024 = vld [vmem:[%s5998 + $0x60] sm:$0xff]
                  %6025 = vst [vmem:[%s5999 + $0x60] sm:$0xff] %v6024
                  %v6026 = vld [vmem:[%s5998 + $0x68] sm:$0xff]
                  %6027 = vst [vmem:[%s5999 + $0x68] sm:$0xff] %v6026
                  %v6028 = vld [vmem:[%s5998 + $0x70] sm:$0xff]
                  %6029 = vst [vmem:[%s5999 + $0x70] sm:$0xff] %v6028
                  %v6030 = vld [vmem:[%s5998 + $0x78] sm:$0xff]
                  %6031 = vst [vmem:[%s5999 + $0x78] sm:$0xff] %v6030
                  %v6032 = vld [vmem:[%s5998 + $0x80] sm:$0xff]
                  %6033 = vst [vmem:[%s5999 + $0x100] sm:$0xff] %v6032
                  %v6034 = vld [vmem:[%s5998 + $0x88] sm:$0xff]
                  %6035 = vst [vmem:[%s5999 + $0x108] sm:$0xff] %v6034
                  %v6036 = vld [vmem:[%s5998 + $0x90] sm:$0xff]
                  %6037 = vst [vmem:[%s5999 + $0x110] sm:$0xff] %v6036
                  %v6038 = vld [vmem:[%s5998 + $0x98] sm:$0xff]
                  %6039 = vst [vmem:[%s5999 + $0x118] sm:$0xff] %v6038
                  %v6040 = vld [vmem:[%s5998 + $0xa0] sm:$0xff]
                  %6041 = vst [vmem:[%s5999 + $0x120] sm:$0xff] %v6040
                  %v6042 = vld [vmem:[%s5998 + $0xa8] sm:$0xff]
                  %6043 = vst [vmem:[%s5999 + $0x128] sm:$0xff] %v6042
                  %v6044 = vld [vmem:[%s5998 + $0xb0] sm:$0xff]
                  %6045 = vst [vmem:[%s5999 + $0x130] sm:$0xff] %v6044
                  %v6046 = vld [vmem:[%s5998 + $0xb8] sm:$0xff]
                  %6047 = vst [vmem:[%s5999 + $0x138] sm:$0xff] %v6046
                  %v6048 = vld [vmem:[%s5998 + $0xc0] sm:$0xff]
                  %6049 = vst [vmem:[%s5999 + $0x140] sm:$0xff] %v6048
                  %v6050 = vld [vmem:[%s5998 + $0xc8] sm:$0xff]
                  %6051 = vst [vmem:[%s5999 + $0x148] sm:$0xff] %v6050
                  %v6052 = vld [vmem:[%s5998 + $0xd0] sm:$0xff]
                  %6053 = vst [vmem:[%s5999 + $0x150] sm:$0xff] %v6052
                  %v6054 = vld [vmem:[%s5998 + $0xd8] sm:$0xff]
                  %6055 = vst [vmem:[%s5999 + $0x158] sm:$0xff] %v6054
                  %v6056 = vld [vmem:[%s5998 + $0xe0] sm:$0xff]
                  %6057 = vst [vmem:[%s5999 + $0x160] sm:$0xff] %v6056
                  %v6058 = vld [vmem:[%s5998 + $0xe8] sm:$0xff]
                  %6059 = vst [vmem:[%s5999 + $0x168] sm:$0xff] %v6058
                  %v6060 = vld [vmem:[%s5998 + $0xf0] sm:$0xff]
                  %6061 = vst [vmem:[%s5999 + $0x170] sm:$0xff] %v6060
                  %v6062 = vld [vmem:[%s5998 + $0xf8] sm:$0xff]
                  %6063 = vst [vmem:[%s5999 + $0x178] sm:$0xff] %v6062
                  %v6064 = vld [vmem:[%s5998 + $0x100] sm:$0xff]
                  %6065 = vst [vmem:[%s5999 + $0x200] sm:$0xff] %v6064
                  %v6066 = vld [vmem:[%s5998 + $0x108] sm:$0xff]
                  %6067 = vst [vmem:[%s5999 + $0x208] sm:$0xff] %v6066
                  %v6068 = vld [vmem:[%s5998 + $0x110] sm:$0xff]
                  %6069 = vst [vmem:[%s5999 + $0x210] sm:$0xff] %v6068
                  %v6070 = vld [vmem:[%s5998 + $0x118] sm:$0xff]
                  %6071 = vst [vmem:[%s5999 + $0x218] sm:$0xff] %v6070
                  %v6072 = vld [vmem:[%s5998 + $0x120] sm:$0xff]
                  %6073 = vst [vmem:[%s5999 + $0x220] sm:$0xff] %v6072
                  %v6074 = vld [vmem:[%s5998 + $0x128] sm:$0xff]
                  %6075 = vst [vmem:[%s5999 + $0x228] sm:$0xff] %v6074
                  %v6076 = vld [vmem:[%s5998 + $0x130] sm:$0xff]
                  %6077 = vst [vmem:[%s5999 + $0x230] sm:$0xff] %v6076
                  %v6078 = vld [vmem:[%s5998 + $0x138] sm:$0xff]
                  %6079 = vst [vmem:[%s5999 + $0x238] sm:$0xff] %v6078
                  %v6080 = vld [vmem:[%s5998 + $0x140] sm:$0xff]
                  %6081 = vst [vmem:[%s5999 + $0x240] sm:$0xff] %v6080
                  %v6082 = vld [vmem:[%s5998 + $0x148] sm:$0xff]
                  %6083 = vst [vmem:[%s5999 + $0x248] sm:$0xff] %v6082
                  %v6084 = vld [vmem:[%s5998 + $0x150] sm:$0xff]
                  %6085 = vst [vmem:[%s5999 + $0x250] sm:$0xff] %v6084
                  %v6086 = vld [vmem:[%s5998 + $0x158] sm:$0xff]
                  %6087 = vst [vmem:[%s5999 + $0x258] sm:$0xff] %v6086
                  %v6088 = vld [vmem:[%s5998 + $0x160] sm:$0xff]
                  %6089 = vst [vmem:[%s5999 + $0x260] sm:$0xff] %v6088
                  %v6090 = vld [vmem:[%s5998 + $0x168] sm:$0xff]
                  %6091 = vst [vmem:[%s5999 + $0x268] sm:$0xff] %v6090
                  %v6092 = vld [vmem:[%s5998 + $0x170] sm:$0xff]
                  %6093 = vst [vmem:[%s5999 + $0x270] sm:$0xff] %v6092
                  %v6094 = vld [vmem:[%s5998 + $0x178] sm:$0xff]
                  %6095 = vst [vmem:[%s5999 + $0x278] sm:$0xff] %v6094
                  %v6096 = vld [vmem:[%s5998 + $0x180] sm:$0xff]
                  %6097 = vst [vmem:[%s5999 + $0x300] sm:$0xff] %v6096
                  %v6098 = vld [vmem:[%s5998 + $0x188] sm:$0xff]
                  %6099 = vst [vmem:[%s5999 + $0x308] sm:$0xff] %v6098
                  %v6100 = vld [vmem:[%s5998 + $0x190] sm:$0xff]
                  %6101 = vst [vmem:[%s5999 + $0x310] sm:$0xff] %v6100
                  %v6102 = vld [vmem:[%s5998 + $0x198] sm:$0xff]
                  %6103 = vst [vmem:[%s5999 + $0x318] sm:$0xff] %v6102
                  %v6104 = vld [vmem:[%s5998 + $0x1a0] sm:$0xff]
                  %6105 = vst [vmem:[%s5999 + $0x320] sm:$0xff] %v6104
                  %v6106 = vld [vmem:[%s5998 + $0x1a8] sm:$0xff]
                  %6107 = vst [vmem:[%s5999 + $0x328] sm:$0xff] %v6106
                  %v6108 = vld [vmem:[%s5998 + $0x1b0] sm:$0xff]
                  %6109 = vst [vmem:[%s5999 + $0x330] sm:$0xff] %v6108
                  %v6110 = vld [vmem:[%s5998 + $0x1b8] sm:$0xff]
                  %6111 = vst [vmem:[%s5999 + $0x338] sm:$0xff] %v6110
                  %v6112 = vld [vmem:[%s5998 + $0x1c0] sm:$0xff]
                  %6113 = vst [vmem:[%s5999 + $0x340] sm:$0xff] %v6112
                  %v6114 = vld [vmem:[%s5998 + $0x1c8] sm:$0xff]
                  %6115 = vst [vmem:[%s5999 + $0x348] sm:$0xff] %v6114
                  %v6116 = vld [vmem:[%s5998 + $0x1d0] sm:$0xff]
                  %6117 = vst [vmem:[%s5999 + $0x350] sm:$0xff] %v6116
                  %v6118 = vld [vmem:[%s5998 + $0x1d8] sm:$0xff]
                  %6119 = vst [vmem:[%s5999 + $0x358] sm:$0xff] %v6118
                  %v6120 = vld [vmem:[%s5998 + $0x1e0] sm:$0xff]
                  %6121 = vst [vmem:[%s5999 + $0x360] sm:$0xff] %v6120
                  %v6122 = vld [vmem:[%s5998 + $0x1e8] sm:$0xff]
                  %6123 = vst [vmem:[%s5999 + $0x368] sm:$0xff] %v6122
                  %v6124 = vld [vmem:[%s5998 + $0x1f0] sm:$0xff]
                  %6125 = vst [vmem:[%s5999 + $0x370] sm:$0xff] %v6124
                  %v6126 = vld [vmem:[%s5998 + $0x1f8] sm:$0xff]
                  %6127 = vst [vmem:[%s5999 + $0x378] sm:$0xff] %v6126
                $region190: #{block_forward_pallas.5} parent=184 // loop_footer
                  %s5997 = sadd.s32 1, %s5993
                $region191: #{block_forward_pallas.5} parent=184 // loop_footer_branch
                  %5992 = sbr.rel target = $region187
                $region192: #{block_forward_pallas.5} parent=184 // loop_exit
                  _
              $region185: #{block_forward_pallas.5} parent=169 // pred_fallthru
                _
              // Predicated region
              $region193: #{block_forward_pallas.5} parent=169 // pred_check
                _
              $region194: #{block_forward_pallas.5} parent=169 // pred_check_branch
                %6129 = sbr.rel target = $region196
              $region195: #{block_forward_pallas.5} parent=169 // pred_region
                _
              $region196: #{block_forward_pallas.5} parent=169 // pred_fallthru
                _
            $region170: #{block_forward_pallas.5} parent=165 // pred_fallthru
              _
            // Predicated region
            $region171: #{block_forward_pallas.5} parent=165 // pred_check
              _
            $region172: #{block_forward_pallas.5} parent=165 // pred_check_branch
              %5852 = sbr.rel target = $region174
            $region173: #{block_forward_pallas.5} parent=165 // pred_region
              loop: start=0, step=1, limit=1
              $region175: #{block_forward_pallas.5} parent=173 // loop_pre_header
                _
              $region176: #{block_forward_pallas.5} parent=173 // loop_header
                %s5855 = sphi 0, %s5859
                %p5856 = scmp.ge.s32.totalorder %s5855, 1
                %s5860 = sphi %s5840, %s5840
                %s5861 = sphi %s5846, %s5846
              $region177: #{block_forward_pallas.5} parent=173 // loop_header_branch
                %5858 = sbr.rel (%p5856) target = $region181
              $region178: #{block_forward_pallas.5} parent=173 // loop_body
                %v5862 = vld [vmem:[%s5860] sm:$0xff]
                %5863 = vst [vmem:[%s5861] sm:$0xff] %v5862
                %v5864 = vld [vmem:[%s5860 + $0x8] sm:$0xff]
                %5865 = vst [vmem:[%s5861 + $0x8] sm:$0xff] %v5864
                %v5866 = vld [vmem:[%s5860 + $0x10] sm:$0xff]
                %5867 = vst [vmem:[%s5861 + $0x10] sm:$0xff] %v5866
                %v5868 = vld [vmem:[%s5860 + $0x18] sm:$0xff]
                %5869 = vst [vmem:[%s5861 + $0x18] sm:$0xff] %v5868
                %v5870 = vld [vmem:[%s5860 + $0x20] sm:$0xff]
                %5871 = vst [vmem:[%s5861 + $0x20] sm:$0xff] %v5870
                %v5872 = vld [vmem:[%s5860 + $0x28] sm:$0xff]
                %5873 = vst [vmem:[%s5861 + $0x28] sm:$0xff] %v5872
                %v5874 = vld [vmem:[%s5860 + $0x30] sm:$0xff]
                %5875 = vst [vmem:[%s5861 + $0x30] sm:$0xff] %v5874
                %v5876 = vld [vmem:[%s5860 + $0x38] sm:$0xff]
                %5877 = vst [vmem:[%s5861 + $0x38] sm:$0xff] %v5876
                %v5878 = vld [vmem:[%s5860 + $0x40] sm:$0xff]
                %5879 = vst [vmem:[%s5861 + $0x40] sm:$0xff] %v5878
                %v5880 = vld [vmem:[%s5860 + $0x48] sm:$0xff]
                %5881 = vst [vmem:[%s5861 + $0x48] sm:$0xff] %v5880
                %v5882 = vld [vmem:[%s5860 + $0x50] sm:$0xff]
                %5883 = vst [vmem:[%s5861 + $0x50] sm:$0xff] %v5882
                %v5884 = vld [vmem:[%s5860 + $0x58] sm:$0xff]
                %5885 = vst [vmem:[%s5861 + $0x58] sm:$0xff] %v5884
                %v5886 = vld [vmem:[%s5860 + $0x60] sm:$0xff]
                %5887 = vst [vmem:[%s5861 + $0x60] sm:$0xff] %v5886
                %v5888 = vld [vmem:[%s5860 + $0x68] sm:$0xff]
                %5889 = vst [vmem:[%s5861 + $0x68] sm:$0xff] %v5888
                %v5890 = vld [vmem:[%s5860 + $0x70] sm:$0xff]
                %5891 = vst [vmem:[%s5861 + $0x70] sm:$0xff] %v5890
                %v5892 = vld [vmem:[%s5860 + $0x78] sm:$0xff]
                %5893 = vst [vmem:[%s5861 + $0x78] sm:$0xff] %v5892
                %v5894 = vld [vmem:[%s5860 + $0x80] sm:$0xff]
                %5895 = vst [vmem:[%s5861 + $0x100] sm:$0xff] %v5894
                %v5896 = vld [vmem:[%s5860 + $0x88] sm:$0xff]
                %5897 = vst [vmem:[%s5861 + $0x108] sm:$0xff] %v5896
                %v5898 = vld [vmem:[%s5860 + $0x90] sm:$0xff]
                %5899 = vst [vmem:[%s5861 + $0x110] sm:$0xff] %v5898
                %v5900 = vld [vmem:[%s5860 + $0x98] sm:$0xff]
                %5901 = vst [vmem:[%s5861 + $0x118] sm:$0xff] %v5900
                %v5902 = vld [vmem:[%s5860 + $0xa0] sm:$0xff]
                %5903 = vst [vmem:[%s5861 + $0x120] sm:$0xff] %v5902
                %v5904 = vld [vmem:[%s5860 + $0xa8] sm:$0xff]
                %5905 = vst [vmem:[%s5861 + $0x128] sm:$0xff] %v5904
                %v5906 = vld [vmem:[%s5860 + $0xb0] sm:$0xff]
                %5907 = vst [vmem:[%s5861 + $0x130] sm:$0xff] %v5906
                %v5908 = vld [vmem:[%s5860 + $0xb8] sm:$0xff]
                %5909 = vst [vmem:[%s5861 + $0x138] sm:$0xff] %v5908
                %v5910 = vld [vmem:[%s5860 + $0xc0] sm:$0xff]
                %5911 = vst [vmem:[%s5861 + $0x140] sm:$0xff] %v5910
                %v5912 = vld [vmem:[%s5860 + $0xc8] sm:$0xff]
                %5913 = vst [vmem:[%s5861 + $0x148] sm:$0xff] %v5912
                %v5914 = vld [vmem:[%s5860 + $0xd0] sm:$0xff]
                %5915 = vst [vmem:[%s5861 + $0x150] sm:$0xff] %v5914
                %v5916 = vld [vmem:[%s5860 + $0xd8] sm:$0xff]
                %5917 = vst [vmem:[%s5861 + $0x158] sm:$0xff] %v5916
                %v5918 = vld [vmem:[%s5860 + $0xe0] sm:$0xff]
                %5919 = vst [vmem:[%s5861 + $0x160] sm:$0xff] %v5918
                %v5920 = vld [vmem:[%s5860 + $0xe8] sm:$0xff]
                %5921 = vst [vmem:[%s5861 + $0x168] sm:$0xff] %v5920
                %v5922 = vld [vmem:[%s5860 + $0xf0] sm:$0xff]
                %5923 = vst [vmem:[%s5861 + $0x170] sm:$0xff] %v5922
                %v5924 = vld [vmem:[%s5860 + $0xf8] sm:$0xff]
                %5925 = vst [vmem:[%s5861 + $0x178] sm:$0xff] %v5924
                %v5926 = vld [vmem:[%s5860 + $0x100] sm:$0xff]
                %5927 = vst [vmem:[%s5861 + $0x200] sm:$0xff] %v5926
                %v5928 = vld [vmem:[%s5860 + $0x108] sm:$0xff]
                %5929 = vst [vmem:[%s5861 + $0x208] sm:$0xff] %v5928
                %v5930 = vld [vmem:[%s5860 + $0x110] sm:$0xff]
                %5931 = vst [vmem:[%s5861 + $0x210] sm:$0xff] %v5930
                %v5932 = vld [vmem:[%s5860 + $0x118] sm:$0xff]
                %5933 = vst [vmem:[%s5861 + $0x218] sm:$0xff] %v5932
                %v5934 = vld [vmem:[%s5860 + $0x120] sm:$0xff]
                %5935 = vst [vmem:[%s5861 + $0x220] sm:$0xff] %v5934
                %v5936 = vld [vmem:[%s5860 + $0x128] sm:$0xff]
                %5937 = vst [vmem:[%s5861 + $0x228] sm:$0xff] %v5936
                %v5938 = vld [vmem:[%s5860 + $0x130] sm:$0xff]
                %5939 = vst [vmem:[%s5861 + $0x230] sm:$0xff] %v5938
                %v5940 = vld [vmem:[%s5860 + $0x138] sm:$0xff]
                %5941 = vst [vmem:[%s5861 + $0x238] sm:$0xff] %v5940
                %v5942 = vld [vmem:[%s5860 + $0x140] sm:$0xff]
                %5943 = vst [vmem:[%s5861 + $0x240] sm:$0xff] %v5942
                %v5944 = vld [vmem:[%s5860 + $0x148] sm:$0xff]
                %5945 = vst [vmem:[%s5861 + $0x248] sm:$0xff] %v5944
                %v5946 = vld [vmem:[%s5860 + $0x150] sm:$0xff]
                %5947 = vst [vmem:[%s5861 + $0x250] sm:$0xff] %v5946
                %v5948 = vld [vmem:[%s5860 + $0x158] sm:$0xff]
                %5949 = vst [vmem:[%s5861 + $0x258] sm:$0xff] %v5948
                %v5950 = vld [vmem:[%s5860 + $0x160] sm:$0xff]
                %5951 = vst [vmem:[%s5861 + $0x260] sm:$0xff] %v5950
                %v5952 = vld [vmem:[%s5860 + $0x168] sm:$0xff]
                %5953 = vst [vmem:[%s5861 + $0x268] sm:$0xff] %v5952
                %v5954 = vld [vmem:[%s5860 + $0x170] sm:$0xff]
                %5955 = vst [vmem:[%s5861 + $0x270] sm:$0xff] %v5954
                %v5956 = vld [vmem:[%s5860 + $0x178] sm:$0xff]
                %5957 = vst [vmem:[%s5861 + $0x278] sm:$0xff] %v5956
                %v5958 = vld [vmem:[%s5860 + $0x180] sm:$0xff]
                %5959 = vst [vmem:[%s5861 + $0x300] sm:$0xff] %v5958
                %v5960 = vld [vmem:[%s5860 + $0x188] sm:$0xff]
                %5961 = vst [vmem:[%s5861 + $0x308] sm:$0xff] %v5960
                %v5962 = vld [vmem:[%s5860 + $0x190] sm:$0xff]
                %5963 = vst [vmem:[%s5861 + $0x310] sm:$0xff] %v5962
                %v5964 = vld [vmem:[%s5860 + $0x198] sm:$0xff]
                %5965 = vst [vmem:[%s5861 + $0x318] sm:$0xff] %v5964
                %v5966 = vld [vmem:[%s5860 + $0x1a0] sm:$0xff]
                %5967 = vst [vmem:[%s5861 + $0x320] sm:$0xff] %v5966
                %v5968 = vld [vmem:[%s5860 + $0x1a8] sm:$0xff]
                %5969 = vst [vmem:[%s5861 + $0x328] sm:$0xff] %v5968
                %v5970 = vld [vmem:[%s5860 + $0x1b0] sm:$0xff]
                %5971 = vst [vmem:[%s5861 + $0x330] sm:$0xff] %v5970
                %v5972 = vld [vmem:[%s5860 + $0x1b8] sm:$0xff]
                %5973 = vst [vmem:[%s5861 + $0x338] sm:$0xff] %v5972
                %v5974 = vld [vmem:[%s5860 + $0x1c0] sm:$0xff]
                %5975 = vst [vmem:[%s5861 + $0x340] sm:$0xff] %v5974
                %v5976 = vld [vmem:[%s5860 + $0x1c8] sm:$0xff]
                %5977 = vst [vmem:[%s5861 + $0x348] sm:$0xff] %v5976
                %v5978 = vld [vmem:[%s5860 + $0x1d0] sm:$0xff]
                %5979 = vst [vmem:[%s5861 + $0x350] sm:$0xff] %v5978
                %v5980 = vld [vmem:[%s5860 + $0x1d8] sm:$0xff]
                %5981 = vst [vmem:[%s5861 + $0x358] sm:$0xff] %v5980
                %v5982 = vld [vmem:[%s5860 + $0x1e0] sm:$0xff]
                %5983 = vst [vmem:[%s5861 + $0x360] sm:$0xff] %v5982
                %v5984 = vld [vmem:[%s5860 + $0x1e8] sm:$0xff]
                %5985 = vst [vmem:[%s5861 + $0x368] sm:$0xff] %v5984
                %v5986 = vld [vmem:[%s5860 + $0x1f0] sm:$0xff]
                %5987 = vst [vmem:[%s5861 + $0x370] sm:$0xff] %v5986
                %v5988 = vld [vmem:[%s5860 + $0x1f8] sm:$0xff]
                %5989 = vst [vmem:[%s5861 + $0x378] sm:$0xff] %v5988
              $region179: #{block_forward_pallas.5} parent=173 // loop_footer
                %s5859 = sadd.s32 1, %s5855
              $region180: #{block_forward_pallas.5} parent=173 // loop_footer_branch
                %5854 = sbr.rel target = $region176
              $region181: #{block_forward_pallas.5} parent=173 // loop_exit
                _
            $region174: #{block_forward_pallas.5} parent=165 // pred_fallthru
              _
          $region166: #{block_forward_pallas.5} parent=161 // pred_fallthru
            _
          %6130 = vnop
        $region162: #{block_forward_pallas.5} parent=133 // pred_fallthru
          _
      $region134: #{block_forward_pallas.5} parent=5 // pred_fallthru
        _
      %p6131 = scmp.le.s32.totalorder 2, %s9
      // Predicated region
      $region197: #{block_forward_pallas.5} parent=5 // pred_check
        %p6132 = pneg %p6131
      $region198: #{block_forward_pallas.5} parent=5 // pred_check_branch
        %6134 = sbr.rel (%p6132) target = $region200
      $region199: #{block_forward_pallas.5} parent=5 // pred_region
        %s6135 = ssub.s32 %s9, 2
        // Predicated region
        $region201: #{block_forward_pallas.5} parent=199 // pred_check
          %p6136 = pneg %p128
        $region202: #{block_forward_pallas.5} parent=199 // pred_check_branch
          %6138 = sbr.rel (%p6136) target = $region204
        $region203: #{block_forward_pallas.5} parent=199 // pred_region
          %s6139 = sand.u32 %s113, 1
          %s6140 = sand.u32 %s113, 1
          %s6141 = smul.addr %s6140, 512
          %s6142 = scalar_lea.vmem [#allocation8], %s6141
        $region204: #{block_forward_pallas.5} parent=199 // pred_fallthru
          _
      $region200: #{block_forward_pallas.5} parent=5 // pred_fallthru
        _
    $region6: #{block_forward_pallas.5} parent=1 // loop_footer
      %s13 = sadd.s32 1, %s9
    $region7: #{block_forward_pallas.5} parent=1 // loop_footer_branch
      %8 = sbr.rel target = $region3
    $region8: #{block_forward_pallas.5} parent=1 // loop_exit
      _

</llo_original>
